<compile_context>
chip_gen: v6e
topology: v6e:2x2x1
jax: 0.10.0
libtpu: 0.0.40
codegen_flags: <defaults>
</compile_context>

<pallas_src>
import functools

import jax
import jax.numpy as jnp
from jax import lax
from jax.experimental import pallas as pl
from jax.experimental.pallas import tpu as pltpu


# ----------------------------------------------------------------------------
# Plain-JAX glue: sampling / grouping (data-dependent gathers).
# TODO(synk): FPS / ball-query involve data-dependent gather with no clean
# rectangular-tile Pallas mapping; they stay in plain JAX (glue), the dense
# MLP + max-reduction hot path is the Pallas kernel.
# ----------------------------------------------------------------------------
def farthest_point_sample(xyz, npoint, key):
    B, N, _ = xyz.shape
    distance0 = jnp.full((B, N), 1e10, dtype=xyz.dtype)
    farthest0 = jax.random.randint(key, (B,), 0, N).astype(jnp.int32)
    centroids0 = jnp.zeros((B, npoint), jnp.int32)

    def body(i, carry):
        distance, farthest, centroids = carry
        centroids = centroids.at[:, i].set(farthest)
        centroid = xyz[jnp.arange(B), farthest, :][:, None, :]
        dist = jnp.sum((xyz - centroid) ** 2, axis=-1)
        distance = jnp.minimum(distance, dist)
        farthest = jnp.argmax(distance, axis=-1).astype(jnp.int32)
        return distance, farthest, centroids

    _, _, centroids = lax.fori_loop(
        0, npoint, body, (distance0, farthest0, centroids0))
    return centroids


def index_points(points, idx):
    # points: (B, N, C), idx: (B, ...) -> (B, ..., C)
    B = points.shape[0]
    C = points.shape[2]
    idx_shape = idx.shape
    idx_flat = idx.reshape(B, -1)
    gathered = jnp.take_along_axis(points, idx_flat[..., None], axis=1)
    return gathered.reshape(*idx_shape, C)


def square_distance(src, dst):
    dist = -2.0 * jnp.matmul(src, jnp.swapaxes(dst, 2, 1))
    dist = dist + jnp.sum(src ** 2, axis=-1)[:, :, None]
    dist = dist + jnp.sum(dst ** 2, axis=-1)[:, None, :]
    return dist


def query_ball_point(radius, nsample, xyz, new_xyz):
    B, N, _ = xyz.shape
    _, S, _ = new_xyz.shape
    sqrdists = square_distance(new_xyz, xyz)
    group_idx = jnp.broadcast_to(jnp.arange(N, dtype=jnp.int32), (B, S, N))
    group_idx = jnp.where(sqrdists > radius ** 2, N, group_idx)
    # smallest `nsample` indices via top_k of negated values (avoids full sort)
    neg_topk, _ = lax.top_k(-group_idx, nsample)
    group_idx = -neg_topk
    group_first = group_idx[:, :, 0]
    group_first = jnp.where(group_first == N, 0, group_first)
    group_first = jnp.broadcast_to(group_first[:, :, None], group_idx.shape)
    group_idx = jnp.where(group_idx == N, group_first, group_idx)
    return group_idx


# ----------------------------------------------------------------------------
# Small helpers
# ----------------------------------------------------------------------------
def _round_up(x, m):
    return (x + m - 1) // m * m


def _pad2(w, r, c):
    return jnp.pad(w, ((0, r - w.shape[0]), (0, c - w.shape[1])))


def _pad1(v, n):
    return jnp.pad(v, (0, n - v.shape[0]))


def _pick_chunk_points(TS, K, target_rows=1024):
    # points-per-chunk: multiple of 8 (aligned sublane stores into the acc
    # scratch), divides TS, ppc*K close to ~1024 rows.
    ppc = 8
    while ppc * 2 <= TS and TS % (ppc * 2) == 0 and (ppc * 2) * K <= target_rows:
        ppc *= 2
    if TS % ppc != 0:       # defensive; TS is a multiple of 128 so unreachable
        ppc = TS
    return ppc


def _vmem_footprint(TS, K, C0p, C1p, C2p, C2s):
    # Count ALL resident buffers (lane-padded where relevant).
    lane = 128
    c0_lanes = _round_up(C0p, lane)
    ppc = _pick_chunk_points(TS, K)
    ch = ppc * K
    in_block = TS * K * c0_lanes * 2                    # bf16, lane-padded
    out_block = C2s * max(TS, lane) * 4                 # f32
    weights = C0p * C1p * 2 + C1p * C2p * 2 + (C1p + C2p) * 4
    acc = TS * C2p * 4
    chunk_live = ch * (c0_lanes * 4 + C1p * (4 + 2) + C2p * 4)
    return 2 * in_block + 2 * out_block + 2 * weights + acc + chunk_live


def _pick_tile_s(S, K, C0p, C1p, C2p, C2s, B):
    # Generation-aware VMEM budget (v7x has 64 MiB/TC vs 128 MiB on v5e/v6e).
    try:
        cap = int(getattr(pltpu.get_tpu_info(), "vmem_capacity_bytes", 0))
    except Exception:
        cap = 0
    if not cap:
        cap = 64 << 20                                   # conservative floor
    budget = min(int(cap * 0.45), 48 << 20)

    assert S % 128 == 0 and K % 8 == 0
    ts = 128
    while S % (ts * 2) == 0 and _vmem_footprint(ts * 2, K, C0p, C1p, C2p, C2s) <= budget:
        ts *= 2
    # v7x: keep >= 2 parallel grid steps so both TensorCores get work.
    while B * (S // ts) < 2 and ts > 128 and S % (ts // 2) == 0:
        ts //= 2

    need = _vmem_footprint(ts, K, C0p, C1p, C2p, C2s)
    vmem_limit = min(cap - (2 << 20), max(32 << 20, need + (8 << 20)))
    return ts, int(vmem_limit)


# ----------------------------------------------------------------------------
# Pallas kernel: fused (1x1 conv -> BN -> ReLU) x2 + max over nsample.
# Output stored pre-transposed as (C2s, TS): npoint is the lane axis.
# ----------------------------------------------------------------------------
def _mlp_max_kernel(x_ref, w1_ref, b1_ref, w2_ref, b2_ref, o_ref, acc_ref, *,
                    TS, K, CH, C2S, vpu_l1):
    C1P = w1_ref.shape[1]
    C2P = w2_ref.shape[1]
    PPC = CH // K
    n_chunks = (TS * K) // CH

    b1 = b1_ref[...]
    b2 = b2_ref[...]
    w2 = w2_ref[...]
    w1f = w1_ref[...].astype(jnp.float32) if vpu_l1 else None

    def chunk(c, carry):
        r0 = pl.multiple_of(c * CH, CH)
        x = x_ref[0, pl.ds(r0, CH), :]                    # (CH, C0p) bf16
        if vpu_l1:
            # Tiny-C0 first layer on the VPU: C0p rank-1 updates instead of an
            # MXU dot at ~8/256 contraction utilization.
            # TODO(synk): the tiny-C0 input block is still lane-padded to 128
            # in VMEM; a channels-first (B, C0p, S*K) x layout would make the
            # input DMA lane-dense and remove the final transpose.
            xf = x.astype(jnp.float32)
            h = xf[:, 0:1] * w1f[0:1, :]
            for ci in range(1, x.shape[1]):
                h = h + xf[:, ci:ci + 1] * w1f[ci:ci + 1, :]
        else:
            h = jnp.dot(x, w1_ref[...], preferred_element_type=jnp.float32)
        h = jnp.maximum(h + b1, 0.0)                      # (CH, C1P) f32
        h2 = jnp.dot(h.astype(w2.dtype), w2,
                     preferred_element_type=jnp.float32)
        h2 = jnp.maximum(h2 + b2, 0.0)                    # (CH, C2P) f32
        # Row index within the chunk is p*K + k; chunks cover whole points.
        m = jnp.max(h2.reshape(PPC, K, C2P), axis=1)      # (PPC, C2P)
        p0 = pl.multiple_of(c * PPC, PPC)
        acc_ref[pl.ds(p0, PPC), :] = m
        return carry

    if n_chunks == 1:
        chunk(0, 0)
    else:
        lax.fori_loop(0, n_chunks, chunk, 0, unroll=n_chunks <= 8)

    # Lane-dense transposed store; only the first C2S (= round_up(C2, 8))
    # sublane rows are real output channels.
    o_ref[0] = jnp.transpose(acc_ref[...], (1, 0))[:C2S, :]


def mlp_max_pallas(x_flat, w1, b1, w2, b2, *, S, K, TS, C2S, vpu_l1, vmem_limit):
    # x_flat: (B, S*K, C0p) bf16 ; w1: (C0p, C1p) bf16 ; w2: (C1p, C2p) bf16
    # b1: (1, C1p) f32 ; b2: (1, C2p) f32  -> out: (B, C2S, S) f32
    B, SK, C0p = x_flat.shape
    C1p = w1.shape[1]
    C2p = w2.shape[1]
    assert SK == S * K and S % TS == 0 and K % 8 == 0

    PPC = _pick_chunk_points(TS, K)
    CH = PPC * K

    flops = 2 * B * S * K * (C0p * C1p + C1p * C2p)
    bytes_accessed = (x_flat.size * 2 + (w1.size + w2.size) * 2
                      + (b1.size + b2.size) * 4 + B * C2S * S * 4)

    kernel = functools.partial(_mlp_max_kernel, TS=TS, K=K, CH=CH, C2S=C2S,
                               vpu_l1=vpu_l1)
    return pl.pallas_call(
        kernel,
        out_shape=jax.ShapeDtypeStruct((B, C2S, S), jnp.float32),
        grid=(B, S // TS),
        in_specs=[
            pl.BlockSpec((1, TS * K, C0p), lambda b, s: (b, s, 0)),
            pl.BlockSpec((C0p, C1p), lambda b, s: (0, 0)),
            pl.BlockSpec((1, C1p), lambda b, s: (0, 0)),
            pl.BlockSpec((C1p, C2p), lambda b, s: (0, 0)),
            pl.BlockSpec((1, C2p), lambda b, s: (0, 0)),
        ],
        out_specs=pl.BlockSpec((1, C2S, TS), lambda b, s: (b, 0, s)),
        scratch_shapes=[pltpu.VMEM((TS, C2p), jnp.float32)],
        compiler_params=pltpu.CompilerParams(
            dimension_semantics=("parallel", "parallel"),
            vmem_limit_bytes=int(vmem_limit)),
        cost_estimate=pl.CostEstimate(flops=int(flops), transcendentals=0,
                                      bytes_accessed=int(bytes_accessed)),
    )(x_flat, w1, b1, w2, b2)


# ----------------------------------------------------------------------------
# Full module forward (non-group_all branch).
# TODO(synk): group_all branch of the PyTorch module is not implemented here
# (this instance is used with group_all=False).
# ----------------------------------------------------------------------------
class PointNetSetAbstractionPallas:
    def __init__(self, npoint, radius, nsample, in_channel, mlp, key):
        assert len(mlp) == 2, "this kernel fuses exactly 2 MLP layers"
        self.npoint, self.radius, self.nsample = npoint, radius, nsample
        C0, C1, C2 = in_channel, mlp[0], mlp[1]
        self.C0, self.C1, self.C2 = C0, C1, C2
        self.C0p = _round_up(C0, 8)        # kept == full lane dim of x
        self.C1p = _round_up(C1, 128)      # lane-dense intermediate (compute)
        self.C2p = _round_up(C2, 128)      # second matmul N (compute only)
        self.C2s = _round_up(C2, 8)        # stored output channels (sublane)

        k = jax.random.split(key, 8)
        w1 = 0.1 * jax.random.normal(k[0], (C0, C1), jnp.float32)
        b1 = 0.05 * jax.random.normal(k[1], (C1,), jnp.float32)
        w2 = 0.1 * jax.random.normal(k[2], (C1, C2), jnp.float32)
        b2 = 0.05 * jax.random.normal(k[3], (C2,), jnp.float32)
        g1 = 1.0 + 0.05 * jax.random.normal(k[4], (C1,), jnp.float32)
        be1 = 0.05 * jax.random.normal(k[5], (C1,), jnp.float32)
        g2 = 1.0 + 0.05 * jax.random.normal(k[6], (C2,), jnp.float32)
        be2 = 0.05 * jax.random.normal(k[7], (C2,), jnp.float32)

        # Eval-mode BatchNorm running stats. NOTE: this fold is ONLY valid in
        # eval/inference mode (general formula, correct for any loaded stats).
        rm1 = jnp.zeros((C1,), jnp.float32); rv1 = jnp.ones((C1,), jnp.float32)
        rm2 = jnp.zeros((C2,), jnp.float32); rv2 = jnp.ones((C2,), jnp.float32)
        eps = 1e-5
        s1 = g1 / jnp.sqrt(rv1 + eps)
        s2 = g2 / jnp.sqrt(rv2 + eps)
        t1 = be1 + (b1 - rm1) * s1          # folded per-channel bias
        t2 = be2 + (b2 - rm2) * s2
        # Fold the BN scale into the weights: (x@W + b)*s + shift == x@(W*s) + t.
        w1f = w1 * s1[None, :]
        w2f = w2 * s2[None, :]

        # Zero-padded, bf16 weights (padded channels are exact zeros).
        self.w1 = _pad2(w1f, self.C0p, self.C1p).astype(jnp.bfloat16)
        self.w2 = _pad2(w2f, self.C1p, self.C2p).astype(jnp.bfloat16)
        self.b1 = _pad1(t1, self.C1p).reshape(1, self.C1p).astype(jnp.float32)
        self.b2 = _pad1(t2, self.C2p).reshape(1, self.C2p).astype(jnp.float32)

    def _sample_and_group(self, new_xyz, xyz, points):
        idx = query_ball_point(self.radius, self.nsample, xyz, new_xyz)
        grouped_xyz = index_points(xyz, idx)                   # (B,S,K,3)
        grouped_xyz = grouped_xyz - new_xyz[:, :, None, :]
        if points is not None:
            points_t = jnp.swapaxes(points, 1, 2)              # (B,N,D)
            grouped_points = index_points(points_t, idx)       # (B,S,K,D)
            grouped = jnp.concatenate([grouped_xyz, grouped_points], axis=-1)
        else:
            grouped = grouped_xyz
        return grouped                                          # (B,S,K,C0)

    def _prepare_features(self, xyz, points, fps_key):
        new_xyz = index_points(
            xyz, farthest_point_sample(xyz, self.npoint, fps_key))  # (B,S,3)
        grouped = self._sample_and_group(new_xyz, xyz, points)      # (B,S,K,C0)
        B, S, K, C0 = grouped.shape
        # Pad nsample to a multiple of 8 by replicating the first sample
        # (max-invariant; matches query_ball_point's duplicate-fill).
        Kp = _round_up(K, 8)
        if Kp != K:
            rep = jnp.broadcast_to(grouped[:, :, :1, :], (B, S, Kp - K, C0))
            grouped = jnp.concatenate([grouped, rep], axis=2)
        # Pad npoint to a multiple of 128 -> lane-dense output tiles.
        Sp = _round_up(S, 128)
        if Sp != S:
            grouped = jnp.pad(grouped, ((0, 0), (0, Sp - S), (0, 0), (0, 0)))
        # Pad input channels to a multiple of 8.
        if self.C0p != C0:
            grouped = jnp.pad(grouped,
                              ((0, 0), (0, 0), (0, 0), (0, self.C0p - C0)))
        # Flatten keeping K contiguous per point (row = s*K + k).
        x_flat = grouped.reshape(B, Sp * Kp, self.C0p).astype(jnp.bfloat16)
        return new_xyz, x_flat, S, Sp, Kp

    def __call__(self, xyz, points, fps_key):
        # xyz: (B, N, 3); points: (B, D, N) or None  (PyTorch convention)
        B = xyz.shape[0]
        new_xyz, x_flat, S, Sp, Kp = self._prepare_features(xyz, points, fps_key)
        TS, vmem_limit = _pick_tile_s(Sp, Kp, self.C0p, self.C1p, self.C2p,
                                      self.C2s, B)
        out = mlp_max_pallas(x_flat, self.w1, self.b1, self.w2, self.b2,
                             S=Sp, K=Kp, TS=TS, C2S=self.C2s,
                             vpu_l1=(self.C0p <= 16),
                             vmem_limit=vmem_limit)             # (B, C2s, Sp)
        new_points = out
        if self.C2s != self.C2:
            new_points = new_points[:, :self.C2, :]
        if Sp != S:
            new_points = new_points[:, :, :S]
        return new_xyz, new_points                              # (B, C2, npoint)


# Pure-JAX reference of the fused hot path (same folded/padded bf16 params).
def _mlp_max_ref(x_flat, w1, b1, w2, b2, Sp, Kp):
    h = jnp.dot(x_flat, w1, preferred_element_type=jnp.float32) + b1
    h = jnp.maximum(h, 0.0)
    h = jnp.dot(h.astype(jnp.bfloat16), w2,
                preferred_element_type=jnp.float32) + b2
    h = jnp.maximum(h, 0.0)
    B = x_flat.shape[0]
    m = jnp.max(h.reshape(B, Sp, Kp, -1), axis=2)        # (B, Sp, C2p)
    return jnp.swapaxes(m, 1, 2)                          # (B, C2p, Sp)


if __name__ == "__main__":
    key = jax.random.PRNGKey(0)
    k_xyz, k_pts, k_params, k_fps = jax.random.split(key, 4)

    B, N, D = 2, 16, 4            # batch, points, extra feature channels
    npoint, radius, nsample = 8, 0.6, 8
    in_channel = 3 + D
    mlp_channels = [16, 32]

    xyz = jax.random.uniform(k_xyz, (B, N, 3), jnp.float32)          # (B,N,3)
    points = jax.random.normal(k_pts, (B, D, N), jnp.float32)        # (B,D,N)

    module = PointNetSetAbstractionPallas(
        npoint, radius, nsample, in_channel, mlp_channels, k_params)

    new_xyz, new_points = module(xyz, points, k_fps)
    jax.block_until_ready((new_xyz, new_points))
    assert new_xyz.shape == (B, npoint, 3)
    assert new_points.shape == (B, mlp_channels[-1], npoint)

    # Sanity check the Pallas hot path against a pure-JAX reference using the
    # same folded/padded bf16 parameters (intentional bf16 precision -> 1e-2).
    _, x_flat, S, Sp, Kp = module._prepare_features(xyz, points, k_fps)
    ref = _mlp_max_ref(x_flat, module.w1, module.b1, module.w2, module.b2,
                       Sp, Kp)
    ref = ref[:, :mlp_channels[-1], :S]
    err = float(jnp.max(jnp.abs(new_points - ref)))
    assert jnp.allclose(new_points, ref, atol=1e-2, rtol=1e-2), err

    print("KERNEL_OK")
</pallas_src>

<mosaic_0001>
module attributes {stable_mosaic.version = 11 : i64} {
  func.func @_mlp_max_kernel(%arg0: i32, %arg1: i32, %arg2: memref<1x1024x8xbf16, #tpu.memory_space<vmem>>, %arg3: memref<8x128xbf16, #tpu.memory_space<vmem>>, %arg4: memref<1x128xf32, #tpu.memory_space<vmem>>, %arg5: memref<128x128xbf16, #tpu.memory_space<vmem>>, %arg6: memref<1x128xf32, #tpu.memory_space<vmem>>, %arg7: memref<1x32x128xf32, #tpu.memory_space<vmem>>, %arg8: memref<128x128xf32, #tpu.memory_space<vmem>>) attributes {dimension_semantics = [#tpu.dimension_semantics<parallel>, #tpu.dimension_semantics<parallel>], iteration_bounds = array<i64: 2, 1>, scalar_prefetch = 0 : i64, scratch_operands = 1 : i64, tpu.core_type = #tpu.core_type<tc>, window_params = [{transform_indices = @transform_0, window_bounds = array<i64: 1, 1024, 8>}, {pipeline_mode = #tpu.pipeline_mode<synchronous>, transform_indices = @transform_1, window_bounds = array<i64: 8, 128>}, {pipeline_mode = #tpu.pipeline_mode<synchronous>, transform_indices = @transform_2, window_bounds = array<i64: 1, 128>}, {pipeline_mode = #tpu.pipeline_mode<synchronous>, transform_indices = @transform_3, window_bounds = array<i64: 128, 128>}, {pipeline_mode = #tpu.pipeline_mode<synchronous>, transform_indices = @transform_4, window_bounds = array<i64: 1, 128>}, {transform_indices = @transform_5, window_bounds = array<i64: 1, 32, 128>}]} {
    %c0 = arith.constant 0 : index
    %c0_0 = arith.constant 0 : index
    %0 = vector.load %arg4[%c0, %c0_0] : memref<1x128xf32, #tpu.memory_space<vmem>>, vector<1x128xf32>
    %c0_1 = arith.constant 0 : index
    %c0_2 = arith.constant 0 : index
    %1 = vector.load %arg6[%c0_1, %c0_2] : memref<1x128xf32, #tpu.memory_space<vmem>>, vector<1x128xf32>
    %c0_3 = arith.constant 0 : index
    %c0_4 = arith.constant 0 : index
    %2 = vector.load %arg5[%c0_3, %c0_4] : memref<128x128xbf16, #tpu.memory_space<vmem>>, vector<128x128xbf16>
    %c0_5 = arith.constant 0 : index
    %c0_6 = arith.constant 0 : index
    %3 = vector.load %arg3[%c0_5, %c0_6] : memref<8x128xbf16, #tpu.memory_space<vmem>>, vector<8x128xbf16>
    %4 = arith.extf %3 : vector<8x128xbf16> to vector<8x128xf32>
    %c0_i32 = arith.constant 0 : i32
    %5 = tpu.assume_multiple %c0_i32, 1024 : i32
    %c0_7 = arith.constant 0 : index
    %6 = arith.index_cast %5 : i32 to index
    %c0_8 = arith.constant 0 : index
    %7 = vector.load %arg2[%c0_7, %6, %c0_8] : memref<1x1024x8xbf16, #tpu.memory_space<vmem>>, vector<1x1024x8xbf16>
    %8 = vector.shape_cast %7 : vector<1x1024x8xbf16> to vector<1024x8xbf16>
    %9 = arith.extf %8 : vector<1024x8xbf16> to vector<1024x8xf32>
    %10 = vector.extract_strided_slice %9 {offsets = [0, 0], sizes = [1024, 1], strides = [1, 1]} : vector<1024x8xf32> to vector<1024x1xf32>
    %11 = vector.extract_strided_slice %4 {offsets = [0, 0], sizes = [1, 128], strides = [1, 1]} : vector<8x128xf32> to vector<1x128xf32>
    %12 = vector.broadcast %10 : vector<1024x1xf32> to vector<1024x128xf32>
    %13 = vector.broadcast %11 : vector<1x128xf32> to vector<1024x128xf32>
    %14 = arith.mulf %12, %13 : vector<1024x128xf32>
    %15 = vector.extract_strided_slice %9 {offsets = [0, 1], sizes = [1024, 1], strides = [1, 1]} : vector<1024x8xf32> to vector<1024x1xf32>
    %16 = vector.extract_strided_slice %4 {offsets = [1, 0], sizes = [1, 128], strides = [1, 1]} : vector<8x128xf32> to vector<1x128xf32>
    %17 = vector.broadcast %15 : vector<1024x1xf32> to vector<1024x128xf32>
    %18 = vector.broadcast %16 : vector<1x128xf32> to vector<1024x128xf32>
    %19 = arith.mulf %17, %18 : vector<1024x128xf32>
    %20 = arith.addf %14, %19 : vector<1024x128xf32>
    %21 = vector.extract_strided_slice %9 {offsets = [0, 2], sizes = [1024, 1], strides = [1, 1]} : vector<1024x8xf32> to vector<1024x1xf32>
    %22 = vector.extract_strided_slice %4 {offsets = [2, 0], sizes = [1, 128], strides = [1, 1]} : vector<8x128xf32> to vector<1x128xf32>
    %23 = vector.broadcast %21 : vector<1024x1xf32> to vector<1024x128xf32>
    %24 = vector.broadcast %22 : vector<1x128xf32> to vector<1024x128xf32>
    %25 = arith.mulf %23, %24 : vector<1024x128xf32>
    %26 = arith.addf %20, %25 : vector<1024x128xf32>
    %27 = vector.extract_strided_slice %9 {offsets = [0, 3], sizes = [1024, 1], strides = [1, 1]} : vector<1024x8xf32> to vector<1024x1xf32>
    %28 = vector.extract_strided_slice %4 {offsets = [3, 0], sizes = [1, 128], strides = [1, 1]} : vector<8x128xf32> to vector<1x128xf32>
    %29 = vector.broadcast %27 : vector<1024x1xf32> to vector<1024x128xf32>
    %30 = vector.broadcast %28 : vector<1x128xf32> to vector<1024x128xf32>
    %31 = arith.mulf %29, %30 : vector<1024x128xf32>
    %32 = arith.addf %26, %31 : vector<1024x128xf32>
    %33 = vector.extract_strided_slice %9 {offsets = [0, 4], sizes = [1024, 1], strides = [1, 1]} : vector<1024x8xf32> to vector<1024x1xf32>
    %34 = vector.extract_strided_slice %4 {offsets = [4, 0], sizes = [1, 128], strides = [1, 1]} : vector<8x128xf32> to vector<1x128xf32>
    %35 = vector.broadcast %33 : vector<1024x1xf32> to vector<1024x128xf32>
    %36 = vector.broadcast %34 : vector<1x128xf32> to vector<1024x128xf32>
    %37 = arith.mulf %35, %36 : vector<1024x128xf32>
    %38 = arith.addf %32, %37 : vector<1024x128xf32>
    %39 = vector.extract_strided_slice %9 {offsets = [0, 5], sizes = [1024, 1], strides = [1, 1]} : vector<1024x8xf32> to vector<1024x1xf32>
    %40 = vector.extract_strided_slice %4 {offsets = [5, 0], sizes = [1, 128], strides = [1, 1]} : vector<8x128xf32> to vector<1x128xf32>
    %41 = vector.broadcast %39 : vector<1024x1xf32> to vector<1024x128xf32>
    %42 = vector.broadcast %40 : vector<1x128xf32> to vector<1024x128xf32>
    %43 = arith.mulf %41, %42 : vector<1024x128xf32>
    %44 = arith.addf %38, %43 : vector<1024x128xf32>
    %45 = vector.extract_strided_slice %9 {offsets = [0, 6], sizes = [1024, 1], strides = [1, 1]} : vector<1024x8xf32> to vector<1024x1xf32>
    %46 = vector.extract_strided_slice %4 {offsets = [6, 0], sizes = [1, 128], strides = [1, 1]} : vector<8x128xf32> to vector<1x128xf32>
    %47 = vector.broadcast %45 : vector<1024x1xf32> to vector<1024x128xf32>
    %48 = vector.broadcast %46 : vector<1x128xf32> to vector<1024x128xf32>
    %49 = arith.mulf %47, %48 : vector<1024x128xf32>
    %50 = arith.addf %44, %49 : vector<1024x128xf32>
    %51 = vector.extract_strided_slice %9 {offsets = [0, 7], sizes = [1024, 1], strides = [1, 1]} : vector<1024x8xf32> to vector<1024x1xf32>
    %52 = vector.extract_strided_slice %4 {offsets = [7, 0], sizes = [1, 128], strides = [1, 1]} : vector<8x128xf32> to vector<1x128xf32>
    %53 = vector.broadcast %51 : vector<1024x1xf32> to vector<1024x128xf32>
    %54 = vector.broadcast %52 : vector<1x128xf32> to vector<1024x128xf32>
    %55 = arith.mulf %53, %54 : vector<1024x128xf32>
    %56 = arith.addf %50, %55 : vector<1024x128xf32>
    %57 = vector.broadcast %0 : vector<1x128xf32> to vector<1024x128xf32>
    %58 = arith.addf %56, %57 : vector<1024x128xf32>
    %cst = arith.constant 0.000000e+00 : f32
    %59 = vector.broadcast %cst : f32 to vector<1024x128xf32>
    %60 = arith.maximumf %58, %59 : vector<1024x128xf32>
    %61 = arith.truncf %60 : vector<1024x128xf32> to vector<1024x128xbf16>
    %cst_9 = arith.constant dense<0.000000e+00> : vector<1024x128xf32>
    %62 = tpu.matmul %61, %2, %cst_9 {dimension_numbers = #tpu.dot_dimension_numbers<[1], [0], [0], [1], [0, 0, 1, 1], [], []>} : vector<1024x128xbf16>, vector<128x128xbf16>, vector<1024x128xf32> -> vector<1024x128xf32>
    %63 = vector.broadcast %1 : vector<1x128xf32> to vector<1024x128xf32>
    %64 = arith.addf %62, %63 : vector<1024x128xf32>
    %cst_10 = arith.constant 0.000000e+00 : f32
    %65 = vector.broadcast %cst_10 : f32 to vector<1024x128xf32>
    %66 = arith.maximumf %64, %65 : vector<1024x128xf32>
    %67 = vector.shape_cast %66 : vector<1024x128xf32> to vector<128x8x128xf32>
    %cst_11 = arith.constant dense<0xFF800000> : vector<128x128xf32>
    %68 = vector.multi_reduction <maximumf>, %67, %cst_11 [1] : vector<128x8x128xf32> to vector<128x128xf32>
    %c0_i32_12 = arith.constant 0 : i32
    %69 = tpu.assume_multiple %c0_i32_12, 128 : i32
    %70 = arith.index_cast %69 : i32 to index
    %c0_13 = arith.constant 0 : index
    %71 = vector.load %arg8[%70, %c0_13] : memref<128x128xf32, #tpu.memory_space<vmem>>, vector<128x128xf32>
    tpu.vector_store %arg8[%70, %c0_13], %68 {strides = array<i32>} : memref<128x128xf32, #tpu.memory_space<vmem>>, vector<128x128xf32>,
    %c0_14 = arith.constant 0 : index
    %c0_15 = arith.constant 0 : index
    %72 = vector.load %arg8[%c0_14, %c0_15] : memref<128x128xf32, #tpu.memory_space<vmem>>, vector<128x128xf32>
    %73 = tpu.transpose %72, [1, 0] : vector<128x128xf32> -> vector<128x128xf32>
    %74 = vector.extract_strided_slice %73 {offsets = [0, 0], sizes = [32, 128], strides = [1, 1]} : vector<128x128xf32> to vector<32x128xf32>
    %c0_16 = arith.constant 0 : index
    %c0_17 = arith.constant 0 : index
    %c0_18 = arith.constant 0 : index
    %75 = vector.load %arg7[%c0_16, %c0_17, %c0_18] : memref<1x32x128xf32, #tpu.memory_space<vmem>>, vector<1x32x128xf32>
    %76 = vector.shape_cast %75 : vector<1x32x128xf32> to vector<32x128xf32>
    %77 = vector.shape_cast %74 : vector<32x128xf32> to vector<1x32x128xf32>
    tpu.vector_store %arg7[%c0_16, %c0_17, %c0_18], %77 {strides = array<i32>} : memref<1x32x128xf32, #tpu.memory_space<vmem>>, vector<1x32x128xf32>,
    return
  }
  func.func @transform_0(%arg0: i32, %arg1: i32) -> (i32, i32, i32) {
    %c0_i32 = arith.constant 0 : i32
    %c0_i32_0 = arith.constant 0 : i32
    return %arg0, %arg1, %c0_i32 : i32, i32, i32
  }
  func.func @transform_1(%arg0: i32, %arg1: i32) -> (i32, i32) {
    %c0_i32 = arith.constant 0 : i32
    %c0_i32_0 = arith.constant 0 : i32
    %c0_i32_1 = arith.constant 0 : i32
    return %c0_i32, %c0_i32_0 : i32, i32
  }
  func.func @transform_2(%arg0: i32, %arg1: i32) -> (i32, i32) {
    %c0_i32 = arith.constant 0 : i32
    %c0_i32_0 = arith.constant 0 : i32
    %c0_i32_1 = arith.constant 0 : i32
    return %c0_i32, %c0_i32_0 : i32, i32
  }
  func.func @transform_3(%arg0: i32, %arg1: i32) -> (i32, i32) {
    %c0_i32 = arith.constant 0 : i32
    %c0_i32_0 = arith.constant 0 : i32
    %c0_i32_1 = arith.constant 0 : i32
    return %c0_i32, %c0_i32_0 : i32, i32
  }
  func.func @transform_4(%arg0: i32, %arg1: i32) -> (i32, i32) {
    %c0_i32 = arith.constant 0 : i32
    %c0_i32_0 = arith.constant 0 : i32
    %c0_i32_1 = arith.constant 0 : i32
    return %c0_i32, %c0_i32_0 : i32, i32
  }
  func.func @transform_5(%arg0: i32, %arg1: i32) -> (i32, i32, i32) {
    %c0_i32 = arith.constant 0 : i32
    %c0_i32_0 = arith.constant 0 : i32
    return %arg0, %c0_i32, %arg1 : i32, i32, i32
  }
}

</mosaic_0001>

<llo_original>
// kernel: tpu_custom_call.1
$region0: #{tpu_custom_call.1}
  #allocation0 [shape = 'u32[]', space=smem, size = 0x4, offset = 0x4, fixed_abs, tag = 'smem constant byte address 0x4 - core index']
  #allocation1 [shape = 'u32[144,128]{1,0:T(1,128)}', space=vmem, size = 0x12000, scoped, tag = 'internal scratch']
  #allocation2 [shape = 'f32[128,128]{1,0:T(8,128)}', space=vmem, size = 0x10000, scoped, tag = 'scratch operand']
  %s0 = inlined_call_operand.vmem [shape: bf16[2,1024,8], index: 0, kind: input, shape index: {}]
  %s1 = inlined_call_operand.vmem [shape: bf16[8,128], index: 1, kind: input, shape index: {}]
  %s2 = inlined_call_operand.vmem [shape: f32[1,128], index: 2, kind: input, shape index: {}]
  %s3 = inlined_call_operand.vmem [shape: bf16[128,128], index: 3, kind: input, shape index: {}]
  %s4 = inlined_call_operand.vmem [shape: f32[1,128], index: 4, kind: input, shape index: {}]
  %s5 = inlined_call_operand.hbm [shape: f32[2,32,128], index: 5, kind: output, shape index: {}]
  %s6 = sld [smem:[#allocation0]]
  $region53: #{tpu_custom_call.1} parent=0
    _
  %s8 = ssub.s32 1, %s6
  %s9 = scalar_select 0, %s8, %s6
  $region1: #{tpu_custom_call.1} parent=0
    #allocation3 [shape = 'u8[32768]{0}', space=vmem, size = 0x8000, scoped, tag = 'output window, operand 0']
    #allocation4 [shape = 's32[2]{0}', space=sflag, size = 0x8, scoped, tag = 'scoped memory for tpu_custom_call.1']
    %10 = vsyncpa [#allocation4], 0
    %s11 = scalar_lea.sflag [#allocation4], 1
    %12 = vsyncpa %s11, 0
    loop: start=0, step=1, limit=4
    $region2: #{tpu_custom_call.1} parent=1 // loop_pre_header
      _
    $region3: #{tpu_custom_call.1} parent=1 // loop_header
      %s14 = sphi 0, %s18
      %p15 = scmp.ge.s32.totalorder %s14, 4
      %s21 = sphi 0, %s33
      %s22 = sphi 0, %s29
      %s23 = sphi 0, %s21
      %s24 = sphi 0, %s22
      %s25 = sphi 0, %s23
      %s26 = sphi 0, %s24
      %s38 = sphi 0, %s40
      %s41 = sphi 0, %s38
      %s42 = sphi 0, %s41
      %s58 = sphi 0, %s42
      %s62 = sphi 0, %s62
      %s64 = sphi 0, %s62
      %s65 = sphi 0, %s64
      %s79 = sphi 0, %s65
      %s83 = sphi 0, %s83
      %s85 = sphi 0, %s83
      %s86 = sphi 0, %s85
      %s100 = sphi 0, %s86
      %s104 = sphi 0, %s104
      %s106 = sphi 0, %s104
      %s107 = sphi 0, %s106
      %s121 = sphi 0, %s107
      %s125 = sphi 0, %s125
      %s127 = sphi 0, %s125
      %s128 = sphi 0, %s127
      %s142 = sphi 0, %s128
      %s150 = sphi 0, %s152
      %s153 = sphi 0, %s150
      %s154 = sphi 0, %s153
      %s170 = sphi 0, %s154
    $region4: #{tpu_custom_call.1} parent=1 // loop_header_branch
      %17 = sbr.rel (%p15) target = $region8
    $region5: #{tpu_custom_call.1} parent=1 // loop_body
      %s19 = ssub.s32 %s14, 1
      %s20 = ssub.s32 %s14, 2
      %s27 = sadd.s32 1, %s22
      %p28 = scmp.ge.s32.totalorder %s27, 1
      %s29 = scalar_select %p28, 0, %s27
      %s30 = sadd.s32 1, %s21
      %s31 = scalar_select %p28, %s30, %s21
      %p32 = scmp.ge.s32.totalorder %s31, 2
      %s33 = scalar_select %p32, 0, %s31
      %s34 = ssub.s32 %s21, %s33
      %s35 = ssub.s32 %s22, %s29
      %s36 = sor.u32 %s34, %s35
      %p37 = scmp.eq.s32.totalorder %s36, 0
      %s39 = sadd.s32 %s38, 1
      %s40 = scalar_select %p37, %s38, %s39
      %p43 = pneg %p37
      %p44 = scmp.eq.s32.totalorder %s14, 1
      %p45 = por %p43, %p44
      %p46 = scmp.ne.s32.totalorder %s38, %s41
      %p47 = scmp.eq.s32.totalorder %s14, 0
      %p48 = por %p46, %p47
      %p49 = scmp.ne.s32.totalorder %s38, %s41
      %p50 = scmp.eq.s32.totalorder %s19, 1
      %p51 = por %p49, %p50
      %p52 = scmp.ne.s32.totalorder %s41, %s42
      %p53 = scmp.eq.s32.totalorder %s19, 0
      %p54 = por %p52, %p53
      %p55 = scmp.ne.s32.totalorder %s41, %s42
      %p56 = scmp.eq.s32.totalorder %s20, 1
      %p57 = por %p55, %p56
      %p59 = scmp.ne.s32.totalorder %s42, %s58
      %p60 = scmp.eq.s32.totalorder %s20, 0
      %p61 = por %p59, %p60
      %s63 = sadd.s32 %s62, 1
      %p66 = scmp.eq.s32.totalorder %s14, 1
      %p67 = scmp.ne.s32.totalorder %s62, %s64
      %p68 = scmp.eq.s32.totalorder %s14, 0
      %p69 = por %p67, %p68
      %p70 = scmp.ne.s32.totalorder %s62, %s64
      %p71 = scmp.eq.s32.totalorder %s19, 1
      %p72 = por %p70, %p71
      %p73 = scmp.ne.s32.totalorder %s64, %s65
      %p74 = scmp.eq.s32.totalorder %s19, 0
      %p75 = por %p73, %p74
      %p76 = scmp.ne.s32.totalorder %s64, %s65
      %p77 = scmp.eq.s32.totalorder %s20, 1
      %p78 = por %p76, %p77
      %p80 = scmp.ne.s32.totalorder %s65, %s79
      %p81 = scmp.eq.s32.totalorder %s20, 0
      %p82 = por %p80, %p81
      %s84 = sadd.s32 %s83, 1
      %p87 = scmp.eq.s32.totalorder %s14, 1
      %p88 = scmp.ne.s32.totalorder %s83, %s85
      %p89 = scmp.eq.s32.totalorder %s14, 0
      %p90 = por %p88, %p89
      %p91 = scmp.ne.s32.totalorder %s83, %s85
      %p92 = scmp.eq.s32.totalorder %s19, 1
      %p93 = por %p91, %p92
      %p94 = scmp.ne.s32.totalorder %s85, %s86
      %p95 = scmp.eq.s32.totalorder %s19, 0
      %p96 = por %p94, %p95
      %p97 = scmp.ne.s32.totalorder %s85, %s86
      %p98 = scmp.eq.s32.totalorder %s20, 1
      %p99 = por %p97, %p98
      %p101 = scmp.ne.s32.totalorder %s86, %s100
      %p102 = scmp.eq.s32.totalorder %s20, 0
      %p103 = por %p101, %p102
      %s105 = sadd.s32 %s104, 1
      %p108 = scmp.eq.s32.totalorder %s14, 1
      %p109 = scmp.ne.s32.totalorder %s104, %s106
      %p110 = scmp.eq.s32.totalorder %s14, 0
      %p111 = por %p109, %p110
      %p112 = scmp.ne.s32.totalorder %s104, %s106
      %p113 = scmp.eq.s32.totalorder %s19, 1
      %p114 = por %p112, %p113
      %p115 = scmp.ne.s32.totalorder %s106, %s107
      %p116 = scmp.eq.s32.totalorder %s19, 0
      %p117 = por %p115, %p116
      %p118 = scmp.ne.s32.totalorder %s106, %s107
      %p119 = scmp.eq.s32.totalorder %s20, 1
      %p120 = por %p118, %p119
      %p122 = scmp.ne.s32.totalorder %s107, %s121
      %p123 = scmp.eq.s32.totalorder %s20, 0
      %p124 = por %p122, %p123
      %s126 = sadd.s32 %s125, 1
      %p129 = scmp.eq.s32.totalorder %s14, 1
      %p130 = scmp.ne.s32.totalorder %s125, %s127
      %p131 = scmp.eq.s32.totalorder %s14, 0
      %p132 = por %p130, %p131
      %p133 = scmp.ne.s32.totalorder %s125, %s127
      %p134 = scmp.eq.s32.totalorder %s19, 1
      %p135 = por %p133, %p134
      %p136 = scmp.ne.s32.totalorder %s127, %s128
      %p137 = scmp.eq.s32.totalorder %s19, 0
      %p138 = por %p136, %p137
      %p139 = scmp.ne.s32.totalorder %s127, %s128
      %p140 = scmp.eq.s32.totalorder %s20, 1
      %p141 = por %p139, %p140
      %p143 = scmp.ne.s32.totalorder %s128, %s142
      %p144 = scmp.eq.s32.totalorder %s20, 0
      %p145 = por %p143, %p144
      %s146 = ssub.s32 %s21, %s33
      %s147 = ssub.s32 %s22, %s29
      %s148 = sor.u32 %s146, %s147
      %p149 = scmp.eq.s32.totalorder %s148, 0
      %s151 = sadd.s32 %s150, 1
      %s152 = scalar_select %p149, %s150, %s151
      %p155 = pneg %p149
      %p156 = scmp.eq.s32.totalorder %s14, 1
      %p157 = por %p155, %p156
      %p158 = scmp.ne.s32.totalorder %s150, %s153
      %p159 = scmp.eq.s32.totalorder %s14, 0
      %p160 = por %p158, %p159
      %p161 = scmp.ne.s32.totalorder %s150, %s153
      %p162 = scmp.eq.s32.totalorder %s19, 1
      %p163 = por %p161, %p162
      %p164 = scmp.ne.s32.totalorder %s153, %s154
      %p165 = scmp.eq.s32.totalorder %s19, 0
      %p166 = por %p164, %p165
      %p167 = scmp.ne.s32.totalorder %s153, %s154
      %p168 = scmp.eq.s32.totalorder %s20, 1
      %p169 = por %p167, %p168
      %p171 = scmp.ne.s32.totalorder %s154, %s170
      %p172 = scmp.eq.s32.totalorder %s20, 0
      %p173 = por %p171, %p172
      %p174 = scmp.le.s32.totalorder 1, %s14
      %p175 = scmp.lt.s32.totalorder %s14, 3
      %p176 = pnand %p174, %p175
      %p177 = pneg %p176
      // Predicated region
      $region9: #{tpu_custom_call.1} parent=5 // pred_check
        _
      $region10: #{tpu_custom_call.1} parent=5 // pred_check_branch
        %179 = sbr.rel (%p176) target = $region12
      $region11: #{tpu_custom_call.1} parent=5 // pred_region
        %s180 = ssub.s32 %s14, 1
        // Predicated region
        $region13: #{tpu_custom_call.1} parent=11 // pred_check
          %p181 = pneg %p75
        $region14: #{tpu_custom_call.1} parent=11 // pred_check_branch
          %183 = sbr.rel (%p181) target = $region16
        $region15: #{tpu_custom_call.1} parent=11 // pred_region
          _
        $region16: #{tpu_custom_call.1} parent=11 // pred_fallthru
          _
        // Predicated region
        $region17: #{tpu_custom_call.1} parent=11 // pred_check
          %p184 = pneg %p96
        $region18: #{tpu_custom_call.1} parent=11 // pred_check_branch
          %186 = sbr.rel (%p184) target = $region20
        $region19: #{tpu_custom_call.1} parent=11 // pred_region
          _
        $region20: #{tpu_custom_call.1} parent=11 // pred_fallthru
          _
        // Predicated region
        $region21: #{tpu_custom_call.1} parent=11 // pred_check
          %p187 = pneg %p117
        $region22: #{tpu_custom_call.1} parent=11 // pred_check_branch
          %189 = sbr.rel (%p187) target = $region24
        $region23: #{tpu_custom_call.1} parent=11 // pred_region
          _
        $region24: #{tpu_custom_call.1} parent=11 // pred_fallthru
          _
        // Predicated region
        $region25: #{tpu_custom_call.1} parent=11 // pred_check
          %p190 = pneg %p138
        $region26: #{tpu_custom_call.1} parent=11 // pred_check_branch
          %192 = sbr.rel (%p190) target = $region28
        $region27: #{tpu_custom_call.1} parent=11 // pred_region
          _
        $region28: #{tpu_custom_call.1} parent=11 // pred_fallthru
          _
      $region12: #{tpu_custom_call.1} parent=5 // pred_fallthru
        _
      %p193 = scmp.lt.s32.totalorder %s14, 2
      // Predicated region
      $region29: #{tpu_custom_call.1} parent=5 // pred_check
        %p194 = pneg %p193
      $region30: #{tpu_custom_call.1} parent=5 // pred_check_branch
        %196 = sbr.rel (%p194) target = $region32
      $region31: #{tpu_custom_call.1} parent=5 // pred_region
        // Predicated region
        $region33: #{tpu_custom_call.1} parent=31 // pred_check
          %p197 = pneg %p48
        $region34: #{tpu_custom_call.1} parent=31 // pred_check_branch
          %199 = sbr.rel (%p197) target = $region36
        $region35: #{tpu_custom_call.1} parent=31 // pred_region
          %s200 = smul.u32 128, %s22
          %p201 = scmp.lt.s32.totalorder %s21, 1
          %s202 = scalar_select %p201, %s21, 1
          %p203 = scmp.lt.s32.totalorder %s200, 127
          %s204 = scalar_select %p203, %s200, 127
          %s205 = smul.addr %s202, 128
          %s206 = sadd.s32 %s204, %s205
          %s207 = smul.addr %s206, 4
          %s208 = scalar_lea.vmem %s0, %s207
          %s209 = smul.u32 128, %s22
        $region36: #{tpu_custom_call.1} parent=31 // pred_fallthru
          _
      $region32: #{tpu_custom_call.1} parent=5 // pred_fallthru
        _
      %p210 = scmp.le.s32.totalorder 1, %s14
      %p211 = scmp.lt.s32.totalorder %s14, 3
      %p212 = pnand %p210, %p211
      %p213 = pneg %p212
      // Predicated region
      $region37: #{tpu_custom_call.1} parent=5 // pred_check
        _
      $region38: #{tpu_custom_call.1} parent=5 // pred_check_branch
        %215 = sbr.rel (%p212) target = $region40
      $region39: #{tpu_custom_call.1} parent=5 // pred_region
        %s216 = ssub.s32 %s14, 1
        %s217 = smul.u32 128, %s24
        %p218 = scmp.lt.s32.totalorder %s23, 1
        %s219 = scalar_select %p218, %s23, 1
        %p220 = scmp.lt.s32.totalorder %s217, 127
        %s221 = scalar_select %p220, %s217, 127
        %s222 = smul.addr %s219, 128
        %s223 = sadd.s32 %s221, %s222
        %s224 = smul.addr %s223, 4
        %s225 = scalar_lea.vmem %s0, %s224
        %p226 = pneg %p54
        %p227 = pneg %p51
        %p228 = pneg %p75
        %p229 = pneg %p72
        %p230 = pneg %p96
        %p231 = pneg %p93
        %p232 = pneg %p117
        %p233 = pneg %p114
        %p234 = pneg %p138
        %p235 = pneg %p135
        %p236 = pneg %p166
        %p237 = pneg %p163
        %s238 = sand.u32 %s153, 1
        %s239 = scalar_lea.sflag [#allocation4], %s238
        %s240 = sand.u32 %s153, 1
        %s241 = smul.addr %s240, 32
        %s242 = scalar_lea.vmem [#allocation3], %s241
        %s243 = smul.u32 128, %s24
        %p244 = scmp.lt.s32.totalorder %s23, 1
        %s245 = scalar_select %p244, %s23, 1
        %p246 = scmp.lt.s32.totalorder %s243, 127
        %s247 = scalar_select %p246, %s243, 127
        %s248 = smul.addr %s245, 128
        %s249 = sadd.s32 %s247, %s248
        %s250 = smul.addr %s249, 4
        %s251 = scalar_lea.vmem %s0, %s250
        %s252 = smul.u32 128, %s24
        %v254 = vld [vmem:[%s2] sm:$0x1]
        %v255 = vld [vmem:[%s4] sm:$0x1]
        %v256 = vld [vmem:[%s3] sm:$0xf]
        %v257 = vld [vmem:[%s3 + $0x4] sm:$0xf]
        %v258 = vld [vmem:[%s3 + $0x8] sm:$0xf]
        %v259 = vld [vmem:[%s3 + $0xc] sm:$0xf]
        %v260 = vld [vmem:[%s3 + $0x10] sm:$0xf]
        %v261 = vld [vmem:[%s3 + $0x14] sm:$0xf]
        %v262 = vld [vmem:[%s3 + $0x18] sm:$0xf]
        %v263 = vld [vmem:[%s3 + $0x1c] sm:$0xf]
        %v264 = vld [vmem:[%s3 + $0x20] sm:$0xf]
        %v265 = vld [vmem:[%s3 + $0x24] sm:$0xf]
        %v266 = vld [vmem:[%s3 + $0x28] sm:$0xf]
        %v267 = vld [vmem:[%s3 + $0x2c] sm:$0xf]
        %v268 = vld [vmem:[%s3 + $0x30] sm:$0xf]
        %v269 = vld [vmem:[%s3 + $0x34] sm:$0xf]
        %v270 = vld [vmem:[%s3 + $0x38] sm:$0xf]
        %v271 = vld [vmem:[%s3 + $0x3c] sm:$0xf]
        %v272 = vld [vmem:[%s1] sm:$0xf]
        %v273 = vunpack.c.l.bf16 %v272
        %v274 = vld [vmem:[%s251] sm:$0xf]
        %v275 = vld [vmem:[%s251 + $0x4] sm:$0xf]
        %v276 = vld [vmem:[%s251 + $0x8] sm:$0xf]
        %v277 = vld [vmem:[%s251 + $0xc] sm:$0xf]
        %v278 = vld [vmem:[%s251 + $0x10] sm:$0xf]
        %v279 = vld [vmem:[%s251 + $0x14] sm:$0xf]
        %v280 = vld [vmem:[%s251 + $0x18] sm:$0xf]
        %v281 = vld [vmem:[%s251 + $0x1c] sm:$0xf]
        %v282 = vld [vmem:[%s251 + $0x20] sm:$0xf]
        %v283 = vld [vmem:[%s251 + $0x24] sm:$0xf]
        %v284 = vld [vmem:[%s251 + $0x28] sm:$0xf]
        %v285 = vld [vmem:[%s251 + $0x2c] sm:$0xf]
        %v286 = vld [vmem:[%s251 + $0x30] sm:$0xf]
        %v287 = vld [vmem:[%s251 + $0x34] sm:$0xf]
        %v288 = vld [vmem:[%s251 + $0x38] sm:$0xf]
        %v289 = vld [vmem:[%s251 + $0x3c] sm:$0xf]
        %v290 = vld [vmem:[%s251 + $0x40] sm:$0xf]
        %v291 = vld [vmem:[%s251 + $0x44] sm:$0xf]
        %v292 = vld [vmem:[%s251 + $0x48] sm:$0xf]
        %v293 = vld [vmem:[%s251 + $0x4c] sm:$0xf]
        %v294 = vld [vmem:[%s251 + $0x50] sm:$0xf]
        %v295 = vld [vmem:[%s251 + $0x54] sm:$0xf]
        %v296 = vld [vmem:[%s251 + $0x58] sm:$0xf]
        %v297 = vld [vmem:[%s251 + $0x5c] sm:$0xf]
        %v298 = vld [vmem:[%s251 + $0x60] sm:$0xf]
        %v299 = vld [vmem:[%s251 + $0x64] sm:$0xf]
        %v300 = vld [vmem:[%s251 + $0x68] sm:$0xf]
        %v301 = vld [vmem:[%s251 + $0x6c] sm:$0xf]
        %v302 = vld [vmem:[%s251 + $0x70] sm:$0xf]
        %v303 = vld [vmem:[%s251 + $0x74] sm:$0xf]
        %v304 = vld [vmem:[%s251 + $0x78] sm:$0xf]
        %v305 = vld [vmem:[%s251 + $0x7c] sm:$0xf]
        %v306 = vld [vmem:[%s251 + $0x80] sm:$0xf]
        %v307 = vld [vmem:[%s251 + $0x84] sm:$0xf]
        %v308 = vld [vmem:[%s251 + $0x88] sm:$0xf]
        %v309 = vld [vmem:[%s251 + $0x8c] sm:$0xf]
        %v310 = vld [vmem:[%s251 + $0x90] sm:$0xf]
        %v311 = vld [vmem:[%s251 + $0x94] sm:$0xf]
        %v312 = vld [vmem:[%s251 + $0x98] sm:$0xf]
        %v313 = vld [vmem:[%s251 + $0x9c] sm:$0xf]
        %v314 = vld [vmem:[%s251 + $0xa0] sm:$0xf]
        %v315 = vld [vmem:[%s251 + $0xa4] sm:$0xf]
        %v316 = vld [vmem:[%s251 + $0xa8] sm:$0xf]
        %v317 = vld [vmem:[%s251 + $0xac] sm:$0xf]
        %v318 = vld [vmem:[%s251 + $0xb0] sm:$0xf]
        %v319 = vld [vmem:[%s251 + $0xb4] sm:$0xf]
        %v320 = vld [vmem:[%s251 + $0xb8] sm:$0xf]
        %v321 = vld [vmem:[%s251 + $0xbc] sm:$0xf]
        %v322 = vld [vmem:[%s251 + $0xc0] sm:$0xf]
        %v323 = vld [vmem:[%s251 + $0xc4] sm:$0xf]
        %v324 = vld [vmem:[%s251 + $0xc8] sm:$0xf]
        %v325 = vld [vmem:[%s251 + $0xcc] sm:$0xf]
        %v326 = vld [vmem:[%s251 + $0xd0] sm:$0xf]
        %v327 = vld [vmem:[%s251 + $0xd4] sm:$0xf]
        %v328 = vld [vmem:[%s251 + $0xd8] sm:$0xf]
        %v329 = vld [vmem:[%s251 + $0xdc] sm:$0xf]
        %v330 = vld [vmem:[%s251 + $0xe0] sm:$0xf]
        %v331 = vld [vmem:[%s251 + $0xe4] sm:$0xf]
        %v332 = vld [vmem:[%s251 + $0xe8] sm:$0xf]
        %v333 = vld [vmem:[%s251 + $0xec] sm:$0xf]
        %v334 = vld [vmem:[%s251 + $0xf0] sm:$0xf]
        %v335 = vld [vmem:[%s251 + $0xf4] sm:$0xf]
        %v336 = vld [vmem:[%s251 + $0xf8] sm:$0xf]
        %v337 = vld [vmem:[%s251 + $0xfc] sm:$0xf]
        %v338 = vld [vmem:[%s251 + $0x100] sm:$0xf]
        %v339 = vld [vmem:[%s251 + $0x104] sm:$0xf]
        %v340 = vld [vmem:[%s251 + $0x108] sm:$0xf]
        %v341 = vld [vmem:[%s251 + $0x10c] sm:$0xf]
        %v342 = vld [vmem:[%s251 + $0x110] sm:$0xf]
        %v343 = vld [vmem:[%s251 + $0x114] sm:$0xf]
        %v344 = vld [vmem:[%s251 + $0x118] sm:$0xf]
        %v345 = vld [vmem:[%s251 + $0x11c] sm:$0xf]
        %v346 = vld [vmem:[%s251 + $0x120] sm:$0xf]
        %v347 = vld [vmem:[%s251 + $0x124] sm:$0xf]
        %v348 = vld [vmem:[%s251 + $0x128] sm:$0xf]
        %v349 = vld [vmem:[%s251 + $0x12c] sm:$0xf]
        %v350 = vld [vmem:[%s251 + $0x130] sm:$0xf]
        %v351 = vld [vmem:[%s251 + $0x134] sm:$0xf]
        %v352 = vld [vmem:[%s251 + $0x138] sm:$0xf]
        %v353 = vld [vmem:[%s251 + $0x13c] sm:$0xf]
        %v354 = vld [vmem:[%s251 + $0x140] sm:$0xf]
        %v355 = vld [vmem:[%s251 + $0x144] sm:$0xf]
        %v356 = vld [vmem:[%s251 + $0x148] sm:$0xf]
        %v357 = vld [vmem:[%s251 + $0x14c] sm:$0xf]
        %v358 = vld [vmem:[%s251 + $0x150] sm:$0xf]
        %v359 = vld [vmem:[%s251 + $0x154] sm:$0xf]
        %v360 = vld [vmem:[%s251 + $0x158] sm:$0xf]
        %v361 = vld [vmem:[%s251 + $0x15c] sm:$0xf]
        %v362 = vld [vmem:[%s251 + $0x160] sm:$0xf]
        %v363 = vld [vmem:[%s251 + $0x164] sm:$0xf]
        %v364 = vld [vmem:[%s251 + $0x168] sm:$0xf]
        %v365 = vld [vmem:[%s251 + $0x16c] sm:$0xf]
        %v366 = vld [vmem:[%s251 + $0x170] sm:$0xf]
        %v367 = vld [vmem:[%s251 + $0x174] sm:$0xf]
        %v368 = vld [vmem:[%s251 + $0x178] sm:$0xf]
        %v369 = vld [vmem:[%s251 + $0x17c] sm:$0xf]
        %v370 = vld [vmem:[%s251 + $0x180] sm:$0xf]
        %v371 = vld [vmem:[%s251 + $0x184] sm:$0xf]
        %v372 = vld [vmem:[%s251 + $0x188] sm:$0xf]
        %v373 = vld [vmem:[%s251 + $0x18c] sm:$0xf]
        %v374 = vld [vmem:[%s251 + $0x190] sm:$0xf]
        %v375 = vld [vmem:[%s251 + $0x194] sm:$0xf]
        %v376 = vld [vmem:[%s251 + $0x198] sm:$0xf]
        %v377 = vld [vmem:[%s251 + $0x19c] sm:$0xf]
        %v378 = vld [vmem:[%s251 + $0x1a0] sm:$0xf]
        %v379 = vld [vmem:[%s251 + $0x1a4] sm:$0xf]
        %v380 = vld [vmem:[%s251 + $0x1a8] sm:$0xf]
        %v381 = vld [vmem:[%s251 + $0x1ac] sm:$0xf]
        %v382 = vld [vmem:[%s251 + $0x1b0] sm:$0xf]
        %v383 = vld [vmem:[%s251 + $0x1b4] sm:$0xf]
        %v384 = vld [vmem:[%s251 + $0x1b8] sm:$0xf]
        %v385 = vld [vmem:[%s251 + $0x1bc] sm:$0xf]
        %v386 = vld [vmem:[%s251 + $0x1c0] sm:$0xf]
        %v387 = vld [vmem:[%s251 + $0x1c4] sm:$0xf]
        %v388 = vld [vmem:[%s251 + $0x1c8] sm:$0xf]
        %v389 = vld [vmem:[%s251 + $0x1cc] sm:$0xf]
        %v390 = vld [vmem:[%s251 + $0x1d0] sm:$0xf]
        %v391 = vld [vmem:[%s251 + $0x1d4] sm:$0xf]
        %v392 = vld [vmem:[%s251 + $0x1d8] sm:$0xf]
        %v393 = vld [vmem:[%s251 + $0x1dc] sm:$0xf]
        %v394 = vld [vmem:[%s251 + $0x1e0] sm:$0xf]
        %v395 = vld [vmem:[%s251 + $0x1e4] sm:$0xf]
        %v396 = vld [vmem:[%s251 + $0x1e8] sm:$0xf]
        %v397 = vld [vmem:[%s251 + $0x1ec] sm:$0xf]
        %v398 = vld [vmem:[%s251 + $0x1f0] sm:$0xf]
        %v399 = vld [vmem:[%s251 + $0x1f4] sm:$0xf]
        %v400 = vld [vmem:[%s251 + $0x1f8] sm:$0xf]
        %v401 = vld [vmem:[%s251 + $0x1fc] sm:$0xf]
        %v402 = vunpack.c.l.bf16 %v274
        %v403 = vunpack.c.l.bf16 %v275
        %v404 = vunpack.c.l.bf16 %v276
        %v405 = vunpack.c.l.bf16 %v277
        %v406 = vunpack.c.l.bf16 %v278
        %v407 = vunpack.c.l.bf16 %v279
        %v408 = vunpack.c.l.bf16 %v280
        %v409 = vunpack.c.l.bf16 %v281
        %v410 = vunpack.c.l.bf16 %v282
        %v411 = vunpack.c.l.bf16 %v283
        %v412 = vunpack.c.l.bf16 %v284
        %v413 = vunpack.c.l.bf16 %v285
        %v414 = vunpack.c.l.bf16 %v286
        %v415 = vunpack.c.l.bf16 %v287
        %v416 = vunpack.c.l.bf16 %v288
        %v417 = vunpack.c.l.bf16 %v289
        %v418 = vunpack.c.l.bf16 %v290
        %v419 = vunpack.c.l.bf16 %v291
        %v420 = vunpack.c.l.bf16 %v292
        %v421 = vunpack.c.l.bf16 %v293
        %v422 = vunpack.c.l.bf16 %v294
        %v423 = vunpack.c.l.bf16 %v295
        %v424 = vunpack.c.l.bf16 %v296
        %v425 = vunpack.c.l.bf16 %v297
        %v426 = vunpack.c.l.bf16 %v298
        %v427 = vunpack.c.l.bf16 %v299
        %v428 = vunpack.c.l.bf16 %v300
        %v429 = vunpack.c.l.bf16 %v301
        %v430 = vunpack.c.l.bf16 %v302
        %v431 = vunpack.c.l.bf16 %v303
        %v432 = vunpack.c.l.bf16 %v304
        %v433 = vunpack.c.l.bf16 %v305
        %v434 = vunpack.c.l.bf16 %v306
        %v435 = vunpack.c.l.bf16 %v307
        %v436 = vunpack.c.l.bf16 %v308
        %v437 = vunpack.c.l.bf16 %v309
        %v438 = vunpack.c.l.bf16 %v310
        %v439 = vunpack.c.l.bf16 %v311
        %v440 = vunpack.c.l.bf16 %v312
        %v441 = vunpack.c.l.bf16 %v313
        %v442 = vunpack.c.l.bf16 %v314
        %v443 = vunpack.c.l.bf16 %v315
        %v444 = vunpack.c.l.bf16 %v316
        %v445 = vunpack.c.l.bf16 %v317
        %v446 = vunpack.c.l.bf16 %v318
        %v447 = vunpack.c.l.bf16 %v319
        %v448 = vunpack.c.l.bf16 %v320
        %v449 = vunpack.c.l.bf16 %v321
        %v450 = vunpack.c.l.bf16 %v322
        %v451 = vunpack.c.l.bf16 %v323
        %v452 = vunpack.c.l.bf16 %v324
        %v453 = vunpack.c.l.bf16 %v325
        %v454 = vunpack.c.l.bf16 %v326
        %v455 = vunpack.c.l.bf16 %v327
        %v456 = vunpack.c.l.bf16 %v328
        %v457 = vunpack.c.l.bf16 %v329
        %v458 = vunpack.c.l.bf16 %v330
        %v459 = vunpack.c.l.bf16 %v331
        %v460 = vunpack.c.l.bf16 %v332
        %v461 = vunpack.c.l.bf16 %v333
        %v462 = vunpack.c.l.bf16 %v334
        %v463 = vunpack.c.l.bf16 %v335
        %v464 = vunpack.c.l.bf16 %v336
        %v465 = vunpack.c.l.bf16 %v337
        %v466 = vunpack.c.l.bf16 %v338
        %v467 = vunpack.c.l.bf16 %v339
        %v468 = vunpack.c.l.bf16 %v340
        %v469 = vunpack.c.l.bf16 %v341
        %v470 = vunpack.c.l.bf16 %v342
        %v471 = vunpack.c.l.bf16 %v343
        %v472 = vunpack.c.l.bf16 %v344
        %v473 = vunpack.c.l.bf16 %v345
        %v474 = vunpack.c.l.bf16 %v346
        %v475 = vunpack.c.l.bf16 %v347
        %v476 = vunpack.c.l.bf16 %v348
        %v477 = vunpack.c.l.bf16 %v349
        %v478 = vunpack.c.l.bf16 %v350
        %v479 = vunpack.c.l.bf16 %v351
        %v480 = vunpack.c.l.bf16 %v352
        %v481 = vunpack.c.l.bf16 %v353
        %v482 = vunpack.c.l.bf16 %v354
        %v483 = vunpack.c.l.bf16 %v355
        %v484 = vunpack.c.l.bf16 %v356
        %v485 = vunpack.c.l.bf16 %v357
        %v486 = vunpack.c.l.bf16 %v358
        %v487 = vunpack.c.l.bf16 %v359
        %v488 = vunpack.c.l.bf16 %v360
        %v489 = vunpack.c.l.bf16 %v361
        %v490 = vunpack.c.l.bf16 %v362
        %v491 = vunpack.c.l.bf16 %v363
        %v492 = vunpack.c.l.bf16 %v364
        %v493 = vunpack.c.l.bf16 %v365
        %v494 = vunpack.c.l.bf16 %v366
        %v495 = vunpack.c.l.bf16 %v367
        %v496 = vunpack.c.l.bf16 %v368
        %v497 = vunpack.c.l.bf16 %v369
        %v498 = vunpack.c.l.bf16 %v370
        %v499 = vunpack.c.l.bf16 %v371
        %v500 = vunpack.c.l.bf16 %v372
        %v501 = vunpack.c.l.bf16 %v373
        %v502 = vunpack.c.l.bf16 %v374
        %v503 = vunpack.c.l.bf16 %v375
        %v504 = vunpack.c.l.bf16 %v376
        %v505 = vunpack.c.l.bf16 %v377
        %v506 = vunpack.c.l.bf16 %v378
        %v507 = vunpack.c.l.bf16 %v379
        %v508 = vunpack.c.l.bf16 %v380
        %v509 = vunpack.c.l.bf16 %v381
        %v510 = vunpack.c.l.bf16 %v382
        %v511 = vunpack.c.l.bf16 %v383
        %v512 = vunpack.c.l.bf16 %v384
        %v513 = vunpack.c.l.bf16 %v385
        %v514 = vunpack.c.l.bf16 %v386
        %v515 = vunpack.c.l.bf16 %v387
        %v516 = vunpack.c.l.bf16 %v388
        %v517 = vunpack.c.l.bf16 %v389
        %v518 = vunpack.c.l.bf16 %v390
        %v519 = vunpack.c.l.bf16 %v391
        %v520 = vunpack.c.l.bf16 %v392
        %v521 = vunpack.c.l.bf16 %v393
        %v522 = vunpack.c.l.bf16 %v394
        %v523 = vunpack.c.l.bf16 %v395
        %v524 = vunpack.c.l.bf16 %v396
        %v525 = vunpack.c.l.bf16 %v397
        %v526 = vunpack.c.l.bf16 %v398
        %v527 = vunpack.c.l.bf16 %v399
        %v528 = vunpack.c.l.bf16 %v400
        %v529 = vunpack.c.l.bf16 %v401
        %531 = vset.pattern.permute.xlu0 0
        %532 = vperm.xlu0 %531, %v402
        %v533 = vpop.permute.xlu0 %532
        %536 = vset.pattern.permute.xlu0 0
        %537 = vperm.xlu0 %536, %v403
        %v538 = vpop.permute.xlu0 %537
        %541 = vset.pattern.permute.xlu0 0
        %542 = vperm.xlu0 %541, %v404
        %v543 = vpop.permute.xlu0 %542
        %546 = vset.pattern.permute.xlu0 0
        %547 = vperm.xlu0 %546, %v405
        %v548 = vpop.permute.xlu0 %547
        %551 = vset.pattern.permute.xlu0 0
        %552 = vperm.xlu0 %551, %v406
        %v553 = vpop.permute.xlu0 %552
        %556 = vset.pattern.permute.xlu0 0
        %557 = vperm.xlu0 %556, %v407
        %v558 = vpop.permute.xlu0 %557
        %561 = vset.pattern.permute.xlu0 0
        %562 = vperm.xlu0 %561, %v408
        %v563 = vpop.permute.xlu0 %562
        %566 = vset.pattern.permute.xlu0 0
        %567 = vperm.xlu0 %566, %v409
        %v568 = vpop.permute.xlu0 %567
        %571 = vset.pattern.permute.xlu0 0
        %572 = vperm.xlu0 %571, %v410
        %v573 = vpop.permute.xlu0 %572
        %576 = vset.pattern.permute.xlu0 0
        %577 = vperm.xlu0 %576, %v411
        %v578 = vpop.permute.xlu0 %577
        %581 = vset.pattern.permute.xlu0 0
        %582 = vperm.xlu0 %581, %v412
        %v583 = vpop.permute.xlu0 %582
        %586 = vset.pattern.permute.xlu0 0
        %587 = vperm.xlu0 %586, %v413
        %v588 = vpop.permute.xlu0 %587
        %591 = vset.pattern.permute.xlu0 0
        %592 = vperm.xlu0 %591, %v414
        %v593 = vpop.permute.xlu0 %592
        %596 = vset.pattern.permute.xlu0 0
        %597 = vperm.xlu0 %596, %v415
        %v598 = vpop.permute.xlu0 %597
        %601 = vset.pattern.permute.xlu0 0
        %602 = vperm.xlu0 %601, %v416
        %v603 = vpop.permute.xlu0 %602
        %606 = vset.pattern.permute.xlu0 0
        %607 = vperm.xlu0 %606, %v417
        %v608 = vpop.permute.xlu0 %607
        %611 = vset.pattern.permute.xlu0 0
        %612 = vperm.xlu0 %611, %v418
        %v613 = vpop.permute.xlu0 %612
        %616 = vset.pattern.permute.xlu0 0
        %617 = vperm.xlu0 %616, %v419
        %v618 = vpop.permute.xlu0 %617
        %621 = vset.pattern.permute.xlu0 0
        %622 = vperm.xlu0 %621, %v420
        %v623 = vpop.permute.xlu0 %622
        %626 = vset.pattern.permute.xlu0 0
        %627 = vperm.xlu0 %626, %v421
        %v628 = vpop.permute.xlu0 %627
        %631 = vset.pattern.permute.xlu0 0
        %632 = vperm.xlu0 %631, %v422
        %v633 = vpop.permute.xlu0 %632
        %636 = vset.pattern.permute.xlu0 0
        %637 = vperm.xlu0 %636, %v423
        %v638 = vpop.permute.xlu0 %637
        %641 = vset.pattern.permute.xlu0 0
        %642 = vperm.xlu0 %641, %v424
        %v643 = vpop.permute.xlu0 %642
        %646 = vset.pattern.permute.xlu0 0
        %647 = vperm.xlu0 %646, %v425
        %v648 = vpop.permute.xlu0 %647
        %651 = vset.pattern.permute.xlu0 0
        %652 = vperm.xlu0 %651, %v426
        %v653 = vpop.permute.xlu0 %652
        %656 = vset.pattern.permute.xlu0 0
        %657 = vperm.xlu0 %656, %v427
        %v658 = vpop.permute.xlu0 %657
        %661 = vset.pattern.permute.xlu0 0
        %662 = vperm.xlu0 %661, %v428
        %v663 = vpop.permute.xlu0 %662
        %666 = vset.pattern.permute.xlu0 0
        %667 = vperm.xlu0 %666, %v429
        %v668 = vpop.permute.xlu0 %667
        %671 = vset.pattern.permute.xlu0 0
        %672 = vperm.xlu0 %671, %v430
        %v673 = vpop.permute.xlu0 %672
        %676 = vset.pattern.permute.xlu0 0
        %677 = vperm.xlu0 %676, %v431
        %v678 = vpop.permute.xlu0 %677
        %681 = vset.pattern.permute.xlu0 0
        %682 = vperm.xlu0 %681, %v432
        %v683 = vpop.permute.xlu0 %682
        %686 = vset.pattern.permute.xlu0 0
        %687 = vperm.xlu0 %686, %v433
        %v688 = vpop.permute.xlu0 %687
        %691 = vset.pattern.permute.xlu0 0
        %692 = vperm.xlu0 %691, %v434
        %v693 = vpop.permute.xlu0 %692
        %696 = vset.pattern.permute.xlu0 0
        %697 = vperm.xlu0 %696, %v435
        %v698 = vpop.permute.xlu0 %697
        %701 = vset.pattern.permute.xlu0 0
        %702 = vperm.xlu0 %701, %v436
        %v703 = vpop.permute.xlu0 %702
        %706 = vset.pattern.permute.xlu0 0
        %707 = vperm.xlu0 %706, %v437
        %v708 = vpop.permute.xlu0 %707
        %711 = vset.pattern.permute.xlu0 0
        %712 = vperm.xlu0 %711, %v438
        %v713 = vpop.permute.xlu0 %712
        %716 = vset.pattern.permute.xlu0 0
        %717 = vperm.xlu0 %716, %v439
        %v718 = vpop.permute.xlu0 %717
        %721 = vset.pattern.permute.xlu0 0
        %722 = vperm.xlu0 %721, %v440
        %v723 = vpop.permute.xlu0 %722
        %726 = vset.pattern.permute.xlu0 0
        %727 = vperm.xlu0 %726, %v441
        %v728 = vpop.permute.xlu0 %727
        %731 = vset.pattern.permute.xlu0 0
        %732 = vperm.xlu0 %731, %v442
        %v733 = vpop.permute.xlu0 %732
        %736 = vset.pattern.permute.xlu0 0
        %737 = vperm.xlu0 %736, %v443
        %v738 = vpop.permute.xlu0 %737
        %741 = vset.pattern.permute.xlu0 0
        %742 = vperm.xlu0 %741, %v444
        %v743 = vpop.permute.xlu0 %742
        %746 = vset.pattern.permute.xlu0 0
        %747 = vperm.xlu0 %746, %v445
        %v748 = vpop.permute.xlu0 %747
        %751 = vset.pattern.permute.xlu0 0
        %752 = vperm.xlu0 %751, %v446
        %v753 = vpop.permute.xlu0 %752
        %756 = vset.pattern.permute.xlu0 0
        %757 = vperm.xlu0 %756, %v447
        %v758 = vpop.permute.xlu0 %757
        %761 = vset.pattern.permute.xlu0 0
        %762 = vperm.xlu0 %761, %v448
        %v763 = vpop.permute.xlu0 %762
        %766 = vset.pattern.permute.xlu0 0
        %767 = vperm.xlu0 %766, %v449
        %v768 = vpop.permute.xlu0 %767
        %771 = vset.pattern.permute.xlu0 0
        %772 = vperm.xlu0 %771, %v450
        %v773 = vpop.permute.xlu0 %772
        %776 = vset.pattern.permute.xlu0 0
        %777 = vperm.xlu0 %776, %v451
        %v778 = vpop.permute.xlu0 %777
        %781 = vset.pattern.permute.xlu0 0
        %782 = vperm.xlu0 %781, %v452
        %v783 = vpop.permute.xlu0 %782
        %786 = vset.pattern.permute.xlu0 0
        %787 = vperm.xlu0 %786, %v453
        %v788 = vpop.permute.xlu0 %787
        %791 = vset.pattern.permute.xlu0 0
        %792 = vperm.xlu0 %791, %v454
        %v793 = vpop.permute.xlu0 %792
        %796 = vset.pattern.permute.xlu0 0
        %797 = vperm.xlu0 %796, %v455
        %v798 = vpop.permute.xlu0 %797
        %801 = vset.pattern.permute.xlu0 0
        %802 = vperm.xlu0 %801, %v456
        %v803 = vpop.permute.xlu0 %802
        %806 = vset.pattern.permute.xlu0 0
        %807 = vperm.xlu0 %806, %v457
        %v808 = vpop.permute.xlu0 %807
        %811 = vset.pattern.permute.xlu0 0
        %812 = vperm.xlu0 %811, %v458
        %v813 = vpop.permute.xlu0 %812
        %816 = vset.pattern.permute.xlu0 0
        %817 = vperm.xlu0 %816, %v459
        %v818 = vpop.permute.xlu0 %817
        %821 = vset.pattern.permute.xlu0 0
        %822 = vperm.xlu0 %821, %v460
        %v823 = vpop.permute.xlu0 %822
        %826 = vset.pattern.permute.xlu0 0
        %827 = vperm.xlu0 %826, %v461
        %v828 = vpop.permute.xlu0 %827
        %831 = vset.pattern.permute.xlu0 0
        %832 = vperm.xlu0 %831, %v462
        %v833 = vpop.permute.xlu0 %832
        %836 = vset.pattern.permute.xlu0 0
        %837 = vperm.xlu0 %836, %v463
        %v838 = vpop.permute.xlu0 %837
        %841 = vset.pattern.permute.xlu0 0
        %842 = vperm.xlu0 %841, %v464
        %v843 = vpop.permute.xlu0 %842
        %846 = vset.pattern.permute.xlu0 0
        %847 = vperm.xlu0 %846, %v465
        %v848 = vpop.permute.xlu0 %847
        %851 = vset.pattern.permute.xlu0 0
        %852 = vperm.xlu0 %851, %v466
        %v853 = vpop.permute.xlu0 %852
        %856 = vset.pattern.permute.xlu0 0
        %857 = vperm.xlu0 %856, %v467
        %v858 = vpop.permute.xlu0 %857
        %861 = vset.pattern.permute.xlu0 0
        %862 = vperm.xlu0 %861, %v468
        %v863 = vpop.permute.xlu0 %862
        %866 = vset.pattern.permute.xlu0 0
        %867 = vperm.xlu0 %866, %v469
        %v868 = vpop.permute.xlu0 %867
        %871 = vset.pattern.permute.xlu0 0
        %872 = vperm.xlu0 %871, %v470
        %v873 = vpop.permute.xlu0 %872
        %876 = vset.pattern.permute.xlu0 0
        %877 = vperm.xlu0 %876, %v471
        %v878 = vpop.permute.xlu0 %877
        %881 = vset.pattern.permute.xlu0 0
        %882 = vperm.xlu0 %881, %v472
        %v883 = vpop.permute.xlu0 %882
        %886 = vset.pattern.permute.xlu0 0
        %887 = vperm.xlu0 %886, %v473
        %v888 = vpop.permute.xlu0 %887
        %891 = vset.pattern.permute.xlu0 0
        %892 = vperm.xlu0 %891, %v474
        %v893 = vpop.permute.xlu0 %892
        %896 = vset.pattern.permute.xlu0 0
        %897 = vperm.xlu0 %896, %v475
        %v898 = vpop.permute.xlu0 %897
        %901 = vset.pattern.permute.xlu0 0
        %902 = vperm.xlu0 %901, %v476
        %v903 = vpop.permute.xlu0 %902
        %906 = vset.pattern.permute.xlu0 0
        %907 = vperm.xlu0 %906, %v477
        %v908 = vpop.permute.xlu0 %907
        %911 = vset.pattern.permute.xlu0 0
        %912 = vperm.xlu0 %911, %v478
        %v913 = vpop.permute.xlu0 %912
        %916 = vset.pattern.permute.xlu0 0
        %917 = vperm.xlu0 %916, %v479
        %v918 = vpop.permute.xlu0 %917
        %921 = vset.pattern.permute.xlu0 0
        %922 = vperm.xlu0 %921, %v480
        %v923 = vpop.permute.xlu0 %922
        %926 = vset.pattern.permute.xlu0 0
        %927 = vperm.xlu0 %926, %v481
        %v928 = vpop.permute.xlu0 %927
        %931 = vset.pattern.permute.xlu0 0
        %932 = vperm.xlu0 %931, %v482
        %v933 = vpop.permute.xlu0 %932
        %936 = vset.pattern.permute.xlu0 0
        %937 = vperm.xlu0 %936, %v483
        %v938 = vpop.permute.xlu0 %937
        %941 = vset.pattern.permute.xlu0 0
        %942 = vperm.xlu0 %941, %v484
        %v943 = vpop.permute.xlu0 %942
        %946 = vset.pattern.permute.xlu0 0
        %947 = vperm.xlu0 %946, %v485
        %v948 = vpop.permute.xlu0 %947
        %951 = vset.pattern.permute.xlu0 0
        %952 = vperm.xlu0 %951, %v486
        %v953 = vpop.permute.xlu0 %952
        %956 = vset.pattern.permute.xlu0 0
        %957 = vperm.xlu0 %956, %v487
        %v958 = vpop.permute.xlu0 %957
        %961 = vset.pattern.permute.xlu0 0
        %962 = vperm.xlu0 %961, %v488
        %v963 = vpop.permute.xlu0 %962
        %966 = vset.pattern.permute.xlu0 0
        %967 = vperm.xlu0 %966, %v489
        %v968 = vpop.permute.xlu0 %967
        %971 = vset.pattern.permute.xlu0 0
        %972 = vperm.xlu0 %971, %v490
        %v973 = vpop.permute.xlu0 %972
        %976 = vset.pattern.permute.xlu0 0
        %977 = vperm.xlu0 %976, %v491
        %v978 = vpop.permute.xlu0 %977
        %981 = vset.pattern.permute.xlu0 0
        %982 = vperm.xlu0 %981, %v492
        %v983 = vpop.permute.xlu0 %982
        %986 = vset.pattern.permute.xlu0 0
        %987 = vperm.xlu0 %986, %v493
        %v988 = vpop.permute.xlu0 %987
        %991 = vset.pattern.permute.xlu0 0
        %992 = vperm.xlu0 %991, %v494
        %v993 = vpop.permute.xlu0 %992
        %996 = vset.pattern.permute.xlu0 0
        %997 = vperm.xlu0 %996, %v495
        %v998 = vpop.permute.xlu0 %997
        %1001 = vset.pattern.permute.xlu0 0
        %1002 = vperm.xlu0 %1001, %v496
        %v1003 = vpop.permute.xlu0 %1002
        %1006 = vset.pattern.permute.xlu0 0
        %1007 = vperm.xlu0 %1006, %v497
        %v1008 = vpop.permute.xlu0 %1007
        %1011 = vset.pattern.permute.xlu0 0
        %1012 = vperm.xlu0 %1011, %v498
        %v1013 = vpop.permute.xlu0 %1012
        %1016 = vset.pattern.permute.xlu0 0
        %1017 = vperm.xlu0 %1016, %v499
        %v1018 = vpop.permute.xlu0 %1017
        %1021 = vset.pattern.permute.xlu0 0
        %1022 = vperm.xlu0 %1021, %v500
        %v1023 = vpop.permute.xlu0 %1022
        %1026 = vset.pattern.permute.xlu0 0
        %1027 = vperm.xlu0 %1026, %v501
        %v1028 = vpop.permute.xlu0 %1027
        %1031 = vset.pattern.permute.xlu0 0
        %1032 = vperm.xlu0 %1031, %v502
        %v1033 = vpop.permute.xlu0 %1032
        %1036 = vset.pattern.permute.xlu0 0
        %1037 = vperm.xlu0 %1036, %v503
        %v1038 = vpop.permute.xlu0 %1037
        %1041 = vset.pattern.permute.xlu0 0
        %1042 = vperm.xlu0 %1041, %v504
        %v1043 = vpop.permute.xlu0 %1042
        %1046 = vset.pattern.permute.xlu0 0
        %1047 = vperm.xlu0 %1046, %v505
        %v1048 = vpop.permute.xlu0 %1047
        %1051 = vset.pattern.permute.xlu0 0
        %1052 = vperm.xlu0 %1051, %v506
        %v1053 = vpop.permute.xlu0 %1052
        %1056 = vset.pattern.permute.xlu0 0
        %1057 = vperm.xlu0 %1056, %v507
        %v1058 = vpop.permute.xlu0 %1057
        %1061 = vset.pattern.permute.xlu0 0
        %1062 = vperm.xlu0 %1061, %v508
        %v1063 = vpop.permute.xlu0 %1062
        %1066 = vset.pattern.permute.xlu0 0
        %1067 = vperm.xlu0 %1066, %v509
        %v1068 = vpop.permute.xlu0 %1067
        %1071 = vset.pattern.permute.xlu0 0
        %1072 = vperm.xlu0 %1071, %v510
        %v1073 = vpop.permute.xlu0 %1072
        %1076 = vset.pattern.permute.xlu0 0
        %1077 = vperm.xlu0 %1076, %v511
        %v1078 = vpop.permute.xlu0 %1077
        %1081 = vset.pattern.permute.xlu0 0
        %1082 = vperm.xlu0 %1081, %v512
        %v1083 = vpop.permute.xlu0 %1082
        %1086 = vset.pattern.permute.xlu0 0
        %1087 = vperm.xlu0 %1086, %v513
        %v1088 = vpop.permute.xlu0 %1087
        %1091 = vset.pattern.permute.xlu0 0
        %1092 = vperm.xlu0 %1091, %v514
        %v1093 = vpop.permute.xlu0 %1092
        %1096 = vset.pattern.permute.xlu0 0
        %1097 = vperm.xlu0 %1096, %v515
        %v1098 = vpop.permute.xlu0 %1097
        %1101 = vset.pattern.permute.xlu0 0
        %1102 = vperm.xlu0 %1101, %v516
        %v1103 = vpop.permute.xlu0 %1102
        %1106 = vset.pattern.permute.xlu0 0
        %1107 = vperm.xlu0 %1106, %v517
        %v1108 = vpop.permute.xlu0 %1107
        %1111 = vset.pattern.permute.xlu0 0
        %1112 = vperm.xlu0 %1111, %v518
        %v1113 = vpop.permute.xlu0 %1112
        %1116 = vset.pattern.permute.xlu0 0
        %1117 = vperm.xlu0 %1116, %v519
        %v1118 = vpop.permute.xlu0 %1117
        %1121 = vset.pattern.permute.xlu0 0
        %1122 = vperm.xlu0 %1121, %v520
        %v1123 = vpop.permute.xlu0 %1122
        %1126 = vset.pattern.permute.xlu0 0
        %1127 = vperm.xlu0 %1126, %v521
        %v1128 = vpop.permute.xlu0 %1127
        %1131 = vset.pattern.permute.xlu0 0
        %1132 = vperm.xlu0 %1131, %v522
        %v1133 = vpop.permute.xlu0 %1132
        %1136 = vset.pattern.permute.xlu0 0
        %1137 = vperm.xlu0 %1136, %v523
        %v1138 = vpop.permute.xlu0 %1137
        %1141 = vset.pattern.permute.xlu0 0
        %1142 = vperm.xlu0 %1141, %v524
        %v1143 = vpop.permute.xlu0 %1142
        %1146 = vset.pattern.permute.xlu0 0
        %1147 = vperm.xlu0 %1146, %v525
        %v1148 = vpop.permute.xlu0 %1147
        %1151 = vset.pattern.permute.xlu0 0
        %1152 = vperm.xlu0 %1151, %v526
        %v1153 = vpop.permute.xlu0 %1152
        %1156 = vset.pattern.permute.xlu0 0
        %1157 = vperm.xlu0 %1156, %v527
        %v1158 = vpop.permute.xlu0 %1157
        %1161 = vset.pattern.permute.xlu0 0
        %1162 = vperm.xlu0 %1161, %v528
        %v1163 = vpop.permute.xlu0 %1162
        %1166 = vset.pattern.permute.xlu0 0
        %1167 = vperm.xlu0 %1166, %v529
        %v1168 = vpop.permute.xlu0 %1167
        %v1170 = vlaneseq
        %v1171 = vshrl.u32 %v1170, 7
        %v1172 = vsub.s32 0, %v1171
        %v1173 = vrot.slane %v273, %v1172
        %v1174 = vmul.f32 %v533, %v1173
        %v1175 = vmul.f32 %v538, %v1173
        %v1176 = vmul.f32 %v543, %v1173
        %v1177 = vmul.f32 %v548, %v1173
        %v1178 = vmul.f32 %v553, %v1173
        %v1179 = vmul.f32 %v558, %v1173
        %v1180 = vmul.f32 %v563, %v1173
        %v1181 = vmul.f32 %v568, %v1173
        %v1182 = vmul.f32 %v573, %v1173
        %v1183 = vmul.f32 %v578, %v1173
        %v1184 = vmul.f32 %v583, %v1173
        %v1185 = vmul.f32 %v588, %v1173
        %v1186 = vmul.f32 %v593, %v1173
        %v1187 = vmul.f32 %v598, %v1173
        %v1188 = vmul.f32 %v603, %v1173
        %v1189 = vmul.f32 %v608, %v1173
        %v1190 = vmul.f32 %v613, %v1173
        %v1191 = vmul.f32 %v618, %v1173
        %v1192 = vmul.f32 %v623, %v1173
        %v1193 = vmul.f32 %v628, %v1173
        %v1194 = vmul.f32 %v633, %v1173
        %v1195 = vmul.f32 %v638, %v1173
        %v1196 = vmul.f32 %v643, %v1173
        %v1197 = vmul.f32 %v648, %v1173
        %v1198 = vmul.f32 %v653, %v1173
        %v1199 = vmul.f32 %v658, %v1173
        %v1200 = vmul.f32 %v663, %v1173
        %v1201 = vmul.f32 %v668, %v1173
        %v1202 = vmul.f32 %v673, %v1173
        %v1203 = vmul.f32 %v678, %v1173
        %v1204 = vmul.f32 %v683, %v1173
        %v1205 = vmul.f32 %v688, %v1173
        %v1206 = vmul.f32 %v693, %v1173
        %v1207 = vmul.f32 %v698, %v1173
        %v1208 = vmul.f32 %v703, %v1173
        %v1209 = vmul.f32 %v708, %v1173
        %v1210 = vmul.f32 %v713, %v1173
        %v1211 = vmul.f32 %v718, %v1173
        %v1212 = vmul.f32 %v723, %v1173
        %v1213 = vmul.f32 %v728, %v1173
        %v1214 = vmul.f32 %v733, %v1173
        %v1215 = vmul.f32 %v738, %v1173
        %v1216 = vmul.f32 %v743, %v1173
        %v1217 = vmul.f32 %v748, %v1173
        %v1218 = vmul.f32 %v753, %v1173
        %v1219 = vmul.f32 %v758, %v1173
        %v1220 = vmul.f32 %v763, %v1173
        %v1221 = vmul.f32 %v768, %v1173
        %v1222 = vmul.f32 %v773, %v1173
        %v1223 = vmul.f32 %v778, %v1173
        %v1224 = vmul.f32 %v783, %v1173
        %v1225 = vmul.f32 %v788, %v1173
        %v1226 = vmul.f32 %v793, %v1173
        %v1227 = vmul.f32 %v798, %v1173
        %v1228 = vmul.f32 %v803, %v1173
        %v1229 = vmul.f32 %v808, %v1173
        %v1230 = vmul.f32 %v813, %v1173
        %v1231 = vmul.f32 %v818, %v1173
        %v1232 = vmul.f32 %v823, %v1173
        %v1233 = vmul.f32 %v828, %v1173
        %v1234 = vmul.f32 %v833, %v1173
        %v1235 = vmul.f32 %v838, %v1173
        %v1236 = vmul.f32 %v843, %v1173
        %v1237 = vmul.f32 %v848, %v1173
        %v1238 = vmul.f32 %v853, %v1173
        %v1239 = vmul.f32 %v858, %v1173
        %v1240 = vmul.f32 %v863, %v1173
        %v1241 = vmul.f32 %v868, %v1173
        %v1242 = vmul.f32 %v873, %v1173
        %v1243 = vmul.f32 %v878, %v1173
        %v1244 = vmul.f32 %v883, %v1173
        %v1245 = vmul.f32 %v888, %v1173
        %v1246 = vmul.f32 %v893, %v1173
        %v1247 = vmul.f32 %v898, %v1173
        %v1248 = vmul.f32 %v903, %v1173
        %v1249 = vmul.f32 %v908, %v1173
        %v1250 = vmul.f32 %v913, %v1173
        %v1251 = vmul.f32 %v918, %v1173
        %v1252 = vmul.f32 %v923, %v1173
        %v1253 = vmul.f32 %v928, %v1173
        %v1254 = vmul.f32 %v933, %v1173
        %v1255 = vmul.f32 %v938, %v1173
        %v1256 = vmul.f32 %v943, %v1173
        %v1257 = vmul.f32 %v948, %v1173
        %v1258 = vmul.f32 %v953, %v1173
        %v1259 = vmul.f32 %v958, %v1173
        %v1260 = vmul.f32 %v963, %v1173
        %v1261 = vmul.f32 %v968, %v1173
        %v1262 = vmul.f32 %v973, %v1173
        %v1263 = vmul.f32 %v978, %v1173
        %v1264 = vmul.f32 %v983, %v1173
        %v1265 = vmul.f32 %v988, %v1173
        %v1266 = vmul.f32 %v993, %v1173
        %v1267 = vmul.f32 %v998, %v1173
        %v1268 = vmul.f32 %v1003, %v1173
        %v1269 = vmul.f32 %v1008, %v1173
        %v1270 = vmul.f32 %v1013, %v1173
        %v1271 = vmul.f32 %v1018, %v1173
        %v1272 = vmul.f32 %v1023, %v1173
        %v1273 = vmul.f32 %v1028, %v1173
        %v1274 = vmul.f32 %v1033, %v1173
        %v1275 = vmul.f32 %v1038, %v1173
        %v1276 = vmul.f32 %v1043, %v1173
        %v1277 = vmul.f32 %v1048, %v1173
        %v1278 = vmul.f32 %v1053, %v1173
        %v1279 = vmul.f32 %v1058, %v1173
        %v1280 = vmul.f32 %v1063, %v1173
        %v1281 = vmul.f32 %v1068, %v1173
        %v1282 = vmul.f32 %v1073, %v1173
        %v1283 = vmul.f32 %v1078, %v1173
        %v1284 = vmul.f32 %v1083, %v1173
        %v1285 = vmul.f32 %v1088, %v1173
        %v1286 = vmul.f32 %v1093, %v1173
        %v1287 = vmul.f32 %v1098, %v1173
        %v1288 = vmul.f32 %v1103, %v1173
        %v1289 = vmul.f32 %v1108, %v1173
        %v1290 = vmul.f32 %v1113, %v1173
        %v1291 = vmul.f32 %v1118, %v1173
        %v1292 = vmul.f32 %v1123, %v1173
        %v1293 = vmul.f32 %v1128, %v1173
        %v1294 = vmul.f32 %v1133, %v1173
        %v1295 = vmul.f32 %v1138, %v1173
        %v1296 = vmul.f32 %v1143, %v1173
        %v1297 = vmul.f32 %v1148, %v1173
        %v1298 = vmul.f32 %v1153, %v1173
        %v1299 = vmul.f32 %v1158, %v1173
        %v1300 = vmul.f32 %v1163, %v1173
        %v1301 = vmul.f32 %v1168, %v1173
        %1302 = vset.pattern.permute.xlu0 1
        %1303 = vperm.xlu0 %1302, %v402
        %v1304 = vpop.permute.xlu0 %1303
        %1306 = vset.pattern.permute.xlu0 1
        %1307 = vperm.xlu0 %1306, %v403
        %v1308 = vpop.permute.xlu0 %1307
        %1310 = vset.pattern.permute.xlu0 1
        %1311 = vperm.xlu0 %1310, %v404
        %v1312 = vpop.permute.xlu0 %1311
        %1314 = vset.pattern.permute.xlu0 1
        %1315 = vperm.xlu0 %1314, %v405
        %v1316 = vpop.permute.xlu0 %1315
        %1318 = vset.pattern.permute.xlu0 1
        %1319 = vperm.xlu0 %1318, %v406
        %v1320 = vpop.permute.xlu0 %1319
        %1322 = vset.pattern.permute.xlu0 1
        %1323 = vperm.xlu0 %1322, %v407
        %v1324 = vpop.permute.xlu0 %1323
        %1326 = vset.pattern.permute.xlu0 1
        %1327 = vperm.xlu0 %1326, %v408
        %v1328 = vpop.permute.xlu0 %1327
        %1330 = vset.pattern.permute.xlu0 1
        %1331 = vperm.xlu0 %1330, %v409
        %v1332 = vpop.permute.xlu0 %1331
        %1334 = vset.pattern.permute.xlu0 1
        %1335 = vperm.xlu0 %1334, %v410
        %v1336 = vpop.permute.xlu0 %1335
        %1338 = vset.pattern.permute.xlu0 1
        %1339 = vperm.xlu0 %1338, %v411
        %v1340 = vpop.permute.xlu0 %1339
        %1342 = vset.pattern.permute.xlu0 1
        %1343 = vperm.xlu0 %1342, %v412
        %v1344 = vpop.permute.xlu0 %1343
        %1346 = vset.pattern.permute.xlu0 1
        %1347 = vperm.xlu0 %1346, %v413
        %v1348 = vpop.permute.xlu0 %1347
        %1350 = vset.pattern.permute.xlu0 1
        %1351 = vperm.xlu0 %1350, %v414
        %v1352 = vpop.permute.xlu0 %1351
        %1354 = vset.pattern.permute.xlu0 1
        %1355 = vperm.xlu0 %1354, %v415
        %v1356 = vpop.permute.xlu0 %1355
        %1358 = vset.pattern.permute.xlu0 1
        %1359 = vperm.xlu0 %1358, %v416
        %v1360 = vpop.permute.xlu0 %1359
        %1362 = vset.pattern.permute.xlu0 1
        %1363 = vperm.xlu0 %1362, %v417
        %v1364 = vpop.permute.xlu0 %1363
        %1366 = vset.pattern.permute.xlu0 1
        %1367 = vperm.xlu0 %1366, %v418
        %v1368 = vpop.permute.xlu0 %1367
        %1370 = vset.pattern.permute.xlu0 1
        %1371 = vperm.xlu0 %1370, %v419
        %v1372 = vpop.permute.xlu0 %1371
        %1374 = vset.pattern.permute.xlu0 1
        %1375 = vperm.xlu0 %1374, %v420
        %v1376 = vpop.permute.xlu0 %1375
        %1378 = vset.pattern.permute.xlu0 1
        %1379 = vperm.xlu0 %1378, %v421
        %v1380 = vpop.permute.xlu0 %1379
        %1382 = vset.pattern.permute.xlu0 1
        %1383 = vperm.xlu0 %1382, %v422
        %v1384 = vpop.permute.xlu0 %1383
        %1386 = vset.pattern.permute.xlu0 1
        %1387 = vperm.xlu0 %1386, %v423
        %v1388 = vpop.permute.xlu0 %1387
        %1390 = vset.pattern.permute.xlu0 1
        %1391 = vperm.xlu0 %1390, %v424
        %v1392 = vpop.permute.xlu0 %1391
        %1394 = vset.pattern.permute.xlu0 1
        %1395 = vperm.xlu0 %1394, %v425
        %v1396 = vpop.permute.xlu0 %1395
        %1398 = vset.pattern.permute.xlu0 1
        %1399 = vperm.xlu0 %1398, %v426
        %v1400 = vpop.permute.xlu0 %1399
        %1402 = vset.pattern.permute.xlu0 1
        %1403 = vperm.xlu0 %1402, %v427
        %v1404 = vpop.permute.xlu0 %1403
        %1406 = vset.pattern.permute.xlu0 1
        %1407 = vperm.xlu0 %1406, %v428
        %v1408 = vpop.permute.xlu0 %1407
        %1410 = vset.pattern.permute.xlu0 1
        %1411 = vperm.xlu0 %1410, %v429
        %v1412 = vpop.permute.xlu0 %1411
        %1414 = vset.pattern.permute.xlu0 1
        %1415 = vperm.xlu0 %1414, %v430
        %v1416 = vpop.permute.xlu0 %1415
        %1418 = vset.pattern.permute.xlu0 1
        %1419 = vperm.xlu0 %1418, %v431
        %v1420 = vpop.permute.xlu0 %1419
        %1422 = vset.pattern.permute.xlu0 1
        %1423 = vperm.xlu0 %1422, %v432
        %v1424 = vpop.permute.xlu0 %1423
        %1426 = vset.pattern.permute.xlu0 1
        %1427 = vperm.xlu0 %1426, %v433
        %v1428 = vpop.permute.xlu0 %1427
        %1430 = vset.pattern.permute.xlu0 1
        %1431 = vperm.xlu0 %1430, %v434
        %v1432 = vpop.permute.xlu0 %1431
        %1434 = vset.pattern.permute.xlu0 1
        %1435 = vperm.xlu0 %1434, %v435
        %v1436 = vpop.permute.xlu0 %1435
        %1438 = vset.pattern.permute.xlu0 1
        %1439 = vperm.xlu0 %1438, %v436
        %v1440 = vpop.permute.xlu0 %1439
        %1442 = vset.pattern.permute.xlu0 1
        %1443 = vperm.xlu0 %1442, %v437
        %v1444 = vpop.permute.xlu0 %1443
        %1446 = vset.pattern.permute.xlu0 1
        %1447 = vperm.xlu0 %1446, %v438
        %v1448 = vpop.permute.xlu0 %1447
        %1450 = vset.pattern.permute.xlu0 1
        %1451 = vperm.xlu0 %1450, %v439
        %v1452 = vpop.permute.xlu0 %1451
        %1454 = vset.pattern.permute.xlu0 1
        %1455 = vperm.xlu0 %1454, %v440
        %v1456 = vpop.permute.xlu0 %1455
        %1458 = vset.pattern.permute.xlu0 1
        %1459 = vperm.xlu0 %1458, %v441
        %v1460 = vpop.permute.xlu0 %1459
        %1462 = vset.pattern.permute.xlu0 1
        %1463 = vperm.xlu0 %1462, %v442
        %v1464 = vpop.permute.xlu0 %1463
        %1466 = vset.pattern.permute.xlu0 1
        %1467 = vperm.xlu0 %1466, %v443
        %v1468 = vpop.permute.xlu0 %1467
        %1470 = vset.pattern.permute.xlu0 1
        %1471 = vperm.xlu0 %1470, %v444
        %v1472 = vpop.permute.xlu0 %1471
        %1474 = vset.pattern.permute.xlu0 1
        %1475 = vperm.xlu0 %1474, %v445
        %v1476 = vpop.permute.xlu0 %1475
        %1478 = vset.pattern.permute.xlu0 1
        %1479 = vperm.xlu0 %1478, %v446
        %v1480 = vpop.permute.xlu0 %1479
        %1482 = vset.pattern.permute.xlu0 1
        %1483 = vperm.xlu0 %1482, %v447
        %v1484 = vpop.permute.xlu0 %1483
        %1486 = vset.pattern.permute.xlu0 1
        %1487 = vperm.xlu0 %1486, %v448
        %v1488 = vpop.permute.xlu0 %1487
        %1490 = vset.pattern.permute.xlu0 1
        %1491 = vperm.xlu0 %1490, %v449
        %v1492 = vpop.permute.xlu0 %1491
        %1494 = vset.pattern.permute.xlu0 1
        %1495 = vperm.xlu0 %1494, %v450
        %v1496 = vpop.permute.xlu0 %1495
        %1498 = vset.pattern.permute.xlu0 1
        %1499 = vperm.xlu0 %1498, %v451
        %v1500 = vpop.permute.xlu0 %1499
        %1502 = vset.pattern.permute.xlu0 1
        %1503 = vperm.xlu0 %1502, %v452
        %v1504 = vpop.permute.xlu0 %1503
        %1506 = vset.pattern.permute.xlu0 1
        %1507 = vperm.xlu0 %1506, %v453
        %v1508 = vpop.permute.xlu0 %1507
        %1510 = vset.pattern.permute.xlu0 1
        %1511 = vperm.xlu0 %1510, %v454
        %v1512 = vpop.permute.xlu0 %1511
        %1514 = vset.pattern.permute.xlu0 1
        %1515 = vperm.xlu0 %1514, %v455
        %v1516 = vpop.permute.xlu0 %1515
        %1518 = vset.pattern.permute.xlu0 1
        %1519 = vperm.xlu0 %1518, %v456
        %v1520 = vpop.permute.xlu0 %1519
        %1522 = vset.pattern.permute.xlu0 1
        %1523 = vperm.xlu0 %1522, %v457
        %v1524 = vpop.permute.xlu0 %1523
        %1526 = vset.pattern.permute.xlu0 1
        %1527 = vperm.xlu0 %1526, %v458
        %v1528 = vpop.permute.xlu0 %1527
        %1530 = vset.pattern.permute.xlu0 1
        %1531 = vperm.xlu0 %1530, %v459
        %v1532 = vpop.permute.xlu0 %1531
        %1534 = vset.pattern.permute.xlu0 1
        %1535 = vperm.xlu0 %1534, %v460
        %v1536 = vpop.permute.xlu0 %1535
        %1538 = vset.pattern.permute.xlu0 1
        %1539 = vperm.xlu0 %1538, %v461
        %v1540 = vpop.permute.xlu0 %1539
        %1542 = vset.pattern.permute.xlu0 1
        %1543 = vperm.xlu0 %1542, %v462
        %v1544 = vpop.permute.xlu0 %1543
        %1546 = vset.pattern.permute.xlu0 1
        %1547 = vperm.xlu0 %1546, %v463
        %v1548 = vpop.permute.xlu0 %1547
        %1550 = vset.pattern.permute.xlu0 1
        %1551 = vperm.xlu0 %1550, %v464
        %v1552 = vpop.permute.xlu0 %1551
        %1554 = vset.pattern.permute.xlu0 1
        %1555 = vperm.xlu0 %1554, %v465
        %v1556 = vpop.permute.xlu0 %1555
        %1558 = vset.pattern.permute.xlu0 1
        %1559 = vperm.xlu0 %1558, %v466
        %v1560 = vpop.permute.xlu0 %1559
        %1562 = vset.pattern.permute.xlu0 1
        %1563 = vperm.xlu0 %1562, %v467
        %v1564 = vpop.permute.xlu0 %1563
        %1566 = vset.pattern.permute.xlu0 1
        %1567 = vperm.xlu0 %1566, %v468
        %v1568 = vpop.permute.xlu0 %1567
        %1570 = vset.pattern.permute.xlu0 1
        %1571 = vperm.xlu0 %1570, %v469
        %v1572 = vpop.permute.xlu0 %1571
        %1574 = vset.pattern.permute.xlu0 1
        %1575 = vperm.xlu0 %1574, %v470
        %v1576 = vpop.permute.xlu0 %1575
        %1578 = vset.pattern.permute.xlu0 1
        %1579 = vperm.xlu0 %1578, %v471
        %v1580 = vpop.permute.xlu0 %1579
        %1582 = vset.pattern.permute.xlu0 1
        %1583 = vperm.xlu0 %1582, %v472
        %v1584 = vpop.permute.xlu0 %1583
        %1586 = vset.pattern.permute.xlu0 1
        %1587 = vperm.xlu0 %1586, %v473
        %v1588 = vpop.permute.xlu0 %1587
        %1590 = vset.pattern.permute.xlu0 1
        %1591 = vperm.xlu0 %1590, %v474
        %v1592 = vpop.permute.xlu0 %1591
        %1594 = vset.pattern.permute.xlu0 1
        %1595 = vperm.xlu0 %1594, %v475
        %v1596 = vpop.permute.xlu0 %1595
        %1598 = vset.pattern.permute.xlu0 1
        %1599 = vperm.xlu0 %1598, %v476
        %v1600 = vpop.permute.xlu0 %1599
        %1602 = vset.pattern.permute.xlu0 1
        %1603 = vperm.xlu0 %1602, %v477
        %v1604 = vpop.permute.xlu0 %1603
        %1606 = vset.pattern.permute.xlu0 1
        %1607 = vperm.xlu0 %1606, %v478
        %v1608 = vpop.permute.xlu0 %1607
        %1610 = vset.pattern.permute.xlu0 1
        %1611 = vperm.xlu0 %1610, %v479
        %v1612 = vpop.permute.xlu0 %1611
        %1614 = vset.pattern.permute.xlu0 1
        %1615 = vperm.xlu0 %1614, %v480
        %v1616 = vpop.permute.xlu0 %1615
        %1618 = vset.pattern.permute.xlu0 1
        %1619 = vperm.xlu0 %1618, %v481
        %v1620 = vpop.permute.xlu0 %1619
        %1622 = vset.pattern.permute.xlu0 1
        %1623 = vperm.xlu0 %1622, %v482
        %v1624 = vpop.permute.xlu0 %1623
        %1626 = vset.pattern.permute.xlu0 1
        %1627 = vperm.xlu0 %1626, %v483
        %v1628 = vpop.permute.xlu0 %1627
        %1630 = vset.pattern.permute.xlu0 1
        %1631 = vperm.xlu0 %1630, %v484
        %v1632 = vpop.permute.xlu0 %1631
        %1634 = vset.pattern.permute.xlu0 1
        %1635 = vperm.xlu0 %1634, %v485
        %v1636 = vpop.permute.xlu0 %1635
        %1638 = vset.pattern.permute.xlu0 1
        %1639 = vperm.xlu0 %1638, %v486
        %v1640 = vpop.permute.xlu0 %1639
        %1642 = vset.pattern.permute.xlu0 1
        %1643 = vperm.xlu0 %1642, %v487
        %v1644 = vpop.permute.xlu0 %1643
        %1646 = vset.pattern.permute.xlu0 1
        %1647 = vperm.xlu0 %1646, %v488
        %v1648 = vpop.permute.xlu0 %1647
        %1650 = vset.pattern.permute.xlu0 1
        %1651 = vperm.xlu0 %1650, %v489
        %v1652 = vpop.permute.xlu0 %1651
        %1654 = vset.pattern.permute.xlu0 1
        %1655 = vperm.xlu0 %1654, %v490
        %v1656 = vpop.permute.xlu0 %1655
        %1658 = vset.pattern.permute.xlu0 1
        %1659 = vperm.xlu0 %1658, %v491
        %v1660 = vpop.permute.xlu0 %1659
        %1662 = vset.pattern.permute.xlu0 1
        %1663 = vperm.xlu0 %1662, %v492
        %v1664 = vpop.permute.xlu0 %1663
        %1666 = vset.pattern.permute.xlu0 1
        %1667 = vperm.xlu0 %1666, %v493
        %v1668 = vpop.permute.xlu0 %1667
        %1670 = vset.pattern.permute.xlu0 1
        %1671 = vperm.xlu0 %1670, %v494
        %v1672 = vpop.permute.xlu0 %1671
        %1674 = vset.pattern.permute.xlu0 1
        %1675 = vperm.xlu0 %1674, %v495
        %v1676 = vpop.permute.xlu0 %1675
        %1678 = vset.pattern.permute.xlu0 1
        %1679 = vperm.xlu0 %1678, %v496
        %v1680 = vpop.permute.xlu0 %1679
        %1682 = vset.pattern.permute.xlu0 1
        %1683 = vperm.xlu0 %1682, %v497
        %v1684 = vpop.permute.xlu0 %1683
        %1686 = vset.pattern.permute.xlu0 1
        %1687 = vperm.xlu0 %1686, %v498
        %v1688 = vpop.permute.xlu0 %1687
        %1690 = vset.pattern.permute.xlu0 1
        %1691 = vperm.xlu0 %1690, %v499
        %v1692 = vpop.permute.xlu0 %1691
        %1694 = vset.pattern.permute.xlu0 1
        %1695 = vperm.xlu0 %1694, %v500
        %v1696 = vpop.permute.xlu0 %1695
        %1698 = vset.pattern.permute.xlu0 1
        %1699 = vperm.xlu0 %1698, %v501
        %v1700 = vpop.permute.xlu0 %1699
        %1702 = vset.pattern.permute.xlu0 1
        %1703 = vperm.xlu0 %1702, %v502
        %v1704 = vpop.permute.xlu0 %1703
        %1706 = vset.pattern.permute.xlu0 1
        %1707 = vperm.xlu0 %1706, %v503
        %v1708 = vpop.permute.xlu0 %1707
        %1710 = vset.pattern.permute.xlu0 1
        %1711 = vperm.xlu0 %1710, %v504
        %v1712 = vpop.permute.xlu0 %1711
        %1714 = vset.pattern.permute.xlu0 1
        %1715 = vperm.xlu0 %1714, %v505
        %v1716 = vpop.permute.xlu0 %1715
        %1718 = vset.pattern.permute.xlu0 1
        %1719 = vperm.xlu0 %1718, %v506
        %v1720 = vpop.permute.xlu0 %1719
        %1722 = vset.pattern.permute.xlu0 1
        %1723 = vperm.xlu0 %1722, %v507
        %v1724 = vpop.permute.xlu0 %1723
        %1726 = vset.pattern.permute.xlu0 1
        %1727 = vperm.xlu0 %1726, %v508
        %v1728 = vpop.permute.xlu0 %1727
        %1730 = vset.pattern.permute.xlu0 1
        %1731 = vperm.xlu0 %1730, %v509
        %v1732 = vpop.permute.xlu0 %1731
        %1734 = vset.pattern.permute.xlu0 1
        %1735 = vperm.xlu0 %1734, %v510
        %v1736 = vpop.permute.xlu0 %1735
        %1738 = vset.pattern.permute.xlu0 1
        %1739 = vperm.xlu0 %1738, %v511
        %v1740 = vpop.permute.xlu0 %1739
        %1742 = vset.pattern.permute.xlu0 1
        %1743 = vperm.xlu0 %1742, %v512
        %v1744 = vpop.permute.xlu0 %1743
        %1746 = vset.pattern.permute.xlu0 1
        %1747 = vperm.xlu0 %1746, %v513
        %v1748 = vpop.permute.xlu0 %1747
        %1750 = vset.pattern.permute.xlu0 1
        %1751 = vperm.xlu0 %1750, %v514
        %v1752 = vpop.permute.xlu0 %1751
        %1754 = vset.pattern.permute.xlu0 1
        %1755 = vperm.xlu0 %1754, %v515
        %v1756 = vpop.permute.xlu0 %1755
        %1758 = vset.pattern.permute.xlu0 1
        %1759 = vperm.xlu0 %1758, %v516
        %v1760 = vpop.permute.xlu0 %1759
        %1762 = vset.pattern.permute.xlu0 1
        %1763 = vperm.xlu0 %1762, %v517
        %v1764 = vpop.permute.xlu0 %1763
        %1766 = vset.pattern.permute.xlu0 1
        %1767 = vperm.xlu0 %1766, %v518
        %v1768 = vpop.permute.xlu0 %1767
        %1770 = vset.pattern.permute.xlu0 1
        %1771 = vperm.xlu0 %1770, %v519
        %v1772 = vpop.permute.xlu0 %1771
        %1774 = vset.pattern.permute.xlu0 1
        %1775 = vperm.xlu0 %1774, %v520
        %v1776 = vpop.permute.xlu0 %1775
        %1778 = vset.pattern.permute.xlu0 1
        %1779 = vperm.xlu0 %1778, %v521
        %v1780 = vpop.permute.xlu0 %1779
        %1782 = vset.pattern.permute.xlu0 1
        %1783 = vperm.xlu0 %1782, %v522
        %v1784 = vpop.permute.xlu0 %1783
        %1786 = vset.pattern.permute.xlu0 1
        %1787 = vperm.xlu0 %1786, %v523
        %v1788 = vpop.permute.xlu0 %1787
        %1790 = vset.pattern.permute.xlu0 1
        %1791 = vperm.xlu0 %1790, %v524
        %v1792 = vpop.permute.xlu0 %1791
        %1794 = vset.pattern.permute.xlu0 1
        %1795 = vperm.xlu0 %1794, %v525
        %v1796 = vpop.permute.xlu0 %1795
        %1798 = vset.pattern.permute.xlu0 1
        %1799 = vperm.xlu0 %1798, %v526
        %v1800 = vpop.permute.xlu0 %1799
        %1802 = vset.pattern.permute.xlu0 1
        %1803 = vperm.xlu0 %1802, %v527
        %v1804 = vpop.permute.xlu0 %1803
        %1806 = vset.pattern.permute.xlu0 1
        %1807 = vperm.xlu0 %1806, %v528
        %v1808 = vpop.permute.xlu0 %1807
        %1810 = vset.pattern.permute.xlu0 1
        %1811 = vperm.xlu0 %1810, %v529
        %v1812 = vpop.permute.xlu0 %1811
        %v1814 = vlaneseq
        %v1815 = vshrl.u32 %v1814, 7
        %v1816 = vsub.s32 1, %v1815
        %v1817 = vrot.slane %v273, %v1816
        %v1818 = vmul.f32 %v1304, %v1817
        %v1819 = vmul.f32 %v1308, %v1817
        %v1820 = vmul.f32 %v1312, %v1817
        %v1821 = vmul.f32 %v1316, %v1817
        %v1822 = vmul.f32 %v1320, %v1817
        %v1823 = vmul.f32 %v1324, %v1817
        %v1824 = vmul.f32 %v1328, %v1817
        %v1825 = vmul.f32 %v1332, %v1817
        %v1826 = vmul.f32 %v1336, %v1817
        %v1827 = vmul.f32 %v1340, %v1817
        %v1828 = vmul.f32 %v1344, %v1817
        %v1829 = vmul.f32 %v1348, %v1817
        %v1830 = vmul.f32 %v1352, %v1817
        %v1831 = vmul.f32 %v1356, %v1817
        %v1832 = vmul.f32 %v1360, %v1817
        %v1833 = vmul.f32 %v1364, %v1817
        %v1834 = vmul.f32 %v1368, %v1817
        %v1835 = vmul.f32 %v1372, %v1817
        %v1836 = vmul.f32 %v1376, %v1817
        %v1837 = vmul.f32 %v1380, %v1817
        %v1838 = vmul.f32 %v1384, %v1817
        %v1839 = vmul.f32 %v1388, %v1817
        %v1840 = vmul.f32 %v1392, %v1817
        %v1841 = vmul.f32 %v1396, %v1817
        %v1842 = vmul.f32 %v1400, %v1817
        %v1843 = vmul.f32 %v1404, %v1817
        %v1844 = vmul.f32 %v1408, %v1817
        %v1845 = vmul.f32 %v1412, %v1817
        %v1846 = vmul.f32 %v1416, %v1817
        %v1847 = vmul.f32 %v1420, %v1817
        %v1848 = vmul.f32 %v1424, %v1817
        %v1849 = vmul.f32 %v1428, %v1817
        %v1850 = vmul.f32 %v1432, %v1817
        %v1851 = vmul.f32 %v1436, %v1817
        %v1852 = vmul.f32 %v1440, %v1817
        %v1853 = vmul.f32 %v1444, %v1817
        %v1854 = vmul.f32 %v1448, %v1817
        %v1855 = vmul.f32 %v1452, %v1817
        %v1856 = vmul.f32 %v1456, %v1817
        %v1857 = vmul.f32 %v1460, %v1817
        %v1858 = vmul.f32 %v1464, %v1817
        %v1859 = vmul.f32 %v1468, %v1817
        %v1860 = vmul.f32 %v1472, %v1817
        %v1861 = vmul.f32 %v1476, %v1817
        %v1862 = vmul.f32 %v1480, %v1817
        %v1863 = vmul.f32 %v1484, %v1817
        %v1864 = vmul.f32 %v1488, %v1817
        %v1865 = vmul.f32 %v1492, %v1817
        %v1866 = vmul.f32 %v1496, %v1817
        %v1867 = vmul.f32 %v1500, %v1817
        %v1868 = vmul.f32 %v1504, %v1817
        %v1869 = vmul.f32 %v1508, %v1817
        %v1870 = vmul.f32 %v1512, %v1817
        %v1871 = vmul.f32 %v1516, %v1817
        %v1872 = vmul.f32 %v1520, %v1817
        %v1873 = vmul.f32 %v1524, %v1817
        %v1874 = vmul.f32 %v1528, %v1817
        %v1875 = vmul.f32 %v1532, %v1817
        %v1876 = vmul.f32 %v1536, %v1817
        %v1877 = vmul.f32 %v1540, %v1817
        %v1878 = vmul.f32 %v1544, %v1817
        %v1879 = vmul.f32 %v1548, %v1817
        %v1880 = vmul.f32 %v1552, %v1817
        %v1881 = vmul.f32 %v1556, %v1817
        %v1882 = vmul.f32 %v1560, %v1817
        %v1883 = vmul.f32 %v1564, %v1817
        %v1884 = vmul.f32 %v1568, %v1817
        %v1885 = vmul.f32 %v1572, %v1817
        %v1886 = vmul.f32 %v1576, %v1817
        %v1887 = vmul.f32 %v1580, %v1817
        %v1888 = vmul.f32 %v1584, %v1817
        %v1889 = vmul.f32 %v1588, %v1817
        %v1890 = vmul.f32 %v1592, %v1817
        %v1891 = vmul.f32 %v1596, %v1817
        %v1892 = vmul.f32 %v1600, %v1817
        %v1893 = vmul.f32 %v1604, %v1817
        %v1894 = vmul.f32 %v1608, %v1817
        %v1895 = vmul.f32 %v1612, %v1817
        %v1896 = vmul.f32 %v1616, %v1817
        %v1897 = vmul.f32 %v1620, %v1817
        %v1898 = vmul.f32 %v1624, %v1817
        %v1899 = vmul.f32 %v1628, %v1817
        %v1900 = vmul.f32 %v1632, %v1817
        %v1901 = vmul.f32 %v1636, %v1817
        %v1902 = vmul.f32 %v1640, %v1817
        %v1903 = vmul.f32 %v1644, %v1817
        %v1904 = vmul.f32 %v1648, %v1817
        %v1905 = vmul.f32 %v1652, %v1817
        %v1906 = vmul.f32 %v1656, %v1817
        %v1907 = vmul.f32 %v1660, %v1817
        %v1908 = vmul.f32 %v1664, %v1817
        %v1909 = vmul.f32 %v1668, %v1817
        %v1910 = vmul.f32 %v1672, %v1817
        %v1911 = vmul.f32 %v1676, %v1817
        %v1912 = vmul.f32 %v1680, %v1817
        %v1913 = vmul.f32 %v1684, %v1817
        %v1914 = vmul.f32 %v1688, %v1817
        %v1915 = vmul.f32 %v1692, %v1817
        %v1916 = vmul.f32 %v1696, %v1817
        %v1917 = vmul.f32 %v1700, %v1817
        %v1918 = vmul.f32 %v1704, %v1817
        %v1919 = vmul.f32 %v1708, %v1817
        %v1920 = vmul.f32 %v1712, %v1817
        %v1921 = vmul.f32 %v1716, %v1817
        %v1922 = vmul.f32 %v1720, %v1817
        %v1923 = vmul.f32 %v1724, %v1817
        %v1924 = vmul.f32 %v1728, %v1817
        %v1925 = vmul.f32 %v1732, %v1817
        %v1926 = vmul.f32 %v1736, %v1817
        %v1927 = vmul.f32 %v1740, %v1817
        %v1928 = vmul.f32 %v1744, %v1817
        %v1929 = vmul.f32 %v1748, %v1817
        %v1930 = vmul.f32 %v1752, %v1817
        %v1931 = vmul.f32 %v1756, %v1817
        %v1932 = vmul.f32 %v1760, %v1817
        %v1933 = vmul.f32 %v1764, %v1817
        %v1934 = vmul.f32 %v1768, %v1817
        %v1935 = vmul.f32 %v1772, %v1817
        %v1936 = vmul.f32 %v1776, %v1817
        %v1937 = vmul.f32 %v1780, %v1817
        %v1938 = vmul.f32 %v1784, %v1817
        %v1939 = vmul.f32 %v1788, %v1817
        %v1940 = vmul.f32 %v1792, %v1817
        %v1941 = vmul.f32 %v1796, %v1817
        %v1942 = vmul.f32 %v1800, %v1817
        %v1943 = vmul.f32 %v1804, %v1817
        %v1944 = vmul.f32 %v1808, %v1817
        %v1945 = vmul.f32 %v1812, %v1817
        %v1946 = vadd.f32 %v1174, %v1818
        %v1947 = vadd.f32 %v1175, %v1819
        %v1948 = vadd.f32 %v1176, %v1820
        %v1949 = vadd.f32 %v1177, %v1821
        %v1950 = vadd.f32 %v1178, %v1822
        %v1951 = vadd.f32 %v1179, %v1823
        %v1952 = vadd.f32 %v1180, %v1824
        %v1953 = vadd.f32 %v1181, %v1825
        %v1954 = vadd.f32 %v1182, %v1826
        %v1955 = vadd.f32 %v1183, %v1827
        %v1956 = vadd.f32 %v1184, %v1828
        %v1957 = vadd.f32 %v1185, %v1829
        %v1958 = vadd.f32 %v1186, %v1830
        %v1959 = vadd.f32 %v1187, %v1831
        %v1960 = vadd.f32 %v1188, %v1832
        %v1961 = vadd.f32 %v1189, %v1833
        %v1962 = vadd.f32 %v1190, %v1834
        %v1963 = vadd.f32 %v1191, %v1835
        %v1964 = vadd.f32 %v1192, %v1836
        %v1965 = vadd.f32 %v1193, %v1837
        %v1966 = vadd.f32 %v1194, %v1838
        %v1967 = vadd.f32 %v1195, %v1839
        %v1968 = vadd.f32 %v1196, %v1840
        %v1969 = vadd.f32 %v1197, %v1841
        %v1970 = vadd.f32 %v1198, %v1842
        %v1971 = vadd.f32 %v1199, %v1843
        %v1972 = vadd.f32 %v1200, %v1844
        %v1973 = vadd.f32 %v1201, %v1845
        %v1974 = vadd.f32 %v1202, %v1846
        %v1975 = vadd.f32 %v1203, %v1847
        %v1976 = vadd.f32 %v1204, %v1848
        %v1977 = vadd.f32 %v1205, %v1849
        %v1978 = vadd.f32 %v1206, %v1850
        %v1979 = vadd.f32 %v1207, %v1851
        %v1980 = vadd.f32 %v1208, %v1852
        %v1981 = vadd.f32 %v1209, %v1853
        %v1982 = vadd.f32 %v1210, %v1854
        %v1983 = vadd.f32 %v1211, %v1855
        %v1984 = vadd.f32 %v1212, %v1856
        %v1985 = vadd.f32 %v1213, %v1857
        %v1986 = vadd.f32 %v1214, %v1858
        %v1987 = vadd.f32 %v1215, %v1859
        %v1988 = vadd.f32 %v1216, %v1860
        %v1989 = vadd.f32 %v1217, %v1861
        %v1990 = vadd.f32 %v1218, %v1862
        %v1991 = vadd.f32 %v1219, %v1863
        %v1992 = vadd.f32 %v1220, %v1864
        %v1993 = vadd.f32 %v1221, %v1865
        %v1994 = vadd.f32 %v1222, %v1866
        %v1995 = vadd.f32 %v1223, %v1867
        %v1996 = vadd.f32 %v1224, %v1868
        %v1997 = vadd.f32 %v1225, %v1869
        %v1998 = vadd.f32 %v1226, %v1870
        %v1999 = vadd.f32 %v1227, %v1871
        %v2000 = vadd.f32 %v1228, %v1872
        %v2001 = vadd.f32 %v1229, %v1873
        %v2002 = vadd.f32 %v1230, %v1874
        %v2003 = vadd.f32 %v1231, %v1875
        %v2004 = vadd.f32 %v1232, %v1876
        %v2005 = vadd.f32 %v1233, %v1877
        %v2006 = vadd.f32 %v1234, %v1878
        %v2007 = vadd.f32 %v1235, %v1879
        %v2008 = vadd.f32 %v1236, %v1880
        %v2009 = vadd.f32 %v1237, %v1881
        %v2010 = vadd.f32 %v1238, %v1882
        %v2011 = vadd.f32 %v1239, %v1883
        %v2012 = vadd.f32 %v1240, %v1884
        %v2013 = vadd.f32 %v1241, %v1885
        %v2014 = vadd.f32 %v1242, %v1886
        %v2015 = vadd.f32 %v1243, %v1887
        %v2016 = vadd.f32 %v1244, %v1888
        %v2017 = vadd.f32 %v1245, %v1889
        %v2018 = vadd.f32 %v1246, %v1890
        %v2019 = vadd.f32 %v1247, %v1891
        %v2020 = vadd.f32 %v1248, %v1892
        %v2021 = vadd.f32 %v1249, %v1893
        %v2022 = vadd.f32 %v1250, %v1894
        %v2023 = vadd.f32 %v1251, %v1895
        %v2024 = vadd.f32 %v1252, %v1896
        %v2025 = vadd.f32 %v1253, %v1897
        %v2026 = vadd.f32 %v1254, %v1898
        %v2027 = vadd.f32 %v1255, %v1899
        %v2028 = vadd.f32 %v1256, %v1900
        %v2029 = vadd.f32 %v1257, %v1901
        %v2030 = vadd.f32 %v1258, %v1902
        %v2031 = vadd.f32 %v1259, %v1903
        %v2032 = vadd.f32 %v1260, %v1904
        %v2033 = vadd.f32 %v1261, %v1905
        %v2034 = vadd.f32 %v1262, %v1906
        %v2035 = vadd.f32 %v1263, %v1907
        %v2036 = vadd.f32 %v1264, %v1908
        %v2037 = vadd.f32 %v1265, %v1909
        %v2038 = vadd.f32 %v1266, %v1910
        %v2039 = vadd.f32 %v1267, %v1911
        %v2040 = vadd.f32 %v1268, %v1912
        %v2041 = vadd.f32 %v1269, %v1913
        %v2042 = vadd.f32 %v1270, %v1914
        %v2043 = vadd.f32 %v1271, %v1915
        %v2044 = vadd.f32 %v1272, %v1916
        %v2045 = vadd.f32 %v1273, %v1917
        %v2046 = vadd.f32 %v1274, %v1918
        %v2047 = vadd.f32 %v1275, %v1919
        %v2048 = vadd.f32 %v1276, %v1920
        %v2049 = vadd.f32 %v1277, %v1921
        %v2050 = vadd.f32 %v1278, %v1922
        %v2051 = vadd.f32 %v1279, %v1923
        %v2052 = vadd.f32 %v1280, %v1924
        %v2053 = vadd.f32 %v1281, %v1925
        %v2054 = vadd.f32 %v1282, %v1926
        %v2055 = vadd.f32 %v1283, %v1927
        %v2056 = vadd.f32 %v1284, %v1928
        %v2057 = vadd.f32 %v1285, %v1929
        %v2058 = vadd.f32 %v1286, %v1930
        %v2059 = vadd.f32 %v1287, %v1931
        %v2060 = vadd.f32 %v1288, %v1932
        %v2061 = vadd.f32 %v1289, %v1933
        %v2062 = vadd.f32 %v1290, %v1934
        %v2063 = vadd.f32 %v1291, %v1935
        %v2064 = vadd.f32 %v1292, %v1936
        %v2065 = vadd.f32 %v1293, %v1937
        %v2066 = vadd.f32 %v1294, %v1938
        %v2067 = vadd.f32 %v1295, %v1939
        %v2068 = vadd.f32 %v1296, %v1940
        %v2069 = vadd.f32 %v1297, %v1941
        %v2070 = vadd.f32 %v1298, %v1942
        %v2071 = vadd.f32 %v1299, %v1943
        %v2072 = vadd.f32 %v1300, %v1944
        %v2073 = vadd.f32 %v1301, %v1945
        %2074 = vset.pattern.permute.xlu0 2
        %2075 = vperm.xlu0 %2074, %v402
        %v2076 = vpop.permute.xlu0 %2075
        %2078 = vset.pattern.permute.xlu0 2
        %2079 = vperm.xlu0 %2078, %v403
        %v2080 = vpop.permute.xlu0 %2079
        %2082 = vset.pattern.permute.xlu0 2
        %2083 = vperm.xlu0 %2082, %v404
        %v2084 = vpop.permute.xlu0 %2083
        %2086 = vset.pattern.permute.xlu0 2
        %2087 = vperm.xlu0 %2086, %v405
        %v2088 = vpop.permute.xlu0 %2087
        %2090 = vset.pattern.permute.xlu0 2
        %2091 = vperm.xlu0 %2090, %v406
        %v2092 = vpop.permute.xlu0 %2091
        %2094 = vset.pattern.permute.xlu0 2
        %2095 = vperm.xlu0 %2094, %v407
        %v2096 = vpop.permute.xlu0 %2095
        %2098 = vset.pattern.permute.xlu0 2
        %2099 = vperm.xlu0 %2098, %v408
        %v2100 = vpop.permute.xlu0 %2099
        %2102 = vset.pattern.permute.xlu0 2
        %2103 = vperm.xlu0 %2102, %v409
        %v2104 = vpop.permute.xlu0 %2103
        %2106 = vset.pattern.permute.xlu0 2
        %2107 = vperm.xlu0 %2106, %v410
        %v2108 = vpop.permute.xlu0 %2107
        %2110 = vset.pattern.permute.xlu0 2
        %2111 = vperm.xlu0 %2110, %v411
        %v2112 = vpop.permute.xlu0 %2111
        %2114 = vset.pattern.permute.xlu0 2
        %2115 = vperm.xlu0 %2114, %v412
        %v2116 = vpop.permute.xlu0 %2115
        %2118 = vset.pattern.permute.xlu0 2
        %2119 = vperm.xlu0 %2118, %v413
        %v2120 = vpop.permute.xlu0 %2119
        %2122 = vset.pattern.permute.xlu0 2
        %2123 = vperm.xlu0 %2122, %v414
        %v2124 = vpop.permute.xlu0 %2123
        %2126 = vset.pattern.permute.xlu0 2
        %2127 = vperm.xlu0 %2126, %v415
        %v2128 = vpop.permute.xlu0 %2127
        %2130 = vset.pattern.permute.xlu0 2
        %2131 = vperm.xlu0 %2130, %v416
        %v2132 = vpop.permute.xlu0 %2131
        %2134 = vset.pattern.permute.xlu0 2
        %2135 = vperm.xlu0 %2134, %v417
        %v2136 = vpop.permute.xlu0 %2135
        %2138 = vset.pattern.permute.xlu0 2
        %2139 = vperm.xlu0 %2138, %v418
        %v2140 = vpop.permute.xlu0 %2139
        %2142 = vset.pattern.permute.xlu0 2
        %2143 = vperm.xlu0 %2142, %v419
        %v2144 = vpop.permute.xlu0 %2143
        %2146 = vset.pattern.permute.xlu0 2
        %2147 = vperm.xlu0 %2146, %v420
        %v2148 = vpop.permute.xlu0 %2147
        %2150 = vset.pattern.permute.xlu0 2
        %2151 = vperm.xlu0 %2150, %v421
        %v2152 = vpop.permute.xlu0 %2151
        %2154 = vset.pattern.permute.xlu0 2
        %2155 = vperm.xlu0 %2154, %v422
        %v2156 = vpop.permute.xlu0 %2155
        %2158 = vset.pattern.permute.xlu0 2
        %2159 = vperm.xlu0 %2158, %v423
        %v2160 = vpop.permute.xlu0 %2159
        %2162 = vset.pattern.permute.xlu0 2
        %2163 = vperm.xlu0 %2162, %v424
        %v2164 = vpop.permute.xlu0 %2163
        %2166 = vset.pattern.permute.xlu0 2
        %2167 = vperm.xlu0 %2166, %v425
        %v2168 = vpop.permute.xlu0 %2167
        %2170 = vset.pattern.permute.xlu0 2
        %2171 = vperm.xlu0 %2170, %v426
        %v2172 = vpop.permute.xlu0 %2171
        %2174 = vset.pattern.permute.xlu0 2
        %2175 = vperm.xlu0 %2174, %v427
        %v2176 = vpop.permute.xlu0 %2175
        %2178 = vset.pattern.permute.xlu0 2
        %2179 = vperm.xlu0 %2178, %v428
        %v2180 = vpop.permute.xlu0 %2179
        %2182 = vset.pattern.permute.xlu0 2
        %2183 = vperm.xlu0 %2182, %v429
        %v2184 = vpop.permute.xlu0 %2183
        %2186 = vset.pattern.permute.xlu0 2
        %2187 = vperm.xlu0 %2186, %v430
        %v2188 = vpop.permute.xlu0 %2187
        %2190 = vset.pattern.permute.xlu0 2
        %2191 = vperm.xlu0 %2190, %v431
        %v2192 = vpop.permute.xlu0 %2191
        %2194 = vset.pattern.permute.xlu0 2
        %2195 = vperm.xlu0 %2194, %v432
        %v2196 = vpop.permute.xlu0 %2195
        %2198 = vset.pattern.permute.xlu0 2
        %2199 = vperm.xlu0 %2198, %v433
        %v2200 = vpop.permute.xlu0 %2199
        %2202 = vset.pattern.permute.xlu0 2
        %2203 = vperm.xlu0 %2202, %v434
        %v2204 = vpop.permute.xlu0 %2203
        %2206 = vset.pattern.permute.xlu0 2
        %2207 = vperm.xlu0 %2206, %v435
        %v2208 = vpop.permute.xlu0 %2207
        %2210 = vset.pattern.permute.xlu0 2
        %2211 = vperm.xlu0 %2210, %v436
        %v2212 = vpop.permute.xlu0 %2211
        %2214 = vset.pattern.permute.xlu0 2
        %2215 = vperm.xlu0 %2214, %v437
        %v2216 = vpop.permute.xlu0 %2215
        %2218 = vset.pattern.permute.xlu0 2
        %2219 = vperm.xlu0 %2218, %v438
        %v2220 = vpop.permute.xlu0 %2219
        %2222 = vset.pattern.permute.xlu0 2
        %2223 = vperm.xlu0 %2222, %v439
        %v2224 = vpop.permute.xlu0 %2223
        %2226 = vset.pattern.permute.xlu0 2
        %2227 = vperm.xlu0 %2226, %v440
        %v2228 = vpop.permute.xlu0 %2227
        %2230 = vset.pattern.permute.xlu0 2
        %2231 = vperm.xlu0 %2230, %v441
        %v2232 = vpop.permute.xlu0 %2231
        %2234 = vset.pattern.permute.xlu0 2
        %2235 = vperm.xlu0 %2234, %v442
        %v2236 = vpop.permute.xlu0 %2235
        %2238 = vset.pattern.permute.xlu0 2
        %2239 = vperm.xlu0 %2238, %v443
        %v2240 = vpop.permute.xlu0 %2239
        %2242 = vset.pattern.permute.xlu0 2
        %2243 = vperm.xlu0 %2242, %v444
        %v2244 = vpop.permute.xlu0 %2243
        %2246 = vset.pattern.permute.xlu0 2
        %2247 = vperm.xlu0 %2246, %v445
        %v2248 = vpop.permute.xlu0 %2247
        %2250 = vset.pattern.permute.xlu0 2
        %2251 = vperm.xlu0 %2250, %v446
        %v2252 = vpop.permute.xlu0 %2251
        %2254 = vset.pattern.permute.xlu0 2
        %2255 = vperm.xlu0 %2254, %v447
        %v2256 = vpop.permute.xlu0 %2255
        %2258 = vset.pattern.permute.xlu0 2
        %2259 = vperm.xlu0 %2258, %v448
        %v2260 = vpop.permute.xlu0 %2259
        %2262 = vset.pattern.permute.xlu0 2
        %2263 = vperm.xlu0 %2262, %v449
        %v2264 = vpop.permute.xlu0 %2263
        %2266 = vset.pattern.permute.xlu0 2
        %2267 = vperm.xlu0 %2266, %v450
        %v2268 = vpop.permute.xlu0 %2267
        %2270 = vset.pattern.permute.xlu0 2
        %2271 = vperm.xlu0 %2270, %v451
        %v2272 = vpop.permute.xlu0 %2271
        %2274 = vset.pattern.permute.xlu0 2
        %2275 = vperm.xlu0 %2274, %v452
        %v2276 = vpop.permute.xlu0 %2275
        %2278 = vset.pattern.permute.xlu0 2
        %2279 = vperm.xlu0 %2278, %v453
        %v2280 = vpop.permute.xlu0 %2279
        %2282 = vset.pattern.permute.xlu0 2
        %2283 = vperm.xlu0 %2282, %v454
        %v2284 = vpop.permute.xlu0 %2283
        %2286 = vset.pattern.permute.xlu0 2
        %2287 = vperm.xlu0 %2286, %v455
        %v2288 = vpop.permute.xlu0 %2287
        %2290 = vset.pattern.permute.xlu0 2
        %2291 = vperm.xlu0 %2290, %v456
        %v2292 = vpop.permute.xlu0 %2291
        %2294 = vset.pattern.permute.xlu0 2
        %2295 = vperm.xlu0 %2294, %v457
        %v2296 = vpop.permute.xlu0 %2295
        %2298 = vset.pattern.permute.xlu0 2
        %2299 = vperm.xlu0 %2298, %v458
        %v2300 = vpop.permute.xlu0 %2299
        %2302 = vset.pattern.permute.xlu0 2
        %2303 = vperm.xlu0 %2302, %v459
        %v2304 = vpop.permute.xlu0 %2303
        %2306 = vset.pattern.permute.xlu0 2
        %2307 = vperm.xlu0 %2306, %v460
        %v2308 = vpop.permute.xlu0 %2307
        %2310 = vset.pattern.permute.xlu0 2
        %2311 = vperm.xlu0 %2310, %v461
        %v2312 = vpop.permute.xlu0 %2311
        %2314 = vset.pattern.permute.xlu0 2
        %2315 = vperm.xlu0 %2314, %v462
        %v2316 = vpop.permute.xlu0 %2315
        %2318 = vset.pattern.permute.xlu0 2
        %2319 = vperm.xlu0 %2318, %v463
        %v2320 = vpop.permute.xlu0 %2319
        %2322 = vset.pattern.permute.xlu0 2
        %2323 = vperm.xlu0 %2322, %v464
        %v2324 = vpop.permute.xlu0 %2323
        %2326 = vset.pattern.permute.xlu0 2
        %2327 = vperm.xlu0 %2326, %v465
        %v2328 = vpop.permute.xlu0 %2327
        %2330 = vset.pattern.permute.xlu0 2
        %2331 = vperm.xlu0 %2330, %v466
        %v2332 = vpop.permute.xlu0 %2331
        %2334 = vset.pattern.permute.xlu0 2
        %2335 = vperm.xlu0 %2334, %v467
        %v2336 = vpop.permute.xlu0 %2335
        %2338 = vset.pattern.permute.xlu0 2
        %2339 = vperm.xlu0 %2338, %v468
        %v2340 = vpop.permute.xlu0 %2339
        %2342 = vset.pattern.permute.xlu0 2
        %2343 = vperm.xlu0 %2342, %v469
        %v2344 = vpop.permute.xlu0 %2343
        %2346 = vset.pattern.permute.xlu0 2
        %2347 = vperm.xlu0 %2346, %v470
        %v2348 = vpop.permute.xlu0 %2347
        %2350 = vset.pattern.permute.xlu0 2
        %2351 = vperm.xlu0 %2350, %v471
        %v2352 = vpop.permute.xlu0 %2351
        %2354 = vset.pattern.permute.xlu0 2
        %2355 = vperm.xlu0 %2354, %v472
        %v2356 = vpop.permute.xlu0 %2355
        %2358 = vset.pattern.permute.xlu0 2
        %2359 = vperm.xlu0 %2358, %v473
        %v2360 = vpop.permute.xlu0 %2359
        %2362 = vset.pattern.permute.xlu0 2
        %2363 = vperm.xlu0 %2362, %v474
        %v2364 = vpop.permute.xlu0 %2363
        %2366 = vset.pattern.permute.xlu0 2
        %2367 = vperm.xlu0 %2366, %v475
        %v2368 = vpop.permute.xlu0 %2367
        %2370 = vset.pattern.permute.xlu0 2
        %2371 = vperm.xlu0 %2370, %v476
        %v2372 = vpop.permute.xlu0 %2371
        %2374 = vset.pattern.permute.xlu0 2
        %2375 = vperm.xlu0 %2374, %v477
        %v2376 = vpop.permute.xlu0 %2375
        %2378 = vset.pattern.permute.xlu0 2
        %2379 = vperm.xlu0 %2378, %v478
        %v2380 = vpop.permute.xlu0 %2379
        %2382 = vset.pattern.permute.xlu0 2
        %2383 = vperm.xlu0 %2382, %v479
        %v2384 = vpop.permute.xlu0 %2383
        %2386 = vset.pattern.permute.xlu0 2
        %2387 = vperm.xlu0 %2386, %v480
        %v2388 = vpop.permute.xlu0 %2387
        %2390 = vset.pattern.permute.xlu0 2
        %2391 = vperm.xlu0 %2390, %v481
        %v2392 = vpop.permute.xlu0 %2391
        %2394 = vset.pattern.permute.xlu0 2
        %2395 = vperm.xlu0 %2394, %v482
        %v2396 = vpop.permute.xlu0 %2395
        %2398 = vset.pattern.permute.xlu0 2
        %2399 = vperm.xlu0 %2398, %v483
        %v2400 = vpop.permute.xlu0 %2399
        %2402 = vset.pattern.permute.xlu0 2
        %2403 = vperm.xlu0 %2402, %v484
        %v2404 = vpop.permute.xlu0 %2403
        %2406 = vset.pattern.permute.xlu0 2
        %2407 = vperm.xlu0 %2406, %v485
        %v2408 = vpop.permute.xlu0 %2407
        %2410 = vset.pattern.permute.xlu0 2
        %2411 = vperm.xlu0 %2410, %v486
        %v2412 = vpop.permute.xlu0 %2411
        %2414 = vset.pattern.permute.xlu0 2
        %2415 = vperm.xlu0 %2414, %v487
        %v2416 = vpop.permute.xlu0 %2415
        %2418 = vset.pattern.permute.xlu0 2
        %2419 = vperm.xlu0 %2418, %v488
        %v2420 = vpop.permute.xlu0 %2419
        %2422 = vset.pattern.permute.xlu0 2
        %2423 = vperm.xlu0 %2422, %v489
        %v2424 = vpop.permute.xlu0 %2423
        %2426 = vset.pattern.permute.xlu0 2
        %2427 = vperm.xlu0 %2426, %v490
        %v2428 = vpop.permute.xlu0 %2427
        %2430 = vset.pattern.permute.xlu0 2
        %2431 = vperm.xlu0 %2430, %v491
        %v2432 = vpop.permute.xlu0 %2431
        %2434 = vset.pattern.permute.xlu0 2
        %2435 = vperm.xlu0 %2434, %v492
        %v2436 = vpop.permute.xlu0 %2435
        %2438 = vset.pattern.permute.xlu0 2
        %2439 = vperm.xlu0 %2438, %v493
        %v2440 = vpop.permute.xlu0 %2439
        %2442 = vset.pattern.permute.xlu0 2
        %2443 = vperm.xlu0 %2442, %v494
        %v2444 = vpop.permute.xlu0 %2443
        %2446 = vset.pattern.permute.xlu0 2
        %2447 = vperm.xlu0 %2446, %v495
        %v2448 = vpop.permute.xlu0 %2447
        %2450 = vset.pattern.permute.xlu0 2
        %2451 = vperm.xlu0 %2450, %v496
        %v2452 = vpop.permute.xlu0 %2451
        %2454 = vset.pattern.permute.xlu0 2
        %2455 = vperm.xlu0 %2454, %v497
        %v2456 = vpop.permute.xlu0 %2455
        %2458 = vset.pattern.permute.xlu0 2
        %2459 = vperm.xlu0 %2458, %v498
        %v2460 = vpop.permute.xlu0 %2459
        %2462 = vset.pattern.permute.xlu0 2
        %2463 = vperm.xlu0 %2462, %v499
        %v2464 = vpop.permute.xlu0 %2463
        %2466 = vset.pattern.permute.xlu0 2
        %2467 = vperm.xlu0 %2466, %v500
        %v2468 = vpop.permute.xlu0 %2467
        %2470 = vset.pattern.permute.xlu0 2
        %2471 = vperm.xlu0 %2470, %v501
        %v2472 = vpop.permute.xlu0 %2471
        %2474 = vset.pattern.permute.xlu0 2
        %2475 = vperm.xlu0 %2474, %v502
        %v2476 = vpop.permute.xlu0 %2475
        %2478 = vset.pattern.permute.xlu0 2
        %2479 = vperm.xlu0 %2478, %v503
        %v2480 = vpop.permute.xlu0 %2479
        %2482 = vset.pattern.permute.xlu0 2
        %2483 = vperm.xlu0 %2482, %v504
        %v2484 = vpop.permute.xlu0 %2483
        %2486 = vset.pattern.permute.xlu0 2
        %2487 = vperm.xlu0 %2486, %v505
        %v2488 = vpop.permute.xlu0 %2487
        %2490 = vset.pattern.permute.xlu0 2
        %2491 = vperm.xlu0 %2490, %v506
        %v2492 = vpop.permute.xlu0 %2491
        %2494 = vset.pattern.permute.xlu0 2
        %2495 = vperm.xlu0 %2494, %v507
        %v2496 = vpop.permute.xlu0 %2495
        %2498 = vset.pattern.permute.xlu0 2
        %2499 = vperm.xlu0 %2498, %v508
        %v2500 = vpop.permute.xlu0 %2499
        %2502 = vset.pattern.permute.xlu0 2
        %2503 = vperm.xlu0 %2502, %v509
        %v2504 = vpop.permute.xlu0 %2503
        %2506 = vset.pattern.permute.xlu0 2
        %2507 = vperm.xlu0 %2506, %v510
        %v2508 = vpop.permute.xlu0 %2507
        %2510 = vset.pattern.permute.xlu0 2
        %2511 = vperm.xlu0 %2510, %v511
        %v2512 = vpop.permute.xlu0 %2511
        %2514 = vset.pattern.permute.xlu0 2
        %2515 = vperm.xlu0 %2514, %v512
        %v2516 = vpop.permute.xlu0 %2515
        %2518 = vset.pattern.permute.xlu0 2
        %2519 = vperm.xlu0 %2518, %v513
        %v2520 = vpop.permute.xlu0 %2519
        %2522 = vset.pattern.permute.xlu0 2
        %2523 = vperm.xlu0 %2522, %v514
        %v2524 = vpop.permute.xlu0 %2523
        %2526 = vset.pattern.permute.xlu0 2
        %2527 = vperm.xlu0 %2526, %v515
        %v2528 = vpop.permute.xlu0 %2527
        %2530 = vset.pattern.permute.xlu0 2
        %2531 = vperm.xlu0 %2530, %v516
        %v2532 = vpop.permute.xlu0 %2531
        %2534 = vset.pattern.permute.xlu0 2
        %2535 = vperm.xlu0 %2534, %v517
        %v2536 = vpop.permute.xlu0 %2535
        %2538 = vset.pattern.permute.xlu0 2
        %2539 = vperm.xlu0 %2538, %v518
        %v2540 = vpop.permute.xlu0 %2539
        %2542 = vset.pattern.permute.xlu0 2
        %2543 = vperm.xlu0 %2542, %v519
        %v2544 = vpop.permute.xlu0 %2543
        %2546 = vset.pattern.permute.xlu0 2
        %2547 = vperm.xlu0 %2546, %v520
        %v2548 = vpop.permute.xlu0 %2547
        %2550 = vset.pattern.permute.xlu0 2
        %2551 = vperm.xlu0 %2550, %v521
        %v2552 = vpop.permute.xlu0 %2551
        %2554 = vset.pattern.permute.xlu0 2
        %2555 = vperm.xlu0 %2554, %v522
        %v2556 = vpop.permute.xlu0 %2555
        %2558 = vset.pattern.permute.xlu0 2
        %2559 = vperm.xlu0 %2558, %v523
        %v2560 = vpop.permute.xlu0 %2559
        %2562 = vset.pattern.permute.xlu0 2
        %2563 = vperm.xlu0 %2562, %v524
        %v2564 = vpop.permute.xlu0 %2563
        %2566 = vset.pattern.permute.xlu0 2
        %2567 = vperm.xlu0 %2566, %v525
        %v2568 = vpop.permute.xlu0 %2567
        %2570 = vset.pattern.permute.xlu0 2
        %2571 = vperm.xlu0 %2570, %v526
        %v2572 = vpop.permute.xlu0 %2571
        %2574 = vset.pattern.permute.xlu0 2
        %2575 = vperm.xlu0 %2574, %v527
        %v2576 = vpop.permute.xlu0 %2575
        %2578 = vset.pattern.permute.xlu0 2
        %2579 = vperm.xlu0 %2578, %v528
        %v2580 = vpop.permute.xlu0 %2579
        %2582 = vset.pattern.permute.xlu0 2
        %2583 = vperm.xlu0 %2582, %v529
        %v2584 = vpop.permute.xlu0 %2583
        %v2586 = vlaneseq
        %v2587 = vshrl.u32 %v2586, 7
        %v2588 = vsub.s32 2, %v2587
        %v2589 = vrot.slane %v273, %v2588
        %v2590 = vmul.f32 %v2076, %v2589
        %v2591 = vmul.f32 %v2080, %v2589
        %v2592 = vmul.f32 %v2084, %v2589
        %v2593 = vmul.f32 %v2088, %v2589
        %v2594 = vmul.f32 %v2092, %v2589
        %v2595 = vmul.f32 %v2096, %v2589
        %v2596 = vmul.f32 %v2100, %v2589
        %v2597 = vmul.f32 %v2104, %v2589
        %v2598 = vmul.f32 %v2108, %v2589
        %v2599 = vmul.f32 %v2112, %v2589
        %v2600 = vmul.f32 %v2116, %v2589
        %v2601 = vmul.f32 %v2120, %v2589
        %v2602 = vmul.f32 %v2124, %v2589
        %v2603 = vmul.f32 %v2128, %v2589
        %v2604 = vmul.f32 %v2132, %v2589
        %v2605 = vmul.f32 %v2136, %v2589
        %v2606 = vmul.f32 %v2140, %v2589
        %v2607 = vmul.f32 %v2144, %v2589
        %v2608 = vmul.f32 %v2148, %v2589
        %v2609 = vmul.f32 %v2152, %v2589
        %v2610 = vmul.f32 %v2156, %v2589
        %v2611 = vmul.f32 %v2160, %v2589
        %v2612 = vmul.f32 %v2164, %v2589
        %v2613 = vmul.f32 %v2168, %v2589
        %v2614 = vmul.f32 %v2172, %v2589
        %v2615 = vmul.f32 %v2176, %v2589
        %v2616 = vmul.f32 %v2180, %v2589
        %v2617 = vmul.f32 %v2184, %v2589
        %v2618 = vmul.f32 %v2188, %v2589
        %v2619 = vmul.f32 %v2192, %v2589
        %v2620 = vmul.f32 %v2196, %v2589
        %v2621 = vmul.f32 %v2200, %v2589
        %v2622 = vmul.f32 %v2204, %v2589
        %v2623 = vmul.f32 %v2208, %v2589
        %v2624 = vmul.f32 %v2212, %v2589
        %v2625 = vmul.f32 %v2216, %v2589
        %v2626 = vmul.f32 %v2220, %v2589
        %v2627 = vmul.f32 %v2224, %v2589
        %v2628 = vmul.f32 %v2228, %v2589
        %v2629 = vmul.f32 %v2232, %v2589
        %v2630 = vmul.f32 %v2236, %v2589
        %v2631 = vmul.f32 %v2240, %v2589
        %v2632 = vmul.f32 %v2244, %v2589
        %v2633 = vmul.f32 %v2248, %v2589
        %v2634 = vmul.f32 %v2252, %v2589
        %v2635 = vmul.f32 %v2256, %v2589
        %v2636 = vmul.f32 %v2260, %v2589
        %v2637 = vmul.f32 %v2264, %v2589
        %v2638 = vmul.f32 %v2268, %v2589
        %v2639 = vmul.f32 %v2272, %v2589
        %v2640 = vmul.f32 %v2276, %v2589
        %v2641 = vmul.f32 %v2280, %v2589
        %v2642 = vmul.f32 %v2284, %v2589
        %v2643 = vmul.f32 %v2288, %v2589
        %v2644 = vmul.f32 %v2292, %v2589
        %v2645 = vmul.f32 %v2296, %v2589
        %v2646 = vmul.f32 %v2300, %v2589
        %v2647 = vmul.f32 %v2304, %v2589
        %v2648 = vmul.f32 %v2308, %v2589
        %v2649 = vmul.f32 %v2312, %v2589
        %v2650 = vmul.f32 %v2316, %v2589
        %v2651 = vmul.f32 %v2320, %v2589
        %v2652 = vmul.f32 %v2324, %v2589
        %v2653 = vmul.f32 %v2328, %v2589
        %v2654 = vmul.f32 %v2332, %v2589
        %v2655 = vmul.f32 %v2336, %v2589
        %v2656 = vmul.f32 %v2340, %v2589
        %v2657 = vmul.f32 %v2344, %v2589
        %v2658 = vmul.f32 %v2348, %v2589
        %v2659 = vmul.f32 %v2352, %v2589
        %v2660 = vmul.f32 %v2356, %v2589
        %v2661 = vmul.f32 %v2360, %v2589
        %v2662 = vmul.f32 %v2364, %v2589
        %v2663 = vmul.f32 %v2368, %v2589
        %v2664 = vmul.f32 %v2372, %v2589
        %v2665 = vmul.f32 %v2376, %v2589
        %v2666 = vmul.f32 %v2380, %v2589
        %v2667 = vmul.f32 %v2384, %v2589
        %v2668 = vmul.f32 %v2388, %v2589
        %v2669 = vmul.f32 %v2392, %v2589
        %v2670 = vmul.f32 %v2396, %v2589
        %v2671 = vmul.f32 %v2400, %v2589
        %v2672 = vmul.f32 %v2404, %v2589
        %v2673 = vmul.f32 %v2408, %v2589
        %v2674 = vmul.f32 %v2412, %v2589
        %v2675 = vmul.f32 %v2416, %v2589
        %v2676 = vmul.f32 %v2420, %v2589
        %v2677 = vmul.f32 %v2424, %v2589
        %v2678 = vmul.f32 %v2428, %v2589
        %v2679 = vmul.f32 %v2432, %v2589
        %v2680 = vmul.f32 %v2436, %v2589
        %v2681 = vmul.f32 %v2440, %v2589
        %v2682 = vmul.f32 %v2444, %v2589
        %v2683 = vmul.f32 %v2448, %v2589
        %v2684 = vmul.f32 %v2452, %v2589
        %v2685 = vmul.f32 %v2456, %v2589
        %v2686 = vmul.f32 %v2460, %v2589
        %v2687 = vmul.f32 %v2464, %v2589
        %v2688 = vmul.f32 %v2468, %v2589
        %v2689 = vmul.f32 %v2472, %v2589
        %v2690 = vmul.f32 %v2476, %v2589
        %v2691 = vmul.f32 %v2480, %v2589
        %v2692 = vmul.f32 %v2484, %v2589
        %v2693 = vmul.f32 %v2488, %v2589
        %v2694 = vmul.f32 %v2492, %v2589
        %v2695 = vmul.f32 %v2496, %v2589
        %v2696 = vmul.f32 %v2500, %v2589
        %v2697 = vmul.f32 %v2504, %v2589
        %v2698 = vmul.f32 %v2508, %v2589
        %v2699 = vmul.f32 %v2512, %v2589
        %v2700 = vmul.f32 %v2516, %v2589
        %v2701 = vmul.f32 %v2520, %v2589
        %v2702 = vmul.f32 %v2524, %v2589
        %v2703 = vmul.f32 %v2528, %v2589
        %v2704 = vmul.f32 %v2532, %v2589
        %v2705 = vmul.f32 %v2536, %v2589
        %v2706 = vmul.f32 %v2540, %v2589
        %v2707 = vmul.f32 %v2544, %v2589
        %v2708 = vmul.f32 %v2548, %v2589
        %v2709 = vmul.f32 %v2552, %v2589
        %v2710 = vmul.f32 %v2556, %v2589
        %v2711 = vmul.f32 %v2560, %v2589
        %v2712 = vmul.f32 %v2564, %v2589
        %v2713 = vmul.f32 %v2568, %v2589
        %v2714 = vmul.f32 %v2572, %v2589
        %v2715 = vmul.f32 %v2576, %v2589
        %v2716 = vmul.f32 %v2580, %v2589
        %v2717 = vmul.f32 %v2584, %v2589
        %v2718 = vadd.f32 %v1946, %v2590
        %v2719 = vadd.f32 %v1947, %v2591
        %v2720 = vadd.f32 %v1948, %v2592
        %v2721 = vadd.f32 %v1949, %v2593
        %v2722 = vadd.f32 %v1950, %v2594
        %v2723 = vadd.f32 %v1951, %v2595
        %v2724 = vadd.f32 %v1952, %v2596
        %v2725 = vadd.f32 %v1953, %v2597
        %v2726 = vadd.f32 %v1954, %v2598
        %v2727 = vadd.f32 %v1955, %v2599
        %v2728 = vadd.f32 %v1956, %v2600
        %v2729 = vadd.f32 %v1957, %v2601
        %v2730 = vadd.f32 %v1958, %v2602
        %v2731 = vadd.f32 %v1959, %v2603
        %v2732 = vadd.f32 %v1960, %v2604
        %v2733 = vadd.f32 %v1961, %v2605
        %v2734 = vadd.f32 %v1962, %v2606
        %v2735 = vadd.f32 %v1963, %v2607
        %v2736 = vadd.f32 %v1964, %v2608
        %v2737 = vadd.f32 %v1965, %v2609
        %v2738 = vadd.f32 %v1966, %v2610
        %v2739 = vadd.f32 %v1967, %v2611
        %v2740 = vadd.f32 %v1968, %v2612
        %v2741 = vadd.f32 %v1969, %v2613
        %v2742 = vadd.f32 %v1970, %v2614
        %v2743 = vadd.f32 %v1971, %v2615
        %v2744 = vadd.f32 %v1972, %v2616
        %v2745 = vadd.f32 %v1973, %v2617
        %v2746 = vadd.f32 %v1974, %v2618
        %v2747 = vadd.f32 %v1975, %v2619
        %v2748 = vadd.f32 %v1976, %v2620
        %v2749 = vadd.f32 %v1977, %v2621
        %v2750 = vadd.f32 %v1978, %v2622
        %v2751 = vadd.f32 %v1979, %v2623
        %v2752 = vadd.f32 %v1980, %v2624
        %v2753 = vadd.f32 %v1981, %v2625
        %v2754 = vadd.f32 %v1982, %v2626
        %v2755 = vadd.f32 %v1983, %v2627
        %v2756 = vadd.f32 %v1984, %v2628
        %v2757 = vadd.f32 %v1985, %v2629
        %v2758 = vadd.f32 %v1986, %v2630
        %v2759 = vadd.f32 %v1987, %v2631
        %v2760 = vadd.f32 %v1988, %v2632
        %v2761 = vadd.f32 %v1989, %v2633
        %v2762 = vadd.f32 %v1990, %v2634
        %v2763 = vadd.f32 %v1991, %v2635
        %v2764 = vadd.f32 %v1992, %v2636
        %v2765 = vadd.f32 %v1993, %v2637
        %v2766 = vadd.f32 %v1994, %v2638
        %v2767 = vadd.f32 %v1995, %v2639
        %v2768 = vadd.f32 %v1996, %v2640
        %v2769 = vadd.f32 %v1997, %v2641
        %v2770 = vadd.f32 %v1998, %v2642
        %v2771 = vadd.f32 %v1999, %v2643
        %v2772 = vadd.f32 %v2000, %v2644
        %v2773 = vadd.f32 %v2001, %v2645
        %v2774 = vadd.f32 %v2002, %v2646
        %v2775 = vadd.f32 %v2003, %v2647
        %v2776 = vadd.f32 %v2004, %v2648
        %v2777 = vadd.f32 %v2005, %v2649
        %v2778 = vadd.f32 %v2006, %v2650
        %v2779 = vadd.f32 %v2007, %v2651
        %v2780 = vadd.f32 %v2008, %v2652
        %v2781 = vadd.f32 %v2009, %v2653
        %v2782 = vadd.f32 %v2010, %v2654
        %v2783 = vadd.f32 %v2011, %v2655
        %v2784 = vadd.f32 %v2012, %v2656
        %v2785 = vadd.f32 %v2013, %v2657
        %v2786 = vadd.f32 %v2014, %v2658
        %v2787 = vadd.f32 %v2015, %v2659
        %v2788 = vadd.f32 %v2016, %v2660
        %v2789 = vadd.f32 %v2017, %v2661
        %v2790 = vadd.f32 %v2018, %v2662
        %v2791 = vadd.f32 %v2019, %v2663
        %v2792 = vadd.f32 %v2020, %v2664
        %v2793 = vadd.f32 %v2021, %v2665
        %v2794 = vadd.f32 %v2022, %v2666
        %v2795 = vadd.f32 %v2023, %v2667
        %v2796 = vadd.f32 %v2024, %v2668
        %v2797 = vadd.f32 %v2025, %v2669
        %v2798 = vadd.f32 %v2026, %v2670
        %v2799 = vadd.f32 %v2027, %v2671
        %v2800 = vadd.f32 %v2028, %v2672
        %v2801 = vadd.f32 %v2029, %v2673
        %v2802 = vadd.f32 %v2030, %v2674
        %v2803 = vadd.f32 %v2031, %v2675
        %v2804 = vadd.f32 %v2032, %v2676
        %v2805 = vadd.f32 %v2033, %v2677
        %v2806 = vadd.f32 %v2034, %v2678
        %v2807 = vadd.f32 %v2035, %v2679
        %v2808 = vadd.f32 %v2036, %v2680
        %v2809 = vadd.f32 %v2037, %v2681
        %v2810 = vadd.f32 %v2038, %v2682
        %v2811 = vadd.f32 %v2039, %v2683
        %v2812 = vadd.f32 %v2040, %v2684
        %v2813 = vadd.f32 %v2041, %v2685
        %v2814 = vadd.f32 %v2042, %v2686
        %v2815 = vadd.f32 %v2043, %v2687
        %v2816 = vadd.f32 %v2044, %v2688
        %v2817 = vadd.f32 %v2045, %v2689
        %v2818 = vadd.f32 %v2046, %v2690
        %v2819 = vadd.f32 %v2047, %v2691
        %v2820 = vadd.f32 %v2048, %v2692
        %v2821 = vadd.f32 %v2049, %v2693
        %v2822 = vadd.f32 %v2050, %v2694
        %v2823 = vadd.f32 %v2051, %v2695
        %v2824 = vadd.f32 %v2052, %v2696
        %v2825 = vadd.f32 %v2053, %v2697
        %v2826 = vadd.f32 %v2054, %v2698
        %v2827 = vadd.f32 %v2055, %v2699
        %v2828 = vadd.f32 %v2056, %v2700
        %v2829 = vadd.f32 %v2057, %v2701
        %v2830 = vadd.f32 %v2058, %v2702
        %v2831 = vadd.f32 %v2059, %v2703
        %v2832 = vadd.f32 %v2060, %v2704
        %v2833 = vadd.f32 %v2061, %v2705
        %v2834 = vadd.f32 %v2062, %v2706
        %v2835 = vadd.f32 %v2063, %v2707
        %v2836 = vadd.f32 %v2064, %v2708
        %v2837 = vadd.f32 %v2065, %v2709
        %v2838 = vadd.f32 %v2066, %v2710
        %v2839 = vadd.f32 %v2067, %v2711
        %v2840 = vadd.f32 %v2068, %v2712
        %v2841 = vadd.f32 %v2069, %v2713
        %v2842 = vadd.f32 %v2070, %v2714
        %v2843 = vadd.f32 %v2071, %v2715
        %v2844 = vadd.f32 %v2072, %v2716
        %v2845 = vadd.f32 %v2073, %v2717
        %2846 = vset.pattern.permute.xlu0 3
        %2847 = vperm.xlu0 %2846, %v402
        %v2848 = vpop.permute.xlu0 %2847
        %2850 = vset.pattern.permute.xlu0 3
        %2851 = vperm.xlu0 %2850, %v403
        %v2852 = vpop.permute.xlu0 %2851
        %2854 = vset.pattern.permute.xlu0 3
        %2855 = vperm.xlu0 %2854, %v404
        %v2856 = vpop.permute.xlu0 %2855
        %2858 = vset.pattern.permute.xlu0 3
        %2859 = vperm.xlu0 %2858, %v405
        %v2860 = vpop.permute.xlu0 %2859
        %2862 = vset.pattern.permute.xlu0 3
        %2863 = vperm.xlu0 %2862, %v406
        %v2864 = vpop.permute.xlu0 %2863
        %2866 = vset.pattern.permute.xlu0 3
        %2867 = vperm.xlu0 %2866, %v407
        %v2868 = vpop.permute.xlu0 %2867
        %2870 = vset.pattern.permute.xlu0 3
        %2871 = vperm.xlu0 %2870, %v408
        %v2872 = vpop.permute.xlu0 %2871
        %2874 = vset.pattern.permute.xlu0 3
        %2875 = vperm.xlu0 %2874, %v409
        %v2876 = vpop.permute.xlu0 %2875
        %2878 = vset.pattern.permute.xlu0 3
        %2879 = vperm.xlu0 %2878, %v410
        %v2880 = vpop.permute.xlu0 %2879
        %2882 = vset.pattern.permute.xlu0 3
        %2883 = vperm.xlu0 %2882, %v411
        %v2884 = vpop.permute.xlu0 %2883
        %2886 = vset.pattern.permute.xlu0 3
        %2887 = vperm.xlu0 %2886, %v412
        %v2888 = vpop.permute.xlu0 %2887
        %2890 = vset.pattern.permute.xlu0 3
        %2891 = vperm.xlu0 %2890, %v413
        %v2892 = vpop.permute.xlu0 %2891
        %2894 = vset.pattern.permute.xlu0 3
        %2895 = vperm.xlu0 %2894, %v414
        %v2896 = vpop.permute.xlu0 %2895
        %2898 = vset.pattern.permute.xlu0 3
        %2899 = vperm.xlu0 %2898, %v415
        %v2900 = vpop.permute.xlu0 %2899
        %2902 = vset.pattern.permute.xlu0 3
        %2903 = vperm.xlu0 %2902, %v416
        %v2904 = vpop.permute.xlu0 %2903
        %2906 = vset.pattern.permute.xlu0 3
        %2907 = vperm.xlu0 %2906, %v417
        %v2908 = vpop.permute.xlu0 %2907
        %2910 = vset.pattern.permute.xlu0 3
        %2911 = vperm.xlu0 %2910, %v418
        %v2912 = vpop.permute.xlu0 %2911
        %2914 = vset.pattern.permute.xlu0 3
        %2915 = vperm.xlu0 %2914, %v419
        %v2916 = vpop.permute.xlu0 %2915
        %2918 = vset.pattern.permute.xlu0 3
        %2919 = vperm.xlu0 %2918, %v420
        %v2920 = vpop.permute.xlu0 %2919
        %2922 = vset.pattern.permute.xlu0 3
        %2923 = vperm.xlu0 %2922, %v421
        %v2924 = vpop.permute.xlu0 %2923
        %2926 = vset.pattern.permute.xlu0 3
        %2927 = vperm.xlu0 %2926, %v422
        %v2928 = vpop.permute.xlu0 %2927
        %2930 = vset.pattern.permute.xlu0 3
        %2931 = vperm.xlu0 %2930, %v423
        %v2932 = vpop.permute.xlu0 %2931
        %2934 = vset.pattern.permute.xlu0 3
        %2935 = vperm.xlu0 %2934, %v424
        %v2936 = vpop.permute.xlu0 %2935
        %2938 = vset.pattern.permute.xlu0 3
        %2939 = vperm.xlu0 %2938, %v425
        %v2940 = vpop.permute.xlu0 %2939
        %2942 = vset.pattern.permute.xlu0 3
        %2943 = vperm.xlu0 %2942, %v426
        %v2944 = vpop.permute.xlu0 %2943
        %2946 = vset.pattern.permute.xlu0 3
        %2947 = vperm.xlu0 %2946, %v427
        %v2948 = vpop.permute.xlu0 %2947
        %2950 = vset.pattern.permute.xlu0 3
        %2951 = vperm.xlu0 %2950, %v428
        %v2952 = vpop.permute.xlu0 %2951
        %2954 = vset.pattern.permute.xlu0 3
        %2955 = vperm.xlu0 %2954, %v429
        %v2956 = vpop.permute.xlu0 %2955
        %2958 = vset.pattern.permute.xlu0 3
        %2959 = vperm.xlu0 %2958, %v430
        %v2960 = vpop.permute.xlu0 %2959
        %2962 = vset.pattern.permute.xlu0 3
        %2963 = vperm.xlu0 %2962, %v431
        %v2964 = vpop.permute.xlu0 %2963
        %2966 = vset.pattern.permute.xlu0 3
        %2967 = vperm.xlu0 %2966, %v432
        %v2968 = vpop.permute.xlu0 %2967
        %2970 = vset.pattern.permute.xlu0 3
        %2971 = vperm.xlu0 %2970, %v433
        %v2972 = vpop.permute.xlu0 %2971
        %2974 = vset.pattern.permute.xlu0 3
        %2975 = vperm.xlu0 %2974, %v434
        %v2976 = vpop.permute.xlu0 %2975
        %2978 = vset.pattern.permute.xlu0 3
        %2979 = vperm.xlu0 %2978, %v435
        %v2980 = vpop.permute.xlu0 %2979
        %2982 = vset.pattern.permute.xlu0 3
        %2983 = vperm.xlu0 %2982, %v436
        %v2984 = vpop.permute.xlu0 %2983
        %2986 = vset.pattern.permute.xlu0 3
        %2987 = vperm.xlu0 %2986, %v437
        %v2988 = vpop.permute.xlu0 %2987
        %2990 = vset.pattern.permute.xlu0 3
        %2991 = vperm.xlu0 %2990, %v438
        %v2992 = vpop.permute.xlu0 %2991
        %2994 = vset.pattern.permute.xlu0 3
        %2995 = vperm.xlu0 %2994, %v439
        %v2996 = vpop.permute.xlu0 %2995
        %2998 = vset.pattern.permute.xlu0 3
        %2999 = vperm.xlu0 %2998, %v440
        %v3000 = vpop.permute.xlu0 %2999
        %3002 = vset.pattern.permute.xlu0 3
        %3003 = vperm.xlu0 %3002, %v441
        %v3004 = vpop.permute.xlu0 %3003
        %3006 = vset.pattern.permute.xlu0 3
        %3007 = vperm.xlu0 %3006, %v442
        %v3008 = vpop.permute.xlu0 %3007
        %3010 = vset.pattern.permute.xlu0 3
        %3011 = vperm.xlu0 %3010, %v443
        %v3012 = vpop.permute.xlu0 %3011
        %3014 = vset.pattern.permute.xlu0 3
        %3015 = vperm.xlu0 %3014, %v444
        %v3016 = vpop.permute.xlu0 %3015
        %3018 = vset.pattern.permute.xlu0 3
        %3019 = vperm.xlu0 %3018, %v445
        %v3020 = vpop.permute.xlu0 %3019
        %3022 = vset.pattern.permute.xlu0 3
        %3023 = vperm.xlu0 %3022, %v446
        %v3024 = vpop.permute.xlu0 %3023
        %3026 = vset.pattern.permute.xlu0 3
        %3027 = vperm.xlu0 %3026, %v447
        %v3028 = vpop.permute.xlu0 %3027
        %3030 = vset.pattern.permute.xlu0 3
        %3031 = vperm.xlu0 %3030, %v448
        %v3032 = vpop.permute.xlu0 %3031
        %3034 = vset.pattern.permute.xlu0 3
        %3035 = vperm.xlu0 %3034, %v449
        %v3036 = vpop.permute.xlu0 %3035
        %3038 = vset.pattern.permute.xlu0 3
        %3039 = vperm.xlu0 %3038, %v450
        %v3040 = vpop.permute.xlu0 %3039
        %3042 = vset.pattern.permute.xlu0 3
        %3043 = vperm.xlu0 %3042, %v451
        %v3044 = vpop.permute.xlu0 %3043
        %3046 = vset.pattern.permute.xlu0 3
        %3047 = vperm.xlu0 %3046, %v452
        %v3048 = vpop.permute.xlu0 %3047
        %3050 = vset.pattern.permute.xlu0 3
        %3051 = vperm.xlu0 %3050, %v453
        %v3052 = vpop.permute.xlu0 %3051
        %3054 = vset.pattern.permute.xlu0 3
        %3055 = vperm.xlu0 %3054, %v454
        %v3056 = vpop.permute.xlu0 %3055
        %3058 = vset.pattern.permute.xlu0 3
        %3059 = vperm.xlu0 %3058, %v455
        %v3060 = vpop.permute.xlu0 %3059
        %3062 = vset.pattern.permute.xlu0 3
        %3063 = vperm.xlu0 %3062, %v456
        %v3064 = vpop.permute.xlu0 %3063
        %3066 = vset.pattern.permute.xlu0 3
        %3067 = vperm.xlu0 %3066, %v457
        %v3068 = vpop.permute.xlu0 %3067
        %3070 = vset.pattern.permute.xlu0 3
        %3071 = vperm.xlu0 %3070, %v458
        %v3072 = vpop.permute.xlu0 %3071
        %3074 = vset.pattern.permute.xlu0 3
        %3075 = vperm.xlu0 %3074, %v459
        %v3076 = vpop.permute.xlu0 %3075
        %3078 = vset.pattern.permute.xlu0 3
        %3079 = vperm.xlu0 %3078, %v460
        %v3080 = vpop.permute.xlu0 %3079
        %3082 = vset.pattern.permute.xlu0 3
        %3083 = vperm.xlu0 %3082, %v461
        %v3084 = vpop.permute.xlu0 %3083
        %3086 = vset.pattern.permute.xlu0 3
        %3087 = vperm.xlu0 %3086, %v462
        %v3088 = vpop.permute.xlu0 %3087
        %3090 = vset.pattern.permute.xlu0 3
        %3091 = vperm.xlu0 %3090, %v463
        %v3092 = vpop.permute.xlu0 %3091
        %3094 = vset.pattern.permute.xlu0 3
        %3095 = vperm.xlu0 %3094, %v464
        %v3096 = vpop.permute.xlu0 %3095
        %3098 = vset.pattern.permute.xlu0 3
        %3099 = vperm.xlu0 %3098, %v465
        %v3100 = vpop.permute.xlu0 %3099
        %3102 = vset.pattern.permute.xlu0 3
        %3103 = vperm.xlu0 %3102, %v466
        %v3104 = vpop.permute.xlu0 %3103
        %3106 = vset.pattern.permute.xlu0 3
        %3107 = vperm.xlu0 %3106, %v467
        %v3108 = vpop.permute.xlu0 %3107
        %3110 = vset.pattern.permute.xlu0 3
        %3111 = vperm.xlu0 %3110, %v468
        %v3112 = vpop.permute.xlu0 %3111
        %3114 = vset.pattern.permute.xlu0 3
        %3115 = vperm.xlu0 %3114, %v469
        %v3116 = vpop.permute.xlu0 %3115
        %3118 = vset.pattern.permute.xlu0 3
        %3119 = vperm.xlu0 %3118, %v470
        %v3120 = vpop.permute.xlu0 %3119
        %3122 = vset.pattern.permute.xlu0 3
        %3123 = vperm.xlu0 %3122, %v471
        %v3124 = vpop.permute.xlu0 %3123
        %3126 = vset.pattern.permute.xlu0 3
        %3127 = vperm.xlu0 %3126, %v472
        %v3128 = vpop.permute.xlu0 %3127
        %3130 = vset.pattern.permute.xlu0 3
        %3131 = vperm.xlu0 %3130, %v473
        %v3132 = vpop.permute.xlu0 %3131
        %3134 = vset.pattern.permute.xlu0 3
        %3135 = vperm.xlu0 %3134, %v474
        %v3136 = vpop.permute.xlu0 %3135
        %3138 = vset.pattern.permute.xlu0 3
        %3139 = vperm.xlu0 %3138, %v475
        %v3140 = vpop.permute.xlu0 %3139
        %3142 = vset.pattern.permute.xlu0 3
        %3143 = vperm.xlu0 %3142, %v476
        %v3144 = vpop.permute.xlu0 %3143
        %3146 = vset.pattern.permute.xlu0 3
        %3147 = vperm.xlu0 %3146, %v477
        %v3148 = vpop.permute.xlu0 %3147
        %3150 = vset.pattern.permute.xlu0 3
        %3151 = vperm.xlu0 %3150, %v478
        %v3152 = vpop.permute.xlu0 %3151
        %3154 = vset.pattern.permute.xlu0 3
        %3155 = vperm.xlu0 %3154, %v479
        %v3156 = vpop.permute.xlu0 %3155
        %3158 = vset.pattern.permute.xlu0 3
        %3159 = vperm.xlu0 %3158, %v480
        %v3160 = vpop.permute.xlu0 %3159
        %3162 = vset.pattern.permute.xlu0 3
        %3163 = vperm.xlu0 %3162, %v481
        %v3164 = vpop.permute.xlu0 %3163
        %3166 = vset.pattern.permute.xlu0 3
        %3167 = vperm.xlu0 %3166, %v482
        %v3168 = vpop.permute.xlu0 %3167
        %3170 = vset.pattern.permute.xlu0 3
        %3171 = vperm.xlu0 %3170, %v483
        %v3172 = vpop.permute.xlu0 %3171
        %3174 = vset.pattern.permute.xlu0 3
        %3175 = vperm.xlu0 %3174, %v484
        %v3176 = vpop.permute.xlu0 %3175
        %3178 = vset.pattern.permute.xlu0 3
        %3179 = vperm.xlu0 %3178, %v485
        %v3180 = vpop.permute.xlu0 %3179
        %3182 = vset.pattern.permute.xlu0 3
        %3183 = vperm.xlu0 %3182, %v486
        %v3184 = vpop.permute.xlu0 %3183
        %3186 = vset.pattern.permute.xlu0 3
        %3187 = vperm.xlu0 %3186, %v487
        %v3188 = vpop.permute.xlu0 %3187
        %3190 = vset.pattern.permute.xlu0 3
        %3191 = vperm.xlu0 %3190, %v488
        %v3192 = vpop.permute.xlu0 %3191
        %3194 = vset.pattern.permute.xlu0 3
        %3195 = vperm.xlu0 %3194, %v489
        %v3196 = vpop.permute.xlu0 %3195
        %3198 = vset.pattern.permute.xlu0 3
        %3199 = vperm.xlu0 %3198, %v490
        %v3200 = vpop.permute.xlu0 %3199
        %3202 = vset.pattern.permute.xlu0 3
        %3203 = vperm.xlu0 %3202, %v491
        %v3204 = vpop.permute.xlu0 %3203
        %3206 = vset.pattern.permute.xlu0 3
        %3207 = vperm.xlu0 %3206, %v492
        %v3208 = vpop.permute.xlu0 %3207
        %3210 = vset.pattern.permute.xlu0 3
        %3211 = vperm.xlu0 %3210, %v493
        %v3212 = vpop.permute.xlu0 %3211
        %3214 = vset.pattern.permute.xlu0 3
        %3215 = vperm.xlu0 %3214, %v494
        %v3216 = vpop.permute.xlu0 %3215
        %3218 = vset.pattern.permute.xlu0 3
        %3219 = vperm.xlu0 %3218, %v495
        %v3220 = vpop.permute.xlu0 %3219
        %3222 = vset.pattern.permute.xlu0 3
        %3223 = vperm.xlu0 %3222, %v496
        %v3224 = vpop.permute.xlu0 %3223
        %3226 = vset.pattern.permute.xlu0 3
        %3227 = vperm.xlu0 %3226, %v497
        %v3228 = vpop.permute.xlu0 %3227
        %3230 = vset.pattern.permute.xlu0 3
        %3231 = vperm.xlu0 %3230, %v498
        %v3232 = vpop.permute.xlu0 %3231
        %3234 = vset.pattern.permute.xlu0 3
        %3235 = vperm.xlu0 %3234, %v499
        %v3236 = vpop.permute.xlu0 %3235
        %3238 = vset.pattern.permute.xlu0 3
        %3239 = vperm.xlu0 %3238, %v500
        %v3240 = vpop.permute.xlu0 %3239
        %3242 = vset.pattern.permute.xlu0 3
        %3243 = vperm.xlu0 %3242, %v501
        %v3244 = vpop.permute.xlu0 %3243
        %3246 = vset.pattern.permute.xlu0 3
        %3247 = vperm.xlu0 %3246, %v502
        %v3248 = vpop.permute.xlu0 %3247
        %3250 = vset.pattern.permute.xlu0 3
        %3251 = vperm.xlu0 %3250, %v503
        %v3252 = vpop.permute.xlu0 %3251
        %3254 = vset.pattern.permute.xlu0 3
        %3255 = vperm.xlu0 %3254, %v504
        %v3256 = vpop.permute.xlu0 %3255
        %3258 = vset.pattern.permute.xlu0 3
        %3259 = vperm.xlu0 %3258, %v505
        %v3260 = vpop.permute.xlu0 %3259
        %3262 = vset.pattern.permute.xlu0 3
        %3263 = vperm.xlu0 %3262, %v506
        %v3264 = vpop.permute.xlu0 %3263
        %3266 = vset.pattern.permute.xlu0 3
        %3267 = vperm.xlu0 %3266, %v507
        %v3268 = vpop.permute.xlu0 %3267
        %3270 = vset.pattern.permute.xlu0 3
        %3271 = vperm.xlu0 %3270, %v508
        %v3272 = vpop.permute.xlu0 %3271
        %3274 = vset.pattern.permute.xlu0 3
        %3275 = vperm.xlu0 %3274, %v509
        %v3276 = vpop.permute.xlu0 %3275
        %3278 = vset.pattern.permute.xlu0 3
        %3279 = vperm.xlu0 %3278, %v510
        %v3280 = vpop.permute.xlu0 %3279
        %3282 = vset.pattern.permute.xlu0 3
        %3283 = vperm.xlu0 %3282, %v511
        %v3284 = vpop.permute.xlu0 %3283
        %3286 = vset.pattern.permute.xlu0 3
        %3287 = vperm.xlu0 %3286, %v512
        %v3288 = vpop.permute.xlu0 %3287
        %3290 = vset.pattern.permute.xlu0 3
        %3291 = vperm.xlu0 %3290, %v513
        %v3292 = vpop.permute.xlu0 %3291
        %3294 = vset.pattern.permute.xlu0 3
        %3295 = vperm.xlu0 %3294, %v514
        %v3296 = vpop.permute.xlu0 %3295
        %3298 = vset.pattern.permute.xlu0 3
        %3299 = vperm.xlu0 %3298, %v515
        %v3300 = vpop.permute.xlu0 %3299
        %3302 = vset.pattern.permute.xlu0 3
        %3303 = vperm.xlu0 %3302, %v516
        %v3304 = vpop.permute.xlu0 %3303
        %3306 = vset.pattern.permute.xlu0 3
        %3307 = vperm.xlu0 %3306, %v517
        %v3308 = vpop.permute.xlu0 %3307
        %3310 = vset.pattern.permute.xlu0 3
        %3311 = vperm.xlu0 %3310, %v518
        %v3312 = vpop.permute.xlu0 %3311
        %3314 = vset.pattern.permute.xlu0 3
        %3315 = vperm.xlu0 %3314, %v519
        %v3316 = vpop.permute.xlu0 %3315
        %3318 = vset.pattern.permute.xlu0 3
        %3319 = vperm.xlu0 %3318, %v520
        %v3320 = vpop.permute.xlu0 %3319
        %3322 = vset.pattern.permute.xlu0 3
        %3323 = vperm.xlu0 %3322, %v521
        %v3324 = vpop.permute.xlu0 %3323
        %3326 = vset.pattern.permute.xlu0 3
        %3327 = vperm.xlu0 %3326, %v522
        %v3328 = vpop.permute.xlu0 %3327
        %3330 = vset.pattern.permute.xlu0 3
        %3331 = vperm.xlu0 %3330, %v523
        %v3332 = vpop.permute.xlu0 %3331
        %3334 = vset.pattern.permute.xlu0 3
        %3335 = vperm.xlu0 %3334, %v524
        %v3336 = vpop.permute.xlu0 %3335
        %3338 = vset.pattern.permute.xlu0 3
        %3339 = vperm.xlu0 %3338, %v525
        %v3340 = vpop.permute.xlu0 %3339
        %3342 = vset.pattern.permute.xlu0 3
        %3343 = vperm.xlu0 %3342, %v526
        %v3344 = vpop.permute.xlu0 %3343
        %3346 = vset.pattern.permute.xlu0 3
        %3347 = vperm.xlu0 %3346, %v527
        %v3348 = vpop.permute.xlu0 %3347
        %3350 = vset.pattern.permute.xlu0 3
        %3351 = vperm.xlu0 %3350, %v528
        %v3352 = vpop.permute.xlu0 %3351
        %3354 = vset.pattern.permute.xlu0 3
        %3355 = vperm.xlu0 %3354, %v529
        %v3356 = vpop.permute.xlu0 %3355
        %v3358 = vlaneseq
        %v3359 = vshrl.u32 %v3358, 7
        %v3360 = vsub.s32 3, %v3359
        %v3361 = vrot.slane %v273, %v3360
        %v3362 = vmul.f32 %v2848, %v3361
        %v3363 = vmul.f32 %v2852, %v3361
        %v3364 = vmul.f32 %v2856, %v3361
        %v3365 = vmul.f32 %v2860, %v3361
        %v3366 = vmul.f32 %v2864, %v3361
        %v3367 = vmul.f32 %v2868, %v3361
        %v3368 = vmul.f32 %v2872, %v3361
        %v3369 = vmul.f32 %v2876, %v3361
        %v3370 = vmul.f32 %v2880, %v3361
        %v3371 = vmul.f32 %v2884, %v3361
        %v3372 = vmul.f32 %v2888, %v3361
        %v3373 = vmul.f32 %v2892, %v3361
        %v3374 = vmul.f32 %v2896, %v3361
        %v3375 = vmul.f32 %v2900, %v3361
        %v3376 = vmul.f32 %v2904, %v3361
        %v3377 = vmul.f32 %v2908, %v3361
        %v3378 = vmul.f32 %v2912, %v3361
        %v3379 = vmul.f32 %v2916, %v3361
        %v3380 = vmul.f32 %v2920, %v3361
        %v3381 = vmul.f32 %v2924, %v3361
        %v3382 = vmul.f32 %v2928, %v3361
        %v3383 = vmul.f32 %v2932, %v3361
        %v3384 = vmul.f32 %v2936, %v3361
        %v3385 = vmul.f32 %v2940, %v3361
        %v3386 = vmul.f32 %v2944, %v3361
        %v3387 = vmul.f32 %v2948, %v3361
        %v3388 = vmul.f32 %v2952, %v3361
        %v3389 = vmul.f32 %v2956, %v3361
        %v3390 = vmul.f32 %v2960, %v3361
        %v3391 = vmul.f32 %v2964, %v3361
        %v3392 = vmul.f32 %v2968, %v3361
        %v3393 = vmul.f32 %v2972, %v3361
        %v3394 = vmul.f32 %v2976, %v3361
        %v3395 = vmul.f32 %v2980, %v3361
        %v3396 = vmul.f32 %v2984, %v3361
        %v3397 = vmul.f32 %v2988, %v3361
        %v3398 = vmul.f32 %v2992, %v3361
        %v3399 = vmul.f32 %v2996, %v3361
        %v3400 = vmul.f32 %v3000, %v3361
        %v3401 = vmul.f32 %v3004, %v3361
        %v3402 = vmul.f32 %v3008, %v3361
        %v3403 = vmul.f32 %v3012, %v3361
        %v3404 = vmul.f32 %v3016, %v3361
        %v3405 = vmul.f32 %v3020, %v3361
        %v3406 = vmul.f32 %v3024, %v3361
        %v3407 = vmul.f32 %v3028, %v3361
        %v3408 = vmul.f32 %v3032, %v3361
        %v3409 = vmul.f32 %v3036, %v3361
        %v3410 = vmul.f32 %v3040, %v3361
        %v3411 = vmul.f32 %v3044, %v3361
        %v3412 = vmul.f32 %v3048, %v3361
        %v3413 = vmul.f32 %v3052, %v3361
        %v3414 = vmul.f32 %v3056, %v3361
        %v3415 = vmul.f32 %v3060, %v3361
        %v3416 = vmul.f32 %v3064, %v3361
        %v3417 = vmul.f32 %v3068, %v3361
        %v3418 = vmul.f32 %v3072, %v3361
        %v3419 = vmul.f32 %v3076, %v3361
        %v3420 = vmul.f32 %v3080, %v3361
        %v3421 = vmul.f32 %v3084, %v3361
        %v3422 = vmul.f32 %v3088, %v3361
        %v3423 = vmul.f32 %v3092, %v3361
        %v3424 = vmul.f32 %v3096, %v3361
        %v3425 = vmul.f32 %v3100, %v3361
        %v3426 = vmul.f32 %v3104, %v3361
        %v3427 = vmul.f32 %v3108, %v3361
        %v3428 = vmul.f32 %v3112, %v3361
        %v3429 = vmul.f32 %v3116, %v3361
        %v3430 = vmul.f32 %v3120, %v3361
        %v3431 = vmul.f32 %v3124, %v3361
        %v3432 = vmul.f32 %v3128, %v3361
        %v3433 = vmul.f32 %v3132, %v3361
        %v3434 = vmul.f32 %v3136, %v3361
        %v3435 = vmul.f32 %v3140, %v3361
        %v3436 = vmul.f32 %v3144, %v3361
        %v3437 = vmul.f32 %v3148, %v3361
        %v3438 = vmul.f32 %v3152, %v3361
        %v3439 = vmul.f32 %v3156, %v3361
        %v3440 = vmul.f32 %v3160, %v3361
        %v3441 = vmul.f32 %v3164, %v3361
        %v3442 = vmul.f32 %v3168, %v3361
        %v3443 = vmul.f32 %v3172, %v3361
        %v3444 = vmul.f32 %v3176, %v3361
        %v3445 = vmul.f32 %v3180, %v3361
        %v3446 = vmul.f32 %v3184, %v3361
        %v3447 = vmul.f32 %v3188, %v3361
        %v3448 = vmul.f32 %v3192, %v3361
        %v3449 = vmul.f32 %v3196, %v3361
        %v3450 = vmul.f32 %v3200, %v3361
        %v3451 = vmul.f32 %v3204, %v3361
        %v3452 = vmul.f32 %v3208, %v3361
        %v3453 = vmul.f32 %v3212, %v3361
        %v3454 = vmul.f32 %v3216, %v3361
        %v3455 = vmul.f32 %v3220, %v3361
        %v3456 = vmul.f32 %v3224, %v3361
        %v3457 = vmul.f32 %v3228, %v3361
        %v3458 = vmul.f32 %v3232, %v3361
        %v3459 = vmul.f32 %v3236, %v3361
        %v3460 = vmul.f32 %v3240, %v3361
        %v3461 = vmul.f32 %v3244, %v3361
        %v3462 = vmul.f32 %v3248, %v3361
        %v3463 = vmul.f32 %v3252, %v3361
        %v3464 = vmul.f32 %v3256, %v3361
        %v3465 = vmul.f32 %v3260, %v3361
        %v3466 = vmul.f32 %v3264, %v3361
        %v3467 = vmul.f32 %v3268, %v3361
        %v3468 = vmul.f32 %v3272, %v3361
        %v3469 = vmul.f32 %v3276, %v3361
        %v3470 = vmul.f32 %v3280, %v3361
        %v3471 = vmul.f32 %v3284, %v3361
        %v3472 = vmul.f32 %v3288, %v3361
        %v3473 = vmul.f32 %v3292, %v3361
        %v3474 = vmul.f32 %v3296, %v3361
        %v3475 = vmul.f32 %v3300, %v3361
        %v3476 = vmul.f32 %v3304, %v3361
        %v3477 = vmul.f32 %v3308, %v3361
        %v3478 = vmul.f32 %v3312, %v3361
        %v3479 = vmul.f32 %v3316, %v3361
        %v3480 = vmul.f32 %v3320, %v3361
        %v3481 = vmul.f32 %v3324, %v3361
        %v3482 = vmul.f32 %v3328, %v3361
        %v3483 = vmul.f32 %v3332, %v3361
        %v3484 = vmul.f32 %v3336, %v3361
        %v3485 = vmul.f32 %v3340, %v3361
        %v3486 = vmul.f32 %v3344, %v3361
        %v3487 = vmul.f32 %v3348, %v3361
        %v3488 = vmul.f32 %v3352, %v3361
        %v3489 = vmul.f32 %v3356, %v3361
        %v3490 = vadd.f32 %v2718, %v3362
        %v3491 = vadd.f32 %v2719, %v3363
        %v3492 = vadd.f32 %v2720, %v3364
        %v3493 = vadd.f32 %v2721, %v3365
        %v3494 = vadd.f32 %v2722, %v3366
        %v3495 = vadd.f32 %v2723, %v3367
        %v3496 = vadd.f32 %v2724, %v3368
        %v3497 = vadd.f32 %v2725, %v3369
        %v3498 = vadd.f32 %v2726, %v3370
        %v3499 = vadd.f32 %v2727, %v3371
        %v3500 = vadd.f32 %v2728, %v3372
        %v3501 = vadd.f32 %v2729, %v3373
        %v3502 = vadd.f32 %v2730, %v3374
        %v3503 = vadd.f32 %v2731, %v3375
        %v3504 = vadd.f32 %v2732, %v3376
        %v3505 = vadd.f32 %v2733, %v3377
        %v3506 = vadd.f32 %v2734, %v3378
        %v3507 = vadd.f32 %v2735, %v3379
        %v3508 = vadd.f32 %v2736, %v3380
        %v3509 = vadd.f32 %v2737, %v3381
        %v3510 = vadd.f32 %v2738, %v3382
        %v3511 = vadd.f32 %v2739, %v3383
        %v3512 = vadd.f32 %v2740, %v3384
        %v3513 = vadd.f32 %v2741, %v3385
        %v3514 = vadd.f32 %v2742, %v3386
        %v3515 = vadd.f32 %v2743, %v3387
        %v3516 = vadd.f32 %v2744, %v3388
        %v3517 = vadd.f32 %v2745, %v3389
        %v3518 = vadd.f32 %v2746, %v3390
        %v3519 = vadd.f32 %v2747, %v3391
        %v3520 = vadd.f32 %v2748, %v3392
        %v3521 = vadd.f32 %v2749, %v3393
        %v3522 = vadd.f32 %v2750, %v3394
        %v3523 = vadd.f32 %v2751, %v3395
        %v3524 = vadd.f32 %v2752, %v3396
        %v3525 = vadd.f32 %v2753, %v3397
        %v3526 = vadd.f32 %v2754, %v3398
        %v3527 = vadd.f32 %v2755, %v3399
        %v3528 = vadd.f32 %v2756, %v3400
        %v3529 = vadd.f32 %v2757, %v3401
        %v3530 = vadd.f32 %v2758, %v3402
        %v3531 = vadd.f32 %v2759, %v3403
        %v3532 = vadd.f32 %v2760, %v3404
        %v3533 = vadd.f32 %v2761, %v3405
        %v3534 = vadd.f32 %v2762, %v3406
        %v3535 = vadd.f32 %v2763, %v3407
        %v3536 = vadd.f32 %v2764, %v3408
        %v3537 = vadd.f32 %v2765, %v3409
        %v3538 = vadd.f32 %v2766, %v3410
        %v3539 = vadd.f32 %v2767, %v3411
        %v3540 = vadd.f32 %v2768, %v3412
        %v3541 = vadd.f32 %v2769, %v3413
        %v3542 = vadd.f32 %v2770, %v3414
        %v3543 = vadd.f32 %v2771, %v3415
        %v3544 = vadd.f32 %v2772, %v3416
        %v3545 = vadd.f32 %v2773, %v3417
        %v3546 = vadd.f32 %v2774, %v3418
        %v3547 = vadd.f32 %v2775, %v3419
        %v3548 = vadd.f32 %v2776, %v3420
        %v3549 = vadd.f32 %v2777, %v3421
        %v3550 = vadd.f32 %v2778, %v3422
        %v3551 = vadd.f32 %v2779, %v3423
        %v3552 = vadd.f32 %v2780, %v3424
        %v3553 = vadd.f32 %v2781, %v3425
        %v3554 = vadd.f32 %v2782, %v3426
        %v3555 = vadd.f32 %v2783, %v3427
        %v3556 = vadd.f32 %v2784, %v3428
        %v3557 = vadd.f32 %v2785, %v3429
        %v3558 = vadd.f32 %v2786, %v3430
        %v3559 = vadd.f32 %v2787, %v3431
        %v3560 = vadd.f32 %v2788, %v3432
        %v3561 = vadd.f32 %v2789, %v3433
        %v3562 = vadd.f32 %v2790, %v3434
        %v3563 = vadd.f32 %v2791, %v3435
        %v3564 = vadd.f32 %v2792, %v3436
        %v3565 = vadd.f32 %v2793, %v3437
        %v3566 = vadd.f32 %v2794, %v3438
        %v3567 = vadd.f32 %v2795, %v3439
        %v3568 = vadd.f32 %v2796, %v3440
        %v3569 = vadd.f32 %v2797, %v3441
        %v3570 = vadd.f32 %v2798, %v3442
        %v3571 = vadd.f32 %v2799, %v3443
        %v3572 = vadd.f32 %v2800, %v3444
        %v3573 = vadd.f32 %v2801, %v3445
        %v3574 = vadd.f32 %v2802, %v3446
        %v3575 = vadd.f32 %v2803, %v3447
        %v3576 = vadd.f32 %v2804, %v3448
        %v3577 = vadd.f32 %v2805, %v3449
        %v3578 = vadd.f32 %v2806, %v3450
        %v3579 = vadd.f32 %v2807, %v3451
        %v3580 = vadd.f32 %v2808, %v3452
        %v3581 = vadd.f32 %v2809, %v3453
        %v3582 = vadd.f32 %v2810, %v3454
        %v3583 = vadd.f32 %v2811, %v3455
        %v3584 = vadd.f32 %v2812, %v3456
        %v3585 = vadd.f32 %v2813, %v3457
        %v3586 = vadd.f32 %v2814, %v3458
        %v3587 = vadd.f32 %v2815, %v3459
        %v3588 = vadd.f32 %v2816, %v3460
        %v3589 = vadd.f32 %v2817, %v3461
        %v3590 = vadd.f32 %v2818, %v3462
        %v3591 = vadd.f32 %v2819, %v3463
        %v3592 = vadd.f32 %v2820, %v3464
        %v3593 = vadd.f32 %v2821, %v3465
        %v3594 = vadd.f32 %v2822, %v3466
        %v3595 = vadd.f32 %v2823, %v3467
        %v3596 = vadd.f32 %v2824, %v3468
        %v3597 = vadd.f32 %v2825, %v3469
        %v3598 = vadd.f32 %v2826, %v3470
        %v3599 = vadd.f32 %v2827, %v3471
        %v3600 = vadd.f32 %v2828, %v3472
        %v3601 = vadd.f32 %v2829, %v3473
        %v3602 = vadd.f32 %v2830, %v3474
        %v3603 = vadd.f32 %v2831, %v3475
        %v3604 = vadd.f32 %v2832, %v3476
        %v3605 = vadd.f32 %v2833, %v3477
        %v3606 = vadd.f32 %v2834, %v3478
        %v3607 = vadd.f32 %v2835, %v3479
        %v3608 = vadd.f32 %v2836, %v3480
        %v3609 = vadd.f32 %v2837, %v3481
        %v3610 = vadd.f32 %v2838, %v3482
        %v3611 = vadd.f32 %v2839, %v3483
        %v3612 = vadd.f32 %v2840, %v3484
        %v3613 = vadd.f32 %v2841, %v3485
        %v3614 = vadd.f32 %v2842, %v3486
        %v3615 = vadd.f32 %v2843, %v3487
        %v3616 = vadd.f32 %v2844, %v3488
        %v3617 = vadd.f32 %v2845, %v3489
        %3618 = vset.pattern.permute.xlu0 4
        %3619 = vperm.xlu0 %3618, %v402
        %v3620 = vpop.permute.xlu0 %3619
        %3622 = vset.pattern.permute.xlu0 4
        %3623 = vperm.xlu0 %3622, %v403
        %v3624 = vpop.permute.xlu0 %3623
        %3626 = vset.pattern.permute.xlu0 4
        %3627 = vperm.xlu0 %3626, %v404
        %v3628 = vpop.permute.xlu0 %3627
        %3630 = vset.pattern.permute.xlu0 4
        %3631 = vperm.xlu0 %3630, %v405
        %v3632 = vpop.permute.xlu0 %3631
        %3634 = vset.pattern.permute.xlu0 4
        %3635 = vperm.xlu0 %3634, %v406
        %v3636 = vpop.permute.xlu0 %3635
        %3638 = vset.pattern.permute.xlu0 4
        %3639 = vperm.xlu0 %3638, %v407
        %v3640 = vpop.permute.xlu0 %3639
        %3642 = vset.pattern.permute.xlu0 4
        %3643 = vperm.xlu0 %3642, %v408
        %v3644 = vpop.permute.xlu0 %3643
        %3646 = vset.pattern.permute.xlu0 4
        %3647 = vperm.xlu0 %3646, %v409
        %v3648 = vpop.permute.xlu0 %3647
        %3650 = vset.pattern.permute.xlu0 4
        %3651 = vperm.xlu0 %3650, %v410
        %v3652 = vpop.permute.xlu0 %3651
        %3654 = vset.pattern.permute.xlu0 4
        %3655 = vperm.xlu0 %3654, %v411
        %v3656 = vpop.permute.xlu0 %3655
        %3658 = vset.pattern.permute.xlu0 4
        %3659 = vperm.xlu0 %3658, %v412
        %v3660 = vpop.permute.xlu0 %3659
        %3662 = vset.pattern.permute.xlu0 4
        %3663 = vperm.xlu0 %3662, %v413
        %v3664 = vpop.permute.xlu0 %3663
        %3666 = vset.pattern.permute.xlu0 4
        %3667 = vperm.xlu0 %3666, %v414
        %v3668 = vpop.permute.xlu0 %3667
        %3670 = vset.pattern.permute.xlu0 4
        %3671 = vperm.xlu0 %3670, %v415
        %v3672 = vpop.permute.xlu0 %3671
        %3674 = vset.pattern.permute.xlu0 4
        %3675 = vperm.xlu0 %3674, %v416
        %v3676 = vpop.permute.xlu0 %3675
        %3678 = vset.pattern.permute.xlu0 4
        %3679 = vperm.xlu0 %3678, %v417
        %v3680 = vpop.permute.xlu0 %3679
        %3682 = vset.pattern.permute.xlu0 4
        %3683 = vperm.xlu0 %3682, %v418
        %v3684 = vpop.permute.xlu0 %3683
        %3686 = vset.pattern.permute.xlu0 4
        %3687 = vperm.xlu0 %3686, %v419
        %v3688 = vpop.permute.xlu0 %3687
        %3690 = vset.pattern.permute.xlu0 4
        %3691 = vperm.xlu0 %3690, %v420
        %v3692 = vpop.permute.xlu0 %3691
        %3694 = vset.pattern.permute.xlu0 4
        %3695 = vperm.xlu0 %3694, %v421
        %v3696 = vpop.permute.xlu0 %3695
        %3698 = vset.pattern.permute.xlu0 4
        %3699 = vperm.xlu0 %3698, %v422
        %v3700 = vpop.permute.xlu0 %3699
        %3702 = vset.pattern.permute.xlu0 4
        %3703 = vperm.xlu0 %3702, %v423
        %v3704 = vpop.permute.xlu0 %3703
        %3706 = vset.pattern.permute.xlu0 4
        %3707 = vperm.xlu0 %3706, %v424
        %v3708 = vpop.permute.xlu0 %3707
        %3710 = vset.pattern.permute.xlu0 4
        %3711 = vperm.xlu0 %3710, %v425
        %v3712 = vpop.permute.xlu0 %3711
        %3714 = vset.pattern.permute.xlu0 4
        %3715 = vperm.xlu0 %3714, %v426
        %v3716 = vpop.permute.xlu0 %3715
        %3718 = vset.pattern.permute.xlu0 4
        %3719 = vperm.xlu0 %3718, %v427
        %v3720 = vpop.permute.xlu0 %3719
        %3722 = vset.pattern.permute.xlu0 4
        %3723 = vperm.xlu0 %3722, %v428
        %v3724 = vpop.permute.xlu0 %3723
        %3726 = vset.pattern.permute.xlu0 4
        %3727 = vperm.xlu0 %3726, %v429
        %v3728 = vpop.permute.xlu0 %3727
        %3730 = vset.pattern.permute.xlu0 4
        %3731 = vperm.xlu0 %3730, %v430
        %v3732 = vpop.permute.xlu0 %3731
        %3734 = vset.pattern.permute.xlu0 4
        %3735 = vperm.xlu0 %3734, %v431
        %v3736 = vpop.permute.xlu0 %3735
        %3738 = vset.pattern.permute.xlu0 4
        %3739 = vperm.xlu0 %3738, %v432
        %v3740 = vpop.permute.xlu0 %3739
        %3742 = vset.pattern.permute.xlu0 4
        %3743 = vperm.xlu0 %3742, %v433
        %v3744 = vpop.permute.xlu0 %3743
        %3746 = vset.pattern.permute.xlu0 4
        %3747 = vperm.xlu0 %3746, %v434
        %v3748 = vpop.permute.xlu0 %3747
        %3750 = vset.pattern.permute.xlu0 4
        %3751 = vperm.xlu0 %3750, %v435
        %v3752 = vpop.permute.xlu0 %3751
        %3754 = vset.pattern.permute.xlu0 4
        %3755 = vperm.xlu0 %3754, %v436
        %v3756 = vpop.permute.xlu0 %3755
        %3758 = vset.pattern.permute.xlu0 4
        %3759 = vperm.xlu0 %3758, %v437
        %v3760 = vpop.permute.xlu0 %3759
        %3762 = vset.pattern.permute.xlu0 4
        %3763 = vperm.xlu0 %3762, %v438
        %v3764 = vpop.permute.xlu0 %3763
        %3766 = vset.pattern.permute.xlu0 4
        %3767 = vperm.xlu0 %3766, %v439
        %v3768 = vpop.permute.xlu0 %3767
        %3770 = vset.pattern.permute.xlu0 4
        %3771 = vperm.xlu0 %3770, %v440
        %v3772 = vpop.permute.xlu0 %3771
        %3774 = vset.pattern.permute.xlu0 4
        %3775 = vperm.xlu0 %3774, %v441
        %v3776 = vpop.permute.xlu0 %3775
        %3778 = vset.pattern.permute.xlu0 4
        %3779 = vperm.xlu0 %3778, %v442
        %v3780 = vpop.permute.xlu0 %3779
        %3782 = vset.pattern.permute.xlu0 4
        %3783 = vperm.xlu0 %3782, %v443
        %v3784 = vpop.permute.xlu0 %3783
        %3786 = vset.pattern.permute.xlu0 4
        %3787 = vperm.xlu0 %3786, %v444
        %v3788 = vpop.permute.xlu0 %3787
        %3790 = vset.pattern.permute.xlu0 4
        %3791 = vperm.xlu0 %3790, %v445
        %v3792 = vpop.permute.xlu0 %3791
        %3794 = vset.pattern.permute.xlu0 4
        %3795 = vperm.xlu0 %3794, %v446
        %v3796 = vpop.permute.xlu0 %3795
        %3798 = vset.pattern.permute.xlu0 4
        %3799 = vperm.xlu0 %3798, %v447
        %v3800 = vpop.permute.xlu0 %3799
        %3802 = vset.pattern.permute.xlu0 4
        %3803 = vperm.xlu0 %3802, %v448
        %v3804 = vpop.permute.xlu0 %3803
        %3806 = vset.pattern.permute.xlu0 4
        %3807 = vperm.xlu0 %3806, %v449
        %v3808 = vpop.permute.xlu0 %3807
        %3810 = vset.pattern.permute.xlu0 4
        %3811 = vperm.xlu0 %3810, %v450
        %v3812 = vpop.permute.xlu0 %3811
        %3814 = vset.pattern.permute.xlu0 4
        %3815 = vperm.xlu0 %3814, %v451
        %v3816 = vpop.permute.xlu0 %3815
        %3818 = vset.pattern.permute.xlu0 4
        %3819 = vperm.xlu0 %3818, %v452
        %v3820 = vpop.permute.xlu0 %3819
        %3822 = vset.pattern.permute.xlu0 4
        %3823 = vperm.xlu0 %3822, %v453
        %v3824 = vpop.permute.xlu0 %3823
        %3826 = vset.pattern.permute.xlu0 4
        %3827 = vperm.xlu0 %3826, %v454
        %v3828 = vpop.permute.xlu0 %3827
        %3830 = vset.pattern.permute.xlu0 4
        %3831 = vperm.xlu0 %3830, %v455
        %v3832 = vpop.permute.xlu0 %3831
        %3834 = vset.pattern.permute.xlu0 4
        %3835 = vperm.xlu0 %3834, %v456
        %v3836 = vpop.permute.xlu0 %3835
        %3838 = vset.pattern.permute.xlu0 4
        %3839 = vperm.xlu0 %3838, %v457
        %v3840 = vpop.permute.xlu0 %3839
        %3842 = vset.pattern.permute.xlu0 4
        %3843 = vperm.xlu0 %3842, %v458
        %v3844 = vpop.permute.xlu0 %3843
        %3846 = vset.pattern.permute.xlu0 4
        %3847 = vperm.xlu0 %3846, %v459
        %v3848 = vpop.permute.xlu0 %3847
        %3850 = vset.pattern.permute.xlu0 4
        %3851 = vperm.xlu0 %3850, %v460
        %v3852 = vpop.permute.xlu0 %3851
        %3854 = vset.pattern.permute.xlu0 4
        %3855 = vperm.xlu0 %3854, %v461
        %v3856 = vpop.permute.xlu0 %3855
        %3858 = vset.pattern.permute.xlu0 4
        %3859 = vperm.xlu0 %3858, %v462
        %v3860 = vpop.permute.xlu0 %3859
        %3862 = vset.pattern.permute.xlu0 4
        %3863 = vperm.xlu0 %3862, %v463
        %v3864 = vpop.permute.xlu0 %3863
        %3866 = vset.pattern.permute.xlu0 4
        %3867 = vperm.xlu0 %3866, %v464
        %v3868 = vpop.permute.xlu0 %3867
        %3870 = vset.pattern.permute.xlu0 4
        %3871 = vperm.xlu0 %3870, %v465
        %v3872 = vpop.permute.xlu0 %3871
        %3874 = vset.pattern.permute.xlu0 4
        %3875 = vperm.xlu0 %3874, %v466
        %v3876 = vpop.permute.xlu0 %3875
        %3878 = vset.pattern.permute.xlu0 4
        %3879 = vperm.xlu0 %3878, %v467
        %v3880 = vpop.permute.xlu0 %3879
        %3882 = vset.pattern.permute.xlu0 4
        %3883 = vperm.xlu0 %3882, %v468
        %v3884 = vpop.permute.xlu0 %3883
        %3886 = vset.pattern.permute.xlu0 4
        %3887 = vperm.xlu0 %3886, %v469
        %v3888 = vpop.permute.xlu0 %3887
        %3890 = vset.pattern.permute.xlu0 4
        %3891 = vperm.xlu0 %3890, %v470
        %v3892 = vpop.permute.xlu0 %3891
        %3894 = vset.pattern.permute.xlu0 4
        %3895 = vperm.xlu0 %3894, %v471
        %v3896 = vpop.permute.xlu0 %3895
        %3898 = vset.pattern.permute.xlu0 4
        %3899 = vperm.xlu0 %3898, %v472
        %v3900 = vpop.permute.xlu0 %3899
        %3902 = vset.pattern.permute.xlu0 4
        %3903 = vperm.xlu0 %3902, %v473
        %v3904 = vpop.permute.xlu0 %3903
        %3906 = vset.pattern.permute.xlu0 4
        %3907 = vperm.xlu0 %3906, %v474
        %v3908 = vpop.permute.xlu0 %3907
        %3910 = vset.pattern.permute.xlu0 4
        %3911 = vperm.xlu0 %3910, %v475
        %v3912 = vpop.permute.xlu0 %3911
        %3914 = vset.pattern.permute.xlu0 4
        %3915 = vperm.xlu0 %3914, %v476
        %v3916 = vpop.permute.xlu0 %3915
        %3918 = vset.pattern.permute.xlu0 4
        %3919 = vperm.xlu0 %3918, %v477
        %v3920 = vpop.permute.xlu0 %3919
        %3922 = vset.pattern.permute.xlu0 4
        %3923 = vperm.xlu0 %3922, %v478
        %v3924 = vpop.permute.xlu0 %3923
        %3926 = vset.pattern.permute.xlu0 4
        %3927 = vperm.xlu0 %3926, %v479
        %v3928 = vpop.permute.xlu0 %3927
        %3930 = vset.pattern.permute.xlu0 4
        %3931 = vperm.xlu0 %3930, %v480
        %v3932 = vpop.permute.xlu0 %3931
        %3934 = vset.pattern.permute.xlu0 4
        %3935 = vperm.xlu0 %3934, %v481
        %v3936 = vpop.permute.xlu0 %3935
        %3938 = vset.pattern.permute.xlu0 4
        %3939 = vperm.xlu0 %3938, %v482
        %v3940 = vpop.permute.xlu0 %3939
        %3942 = vset.pattern.permute.xlu0 4
        %3943 = vperm.xlu0 %3942, %v483
        %v3944 = vpop.permute.xlu0 %3943
        %3946 = vset.pattern.permute.xlu0 4
        %3947 = vperm.xlu0 %3946, %v484
        %v3948 = vpop.permute.xlu0 %3947
        %3950 = vset.pattern.permute.xlu0 4
        %3951 = vperm.xlu0 %3950, %v485
        %v3952 = vpop.permute.xlu0 %3951
        %3954 = vset.pattern.permute.xlu0 4
        %3955 = vperm.xlu0 %3954, %v486
        %v3956 = vpop.permute.xlu0 %3955
        %3958 = vset.pattern.permute.xlu0 4
        %3959 = vperm.xlu0 %3958, %v487
        %v3960 = vpop.permute.xlu0 %3959
        %3962 = vset.pattern.permute.xlu0 4
        %3963 = vperm.xlu0 %3962, %v488
        %v3964 = vpop.permute.xlu0 %3963
        %3966 = vset.pattern.permute.xlu0 4
        %3967 = vperm.xlu0 %3966, %v489
        %v3968 = vpop.permute.xlu0 %3967
        %3970 = vset.pattern.permute.xlu0 4
        %3971 = vperm.xlu0 %3970, %v490
        %v3972 = vpop.permute.xlu0 %3971
        %3974 = vset.pattern.permute.xlu0 4
        %3975 = vperm.xlu0 %3974, %v491
        %v3976 = vpop.permute.xlu0 %3975
        %3978 = vset.pattern.permute.xlu0 4
        %3979 = vperm.xlu0 %3978, %v492
        %v3980 = vpop.permute.xlu0 %3979
        %3982 = vset.pattern.permute.xlu0 4
        %3983 = vperm.xlu0 %3982, %v493
        %v3984 = vpop.permute.xlu0 %3983
        %3986 = vset.pattern.permute.xlu0 4
        %3987 = vperm.xlu0 %3986, %v494
        %v3988 = vpop.permute.xlu0 %3987
        %3990 = vset.pattern.permute.xlu0 4
        %3991 = vperm.xlu0 %3990, %v495
        %v3992 = vpop.permute.xlu0 %3991
        %3994 = vset.pattern.permute.xlu0 4
        %3995 = vperm.xlu0 %3994, %v496
        %v3996 = vpop.permute.xlu0 %3995
        %3998 = vset.pattern.permute.xlu0 4
        %3999 = vperm.xlu0 %3998, %v497
        %v4000 = vpop.permute.xlu0 %3999
        %4002 = vset.pattern.permute.xlu0 4
        %4003 = vperm.xlu0 %4002, %v498
        %v4004 = vpop.permute.xlu0 %4003
        %4006 = vset.pattern.permute.xlu0 4
        %4007 = vperm.xlu0 %4006, %v499
        %v4008 = vpop.permute.xlu0 %4007
        %4010 = vset.pattern.permute.xlu0 4
        %4011 = vperm.xlu0 %4010, %v500
        %v4012 = vpop.permute.xlu0 %4011
        %4014 = vset.pattern.permute.xlu0 4
        %4015 = vperm.xlu0 %4014, %v501
        %v4016 = vpop.permute.xlu0 %4015
        %4018 = vset.pattern.permute.xlu0 4
        %4019 = vperm.xlu0 %4018, %v502
        %v4020 = vpop.permute.xlu0 %4019
        %4022 = vset.pattern.permute.xlu0 4
        %4023 = vperm.xlu0 %4022, %v503
        %v4024 = vpop.permute.xlu0 %4023
        %4026 = vset.pattern.permute.xlu0 4
        %4027 = vperm.xlu0 %4026, %v504
        %v4028 = vpop.permute.xlu0 %4027
        %4030 = vset.pattern.permute.xlu0 4
        %4031 = vperm.xlu0 %4030, %v505
        %v4032 = vpop.permute.xlu0 %4031
        %4034 = vset.pattern.permute.xlu0 4
        %4035 = vperm.xlu0 %4034, %v506
        %v4036 = vpop.permute.xlu0 %4035
        %4038 = vset.pattern.permute.xlu0 4
        %4039 = vperm.xlu0 %4038, %v507
        %v4040 = vpop.permute.xlu0 %4039
        %4042 = vset.pattern.permute.xlu0 4
        %4043 = vperm.xlu0 %4042, %v508
        %v4044 = vpop.permute.xlu0 %4043
        %4046 = vset.pattern.permute.xlu0 4
        %4047 = vperm.xlu0 %4046, %v509
        %v4048 = vpop.permute.xlu0 %4047
        %4050 = vset.pattern.permute.xlu0 4
        %4051 = vperm.xlu0 %4050, %v510
        %v4052 = vpop.permute.xlu0 %4051
        %4054 = vset.pattern.permute.xlu0 4
        %4055 = vperm.xlu0 %4054, %v511
        %v4056 = vpop.permute.xlu0 %4055
        %4058 = vset.pattern.permute.xlu0 4
        %4059 = vperm.xlu0 %4058, %v512
        %v4060 = vpop.permute.xlu0 %4059
        %4062 = vset.pattern.permute.xlu0 4
        %4063 = vperm.xlu0 %4062, %v513
        %v4064 = vpop.permute.xlu0 %4063
        %4066 = vset.pattern.permute.xlu0 4
        %4067 = vperm.xlu0 %4066, %v514
        %v4068 = vpop.permute.xlu0 %4067
        %4070 = vset.pattern.permute.xlu0 4
        %4071 = vperm.xlu0 %4070, %v515
        %v4072 = vpop.permute.xlu0 %4071
        %4074 = vset.pattern.permute.xlu0 4
        %4075 = vperm.xlu0 %4074, %v516
        %v4076 = vpop.permute.xlu0 %4075
        %4078 = vset.pattern.permute.xlu0 4
        %4079 = vperm.xlu0 %4078, %v517
        %v4080 = vpop.permute.xlu0 %4079
        %4082 = vset.pattern.permute.xlu0 4
        %4083 = vperm.xlu0 %4082, %v518
        %v4084 = vpop.permute.xlu0 %4083
        %4086 = vset.pattern.permute.xlu0 4
        %4087 = vperm.xlu0 %4086, %v519
        %v4088 = vpop.permute.xlu0 %4087
        %4090 = vset.pattern.permute.xlu0 4
        %4091 = vperm.xlu0 %4090, %v520
        %v4092 = vpop.permute.xlu0 %4091
        %4094 = vset.pattern.permute.xlu0 4
        %4095 = vperm.xlu0 %4094, %v521
        %v4096 = vpop.permute.xlu0 %4095
        %4098 = vset.pattern.permute.xlu0 4
        %4099 = vperm.xlu0 %4098, %v522
        %v4100 = vpop.permute.xlu0 %4099
        %4102 = vset.pattern.permute.xlu0 4
        %4103 = vperm.xlu0 %4102, %v523
        %v4104 = vpop.permute.xlu0 %4103
        %4106 = vset.pattern.permute.xlu0 4
        %4107 = vperm.xlu0 %4106, %v524
        %v4108 = vpop.permute.xlu0 %4107
        %4110 = vset.pattern.permute.xlu0 4
        %4111 = vperm.xlu0 %4110, %v525
        %v4112 = vpop.permute.xlu0 %4111
        %4114 = vset.pattern.permute.xlu0 4
        %4115 = vperm.xlu0 %4114, %v526
        %v4116 = vpop.permute.xlu0 %4115
        %4118 = vset.pattern.permute.xlu0 4
        %4119 = vperm.xlu0 %4118, %v527
        %v4120 = vpop.permute.xlu0 %4119
        %4122 = vset.pattern.permute.xlu0 4
        %4123 = vperm.xlu0 %4122, %v528
        %v4124 = vpop.permute.xlu0 %4123
        %4126 = vset.pattern.permute.xlu0 4
        %4127 = vperm.xlu0 %4126, %v529
        %v4128 = vpop.permute.xlu0 %4127
        %v4130 = vlaneseq
        %v4131 = vshrl.u32 %v4130, 7
        %v4132 = vsub.s32 4, %v4131
        %v4133 = vrot.slane %v273, %v4132
        %v4134 = vmul.f32 %v3620, %v4133
        %v4135 = vmul.f32 %v3624, %v4133
        %v4136 = vmul.f32 %v3628, %v4133
        %v4137 = vmul.f32 %v3632, %v4133
        %v4138 = vmul.f32 %v3636, %v4133
        %v4139 = vmul.f32 %v3640, %v4133
        %v4140 = vmul.f32 %v3644, %v4133
        %v4141 = vmul.f32 %v3648, %v4133
        %v4142 = vmul.f32 %v3652, %v4133
        %v4143 = vmul.f32 %v3656, %v4133
        %v4144 = vmul.f32 %v3660, %v4133
        %v4145 = vmul.f32 %v3664, %v4133
        %v4146 = vmul.f32 %v3668, %v4133
        %v4147 = vmul.f32 %v3672, %v4133
        %v4148 = vmul.f32 %v3676, %v4133
        %v4149 = vmul.f32 %v3680, %v4133
        %v4150 = vmul.f32 %v3684, %v4133
        %v4151 = vmul.f32 %v3688, %v4133
        %v4152 = vmul.f32 %v3692, %v4133
        %v4153 = vmul.f32 %v3696, %v4133
        %v4154 = vmul.f32 %v3700, %v4133
        %v4155 = vmul.f32 %v3704, %v4133
        %v4156 = vmul.f32 %v3708, %v4133
        %v4157 = vmul.f32 %v3712, %v4133
        %v4158 = vmul.f32 %v3716, %v4133
        %v4159 = vmul.f32 %v3720, %v4133
        %v4160 = vmul.f32 %v3724, %v4133
        %v4161 = vmul.f32 %v3728, %v4133
        %v4162 = vmul.f32 %v3732, %v4133
        %v4163 = vmul.f32 %v3736, %v4133
        %v4164 = vmul.f32 %v3740, %v4133
        %v4165 = vmul.f32 %v3744, %v4133
        %v4166 = vmul.f32 %v3748, %v4133
        %v4167 = vmul.f32 %v3752, %v4133
        %v4168 = vmul.f32 %v3756, %v4133
        %v4169 = vmul.f32 %v3760, %v4133
        %v4170 = vmul.f32 %v3764, %v4133
        %v4171 = vmul.f32 %v3768, %v4133
        %v4172 = vmul.f32 %v3772, %v4133
        %v4173 = vmul.f32 %v3776, %v4133
        %v4174 = vmul.f32 %v3780, %v4133
        %v4175 = vmul.f32 %v3784, %v4133
        %v4176 = vmul.f32 %v3788, %v4133
        %v4177 = vmul.f32 %v3792, %v4133
        %v4178 = vmul.f32 %v3796, %v4133
        %v4179 = vmul.f32 %v3800, %v4133
        %v4180 = vmul.f32 %v3804, %v4133
        %v4181 = vmul.f32 %v3808, %v4133
        %v4182 = vmul.f32 %v3812, %v4133
        %v4183 = vmul.f32 %v3816, %v4133
        %v4184 = vmul.f32 %v3820, %v4133
        %v4185 = vmul.f32 %v3824, %v4133
        %v4186 = vmul.f32 %v3828, %v4133
        %v4187 = vmul.f32 %v3832, %v4133
        %v4188 = vmul.f32 %v3836, %v4133
        %v4189 = vmul.f32 %v3840, %v4133
        %v4190 = vmul.f32 %v3844, %v4133
        %v4191 = vmul.f32 %v3848, %v4133
        %v4192 = vmul.f32 %v3852, %v4133
        %v4193 = vmul.f32 %v3856, %v4133
        %v4194 = vmul.f32 %v3860, %v4133
        %v4195 = vmul.f32 %v3864, %v4133
        %v4196 = vmul.f32 %v3868, %v4133
        %v4197 = vmul.f32 %v3872, %v4133
        %v4198 = vmul.f32 %v3876, %v4133
        %v4199 = vmul.f32 %v3880, %v4133
        %v4200 = vmul.f32 %v3884, %v4133
        %v4201 = vmul.f32 %v3888, %v4133
        %v4202 = vmul.f32 %v3892, %v4133
        %v4203 = vmul.f32 %v3896, %v4133
        %v4204 = vmul.f32 %v3900, %v4133
        %v4205 = vmul.f32 %v3904, %v4133
        %v4206 = vmul.f32 %v3908, %v4133
        %v4207 = vmul.f32 %v3912, %v4133
        %v4208 = vmul.f32 %v3916, %v4133
        %v4209 = vmul.f32 %v3920, %v4133
        %v4210 = vmul.f32 %v3924, %v4133
        %v4211 = vmul.f32 %v3928, %v4133
        %v4212 = vmul.f32 %v3932, %v4133
        %v4213 = vmul.f32 %v3936, %v4133
        %v4214 = vmul.f32 %v3940, %v4133
        %v4215 = vmul.f32 %v3944, %v4133
        %v4216 = vmul.f32 %v3948, %v4133
        %v4217 = vmul.f32 %v3952, %v4133
        %v4218 = vmul.f32 %v3956, %v4133
        %v4219 = vmul.f32 %v3960, %v4133
        %v4220 = vmul.f32 %v3964, %v4133
        %v4221 = vmul.f32 %v3968, %v4133
        %v4222 = vmul.f32 %v3972, %v4133
        %v4223 = vmul.f32 %v3976, %v4133
        %v4224 = vmul.f32 %v3980, %v4133
        %v4225 = vmul.f32 %v3984, %v4133
        %v4226 = vmul.f32 %v3988, %v4133
        %v4227 = vmul.f32 %v3992, %v4133
        %v4228 = vmul.f32 %v3996, %v4133
        %v4229 = vmul.f32 %v4000, %v4133
        %v4230 = vmul.f32 %v4004, %v4133
        %v4231 = vmul.f32 %v4008, %v4133
        %v4232 = vmul.f32 %v4012, %v4133
        %v4233 = vmul.f32 %v4016, %v4133
        %v4234 = vmul.f32 %v4020, %v4133
        %v4235 = vmul.f32 %v4024, %v4133
        %v4236 = vmul.f32 %v4028, %v4133
        %v4237 = vmul.f32 %v4032, %v4133
        %v4238 = vmul.f32 %v4036, %v4133
        %v4239 = vmul.f32 %v4040, %v4133
        %v4240 = vmul.f32 %v4044, %v4133
        %v4241 = vmul.f32 %v4048, %v4133
        %v4242 = vmul.f32 %v4052, %v4133
        %v4243 = vmul.f32 %v4056, %v4133
        %v4244 = vmul.f32 %v4060, %v4133
        %v4245 = vmul.f32 %v4064, %v4133
        %v4246 = vmul.f32 %v4068, %v4133
        %v4247 = vmul.f32 %v4072, %v4133
        %v4248 = vmul.f32 %v4076, %v4133
        %v4249 = vmul.f32 %v4080, %v4133
        %v4250 = vmul.f32 %v4084, %v4133
        %v4251 = vmul.f32 %v4088, %v4133
        %v4252 = vmul.f32 %v4092, %v4133
        %v4253 = vmul.f32 %v4096, %v4133
        %v4254 = vmul.f32 %v4100, %v4133
        %v4255 = vmul.f32 %v4104, %v4133
        %v4256 = vmul.f32 %v4108, %v4133
        %v4257 = vmul.f32 %v4112, %v4133
        %v4258 = vmul.f32 %v4116, %v4133
        %v4259 = vmul.f32 %v4120, %v4133
        %v4260 = vmul.f32 %v4124, %v4133
        %v4261 = vmul.f32 %v4128, %v4133
        %v4262 = vadd.f32 %v3490, %v4134
        %v4263 = vadd.f32 %v3491, %v4135
        %v4264 = vadd.f32 %v3492, %v4136
        %v4265 = vadd.f32 %v3493, %v4137
        %v4266 = vadd.f32 %v3494, %v4138
        %v4267 = vadd.f32 %v3495, %v4139
        %v4268 = vadd.f32 %v3496, %v4140
        %v4269 = vadd.f32 %v3497, %v4141
        %v4270 = vadd.f32 %v3498, %v4142
        %v4271 = vadd.f32 %v3499, %v4143
        %v4272 = vadd.f32 %v3500, %v4144
        %v4273 = vadd.f32 %v3501, %v4145
        %v4274 = vadd.f32 %v3502, %v4146
        %v4275 = vadd.f32 %v3503, %v4147
        %v4276 = vadd.f32 %v3504, %v4148
        %v4277 = vadd.f32 %v3505, %v4149
        %v4278 = vadd.f32 %v3506, %v4150
        %v4279 = vadd.f32 %v3507, %v4151
        %v4280 = vadd.f32 %v3508, %v4152
        %v4281 = vadd.f32 %v3509, %v4153
        %v4282 = vadd.f32 %v3510, %v4154
        %v4283 = vadd.f32 %v3511, %v4155
        %v4284 = vadd.f32 %v3512, %v4156
        %v4285 = vadd.f32 %v3513, %v4157
        %v4286 = vadd.f32 %v3514, %v4158
        %v4287 = vadd.f32 %v3515, %v4159
        %v4288 = vadd.f32 %v3516, %v4160
        %v4289 = vadd.f32 %v3517, %v4161
        %v4290 = vadd.f32 %v3518, %v4162
        %v4291 = vadd.f32 %v3519, %v4163
        %v4292 = vadd.f32 %v3520, %v4164
        %v4293 = vadd.f32 %v3521, %v4165
        %v4294 = vadd.f32 %v3522, %v4166
        %v4295 = vadd.f32 %v3523, %v4167
        %v4296 = vadd.f32 %v3524, %v4168
        %v4297 = vadd.f32 %v3525, %v4169
        %v4298 = vadd.f32 %v3526, %v4170
        %v4299 = vadd.f32 %v3527, %v4171
        %v4300 = vadd.f32 %v3528, %v4172
        %v4301 = vadd.f32 %v3529, %v4173
        %v4302 = vadd.f32 %v3530, %v4174
        %v4303 = vadd.f32 %v3531, %v4175
        %v4304 = vadd.f32 %v3532, %v4176
        %v4305 = vadd.f32 %v3533, %v4177
        %v4306 = vadd.f32 %v3534, %v4178
        %v4307 = vadd.f32 %v3535, %v4179
        %v4308 = vadd.f32 %v3536, %v4180
        %v4309 = vadd.f32 %v3537, %v4181
        %v4310 = vadd.f32 %v3538, %v4182
        %v4311 = vadd.f32 %v3539, %v4183
        %v4312 = vadd.f32 %v3540, %v4184
        %v4313 = vadd.f32 %v3541, %v4185
        %v4314 = vadd.f32 %v3542, %v4186
        %v4315 = vadd.f32 %v3543, %v4187
        %v4316 = vadd.f32 %v3544, %v4188
        %v4317 = vadd.f32 %v3545, %v4189
        %v4318 = vadd.f32 %v3546, %v4190
        %v4319 = vadd.f32 %v3547, %v4191
        %v4320 = vadd.f32 %v3548, %v4192
        %v4321 = vadd.f32 %v3549, %v4193
        %v4322 = vadd.f32 %v3550, %v4194
        %v4323 = vadd.f32 %v3551, %v4195
        %v4324 = vadd.f32 %v3552, %v4196
        %v4325 = vadd.f32 %v3553, %v4197
        %v4326 = vadd.f32 %v3554, %v4198
        %v4327 = vadd.f32 %v3555, %v4199
        %v4328 = vadd.f32 %v3556, %v4200
        %v4329 = vadd.f32 %v3557, %v4201
        %v4330 = vadd.f32 %v3558, %v4202
        %v4331 = vadd.f32 %v3559, %v4203
        %v4332 = vadd.f32 %v3560, %v4204
        %v4333 = vadd.f32 %v3561, %v4205
        %v4334 = vadd.f32 %v3562, %v4206
        %v4335 = vadd.f32 %v3563, %v4207
        %v4336 = vadd.f32 %v3564, %v4208
        %v4337 = vadd.f32 %v3565, %v4209
        %v4338 = vadd.f32 %v3566, %v4210
        %v4339 = vadd.f32 %v3567, %v4211
        %v4340 = vadd.f32 %v3568, %v4212
        %v4341 = vadd.f32 %v3569, %v4213
        %v4342 = vadd.f32 %v3570, %v4214
        %v4343 = vadd.f32 %v3571, %v4215
        %v4344 = vadd.f32 %v3572, %v4216
        %v4345 = vadd.f32 %v3573, %v4217
        %v4346 = vadd.f32 %v3574, %v4218
        %v4347 = vadd.f32 %v3575, %v4219
        %v4348 = vadd.f32 %v3576, %v4220
        %v4349 = vadd.f32 %v3577, %v4221
        %v4350 = vadd.f32 %v3578, %v4222
        %v4351 = vadd.f32 %v3579, %v4223
        %v4352 = vadd.f32 %v3580, %v4224
        %v4353 = vadd.f32 %v3581, %v4225
        %v4354 = vadd.f32 %v3582, %v4226
        %v4355 = vadd.f32 %v3583, %v4227
        %v4356 = vadd.f32 %v3584, %v4228
        %v4357 = vadd.f32 %v3585, %v4229
        %v4358 = vadd.f32 %v3586, %v4230
        %v4359 = vadd.f32 %v3587, %v4231
        %v4360 = vadd.f32 %v3588, %v4232
        %v4361 = vadd.f32 %v3589, %v4233
        %v4362 = vadd.f32 %v3590, %v4234
        %v4363 = vadd.f32 %v3591, %v4235
        %v4364 = vadd.f32 %v3592, %v4236
        %v4365 = vadd.f32 %v3593, %v4237
        %v4366 = vadd.f32 %v3594, %v4238
        %v4367 = vadd.f32 %v3595, %v4239
        %v4368 = vadd.f32 %v3596, %v4240
        %v4369 = vadd.f32 %v3597, %v4241
        %v4370 = vadd.f32 %v3598, %v4242
        %v4371 = vadd.f32 %v3599, %v4243
        %v4372 = vadd.f32 %v3600, %v4244
        %v4373 = vadd.f32 %v3601, %v4245
        %v4374 = vadd.f32 %v3602, %v4246
        %v4375 = vadd.f32 %v3603, %v4247
        %v4376 = vadd.f32 %v3604, %v4248
        %v4377 = vadd.f32 %v3605, %v4249
        %v4378 = vadd.f32 %v3606, %v4250
        %v4379 = vadd.f32 %v3607, %v4251
        %v4380 = vadd.f32 %v3608, %v4252
        %v4381 = vadd.f32 %v3609, %v4253
        %v4382 = vadd.f32 %v3610, %v4254
        %v4383 = vadd.f32 %v3611, %v4255
        %v4384 = vadd.f32 %v3612, %v4256
        %v4385 = vadd.f32 %v3613, %v4257
        %v4386 = vadd.f32 %v3614, %v4258
        %v4387 = vadd.f32 %v3615, %v4259
        %v4388 = vadd.f32 %v3616, %v4260
        %v4389 = vadd.f32 %v3617, %v4261
        %4390 = vset.pattern.permute.xlu0 5
        %4391 = vperm.xlu0 %4390, %v402
        %v4392 = vpop.permute.xlu0 %4391
        %4394 = vset.pattern.permute.xlu0 5
        %4395 = vperm.xlu0 %4394, %v403
        %v4396 = vpop.permute.xlu0 %4395
        %4398 = vset.pattern.permute.xlu0 5
        %4399 = vperm.xlu0 %4398, %v404
        %v4400 = vpop.permute.xlu0 %4399
        %4402 = vset.pattern.permute.xlu0 5
        %4403 = vperm.xlu0 %4402, %v405
        %v4404 = vpop.permute.xlu0 %4403
        %4406 = vset.pattern.permute.xlu0 5
        %4407 = vperm.xlu0 %4406, %v406
        %v4408 = vpop.permute.xlu0 %4407
        %4410 = vset.pattern.permute.xlu0 5
        %4411 = vperm.xlu0 %4410, %v407
        %v4412 = vpop.permute.xlu0 %4411
        %4414 = vset.pattern.permute.xlu0 5
        %4415 = vperm.xlu0 %4414, %v408
        %v4416 = vpop.permute.xlu0 %4415
        %4418 = vset.pattern.permute.xlu0 5
        %4419 = vperm.xlu0 %4418, %v409
        %v4420 = vpop.permute.xlu0 %4419
        %4422 = vset.pattern.permute.xlu0 5
        %4423 = vperm.xlu0 %4422, %v410
        %v4424 = vpop.permute.xlu0 %4423
        %4426 = vset.pattern.permute.xlu0 5
        %4427 = vperm.xlu0 %4426, %v411
        %v4428 = vpop.permute.xlu0 %4427
        %4430 = vset.pattern.permute.xlu0 5
        %4431 = vperm.xlu0 %4430, %v412
        %v4432 = vpop.permute.xlu0 %4431
        %4434 = vset.pattern.permute.xlu0 5
        %4435 = vperm.xlu0 %4434, %v413
        %v4436 = vpop.permute.xlu0 %4435
        %4438 = vset.pattern.permute.xlu0 5
        %4439 = vperm.xlu0 %4438, %v414
        %v4440 = vpop.permute.xlu0 %4439
        %4442 = vset.pattern.permute.xlu0 5
        %4443 = vperm.xlu0 %4442, %v415
        %v4444 = vpop.permute.xlu0 %4443
        %4446 = vset.pattern.permute.xlu0 5
        %4447 = vperm.xlu0 %4446, %v416
        %v4448 = vpop.permute.xlu0 %4447
        %4450 = vset.pattern.permute.xlu0 5
        %4451 = vperm.xlu0 %4450, %v417
        %v4452 = vpop.permute.xlu0 %4451
        %4454 = vset.pattern.permute.xlu0 5
        %4455 = vperm.xlu0 %4454, %v418
        %v4456 = vpop.permute.xlu0 %4455
        %4458 = vset.pattern.permute.xlu0 5
        %4459 = vperm.xlu0 %4458, %v419
        %v4460 = vpop.permute.xlu0 %4459
        %4462 = vset.pattern.permute.xlu0 5
        %4463 = vperm.xlu0 %4462, %v420
        %v4464 = vpop.permute.xlu0 %4463
        %4466 = vset.pattern.permute.xlu0 5
        %4467 = vperm.xlu0 %4466, %v421
        %v4468 = vpop.permute.xlu0 %4467
        %4470 = vset.pattern.permute.xlu0 5
        %4471 = vperm.xlu0 %4470, %v422
        %v4472 = vpop.permute.xlu0 %4471
        %4474 = vset.pattern.permute.xlu0 5
        %4475 = vperm.xlu0 %4474, %v423
        %v4476 = vpop.permute.xlu0 %4475
        %4478 = vset.pattern.permute.xlu0 5
        %4479 = vperm.xlu0 %4478, %v424
        %v4480 = vpop.permute.xlu0 %4479
        %4482 = vset.pattern.permute.xlu0 5
        %4483 = vperm.xlu0 %4482, %v425
        %v4484 = vpop.permute.xlu0 %4483
        %4486 = vset.pattern.permute.xlu0 5
        %4487 = vperm.xlu0 %4486, %v426
        %v4488 = vpop.permute.xlu0 %4487
        %4490 = vset.pattern.permute.xlu0 5
        %4491 = vperm.xlu0 %4490, %v427
        %v4492 = vpop.permute.xlu0 %4491
        %4494 = vset.pattern.permute.xlu0 5
        %4495 = vperm.xlu0 %4494, %v428
        %v4496 = vpop.permute.xlu0 %4495
        %4498 = vset.pattern.permute.xlu0 5
        %4499 = vperm.xlu0 %4498, %v429
        %v4500 = vpop.permute.xlu0 %4499
        %4502 = vset.pattern.permute.xlu0 5
        %4503 = vperm.xlu0 %4502, %v430
        %v4504 = vpop.permute.xlu0 %4503
        %4506 = vset.pattern.permute.xlu0 5
        %4507 = vperm.xlu0 %4506, %v431
        %v4508 = vpop.permute.xlu0 %4507
        %4510 = vset.pattern.permute.xlu0 5
        %4511 = vperm.xlu0 %4510, %v432
        %v4512 = vpop.permute.xlu0 %4511
        %4514 = vset.pattern.permute.xlu0 5
        %4515 = vperm.xlu0 %4514, %v433
        %v4516 = vpop.permute.xlu0 %4515
        %4518 = vset.pattern.permute.xlu0 5
        %4519 = vperm.xlu0 %4518, %v434
        %v4520 = vpop.permute.xlu0 %4519
        %4522 = vset.pattern.permute.xlu0 5
        %4523 = vperm.xlu0 %4522, %v435
        %v4524 = vpop.permute.xlu0 %4523
        %4526 = vset.pattern.permute.xlu0 5
        %4527 = vperm.xlu0 %4526, %v436
        %v4528 = vpop.permute.xlu0 %4527
        %4530 = vset.pattern.permute.xlu0 5
        %4531 = vperm.xlu0 %4530, %v437
        %v4532 = vpop.permute.xlu0 %4531
        %4534 = vset.pattern.permute.xlu0 5
        %4535 = vperm.xlu0 %4534, %v438
        %v4536 = vpop.permute.xlu0 %4535
        %4538 = vset.pattern.permute.xlu0 5
        %4539 = vperm.xlu0 %4538, %v439
        %v4540 = vpop.permute.xlu0 %4539
        %4542 = vset.pattern.permute.xlu0 5
        %4543 = vperm.xlu0 %4542, %v440
        %v4544 = vpop.permute.xlu0 %4543
        %4546 = vset.pattern.permute.xlu0 5
        %4547 = vperm.xlu0 %4546, %v441
        %v4548 = vpop.permute.xlu0 %4547
        %4550 = vset.pattern.permute.xlu0 5
        %4551 = vperm.xlu0 %4550, %v442
        %v4552 = vpop.permute.xlu0 %4551
        %4554 = vset.pattern.permute.xlu0 5
        %4555 = vperm.xlu0 %4554, %v443
        %v4556 = vpop.permute.xlu0 %4555
        %4558 = vset.pattern.permute.xlu0 5
        %4559 = vperm.xlu0 %4558, %v444
        %v4560 = vpop.permute.xlu0 %4559
        %4562 = vset.pattern.permute.xlu0 5
        %4563 = vperm.xlu0 %4562, %v445
        %v4564 = vpop.permute.xlu0 %4563
        %4566 = vset.pattern.permute.xlu0 5
        %4567 = vperm.xlu0 %4566, %v446
        %v4568 = vpop.permute.xlu0 %4567
        %4570 = vset.pattern.permute.xlu0 5
        %4571 = vperm.xlu0 %4570, %v447
        %v4572 = vpop.permute.xlu0 %4571
        %4574 = vset.pattern.permute.xlu0 5
        %4575 = vperm.xlu0 %4574, %v448
        %v4576 = vpop.permute.xlu0 %4575
        %4578 = vset.pattern.permute.xlu0 5
        %4579 = vperm.xlu0 %4578, %v449
        %v4580 = vpop.permute.xlu0 %4579
        %4582 = vset.pattern.permute.xlu0 5
        %4583 = vperm.xlu0 %4582, %v450
        %v4584 = vpop.permute.xlu0 %4583
        %4586 = vset.pattern.permute.xlu0 5
        %4587 = vperm.xlu0 %4586, %v451
        %v4588 = vpop.permute.xlu0 %4587
        %4590 = vset.pattern.permute.xlu0 5
        %4591 = vperm.xlu0 %4590, %v452
        %v4592 = vpop.permute.xlu0 %4591
        %4594 = vset.pattern.permute.xlu0 5
        %4595 = vperm.xlu0 %4594, %v453
        %v4596 = vpop.permute.xlu0 %4595
        %4598 = vset.pattern.permute.xlu0 5
        %4599 = vperm.xlu0 %4598, %v454
        %v4600 = vpop.permute.xlu0 %4599
        %4602 = vset.pattern.permute.xlu0 5
        %4603 = vperm.xlu0 %4602, %v455
        %v4604 = vpop.permute.xlu0 %4603
        %4606 = vset.pattern.permute.xlu0 5
        %4607 = vperm.xlu0 %4606, %v456
        %v4608 = vpop.permute.xlu0 %4607
        %4610 = vset.pattern.permute.xlu0 5
        %4611 = vperm.xlu0 %4610, %v457
        %v4612 = vpop.permute.xlu0 %4611
        %4614 = vset.pattern.permute.xlu0 5
        %4615 = vperm.xlu0 %4614, %v458
        %v4616 = vpop.permute.xlu0 %4615
        %4618 = vset.pattern.permute.xlu0 5
        %4619 = vperm.xlu0 %4618, %v459
        %v4620 = vpop.permute.xlu0 %4619
        %4622 = vset.pattern.permute.xlu0 5
        %4623 = vperm.xlu0 %4622, %v460
        %v4624 = vpop.permute.xlu0 %4623
        %4626 = vset.pattern.permute.xlu0 5
        %4627 = vperm.xlu0 %4626, %v461
        %v4628 = vpop.permute.xlu0 %4627
        %4630 = vset.pattern.permute.xlu0 5
        %4631 = vperm.xlu0 %4630, %v462
        %v4632 = vpop.permute.xlu0 %4631
        %4634 = vset.pattern.permute.xlu0 5
        %4635 = vperm.xlu0 %4634, %v463
        %v4636 = vpop.permute.xlu0 %4635
        %4638 = vset.pattern.permute.xlu0 5
        %4639 = vperm.xlu0 %4638, %v464
        %v4640 = vpop.permute.xlu0 %4639
        %4642 = vset.pattern.permute.xlu0 5
        %4643 = vperm.xlu0 %4642, %v465
        %v4644 = vpop.permute.xlu0 %4643
        %4646 = vset.pattern.permute.xlu0 5
        %4647 = vperm.xlu0 %4646, %v466
        %v4648 = vpop.permute.xlu0 %4647
        %4650 = vset.pattern.permute.xlu0 5
        %4651 = vperm.xlu0 %4650, %v467
        %v4652 = vpop.permute.xlu0 %4651
        %4654 = vset.pattern.permute.xlu0 5
        %4655 = vperm.xlu0 %4654, %v468
        %v4656 = vpop.permute.xlu0 %4655
        %4658 = vset.pattern.permute.xlu0 5
        %4659 = vperm.xlu0 %4658, %v469
        %v4660 = vpop.permute.xlu0 %4659
        %4662 = vset.pattern.permute.xlu0 5
        %4663 = vperm.xlu0 %4662, %v470
        %v4664 = vpop.permute.xlu0 %4663
        %4666 = vset.pattern.permute.xlu0 5
        %4667 = vperm.xlu0 %4666, %v471
        %v4668 = vpop.permute.xlu0 %4667
        %4670 = vset.pattern.permute.xlu0 5
        %4671 = vperm.xlu0 %4670, %v472
        %v4672 = vpop.permute.xlu0 %4671
        %4674 = vset.pattern.permute.xlu0 5
        %4675 = vperm.xlu0 %4674, %v473
        %v4676 = vpop.permute.xlu0 %4675
        %4678 = vset.pattern.permute.xlu0 5
        %4679 = vperm.xlu0 %4678, %v474
        %v4680 = vpop.permute.xlu0 %4679
        %4682 = vset.pattern.permute.xlu0 5
        %4683 = vperm.xlu0 %4682, %v475
        %v4684 = vpop.permute.xlu0 %4683
        %4686 = vset.pattern.permute.xlu0 5
        %4687 = vperm.xlu0 %4686, %v476
        %v4688 = vpop.permute.xlu0 %4687
        %4690 = vset.pattern.permute.xlu0 5
        %4691 = vperm.xlu0 %4690, %v477
        %v4692 = vpop.permute.xlu0 %4691
        %4694 = vset.pattern.permute.xlu0 5
        %4695 = vperm.xlu0 %4694, %v478
        %v4696 = vpop.permute.xlu0 %4695
        %4698 = vset.pattern.permute.xlu0 5
        %4699 = vperm.xlu0 %4698, %v479
        %v4700 = vpop.permute.xlu0 %4699
        %4702 = vset.pattern.permute.xlu0 5
        %4703 = vperm.xlu0 %4702, %v480
        %v4704 = vpop.permute.xlu0 %4703
        %4706 = vset.pattern.permute.xlu0 5
        %4707 = vperm.xlu0 %4706, %v481
        %v4708 = vpop.permute.xlu0 %4707
        %4710 = vset.pattern.permute.xlu0 5
        %4711 = vperm.xlu0 %4710, %v482
        %v4712 = vpop.permute.xlu0 %4711
        %4714 = vset.pattern.permute.xlu0 5
        %4715 = vperm.xlu0 %4714, %v483
        %v4716 = vpop.permute.xlu0 %4715
        %4718 = vset.pattern.permute.xlu0 5
        %4719 = vperm.xlu0 %4718, %v484
        %v4720 = vpop.permute.xlu0 %4719
        %4722 = vset.pattern.permute.xlu0 5
        %4723 = vperm.xlu0 %4722, %v485
        %v4724 = vpop.permute.xlu0 %4723
        %4726 = vset.pattern.permute.xlu0 5
        %4727 = vperm.xlu0 %4726, %v486
        %v4728 = vpop.permute.xlu0 %4727
        %4730 = vset.pattern.permute.xlu0 5
        %4731 = vperm.xlu0 %4730, %v487
        %v4732 = vpop.permute.xlu0 %4731
        %4734 = vset.pattern.permute.xlu0 5
        %4735 = vperm.xlu0 %4734, %v488
        %v4736 = vpop.permute.xlu0 %4735
        %4738 = vset.pattern.permute.xlu0 5
        %4739 = vperm.xlu0 %4738, %v489
        %v4740 = vpop.permute.xlu0 %4739
        %4742 = vset.pattern.permute.xlu0 5
        %4743 = vperm.xlu0 %4742, %v490
        %v4744 = vpop.permute.xlu0 %4743
        %4746 = vset.pattern.permute.xlu0 5
        %4747 = vperm.xlu0 %4746, %v491
        %v4748 = vpop.permute.xlu0 %4747
        %4750 = vset.pattern.permute.xlu0 5
        %4751 = vperm.xlu0 %4750, %v492
        %v4752 = vpop.permute.xlu0 %4751
        %4754 = vset.pattern.permute.xlu0 5
        %4755 = vperm.xlu0 %4754, %v493
        %v4756 = vpop.permute.xlu0 %4755
        %4758 = vset.pattern.permute.xlu0 5
        %4759 = vperm.xlu0 %4758, %v494
        %v4760 = vpop.permute.xlu0 %4759
        %4762 = vset.pattern.permute.xlu0 5
        %4763 = vperm.xlu0 %4762, %v495
        %v4764 = vpop.permute.xlu0 %4763
        %4766 = vset.pattern.permute.xlu0 5
        %4767 = vperm.xlu0 %4766, %v496
        %v4768 = vpop.permute.xlu0 %4767
        %4770 = vset.pattern.permute.xlu0 5
        %4771 = vperm.xlu0 %4770, %v497
        %v4772 = vpop.permute.xlu0 %4771
        %4774 = vset.pattern.permute.xlu0 5
        %4775 = vperm.xlu0 %4774, %v498
        %v4776 = vpop.permute.xlu0 %4775
        %4778 = vset.pattern.permute.xlu0 5
        %4779 = vperm.xlu0 %4778, %v499
        %v4780 = vpop.permute.xlu0 %4779
        %4782 = vset.pattern.permute.xlu0 5
        %4783 = vperm.xlu0 %4782, %v500
        %v4784 = vpop.permute.xlu0 %4783
        %4786 = vset.pattern.permute.xlu0 5
        %4787 = vperm.xlu0 %4786, %v501
        %v4788 = vpop.permute.xlu0 %4787
        %4790 = vset.pattern.permute.xlu0 5
        %4791 = vperm.xlu0 %4790, %v502
        %v4792 = vpop.permute.xlu0 %4791
        %4794 = vset.pattern.permute.xlu0 5
        %4795 = vperm.xlu0 %4794, %v503
        %v4796 = vpop.permute.xlu0 %4795
        %4798 = vset.pattern.permute.xlu0 5
        %4799 = vperm.xlu0 %4798, %v504
        %v4800 = vpop.permute.xlu0 %4799
        %4802 = vset.pattern.permute.xlu0 5
        %4803 = vperm.xlu0 %4802, %v505
        %v4804 = vpop.permute.xlu0 %4803
        %4806 = vset.pattern.permute.xlu0 5
        %4807 = vperm.xlu0 %4806, %v506
        %v4808 = vpop.permute.xlu0 %4807
        %4810 = vset.pattern.permute.xlu0 5
        %4811 = vperm.xlu0 %4810, %v507
        %v4812 = vpop.permute.xlu0 %4811
        %4814 = vset.pattern.permute.xlu0 5
        %4815 = vperm.xlu0 %4814, %v508
        %v4816 = vpop.permute.xlu0 %4815
        %4818 = vset.pattern.permute.xlu0 5
        %4819 = vperm.xlu0 %4818, %v509
        %v4820 = vpop.permute.xlu0 %4819
        %4822 = vset.pattern.permute.xlu0 5
        %4823 = vperm.xlu0 %4822, %v510
        %v4824 = vpop.permute.xlu0 %4823
        %4826 = vset.pattern.permute.xlu0 5
        %4827 = vperm.xlu0 %4826, %v511
        %v4828 = vpop.permute.xlu0 %4827
        %4830 = vset.pattern.permute.xlu0 5
        %4831 = vperm.xlu0 %4830, %v512
        %v4832 = vpop.permute.xlu0 %4831
        %4834 = vset.pattern.permute.xlu0 5
        %4835 = vperm.xlu0 %4834, %v513
        %v4836 = vpop.permute.xlu0 %4835
        %4838 = vset.pattern.permute.xlu0 5
        %4839 = vperm.xlu0 %4838, %v514
        %v4840 = vpop.permute.xlu0 %4839
        %4842 = vset.pattern.permute.xlu0 5
        %4843 = vperm.xlu0 %4842, %v515
        %v4844 = vpop.permute.xlu0 %4843
        %4846 = vset.pattern.permute.xlu0 5
        %4847 = vperm.xlu0 %4846, %v516
        %v4848 = vpop.permute.xlu0 %4847
        %4850 = vset.pattern.permute.xlu0 5
        %4851 = vperm.xlu0 %4850, %v517
        %v4852 = vpop.permute.xlu0 %4851
        %4854 = vset.pattern.permute.xlu0 5
        %4855 = vperm.xlu0 %4854, %v518
        %v4856 = vpop.permute.xlu0 %4855
        %4858 = vset.pattern.permute.xlu0 5
        %4859 = vperm.xlu0 %4858, %v519
        %v4860 = vpop.permute.xlu0 %4859
        %4862 = vset.pattern.permute.xlu0 5
        %4863 = vperm.xlu0 %4862, %v520
        %v4864 = vpop.permute.xlu0 %4863
        %4866 = vset.pattern.permute.xlu0 5
        %4867 = vperm.xlu0 %4866, %v521
        %v4868 = vpop.permute.xlu0 %4867
        %4870 = vset.pattern.permute.xlu0 5
        %4871 = vperm.xlu0 %4870, %v522
        %v4872 = vpop.permute.xlu0 %4871
        %4874 = vset.pattern.permute.xlu0 5
        %4875 = vperm.xlu0 %4874, %v523
        %v4876 = vpop.permute.xlu0 %4875
        %4878 = vset.pattern.permute.xlu0 5
        %4879 = vperm.xlu0 %4878, %v524
        %v4880 = vpop.permute.xlu0 %4879
        %4882 = vset.pattern.permute.xlu0 5
        %4883 = vperm.xlu0 %4882, %v525
        %v4884 = vpop.permute.xlu0 %4883
        %4886 = vset.pattern.permute.xlu0 5
        %4887 = vperm.xlu0 %4886, %v526
        %v4888 = vpop.permute.xlu0 %4887
        %4890 = vset.pattern.permute.xlu0 5
        %4891 = vperm.xlu0 %4890, %v527
        %v4892 = vpop.permute.xlu0 %4891
        %4894 = vset.pattern.permute.xlu0 5
        %4895 = vperm.xlu0 %4894, %v528
        %v4896 = vpop.permute.xlu0 %4895
        %4898 = vset.pattern.permute.xlu0 5
        %4899 = vperm.xlu0 %4898, %v529
        %v4900 = vpop.permute.xlu0 %4899
        %v4902 = vlaneseq
        %v4903 = vshrl.u32 %v4902, 7
        %v4904 = vsub.s32 5, %v4903
        %v4905 = vrot.slane %v273, %v4904
        %v4906 = vmul.f32 %v4392, %v4905
        %v4907 = vmul.f32 %v4396, %v4905
        %v4908 = vmul.f32 %v4400, %v4905
        %v4909 = vmul.f32 %v4404, %v4905
        %v4910 = vmul.f32 %v4408, %v4905
        %v4911 = vmul.f32 %v4412, %v4905
        %v4912 = vmul.f32 %v4416, %v4905
        %v4913 = vmul.f32 %v4420, %v4905
        %v4914 = vmul.f32 %v4424, %v4905
        %v4915 = vmul.f32 %v4428, %v4905
        %v4916 = vmul.f32 %v4432, %v4905
        %v4917 = vmul.f32 %v4436, %v4905
        %v4918 = vmul.f32 %v4440, %v4905
        %v4919 = vmul.f32 %v4444, %v4905
        %v4920 = vmul.f32 %v4448, %v4905
        %v4921 = vmul.f32 %v4452, %v4905
        %v4922 = vmul.f32 %v4456, %v4905
        %v4923 = vmul.f32 %v4460, %v4905
        %v4924 = vmul.f32 %v4464, %v4905
        %v4925 = vmul.f32 %v4468, %v4905
        %v4926 = vmul.f32 %v4472, %v4905
        %v4927 = vmul.f32 %v4476, %v4905
        %v4928 = vmul.f32 %v4480, %v4905
        %v4929 = vmul.f32 %v4484, %v4905
        %v4930 = vmul.f32 %v4488, %v4905
        %v4931 = vmul.f32 %v4492, %v4905
        %v4932 = vmul.f32 %v4496, %v4905
        %v4933 = vmul.f32 %v4500, %v4905
        %v4934 = vmul.f32 %v4504, %v4905
        %v4935 = vmul.f32 %v4508, %v4905
        %v4936 = vmul.f32 %v4512, %v4905
        %v4937 = vmul.f32 %v4516, %v4905
        %v4938 = vmul.f32 %v4520, %v4905
        %v4939 = vmul.f32 %v4524, %v4905
        %v4940 = vmul.f32 %v4528, %v4905
        %v4941 = vmul.f32 %v4532, %v4905
        %v4942 = vmul.f32 %v4536, %v4905
        %v4943 = vmul.f32 %v4540, %v4905
        %v4944 = vmul.f32 %v4544, %v4905
        %v4945 = vmul.f32 %v4548, %v4905
        %v4946 = vmul.f32 %v4552, %v4905
        %v4947 = vmul.f32 %v4556, %v4905
        %v4948 = vmul.f32 %v4560, %v4905
        %v4949 = vmul.f32 %v4564, %v4905
        %v4950 = vmul.f32 %v4568, %v4905
        %v4951 = vmul.f32 %v4572, %v4905
        %v4952 = vmul.f32 %v4576, %v4905
        %v4953 = vmul.f32 %v4580, %v4905
        %v4954 = vmul.f32 %v4584, %v4905
        %v4955 = vmul.f32 %v4588, %v4905
        %v4956 = vmul.f32 %v4592, %v4905
        %v4957 = vmul.f32 %v4596, %v4905
        %v4958 = vmul.f32 %v4600, %v4905
        %v4959 = vmul.f32 %v4604, %v4905
        %v4960 = vmul.f32 %v4608, %v4905
        %v4961 = vmul.f32 %v4612, %v4905
        %v4962 = vmul.f32 %v4616, %v4905
        %v4963 = vmul.f32 %v4620, %v4905
        %v4964 = vmul.f32 %v4624, %v4905
        %v4965 = vmul.f32 %v4628, %v4905
        %v4966 = vmul.f32 %v4632, %v4905
        %v4967 = vmul.f32 %v4636, %v4905
        %v4968 = vmul.f32 %v4640, %v4905
        %v4969 = vmul.f32 %v4644, %v4905
        %v4970 = vmul.f32 %v4648, %v4905
        %v4971 = vmul.f32 %v4652, %v4905
        %v4972 = vmul.f32 %v4656, %v4905
        %v4973 = vmul.f32 %v4660, %v4905
        %v4974 = vmul.f32 %v4664, %v4905
        %v4975 = vmul.f32 %v4668, %v4905
        %v4976 = vmul.f32 %v4672, %v4905
        %v4977 = vmul.f32 %v4676, %v4905
        %v4978 = vmul.f32 %v4680, %v4905
        %v4979 = vmul.f32 %v4684, %v4905
        %v4980 = vmul.f32 %v4688, %v4905
        %v4981 = vmul.f32 %v4692, %v4905
        %v4982 = vmul.f32 %v4696, %v4905
        %v4983 = vmul.f32 %v4700, %v4905
        %v4984 = vmul.f32 %v4704, %v4905
        %v4985 = vmul.f32 %v4708, %v4905
        %v4986 = vmul.f32 %v4712, %v4905
        %v4987 = vmul.f32 %v4716, %v4905
        %v4988 = vmul.f32 %v4720, %v4905
        %v4989 = vmul.f32 %v4724, %v4905
        %v4990 = vmul.f32 %v4728, %v4905
        %v4991 = vmul.f32 %v4732, %v4905
        %v4992 = vmul.f32 %v4736, %v4905
        %v4993 = vmul.f32 %v4740, %v4905
        %v4994 = vmul.f32 %v4744, %v4905
        %v4995 = vmul.f32 %v4748, %v4905
        %v4996 = vmul.f32 %v4752, %v4905
        %v4997 = vmul.f32 %v4756, %v4905
        %v4998 = vmul.f32 %v4760, %v4905
        %v4999 = vmul.f32 %v4764, %v4905
        %v5000 = vmul.f32 %v4768, %v4905
        %v5001 = vmul.f32 %v4772, %v4905
        %v5002 = vmul.f32 %v4776, %v4905
        %v5003 = vmul.f32 %v4780, %v4905
        %v5004 = vmul.f32 %v4784, %v4905
        %v5005 = vmul.f32 %v4788, %v4905
        %v5006 = vmul.f32 %v4792, %v4905
        %v5007 = vmul.f32 %v4796, %v4905
        %v5008 = vmul.f32 %v4800, %v4905
        %v5009 = vmul.f32 %v4804, %v4905
        %v5010 = vmul.f32 %v4808, %v4905
        %v5011 = vmul.f32 %v4812, %v4905
        %v5012 = vmul.f32 %v4816, %v4905
        %v5013 = vmul.f32 %v4820, %v4905
        %v5014 = vmul.f32 %v4824, %v4905
        %v5015 = vmul.f32 %v4828, %v4905
        %v5016 = vmul.f32 %v4832, %v4905
        %v5017 = vmul.f32 %v4836, %v4905
        %v5018 = vmul.f32 %v4840, %v4905
        %v5019 = vmul.f32 %v4844, %v4905
        %v5020 = vmul.f32 %v4848, %v4905
        %v5021 = vmul.f32 %v4852, %v4905
        %v5022 = vmul.f32 %v4856, %v4905
        %v5023 = vmul.f32 %v4860, %v4905
        %v5024 = vmul.f32 %v4864, %v4905
        %v5025 = vmul.f32 %v4868, %v4905
        %v5026 = vmul.f32 %v4872, %v4905
        %v5027 = vmul.f32 %v4876, %v4905
        %v5028 = vmul.f32 %v4880, %v4905
        %v5029 = vmul.f32 %v4884, %v4905
        %v5030 = vmul.f32 %v4888, %v4905
        %v5031 = vmul.f32 %v4892, %v4905
        %v5032 = vmul.f32 %v4896, %v4905
        %v5033 = vmul.f32 %v4900, %v4905
        %v5034 = vadd.f32 %v4262, %v4906
        %v5035 = vadd.f32 %v4263, %v4907
        %v5036 = vadd.f32 %v4264, %v4908
        %v5037 = vadd.f32 %v4265, %v4909
        %v5038 = vadd.f32 %v4266, %v4910
        %v5039 = vadd.f32 %v4267, %v4911
        %v5040 = vadd.f32 %v4268, %v4912
        %v5041 = vadd.f32 %v4269, %v4913
        %v5042 = vadd.f32 %v4270, %v4914
        %v5043 = vadd.f32 %v4271, %v4915
        %v5044 = vadd.f32 %v4272, %v4916
        %v5045 = vadd.f32 %v4273, %v4917
        %v5046 = vadd.f32 %v4274, %v4918
        %v5047 = vadd.f32 %v4275, %v4919
        %v5048 = vadd.f32 %v4276, %v4920
        %v5049 = vadd.f32 %v4277, %v4921
        %v5050 = vadd.f32 %v4278, %v4922
        %v5051 = vadd.f32 %v4279, %v4923
        %v5052 = vadd.f32 %v4280, %v4924
        %v5053 = vadd.f32 %v4281, %v4925
        %v5054 = vadd.f32 %v4282, %v4926
        %v5055 = vadd.f32 %v4283, %v4927
        %v5056 = vadd.f32 %v4284, %v4928
        %v5057 = vadd.f32 %v4285, %v4929
        %v5058 = vadd.f32 %v4286, %v4930
        %v5059 = vadd.f32 %v4287, %v4931
        %v5060 = vadd.f32 %v4288, %v4932
        %v5061 = vadd.f32 %v4289, %v4933
        %v5062 = vadd.f32 %v4290, %v4934
        %v5063 = vadd.f32 %v4291, %v4935
        %v5064 = vadd.f32 %v4292, %v4936
        %v5065 = vadd.f32 %v4293, %v4937
        %v5066 = vadd.f32 %v4294, %v4938
        %v5067 = vadd.f32 %v4295, %v4939
        %v5068 = vadd.f32 %v4296, %v4940
        %v5069 = vadd.f32 %v4297, %v4941
        %v5070 = vadd.f32 %v4298, %v4942
        %v5071 = vadd.f32 %v4299, %v4943
        %v5072 = vadd.f32 %v4300, %v4944
        %v5073 = vadd.f32 %v4301, %v4945
        %v5074 = vadd.f32 %v4302, %v4946
        %v5075 = vadd.f32 %v4303, %v4947
        %v5076 = vadd.f32 %v4304, %v4948
        %v5077 = vadd.f32 %v4305, %v4949
        %v5078 = vadd.f32 %v4306, %v4950
        %v5079 = vadd.f32 %v4307, %v4951
        %v5080 = vadd.f32 %v4308, %v4952
        %v5081 = vadd.f32 %v4309, %v4953
        %v5082 = vadd.f32 %v4310, %v4954
        %v5083 = vadd.f32 %v4311, %v4955
        %v5084 = vadd.f32 %v4312, %v4956
        %v5085 = vadd.f32 %v4313, %v4957
        %v5086 = vadd.f32 %v4314, %v4958
        %v5087 = vadd.f32 %v4315, %v4959
        %v5088 = vadd.f32 %v4316, %v4960
        %v5089 = vadd.f32 %v4317, %v4961
        %v5090 = vadd.f32 %v4318, %v4962
        %v5091 = vadd.f32 %v4319, %v4963
        %v5092 = vadd.f32 %v4320, %v4964
        %v5093 = vadd.f32 %v4321, %v4965
        %v5094 = vadd.f32 %v4322, %v4966
        %v5095 = vadd.f32 %v4323, %v4967
        %v5096 = vadd.f32 %v4324, %v4968
        %v5097 = vadd.f32 %v4325, %v4969
        %v5098 = vadd.f32 %v4326, %v4970
        %v5099 = vadd.f32 %v4327, %v4971
        %v5100 = vadd.f32 %v4328, %v4972
        %v5101 = vadd.f32 %v4329, %v4973
        %v5102 = vadd.f32 %v4330, %v4974
        %v5103 = vadd.f32 %v4331, %v4975
        %v5104 = vadd.f32 %v4332, %v4976
        %v5105 = vadd.f32 %v4333, %v4977
        %v5106 = vadd.f32 %v4334, %v4978
        %v5107 = vadd.f32 %v4335, %v4979
        %v5108 = vadd.f32 %v4336, %v4980
        %v5109 = vadd.f32 %v4337, %v4981
        %v5110 = vadd.f32 %v4338, %v4982
        %v5111 = vadd.f32 %v4339, %v4983
        %v5112 = vadd.f32 %v4340, %v4984
        %v5113 = vadd.f32 %v4341, %v4985
        %v5114 = vadd.f32 %v4342, %v4986
        %v5115 = vadd.f32 %v4343, %v4987
        %v5116 = vadd.f32 %v4344, %v4988
        %v5117 = vadd.f32 %v4345, %v4989
        %v5118 = vadd.f32 %v4346, %v4990
        %v5119 = vadd.f32 %v4347, %v4991
        %v5120 = vadd.f32 %v4348, %v4992
        %v5121 = vadd.f32 %v4349, %v4993
        %v5122 = vadd.f32 %v4350, %v4994
        %v5123 = vadd.f32 %v4351, %v4995
        %v5124 = vadd.f32 %v4352, %v4996
        %v5125 = vadd.f32 %v4353, %v4997
        %v5126 = vadd.f32 %v4354, %v4998
        %v5127 = vadd.f32 %v4355, %v4999
        %v5128 = vadd.f32 %v4356, %v5000
        %v5129 = vadd.f32 %v4357, %v5001
        %v5130 = vadd.f32 %v4358, %v5002
        %v5131 = vadd.f32 %v4359, %v5003
        %v5132 = vadd.f32 %v4360, %v5004
        %v5133 = vadd.f32 %v4361, %v5005
        %v5134 = vadd.f32 %v4362, %v5006
        %v5135 = vadd.f32 %v4363, %v5007
        %v5136 = vadd.f32 %v4364, %v5008
        %v5137 = vadd.f32 %v4365, %v5009
        %v5138 = vadd.f32 %v4366, %v5010
        %v5139 = vadd.f32 %v4367, %v5011
        %v5140 = vadd.f32 %v4368, %v5012
        %v5141 = vadd.f32 %v4369, %v5013
        %v5142 = vadd.f32 %v4370, %v5014
        %v5143 = vadd.f32 %v4371, %v5015
        %v5144 = vadd.f32 %v4372, %v5016
        %v5145 = vadd.f32 %v4373, %v5017
        %v5146 = vadd.f32 %v4374, %v5018
        %v5147 = vadd.f32 %v4375, %v5019
        %v5148 = vadd.f32 %v4376, %v5020
        %v5149 = vadd.f32 %v4377, %v5021
        %v5150 = vadd.f32 %v4378, %v5022
        %v5151 = vadd.f32 %v4379, %v5023
        %v5152 = vadd.f32 %v4380, %v5024
        %v5153 = vadd.f32 %v4381, %v5025
        %v5154 = vadd.f32 %v4382, %v5026
        %v5155 = vadd.f32 %v4383, %v5027
        %v5156 = vadd.f32 %v4384, %v5028
        %v5157 = vadd.f32 %v4385, %v5029
        %v5158 = vadd.f32 %v4386, %v5030
        %v5159 = vadd.f32 %v4387, %v5031
        %v5160 = vadd.f32 %v4388, %v5032
        %v5161 = vadd.f32 %v4389, %v5033
        %5162 = vset.pattern.permute.xlu0 6
        %5163 = vperm.xlu0 %5162, %v402
        %v5164 = vpop.permute.xlu0 %5163
        %5166 = vset.pattern.permute.xlu0 6
        %5167 = vperm.xlu0 %5166, %v403
        %v5168 = vpop.permute.xlu0 %5167
        %5170 = vset.pattern.permute.xlu0 6
        %5171 = vperm.xlu0 %5170, %v404
        %v5172 = vpop.permute.xlu0 %5171
        %5174 = vset.pattern.permute.xlu0 6
        %5175 = vperm.xlu0 %5174, %v405
        %v5176 = vpop.permute.xlu0 %5175
        %5178 = vset.pattern.permute.xlu0 6
        %5179 = vperm.xlu0 %5178, %v406
        %v5180 = vpop.permute.xlu0 %5179
        %5182 = vset.pattern.permute.xlu0 6
        %5183 = vperm.xlu0 %5182, %v407
        %v5184 = vpop.permute.xlu0 %5183
        %5186 = vset.pattern.permute.xlu0 6
        %5187 = vperm.xlu0 %5186, %v408
        %v5188 = vpop.permute.xlu0 %5187
        %5190 = vset.pattern.permute.xlu0 6
        %5191 = vperm.xlu0 %5190, %v409
        %v5192 = vpop.permute.xlu0 %5191
        %5194 = vset.pattern.permute.xlu0 6
        %5195 = vperm.xlu0 %5194, %v410
        %v5196 = vpop.permute.xlu0 %5195
        %5198 = vset.pattern.permute.xlu0 6
        %5199 = vperm.xlu0 %5198, %v411
        %v5200 = vpop.permute.xlu0 %5199
        %5202 = vset.pattern.permute.xlu0 6
        %5203 = vperm.xlu0 %5202, %v412
        %v5204 = vpop.permute.xlu0 %5203
        %5206 = vset.pattern.permute.xlu0 6
        %5207 = vperm.xlu0 %5206, %v413
        %v5208 = vpop.permute.xlu0 %5207
        %5210 = vset.pattern.permute.xlu0 6
        %5211 = vperm.xlu0 %5210, %v414
        %v5212 = vpop.permute.xlu0 %5211
        %5214 = vset.pattern.permute.xlu0 6
        %5215 = vperm.xlu0 %5214, %v415
        %v5216 = vpop.permute.xlu0 %5215
        %5218 = vset.pattern.permute.xlu0 6
        %5219 = vperm.xlu0 %5218, %v416
        %v5220 = vpop.permute.xlu0 %5219
        %5222 = vset.pattern.permute.xlu0 6
        %5223 = vperm.xlu0 %5222, %v417
        %v5224 = vpop.permute.xlu0 %5223
        %5226 = vset.pattern.permute.xlu0 6
        %5227 = vperm.xlu0 %5226, %v418
        %v5228 = vpop.permute.xlu0 %5227
        %5230 = vset.pattern.permute.xlu0 6
        %5231 = vperm.xlu0 %5230, %v419
        %v5232 = vpop.permute.xlu0 %5231
        %5234 = vset.pattern.permute.xlu0 6
        %5235 = vperm.xlu0 %5234, %v420
        %v5236 = vpop.permute.xlu0 %5235
        %5238 = vset.pattern.permute.xlu0 6
        %5239 = vperm.xlu0 %5238, %v421
        %v5240 = vpop.permute.xlu0 %5239
        %5242 = vset.pattern.permute.xlu0 6
        %5243 = vperm.xlu0 %5242, %v422
        %v5244 = vpop.permute.xlu0 %5243
        %5246 = vset.pattern.permute.xlu0 6
        %5247 = vperm.xlu0 %5246, %v423
        %v5248 = vpop.permute.xlu0 %5247
        %5250 = vset.pattern.permute.xlu0 6
        %5251 = vperm.xlu0 %5250, %v424
        %v5252 = vpop.permute.xlu0 %5251
        %5254 = vset.pattern.permute.xlu0 6
        %5255 = vperm.xlu0 %5254, %v425
        %v5256 = vpop.permute.xlu0 %5255
        %5258 = vset.pattern.permute.xlu0 6
        %5259 = vperm.xlu0 %5258, %v426
        %v5260 = vpop.permute.xlu0 %5259
        %5262 = vset.pattern.permute.xlu0 6
        %5263 = vperm.xlu0 %5262, %v427
        %v5264 = vpop.permute.xlu0 %5263
        %5266 = vset.pattern.permute.xlu0 6
        %5267 = vperm.xlu0 %5266, %v428
        %v5268 = vpop.permute.xlu0 %5267
        %5270 = vset.pattern.permute.xlu0 6
        %5271 = vperm.xlu0 %5270, %v429
        %v5272 = vpop.permute.xlu0 %5271
        %5274 = vset.pattern.permute.xlu0 6
        %5275 = vperm.xlu0 %5274, %v430
        %v5276 = vpop.permute.xlu0 %5275
        %5278 = vset.pattern.permute.xlu0 6
        %5279 = vperm.xlu0 %5278, %v431
        %v5280 = vpop.permute.xlu0 %5279
        %5282 = vset.pattern.permute.xlu0 6
        %5283 = vperm.xlu0 %5282, %v432
        %v5284 = vpop.permute.xlu0 %5283
        %5286 = vset.pattern.permute.xlu0 6
        %5287 = vperm.xlu0 %5286, %v433
        %v5288 = vpop.permute.xlu0 %5287
        %5290 = vset.pattern.permute.xlu0 6
        %5291 = vperm.xlu0 %5290, %v434
        %v5292 = vpop.permute.xlu0 %5291
        %5294 = vset.pattern.permute.xlu0 6
        %5295 = vperm.xlu0 %5294, %v435
        %v5296 = vpop.permute.xlu0 %5295
        %5298 = vset.pattern.permute.xlu0 6
        %5299 = vperm.xlu0 %5298, %v436
        %v5300 = vpop.permute.xlu0 %5299
        %5302 = vset.pattern.permute.xlu0 6
        %5303 = vperm.xlu0 %5302, %v437
        %v5304 = vpop.permute.xlu0 %5303
        %5306 = vset.pattern.permute.xlu0 6
        %5307 = vperm.xlu0 %5306, %v438
        %v5308 = vpop.permute.xlu0 %5307
        %5310 = vset.pattern.permute.xlu0 6
        %5311 = vperm.xlu0 %5310, %v439
        %v5312 = vpop.permute.xlu0 %5311
        %5314 = vset.pattern.permute.xlu0 6
        %5315 = vperm.xlu0 %5314, %v440
        %v5316 = vpop.permute.xlu0 %5315
        %5318 = vset.pattern.permute.xlu0 6
        %5319 = vperm.xlu0 %5318, %v441
        %v5320 = vpop.permute.xlu0 %5319
        %5322 = vset.pattern.permute.xlu0 6
        %5323 = vperm.xlu0 %5322, %v442
        %v5324 = vpop.permute.xlu0 %5323
        %5326 = vset.pattern.permute.xlu0 6
        %5327 = vperm.xlu0 %5326, %v443
        %v5328 = vpop.permute.xlu0 %5327
        %5330 = vset.pattern.permute.xlu0 6
        %5331 = vperm.xlu0 %5330, %v444
        %v5332 = vpop.permute.xlu0 %5331
        %5334 = vset.pattern.permute.xlu0 6
        %5335 = vperm.xlu0 %5334, %v445
        %v5336 = vpop.permute.xlu0 %5335
        %5338 = vset.pattern.permute.xlu0 6
        %5339 = vperm.xlu0 %5338, %v446
        %v5340 = vpop.permute.xlu0 %5339
        %5342 = vset.pattern.permute.xlu0 6
        %5343 = vperm.xlu0 %5342, %v447
        %v5344 = vpop.permute.xlu0 %5343
        %5346 = vset.pattern.permute.xlu0 6
        %5347 = vperm.xlu0 %5346, %v448
        %v5348 = vpop.permute.xlu0 %5347
        %5350 = vset.pattern.permute.xlu0 6
        %5351 = vperm.xlu0 %5350, %v449
        %v5352 = vpop.permute.xlu0 %5351
        %5354 = vset.pattern.permute.xlu0 6
        %5355 = vperm.xlu0 %5354, %v450
        %v5356 = vpop.permute.xlu0 %5355
        %5358 = vset.pattern.permute.xlu0 6
        %5359 = vperm.xlu0 %5358, %v451
        %v5360 = vpop.permute.xlu0 %5359
        %5362 = vset.pattern.permute.xlu0 6
        %5363 = vperm.xlu0 %5362, %v452
        %v5364 = vpop.permute.xlu0 %5363
        %5366 = vset.pattern.permute.xlu0 6
        %5367 = vperm.xlu0 %5366, %v453
        %v5368 = vpop.permute.xlu0 %5367
        %5370 = vset.pattern.permute.xlu0 6
        %5371 = vperm.xlu0 %5370, %v454
        %v5372 = vpop.permute.xlu0 %5371
        %5374 = vset.pattern.permute.xlu0 6
        %5375 = vperm.xlu0 %5374, %v455
        %v5376 = vpop.permute.xlu0 %5375
        %5378 = vset.pattern.permute.xlu0 6
        %5379 = vperm.xlu0 %5378, %v456
        %v5380 = vpop.permute.xlu0 %5379
        %5382 = vset.pattern.permute.xlu0 6
        %5383 = vperm.xlu0 %5382, %v457
        %v5384 = vpop.permute.xlu0 %5383
        %5386 = vset.pattern.permute.xlu0 6
        %5387 = vperm.xlu0 %5386, %v458
        %v5388 = vpop.permute.xlu0 %5387
        %5390 = vset.pattern.permute.xlu0 6
        %5391 = vperm.xlu0 %5390, %v459
        %v5392 = vpop.permute.xlu0 %5391
        %5394 = vset.pattern.permute.xlu0 6
        %5395 = vperm.xlu0 %5394, %v460
        %v5396 = vpop.permute.xlu0 %5395
        %5398 = vset.pattern.permute.xlu0 6
        %5399 = vperm.xlu0 %5398, %v461
        %v5400 = vpop.permute.xlu0 %5399
        %5402 = vset.pattern.permute.xlu0 6
        %5403 = vperm.xlu0 %5402, %v462
        %v5404 = vpop.permute.xlu0 %5403
        %5406 = vset.pattern.permute.xlu0 6
        %5407 = vperm.xlu0 %5406, %v463
        %v5408 = vpop.permute.xlu0 %5407
        %5410 = vset.pattern.permute.xlu0 6
        %5411 = vperm.xlu0 %5410, %v464
        %v5412 = vpop.permute.xlu0 %5411
        %5414 = vset.pattern.permute.xlu0 6
        %5415 = vperm.xlu0 %5414, %v465
        %v5416 = vpop.permute.xlu0 %5415
        %5418 = vset.pattern.permute.xlu0 6
        %5419 = vperm.xlu0 %5418, %v466
        %v5420 = vpop.permute.xlu0 %5419
        %5422 = vset.pattern.permute.xlu0 6
        %5423 = vperm.xlu0 %5422, %v467
        %v5424 = vpop.permute.xlu0 %5423
        %5426 = vset.pattern.permute.xlu0 6
        %5427 = vperm.xlu0 %5426, %v468
        %v5428 = vpop.permute.xlu0 %5427
        %5430 = vset.pattern.permute.xlu0 6
        %5431 = vperm.xlu0 %5430, %v469
        %v5432 = vpop.permute.xlu0 %5431
        %5434 = vset.pattern.permute.xlu0 6
        %5435 = vperm.xlu0 %5434, %v470
        %v5436 = vpop.permute.xlu0 %5435
        %5438 = vset.pattern.permute.xlu0 6
        %5439 = vperm.xlu0 %5438, %v471
        %v5440 = vpop.permute.xlu0 %5439
        %5442 = vset.pattern.permute.xlu0 6
        %5443 = vperm.xlu0 %5442, %v472
        %v5444 = vpop.permute.xlu0 %5443
        %5446 = vset.pattern.permute.xlu0 6
        %5447 = vperm.xlu0 %5446, %v473
        %v5448 = vpop.permute.xlu0 %5447
        %5450 = vset.pattern.permute.xlu0 6
        %5451 = vperm.xlu0 %5450, %v474
        %v5452 = vpop.permute.xlu0 %5451
        %5454 = vset.pattern.permute.xlu0 6
        %5455 = vperm.xlu0 %5454, %v475
        %v5456 = vpop.permute.xlu0 %5455
        %5458 = vset.pattern.permute.xlu0 6
        %5459 = vperm.xlu0 %5458, %v476
        %v5460 = vpop.permute.xlu0 %5459
        %5462 = vset.pattern.permute.xlu0 6
        %5463 = vperm.xlu0 %5462, %v477
        %v5464 = vpop.permute.xlu0 %5463
        %5466 = vset.pattern.permute.xlu0 6
        %5467 = vperm.xlu0 %5466, %v478
        %v5468 = vpop.permute.xlu0 %5467
        %5470 = vset.pattern.permute.xlu0 6
        %5471 = vperm.xlu0 %5470, %v479
        %v5472 = vpop.permute.xlu0 %5471
        %5474 = vset.pattern.permute.xlu0 6
        %5475 = vperm.xlu0 %5474, %v480
        %v5476 = vpop.permute.xlu0 %5475
        %5478 = vset.pattern.permute.xlu0 6
        %5479 = vperm.xlu0 %5478, %v481
        %v5480 = vpop.permute.xlu0 %5479
        %5482 = vset.pattern.permute.xlu0 6
        %5483 = vperm.xlu0 %5482, %v482
        %v5484 = vpop.permute.xlu0 %5483
        %5486 = vset.pattern.permute.xlu0 6
        %5487 = vperm.xlu0 %5486, %v483
        %v5488 = vpop.permute.xlu0 %5487
        %5490 = vset.pattern.permute.xlu0 6
        %5491 = vperm.xlu0 %5490, %v484
        %v5492 = vpop.permute.xlu0 %5491
        %5494 = vset.pattern.permute.xlu0 6
        %5495 = vperm.xlu0 %5494, %v485
        %v5496 = vpop.permute.xlu0 %5495
        %5498 = vset.pattern.permute.xlu0 6
        %5499 = vperm.xlu0 %5498, %v486
        %v5500 = vpop.permute.xlu0 %5499
        %5502 = vset.pattern.permute.xlu0 6
        %5503 = vperm.xlu0 %5502, %v487
        %v5504 = vpop.permute.xlu0 %5503
        %5506 = vset.pattern.permute.xlu0 6
        %5507 = vperm.xlu0 %5506, %v488
        %v5508 = vpop.permute.xlu0 %5507
        %5510 = vset.pattern.permute.xlu0 6
        %5511 = vperm.xlu0 %5510, %v489
        %v5512 = vpop.permute.xlu0 %5511
        %5514 = vset.pattern.permute.xlu0 6
        %5515 = vperm.xlu0 %5514, %v490
        %v5516 = vpop.permute.xlu0 %5515
        %5518 = vset.pattern.permute.xlu0 6
        %5519 = vperm.xlu0 %5518, %v491
        %v5520 = vpop.permute.xlu0 %5519
        %5522 = vset.pattern.permute.xlu0 6
        %5523 = vperm.xlu0 %5522, %v492
        %v5524 = vpop.permute.xlu0 %5523
        %5526 = vset.pattern.permute.xlu0 6
        %5527 = vperm.xlu0 %5526, %v493
        %v5528 = vpop.permute.xlu0 %5527
        %5530 = vset.pattern.permute.xlu0 6
        %5531 = vperm.xlu0 %5530, %v494
        %v5532 = vpop.permute.xlu0 %5531
        %5534 = vset.pattern.permute.xlu0 6
        %5535 = vperm.xlu0 %5534, %v495
        %v5536 = vpop.permute.xlu0 %5535
        %5538 = vset.pattern.permute.xlu0 6
        %5539 = vperm.xlu0 %5538, %v496
        %v5540 = vpop.permute.xlu0 %5539
        %5542 = vset.pattern.permute.xlu0 6
        %5543 = vperm.xlu0 %5542, %v497
        %v5544 = vpop.permute.xlu0 %5543
        %5546 = vset.pattern.permute.xlu0 6
        %5547 = vperm.xlu0 %5546, %v498
        %v5548 = vpop.permute.xlu0 %5547
        %5550 = vset.pattern.permute.xlu0 6
        %5551 = vperm.xlu0 %5550, %v499
        %v5552 = vpop.permute.xlu0 %5551
        %5554 = vset.pattern.permute.xlu0 6
        %5555 = vperm.xlu0 %5554, %v500
        %v5556 = vpop.permute.xlu0 %5555
        %5558 = vset.pattern.permute.xlu0 6
        %5559 = vperm.xlu0 %5558, %v501
        %v5560 = vpop.permute.xlu0 %5559
        %5562 = vset.pattern.permute.xlu0 6
        %5563 = vperm.xlu0 %5562, %v502
        %v5564 = vpop.permute.xlu0 %5563
        %5566 = vset.pattern.permute.xlu0 6
        %5567 = vperm.xlu0 %5566, %v503
        %v5568 = vpop.permute.xlu0 %5567
        %5570 = vset.pattern.permute.xlu0 6
        %5571 = vperm.xlu0 %5570, %v504
        %v5572 = vpop.permute.xlu0 %5571
        %5574 = vset.pattern.permute.xlu0 6
        %5575 = vperm.xlu0 %5574, %v505
        %v5576 = vpop.permute.xlu0 %5575
        %5578 = vset.pattern.permute.xlu0 6
        %5579 = vperm.xlu0 %5578, %v506
        %v5580 = vpop.permute.xlu0 %5579
        %5582 = vset.pattern.permute.xlu0 6
        %5583 = vperm.xlu0 %5582, %v507
        %v5584 = vpop.permute.xlu0 %5583
        %5586 = vset.pattern.permute.xlu0 6
        %5587 = vperm.xlu0 %5586, %v508
        %v5588 = vpop.permute.xlu0 %5587
        %5590 = vset.pattern.permute.xlu0 6
        %5591 = vperm.xlu0 %5590, %v509
        %v5592 = vpop.permute.xlu0 %5591
        %5594 = vset.pattern.permute.xlu0 6
        %5595 = vperm.xlu0 %5594, %v510
        %v5596 = vpop.permute.xlu0 %5595
        %5598 = vset.pattern.permute.xlu0 6
        %5599 = vperm.xlu0 %5598, %v511
        %v5600 = vpop.permute.xlu0 %5599
        %5602 = vset.pattern.permute.xlu0 6
        %5603 = vperm.xlu0 %5602, %v512
        %v5604 = vpop.permute.xlu0 %5603
        %5606 = vset.pattern.permute.xlu0 6
        %5607 = vperm.xlu0 %5606, %v513
        %v5608 = vpop.permute.xlu0 %5607
        %5610 = vset.pattern.permute.xlu0 6
        %5611 = vperm.xlu0 %5610, %v514
        %v5612 = vpop.permute.xlu0 %5611
        %5614 = vset.pattern.permute.xlu0 6
        %5615 = vperm.xlu0 %5614, %v515
        %v5616 = vpop.permute.xlu0 %5615
        %5618 = vset.pattern.permute.xlu0 6
        %5619 = vperm.xlu0 %5618, %v516
        %v5620 = vpop.permute.xlu0 %5619
        %5622 = vset.pattern.permute.xlu0 6
        %5623 = vperm.xlu0 %5622, %v517
        %v5624 = vpop.permute.xlu0 %5623
        %5626 = vset.pattern.permute.xlu0 6
        %5627 = vperm.xlu0 %5626, %v518
        %v5628 = vpop.permute.xlu0 %5627
        %5630 = vset.pattern.permute.xlu0 6
        %5631 = vperm.xlu0 %5630, %v519
        %v5632 = vpop.permute.xlu0 %5631
        %5634 = vset.pattern.permute.xlu0 6
        %5635 = vperm.xlu0 %5634, %v520
        %v5636 = vpop.permute.xlu0 %5635
        %5638 = vset.pattern.permute.xlu0 6
        %5639 = vperm.xlu0 %5638, %v521
        %v5640 = vpop.permute.xlu0 %5639
        %5642 = vset.pattern.permute.xlu0 6
        %5643 = vperm.xlu0 %5642, %v522
        %v5644 = vpop.permute.xlu0 %5643
        %5646 = vset.pattern.permute.xlu0 6
        %5647 = vperm.xlu0 %5646, %v523
        %v5648 = vpop.permute.xlu0 %5647
        %5650 = vset.pattern.permute.xlu0 6
        %5651 = vperm.xlu0 %5650, %v524
        %v5652 = vpop.permute.xlu0 %5651
        %5654 = vset.pattern.permute.xlu0 6
        %5655 = vperm.xlu0 %5654, %v525
        %v5656 = vpop.permute.xlu0 %5655
        %5658 = vset.pattern.permute.xlu0 6
        %5659 = vperm.xlu0 %5658, %v526
        %v5660 = vpop.permute.xlu0 %5659
        %5662 = vset.pattern.permute.xlu0 6
        %5663 = vperm.xlu0 %5662, %v527
        %v5664 = vpop.permute.xlu0 %5663
        %5666 = vset.pattern.permute.xlu0 6
        %5667 = vperm.xlu0 %5666, %v528
        %v5668 = vpop.permute.xlu0 %5667
        %5670 = vset.pattern.permute.xlu0 6
        %5671 = vperm.xlu0 %5670, %v529
        %v5672 = vpop.permute.xlu0 %5671
        %v5674 = vlaneseq
        %v5675 = vshrl.u32 %v5674, 7
        %v5676 = vsub.s32 6, %v5675
        %v5677 = vrot.slane %v273, %v5676
        %v5678 = vmul.f32 %v5164, %v5677
        %v5679 = vmul.f32 %v5168, %v5677
        %v5680 = vmul.f32 %v5172, %v5677
        %v5681 = vmul.f32 %v5176, %v5677
        %v5682 = vmul.f32 %v5180, %v5677
        %v5683 = vmul.f32 %v5184, %v5677
        %v5684 = vmul.f32 %v5188, %v5677
        %v5685 = vmul.f32 %v5192, %v5677
        %v5686 = vmul.f32 %v5196, %v5677
        %v5687 = vmul.f32 %v5200, %v5677
        %v5688 = vmul.f32 %v5204, %v5677
        %v5689 = vmul.f32 %v5208, %v5677
        %v5690 = vmul.f32 %v5212, %v5677
        %v5691 = vmul.f32 %v5216, %v5677
        %v5692 = vmul.f32 %v5220, %v5677
        %v5693 = vmul.f32 %v5224, %v5677
        %v5694 = vmul.f32 %v5228, %v5677
        %v5695 = vmul.f32 %v5232, %v5677
        %v5696 = vmul.f32 %v5236, %v5677
        %v5697 = vmul.f32 %v5240, %v5677
        %v5698 = vmul.f32 %v5244, %v5677
        %v5699 = vmul.f32 %v5248, %v5677
        %v5700 = vmul.f32 %v5252, %v5677
        %v5701 = vmul.f32 %v5256, %v5677
        %v5702 = vmul.f32 %v5260, %v5677
        %v5703 = vmul.f32 %v5264, %v5677
        %v5704 = vmul.f32 %v5268, %v5677
        %v5705 = vmul.f32 %v5272, %v5677
        %v5706 = vmul.f32 %v5276, %v5677
        %v5707 = vmul.f32 %v5280, %v5677
        %v5708 = vmul.f32 %v5284, %v5677
        %v5709 = vmul.f32 %v5288, %v5677
        %v5710 = vmul.f32 %v5292, %v5677
        %v5711 = vmul.f32 %v5296, %v5677
        %v5712 = vmul.f32 %v5300, %v5677
        %v5713 = vmul.f32 %v5304, %v5677
        %v5714 = vmul.f32 %v5308, %v5677
        %v5715 = vmul.f32 %v5312, %v5677
        %v5716 = vmul.f32 %v5316, %v5677
        %v5717 = vmul.f32 %v5320, %v5677
        %v5718 = vmul.f32 %v5324, %v5677
        %v5719 = vmul.f32 %v5328, %v5677
        %v5720 = vmul.f32 %v5332, %v5677
        %v5721 = vmul.f32 %v5336, %v5677
        %v5722 = vmul.f32 %v5340, %v5677
        %v5723 = vmul.f32 %v5344, %v5677
        %v5724 = vmul.f32 %v5348, %v5677
        %v5725 = vmul.f32 %v5352, %v5677
        %v5726 = vmul.f32 %v5356, %v5677
        %v5727 = vmul.f32 %v5360, %v5677
        %v5728 = vmul.f32 %v5364, %v5677
        %v5729 = vmul.f32 %v5368, %v5677
        %v5730 = vmul.f32 %v5372, %v5677
        %v5731 = vmul.f32 %v5376, %v5677
        %v5732 = vmul.f32 %v5380, %v5677
        %v5733 = vmul.f32 %v5384, %v5677
        %v5734 = vmul.f32 %v5388, %v5677
        %v5735 = vmul.f32 %v5392, %v5677
        %v5736 = vmul.f32 %v5396, %v5677
        %v5737 = vmul.f32 %v5400, %v5677
        %v5738 = vmul.f32 %v5404, %v5677
        %v5739 = vmul.f32 %v5408, %v5677
        %v5740 = vmul.f32 %v5412, %v5677
        %v5741 = vmul.f32 %v5416, %v5677
        %v5742 = vmul.f32 %v5420, %v5677
        %v5743 = vmul.f32 %v5424, %v5677
        %v5744 = vmul.f32 %v5428, %v5677
        %v5745 = vmul.f32 %v5432, %v5677
        %v5746 = vmul.f32 %v5436, %v5677
        %v5747 = vmul.f32 %v5440, %v5677
        %v5748 = vmul.f32 %v5444, %v5677
        %v5749 = vmul.f32 %v5448, %v5677
        %v5750 = vmul.f32 %v5452, %v5677
        %v5751 = vmul.f32 %v5456, %v5677
        %v5752 = vmul.f32 %v5460, %v5677
        %v5753 = vmul.f32 %v5464, %v5677
        %v5754 = vmul.f32 %v5468, %v5677
        %v5755 = vmul.f32 %v5472, %v5677
        %v5756 = vmul.f32 %v5476, %v5677
        %v5757 = vmul.f32 %v5480, %v5677
        %v5758 = vmul.f32 %v5484, %v5677
        %v5759 = vmul.f32 %v5488, %v5677
        %v5760 = vmul.f32 %v5492, %v5677
        %v5761 = vmul.f32 %v5496, %v5677
        %v5762 = vmul.f32 %v5500, %v5677
        %v5763 = vmul.f32 %v5504, %v5677
        %v5764 = vmul.f32 %v5508, %v5677
        %v5765 = vmul.f32 %v5512, %v5677
        %v5766 = vmul.f32 %v5516, %v5677
        %v5767 = vmul.f32 %v5520, %v5677
        %v5768 = vmul.f32 %v5524, %v5677
        %v5769 = vmul.f32 %v5528, %v5677
        %v5770 = vmul.f32 %v5532, %v5677
        %v5771 = vmul.f32 %v5536, %v5677
        %v5772 = vmul.f32 %v5540, %v5677
        %v5773 = vmul.f32 %v5544, %v5677
        %v5774 = vmul.f32 %v5548, %v5677
        %v5775 = vmul.f32 %v5552, %v5677
        %v5776 = vmul.f32 %v5556, %v5677
        %v5777 = vmul.f32 %v5560, %v5677
        %v5778 = vmul.f32 %v5564, %v5677
        %v5779 = vmul.f32 %v5568, %v5677
        %v5780 = vmul.f32 %v5572, %v5677
        %v5781 = vmul.f32 %v5576, %v5677
        %v5782 = vmul.f32 %v5580, %v5677
        %v5783 = vmul.f32 %v5584, %v5677
        %v5784 = vmul.f32 %v5588, %v5677
        %v5785 = vmul.f32 %v5592, %v5677
        %v5786 = vmul.f32 %v5596, %v5677
        %v5787 = vmul.f32 %v5600, %v5677
        %v5788 = vmul.f32 %v5604, %v5677
        %v5789 = vmul.f32 %v5608, %v5677
        %v5790 = vmul.f32 %v5612, %v5677
        %v5791 = vmul.f32 %v5616, %v5677
        %v5792 = vmul.f32 %v5620, %v5677
        %v5793 = vmul.f32 %v5624, %v5677
        %v5794 = vmul.f32 %v5628, %v5677
        %v5795 = vmul.f32 %v5632, %v5677
        %v5796 = vmul.f32 %v5636, %v5677
        %v5797 = vmul.f32 %v5640, %v5677
        %v5798 = vmul.f32 %v5644, %v5677
        %v5799 = vmul.f32 %v5648, %v5677
        %v5800 = vmul.f32 %v5652, %v5677
        %v5801 = vmul.f32 %v5656, %v5677
        %v5802 = vmul.f32 %v5660, %v5677
        %v5803 = vmul.f32 %v5664, %v5677
        %v5804 = vmul.f32 %v5668, %v5677
        %v5805 = vmul.f32 %v5672, %v5677
        %v5806 = vadd.f32 %v5034, %v5678
        %v5807 = vadd.f32 %v5035, %v5679
        %v5808 = vadd.f32 %v5036, %v5680
        %v5809 = vadd.f32 %v5037, %v5681
        %v5810 = vadd.f32 %v5038, %v5682
        %v5811 = vadd.f32 %v5039, %v5683
        %v5812 = vadd.f32 %v5040, %v5684
        %v5813 = vadd.f32 %v5041, %v5685
        %v5814 = vadd.f32 %v5042, %v5686
        %v5815 = vadd.f32 %v5043, %v5687
        %v5816 = vadd.f32 %v5044, %v5688
        %v5817 = vadd.f32 %v5045, %v5689
        %v5818 = vadd.f32 %v5046, %v5690
        %v5819 = vadd.f32 %v5047, %v5691
        %v5820 = vadd.f32 %v5048, %v5692
        %v5821 = vadd.f32 %v5049, %v5693
        %v5822 = vadd.f32 %v5050, %v5694
        %v5823 = vadd.f32 %v5051, %v5695
        %v5824 = vadd.f32 %v5052, %v5696
        %v5825 = vadd.f32 %v5053, %v5697
        %v5826 = vadd.f32 %v5054, %v5698
        %v5827 = vadd.f32 %v5055, %v5699
        %v5828 = vadd.f32 %v5056, %v5700
        %v5829 = vadd.f32 %v5057, %v5701
        %v5830 = vadd.f32 %v5058, %v5702
        %v5831 = vadd.f32 %v5059, %v5703
        %v5832 = vadd.f32 %v5060, %v5704
        %v5833 = vadd.f32 %v5061, %v5705
        %v5834 = vadd.f32 %v5062, %v5706
        %v5835 = vadd.f32 %v5063, %v5707
        %v5836 = vadd.f32 %v5064, %v5708
        %v5837 = vadd.f32 %v5065, %v5709
        %v5838 = vadd.f32 %v5066, %v5710
        %v5839 = vadd.f32 %v5067, %v5711
        %v5840 = vadd.f32 %v5068, %v5712
        %v5841 = vadd.f32 %v5069, %v5713
        %v5842 = vadd.f32 %v5070, %v5714
        %v5843 = vadd.f32 %v5071, %v5715
        %v5844 = vadd.f32 %v5072, %v5716
        %v5845 = vadd.f32 %v5073, %v5717
        %v5846 = vadd.f32 %v5074, %v5718
        %v5847 = vadd.f32 %v5075, %v5719
        %v5848 = vadd.f32 %v5076, %v5720
        %v5849 = vadd.f32 %v5077, %v5721
        %v5850 = vadd.f32 %v5078, %v5722
        %v5851 = vadd.f32 %v5079, %v5723
        %v5852 = vadd.f32 %v5080, %v5724
        %v5853 = vadd.f32 %v5081, %v5725
        %v5854 = vadd.f32 %v5082, %v5726
        %v5855 = vadd.f32 %v5083, %v5727
        %v5856 = vadd.f32 %v5084, %v5728
        %v5857 = vadd.f32 %v5085, %v5729
        %v5858 = vadd.f32 %v5086, %v5730
        %v5859 = vadd.f32 %v5087, %v5731
        %v5860 = vadd.f32 %v5088, %v5732
        %v5861 = vadd.f32 %v5089, %v5733
        %v5862 = vadd.f32 %v5090, %v5734
        %v5863 = vadd.f32 %v5091, %v5735
        %v5864 = vadd.f32 %v5092, %v5736
        %v5865 = vadd.f32 %v5093, %v5737
        %v5866 = vadd.f32 %v5094, %v5738
        %v5867 = vadd.f32 %v5095, %v5739
        %v5868 = vadd.f32 %v5096, %v5740
        %v5869 = vadd.f32 %v5097, %v5741
        %v5870 = vadd.f32 %v5098, %v5742
        %v5871 = vadd.f32 %v5099, %v5743
        %v5872 = vadd.f32 %v5100, %v5744
        %v5873 = vadd.f32 %v5101, %v5745
        %v5874 = vadd.f32 %v5102, %v5746
        %v5875 = vadd.f32 %v5103, %v5747
        %v5876 = vadd.f32 %v5104, %v5748
        %v5877 = vadd.f32 %v5105, %v5749
        %v5878 = vadd.f32 %v5106, %v5750
        %v5879 = vadd.f32 %v5107, %v5751
        %v5880 = vadd.f32 %v5108, %v5752
        %v5881 = vadd.f32 %v5109, %v5753
        %v5882 = vadd.f32 %v5110, %v5754
        %v5883 = vadd.f32 %v5111, %v5755
        %v5884 = vadd.f32 %v5112, %v5756
        %v5885 = vadd.f32 %v5113, %v5757
        %v5886 = vadd.f32 %v5114, %v5758
        %v5887 = vadd.f32 %v5115, %v5759
        %v5888 = vadd.f32 %v5116, %v5760
        %v5889 = vadd.f32 %v5117, %v5761
        %v5890 = vadd.f32 %v5118, %v5762
        %v5891 = vadd.f32 %v5119, %v5763
        %v5892 = vadd.f32 %v5120, %v5764
        %v5893 = vadd.f32 %v5121, %v5765
        %v5894 = vadd.f32 %v5122, %v5766
        %v5895 = vadd.f32 %v5123, %v5767
        %v5896 = vadd.f32 %v5124, %v5768
        %v5897 = vadd.f32 %v5125, %v5769
        %v5898 = vadd.f32 %v5126, %v5770
        %v5899 = vadd.f32 %v5127, %v5771
        %v5900 = vadd.f32 %v5128, %v5772
        %v5901 = vadd.f32 %v5129, %v5773
        %v5902 = vadd.f32 %v5130, %v5774
        %v5903 = vadd.f32 %v5131, %v5775
        %v5904 = vadd.f32 %v5132, %v5776
        %v5905 = vadd.f32 %v5133, %v5777
        %v5906 = vadd.f32 %v5134, %v5778
        %v5907 = vadd.f32 %v5135, %v5779
        %v5908 = vadd.f32 %v5136, %v5780
        %v5909 = vadd.f32 %v5137, %v5781
        %v5910 = vadd.f32 %v5138, %v5782
        %v5911 = vadd.f32 %v5139, %v5783
        %v5912 = vadd.f32 %v5140, %v5784
        %v5913 = vadd.f32 %v5141, %v5785
        %v5914 = vadd.f32 %v5142, %v5786
        %v5915 = vadd.f32 %v5143, %v5787
        %v5916 = vadd.f32 %v5144, %v5788
        %v5917 = vadd.f32 %v5145, %v5789
        %v5918 = vadd.f32 %v5146, %v5790
        %v5919 = vadd.f32 %v5147, %v5791
        %v5920 = vadd.f32 %v5148, %v5792
        %v5921 = vadd.f32 %v5149, %v5793
        %v5922 = vadd.f32 %v5150, %v5794
        %v5923 = vadd.f32 %v5151, %v5795
        %v5924 = vadd.f32 %v5152, %v5796
        %v5925 = vadd.f32 %v5153, %v5797
        %v5926 = vadd.f32 %v5154, %v5798
        %v5927 = vadd.f32 %v5155, %v5799
        %v5928 = vadd.f32 %v5156, %v5800
        %v5929 = vadd.f32 %v5157, %v5801
        %v5930 = vadd.f32 %v5158, %v5802
        %v5931 = vadd.f32 %v5159, %v5803
        %v5932 = vadd.f32 %v5160, %v5804
        %v5933 = vadd.f32 %v5161, %v5805
        %5934 = vset.pattern.permute.xlu0 7
        %5935 = vperm.xlu0 %5934, %v402
        %v5936 = vpop.permute.xlu0 %5935
        %5938 = vset.pattern.permute.xlu0 7
        %5939 = vperm.xlu0 %5938, %v403
        %v5940 = vpop.permute.xlu0 %5939
        %5942 = vset.pattern.permute.xlu0 7
        %5943 = vperm.xlu0 %5942, %v404
        %v5944 = vpop.permute.xlu0 %5943
        %5946 = vset.pattern.permute.xlu0 7
        %5947 = vperm.xlu0 %5946, %v405
        %v5948 = vpop.permute.xlu0 %5947
        %5950 = vset.pattern.permute.xlu0 7
        %5951 = vperm.xlu0 %5950, %v406
        %v5952 = vpop.permute.xlu0 %5951
        %5954 = vset.pattern.permute.xlu0 7
        %5955 = vperm.xlu0 %5954, %v407
        %v5956 = vpop.permute.xlu0 %5955
        %5958 = vset.pattern.permute.xlu0 7
        %5959 = vperm.xlu0 %5958, %v408
        %v5960 = vpop.permute.xlu0 %5959
        %5962 = vset.pattern.permute.xlu0 7
        %5963 = vperm.xlu0 %5962, %v409
        %v5964 = vpop.permute.xlu0 %5963
        %5966 = vset.pattern.permute.xlu0 7
        %5967 = vperm.xlu0 %5966, %v410
        %v5968 = vpop.permute.xlu0 %5967
        %5970 = vset.pattern.permute.xlu0 7
        %5971 = vperm.xlu0 %5970, %v411
        %v5972 = vpop.permute.xlu0 %5971
        %5974 = vset.pattern.permute.xlu0 7
        %5975 = vperm.xlu0 %5974, %v412
        %v5976 = vpop.permute.xlu0 %5975
        %5978 = vset.pattern.permute.xlu0 7
        %5979 = vperm.xlu0 %5978, %v413
        %v5980 = vpop.permute.xlu0 %5979
        %5982 = vset.pattern.permute.xlu0 7
        %5983 = vperm.xlu0 %5982, %v414
        %v5984 = vpop.permute.xlu0 %5983
        %5986 = vset.pattern.permute.xlu0 7
        %5987 = vperm.xlu0 %5986, %v415
        %v5988 = vpop.permute.xlu0 %5987
        %5990 = vset.pattern.permute.xlu0 7
        %5991 = vperm.xlu0 %5990, %v416
        %v5992 = vpop.permute.xlu0 %5991
        %5994 = vset.pattern.permute.xlu0 7
        %5995 = vperm.xlu0 %5994, %v417
        %v5996 = vpop.permute.xlu0 %5995
        %5998 = vset.pattern.permute.xlu0 7
        %5999 = vperm.xlu0 %5998, %v418
        %v6000 = vpop.permute.xlu0 %5999
        %6002 = vset.pattern.permute.xlu0 7
        %6003 = vperm.xlu0 %6002, %v419
        %v6004 = vpop.permute.xlu0 %6003
        %6006 = vset.pattern.permute.xlu0 7
        %6007 = vperm.xlu0 %6006, %v420
        %v6008 = vpop.permute.xlu0 %6007
        %6010 = vset.pattern.permute.xlu0 7
        %6011 = vperm.xlu0 %6010, %v421
        %v6012 = vpop.permute.xlu0 %6011
        %6014 = vset.pattern.permute.xlu0 7
        %6015 = vperm.xlu0 %6014, %v422
        %v6016 = vpop.permute.xlu0 %6015
        %6018 = vset.pattern.permute.xlu0 7
        %6019 = vperm.xlu0 %6018, %v423
        %v6020 = vpop.permute.xlu0 %6019
        %6022 = vset.pattern.permute.xlu0 7
        %6023 = vperm.xlu0 %6022, %v424
        %v6024 = vpop.permute.xlu0 %6023
        %6026 = vset.pattern.permute.xlu0 7
        %6027 = vperm.xlu0 %6026, %v425
        %v6028 = vpop.permute.xlu0 %6027
        %6030 = vset.pattern.permute.xlu0 7
        %6031 = vperm.xlu0 %6030, %v426
        %v6032 = vpop.permute.xlu0 %6031
        %6034 = vset.pattern.permute.xlu0 7
        %6035 = vperm.xlu0 %6034, %v427
        %v6036 = vpop.permute.xlu0 %6035
        %6038 = vset.pattern.permute.xlu0 7
        %6039 = vperm.xlu0 %6038, %v428
        %v6040 = vpop.permute.xlu0 %6039
        %6042 = vset.pattern.permute.xlu0 7
        %6043 = vperm.xlu0 %6042, %v429
        %v6044 = vpop.permute.xlu0 %6043
        %6046 = vset.pattern.permute.xlu0 7
        %6047 = vperm.xlu0 %6046, %v430
        %v6048 = vpop.permute.xlu0 %6047
        %6050 = vset.pattern.permute.xlu0 7
        %6051 = vperm.xlu0 %6050, %v431
        %v6052 = vpop.permute.xlu0 %6051
        %6054 = vset.pattern.permute.xlu0 7
        %6055 = vperm.xlu0 %6054, %v432
        %v6056 = vpop.permute.xlu0 %6055
        %6058 = vset.pattern.permute.xlu0 7
        %6059 = vperm.xlu0 %6058, %v433
        %v6060 = vpop.permute.xlu0 %6059
        %6062 = vset.pattern.permute.xlu0 7
        %6063 = vperm.xlu0 %6062, %v434
        %v6064 = vpop.permute.xlu0 %6063
        %6066 = vset.pattern.permute.xlu0 7
        %6067 = vperm.xlu0 %6066, %v435
        %v6068 = vpop.permute.xlu0 %6067
        %6070 = vset.pattern.permute.xlu0 7
        %6071 = vperm.xlu0 %6070, %v436
        %v6072 = vpop.permute.xlu0 %6071
        %6074 = vset.pattern.permute.xlu0 7
        %6075 = vperm.xlu0 %6074, %v437
        %v6076 = vpop.permute.xlu0 %6075
        %6078 = vset.pattern.permute.xlu0 7
        %6079 = vperm.xlu0 %6078, %v438
        %v6080 = vpop.permute.xlu0 %6079
        %6082 = vset.pattern.permute.xlu0 7
        %6083 = vperm.xlu0 %6082, %v439
        %v6084 = vpop.permute.xlu0 %6083
        %6086 = vset.pattern.permute.xlu0 7
        %6087 = vperm.xlu0 %6086, %v440
        %v6088 = vpop.permute.xlu0 %6087
        %6090 = vset.pattern.permute.xlu0 7
        %6091 = vperm.xlu0 %6090, %v441
        %v6092 = vpop.permute.xlu0 %6091
        %6094 = vset.pattern.permute.xlu0 7
        %6095 = vperm.xlu0 %6094, %v442
        %v6096 = vpop.permute.xlu0 %6095
        %6098 = vset.pattern.permute.xlu0 7
        %6099 = vperm.xlu0 %6098, %v443
        %v6100 = vpop.permute.xlu0 %6099
        %6102 = vset.pattern.permute.xlu0 7
        %6103 = vperm.xlu0 %6102, %v444
        %v6104 = vpop.permute.xlu0 %6103
        %6106 = vset.pattern.permute.xlu0 7
        %6107 = vperm.xlu0 %6106, %v445
        %v6108 = vpop.permute.xlu0 %6107
        %6110 = vset.pattern.permute.xlu0 7
        %6111 = vperm.xlu0 %6110, %v446
        %v6112 = vpop.permute.xlu0 %6111
        %6114 = vset.pattern.permute.xlu0 7
        %6115 = vperm.xlu0 %6114, %v447
        %v6116 = vpop.permute.xlu0 %6115
        %6118 = vset.pattern.permute.xlu0 7
        %6119 = vperm.xlu0 %6118, %v448
        %v6120 = vpop.permute.xlu0 %6119
        %6122 = vset.pattern.permute.xlu0 7
        %6123 = vperm.xlu0 %6122, %v449
        %v6124 = vpop.permute.xlu0 %6123
        %6126 = vset.pattern.permute.xlu0 7
        %6127 = vperm.xlu0 %6126, %v450
        %v6128 = vpop.permute.xlu0 %6127
        %6130 = vset.pattern.permute.xlu0 7
        %6131 = vperm.xlu0 %6130, %v451
        %v6132 = vpop.permute.xlu0 %6131
        %6134 = vset.pattern.permute.xlu0 7
        %6135 = vperm.xlu0 %6134, %v452
        %v6136 = vpop.permute.xlu0 %6135
        %6138 = vset.pattern.permute.xlu0 7
        %6139 = vperm.xlu0 %6138, %v453
        %v6140 = vpop.permute.xlu0 %6139
        %6142 = vset.pattern.permute.xlu0 7
        %6143 = vperm.xlu0 %6142, %v454
        %v6144 = vpop.permute.xlu0 %6143
        %6146 = vset.pattern.permute.xlu0 7
        %6147 = vperm.xlu0 %6146, %v455
        %v6148 = vpop.permute.xlu0 %6147
        %6150 = vset.pattern.permute.xlu0 7
        %6151 = vperm.xlu0 %6150, %v456
        %v6152 = vpop.permute.xlu0 %6151
        %6154 = vset.pattern.permute.xlu0 7
        %6155 = vperm.xlu0 %6154, %v457
        %v6156 = vpop.permute.xlu0 %6155
        %6158 = vset.pattern.permute.xlu0 7
        %6159 = vperm.xlu0 %6158, %v458
        %v6160 = vpop.permute.xlu0 %6159
        %6162 = vset.pattern.permute.xlu0 7
        %6163 = vperm.xlu0 %6162, %v459
        %v6164 = vpop.permute.xlu0 %6163
        %6166 = vset.pattern.permute.xlu0 7
        %6167 = vperm.xlu0 %6166, %v460
        %v6168 = vpop.permute.xlu0 %6167
        %6170 = vset.pattern.permute.xlu0 7
        %6171 = vperm.xlu0 %6170, %v461
        %v6172 = vpop.permute.xlu0 %6171
        %6174 = vset.pattern.permute.xlu0 7
        %6175 = vperm.xlu0 %6174, %v462
        %v6176 = vpop.permute.xlu0 %6175
        %6178 = vset.pattern.permute.xlu0 7
        %6179 = vperm.xlu0 %6178, %v463
        %v6180 = vpop.permute.xlu0 %6179
        %6182 = vset.pattern.permute.xlu0 7
        %6183 = vperm.xlu0 %6182, %v464
        %v6184 = vpop.permute.xlu0 %6183
        %6186 = vset.pattern.permute.xlu0 7
        %6187 = vperm.xlu0 %6186, %v465
        %v6188 = vpop.permute.xlu0 %6187
        %6190 = vset.pattern.permute.xlu0 7
        %6191 = vperm.xlu0 %6190, %v466
        %v6192 = vpop.permute.xlu0 %6191
        %6194 = vset.pattern.permute.xlu0 7
        %6195 = vperm.xlu0 %6194, %v467
        %v6196 = vpop.permute.xlu0 %6195
        %6198 = vset.pattern.permute.xlu0 7
        %6199 = vperm.xlu0 %6198, %v468
        %v6200 = vpop.permute.xlu0 %6199
        %6202 = vset.pattern.permute.xlu0 7
        %6203 = vperm.xlu0 %6202, %v469
        %v6204 = vpop.permute.xlu0 %6203
        %6206 = vset.pattern.permute.xlu0 7
        %6207 = vperm.xlu0 %6206, %v470
        %v6208 = vpop.permute.xlu0 %6207
        %6210 = vset.pattern.permute.xlu0 7
        %6211 = vperm.xlu0 %6210, %v471
        %v6212 = vpop.permute.xlu0 %6211
        %6214 = vset.pattern.permute.xlu0 7
        %6215 = vperm.xlu0 %6214, %v472
        %v6216 = vpop.permute.xlu0 %6215
        %6218 = vset.pattern.permute.xlu0 7
        %6219 = vperm.xlu0 %6218, %v473
        %v6220 = vpop.permute.xlu0 %6219
        %6222 = vset.pattern.permute.xlu0 7
        %6223 = vperm.xlu0 %6222, %v474
        %v6224 = vpop.permute.xlu0 %6223
        %6226 = vset.pattern.permute.xlu0 7
        %6227 = vperm.xlu0 %6226, %v475
        %v6228 = vpop.permute.xlu0 %6227
        %6230 = vset.pattern.permute.xlu0 7
        %6231 = vperm.xlu0 %6230, %v476
        %v6232 = vpop.permute.xlu0 %6231
        %6234 = vset.pattern.permute.xlu0 7
        %6235 = vperm.xlu0 %6234, %v477
        %v6236 = vpop.permute.xlu0 %6235
        %6238 = vset.pattern.permute.xlu0 7
        %6239 = vperm.xlu0 %6238, %v478
        %v6240 = vpop.permute.xlu0 %6239
        %6242 = vset.pattern.permute.xlu0 7
        %6243 = vperm.xlu0 %6242, %v479
        %v6244 = vpop.permute.xlu0 %6243
        %6246 = vset.pattern.permute.xlu0 7
        %6247 = vperm.xlu0 %6246, %v480
        %v6248 = vpop.permute.xlu0 %6247
        %6250 = vset.pattern.permute.xlu0 7
        %6251 = vperm.xlu0 %6250, %v481
        %v6252 = vpop.permute.xlu0 %6251
        %6254 = vset.pattern.permute.xlu0 7
        %6255 = vperm.xlu0 %6254, %v482
        %v6256 = vpop.permute.xlu0 %6255
        %6258 = vset.pattern.permute.xlu0 7
        %6259 = vperm.xlu0 %6258, %v483
        %v6260 = vpop.permute.xlu0 %6259
        %6262 = vset.pattern.permute.xlu0 7
        %6263 = vperm.xlu0 %6262, %v484
        %v6264 = vpop.permute.xlu0 %6263
        %6266 = vset.pattern.permute.xlu0 7
        %6267 = vperm.xlu0 %6266, %v485
        %v6268 = vpop.permute.xlu0 %6267
        %6270 = vset.pattern.permute.xlu0 7
        %6271 = vperm.xlu0 %6270, %v486
        %v6272 = vpop.permute.xlu0 %6271
        %6274 = vset.pattern.permute.xlu0 7
        %6275 = vperm.xlu0 %6274, %v487
        %v6276 = vpop.permute.xlu0 %6275
        %6278 = vset.pattern.permute.xlu0 7
        %6279 = vperm.xlu0 %6278, %v488
        %v6280 = vpop.permute.xlu0 %6279
        %6282 = vset.pattern.permute.xlu0 7
        %6283 = vperm.xlu0 %6282, %v489
        %v6284 = vpop.permute.xlu0 %6283
        %6286 = vset.pattern.permute.xlu0 7
        %6287 = vperm.xlu0 %6286, %v490
        %v6288 = vpop.permute.xlu0 %6287
        %6290 = vset.pattern.permute.xlu0 7
        %6291 = vperm.xlu0 %6290, %v491
        %v6292 = vpop.permute.xlu0 %6291
        %6294 = vset.pattern.permute.xlu0 7
        %6295 = vperm.xlu0 %6294, %v492
        %v6296 = vpop.permute.xlu0 %6295
        %6298 = vset.pattern.permute.xlu0 7
        %6299 = vperm.xlu0 %6298, %v493
        %v6300 = vpop.permute.xlu0 %6299
        %6302 = vset.pattern.permute.xlu0 7
        %6303 = vperm.xlu0 %6302, %v494
        %v6304 = vpop.permute.xlu0 %6303
        %6306 = vset.pattern.permute.xlu0 7
        %6307 = vperm.xlu0 %6306, %v495
        %v6308 = vpop.permute.xlu0 %6307
        %6310 = vset.pattern.permute.xlu0 7
        %6311 = vperm.xlu0 %6310, %v496
        %v6312 = vpop.permute.xlu0 %6311
        %6314 = vset.pattern.permute.xlu0 7
        %6315 = vperm.xlu0 %6314, %v497
        %v6316 = vpop.permute.xlu0 %6315
        %6318 = vset.pattern.permute.xlu0 7
        %6319 = vperm.xlu0 %6318, %v498
        %v6320 = vpop.permute.xlu0 %6319
        %6322 = vset.pattern.permute.xlu0 7
        %6323 = vperm.xlu0 %6322, %v499
        %v6324 = vpop.permute.xlu0 %6323
        %6326 = vset.pattern.permute.xlu0 7
        %6327 = vperm.xlu0 %6326, %v500
        %v6328 = vpop.permute.xlu0 %6327
        %6330 = vset.pattern.permute.xlu0 7
        %6331 = vperm.xlu0 %6330, %v501
        %v6332 = vpop.permute.xlu0 %6331
        %6334 = vset.pattern.permute.xlu0 7
        %6335 = vperm.xlu0 %6334, %v502
        %v6336 = vpop.permute.xlu0 %6335
        %6338 = vset.pattern.permute.xlu0 7
        %6339 = vperm.xlu0 %6338, %v503
        %v6340 = vpop.permute.xlu0 %6339
        %6342 = vset.pattern.permute.xlu0 7
        %6343 = vperm.xlu0 %6342, %v504
        %v6344 = vpop.permute.xlu0 %6343
        %6346 = vset.pattern.permute.xlu0 7
        %6347 = vperm.xlu0 %6346, %v505
        %v6348 = vpop.permute.xlu0 %6347
        %6350 = vset.pattern.permute.xlu0 7
        %6351 = vperm.xlu0 %6350, %v506
        %v6352 = vpop.permute.xlu0 %6351
        %6354 = vset.pattern.permute.xlu0 7
        %6355 = vperm.xlu0 %6354, %v507
        %v6356 = vpop.permute.xlu0 %6355
        %6358 = vset.pattern.permute.xlu0 7
        %6359 = vperm.xlu0 %6358, %v508
        %v6360 = vpop.permute.xlu0 %6359
        %6362 = vset.pattern.permute.xlu0 7
        %6363 = vperm.xlu0 %6362, %v509
        %v6364 = vpop.permute.xlu0 %6363
        %6366 = vset.pattern.permute.xlu0 7
        %6367 = vperm.xlu0 %6366, %v510
        %v6368 = vpop.permute.xlu0 %6367
        %6370 = vset.pattern.permute.xlu0 7
        %6371 = vperm.xlu0 %6370, %v511
        %v6372 = vpop.permute.xlu0 %6371
        %6374 = vset.pattern.permute.xlu0 7
        %6375 = vperm.xlu0 %6374, %v512
        %v6376 = vpop.permute.xlu0 %6375
        %6378 = vset.pattern.permute.xlu0 7
        %6379 = vperm.xlu0 %6378, %v513
        %v6380 = vpop.permute.xlu0 %6379
        %6382 = vset.pattern.permute.xlu0 7
        %6383 = vperm.xlu0 %6382, %v514
        %v6384 = vpop.permute.xlu0 %6383
        %6386 = vset.pattern.permute.xlu0 7
        %6387 = vperm.xlu0 %6386, %v515
        %v6388 = vpop.permute.xlu0 %6387
        %6390 = vset.pattern.permute.xlu0 7
        %6391 = vperm.xlu0 %6390, %v516
        %v6392 = vpop.permute.xlu0 %6391
        %6394 = vset.pattern.permute.xlu0 7
        %6395 = vperm.xlu0 %6394, %v517
        %v6396 = vpop.permute.xlu0 %6395
        %6398 = vset.pattern.permute.xlu0 7
        %6399 = vperm.xlu0 %6398, %v518
        %v6400 = vpop.permute.xlu0 %6399
        %6402 = vset.pattern.permute.xlu0 7
        %6403 = vperm.xlu0 %6402, %v519
        %v6404 = vpop.permute.xlu0 %6403
        %6406 = vset.pattern.permute.xlu0 7
        %6407 = vperm.xlu0 %6406, %v520
        %v6408 = vpop.permute.xlu0 %6407
        %6410 = vset.pattern.permute.xlu0 7
        %6411 = vperm.xlu0 %6410, %v521
        %v6412 = vpop.permute.xlu0 %6411
        %6414 = vset.pattern.permute.xlu0 7
        %6415 = vperm.xlu0 %6414, %v522
        %v6416 = vpop.permute.xlu0 %6415
        %6418 = vset.pattern.permute.xlu0 7
        %6419 = vperm.xlu0 %6418, %v523
        %v6420 = vpop.permute.xlu0 %6419
        %6422 = vset.pattern.permute.xlu0 7
        %6423 = vperm.xlu0 %6422, %v524
        %v6424 = vpop.permute.xlu0 %6423
        %6426 = vset.pattern.permute.xlu0 7
        %6427 = vperm.xlu0 %6426, %v525
        %v6428 = vpop.permute.xlu0 %6427
        %6430 = vset.pattern.permute.xlu0 7
        %6431 = vperm.xlu0 %6430, %v526
        %v6432 = vpop.permute.xlu0 %6431
        %6434 = vset.pattern.permute.xlu0 7
        %6435 = vperm.xlu0 %6434, %v527
        %v6436 = vpop.permute.xlu0 %6435
        %6438 = vset.pattern.permute.xlu0 7
        %6439 = vperm.xlu0 %6438, %v528
        %v6440 = vpop.permute.xlu0 %6439
        %6442 = vset.pattern.permute.xlu0 7
        %6443 = vperm.xlu0 %6442, %v529
        %v6444 = vpop.permute.xlu0 %6443
        %v6446 = vlaneseq
        %v6447 = vshrl.u32 %v6446, 7
        %v6448 = vsub.s32 7, %v6447
        %v6449 = vrot.slane %v273, %v6448
        %v6450 = vmul.f32 %v5936, %v6449
        %v6451 = vmul.f32 %v5940, %v6449
        %v6452 = vmul.f32 %v5944, %v6449
        %v6453 = vmul.f32 %v5948, %v6449
        %v6454 = vmul.f32 %v5952, %v6449
        %v6455 = vmul.f32 %v5956, %v6449
        %v6456 = vmul.f32 %v5960, %v6449
        %v6457 = vmul.f32 %v5964, %v6449
        %v6458 = vmul.f32 %v5968, %v6449
        %v6459 = vmul.f32 %v5972, %v6449
        %v6460 = vmul.f32 %v5976, %v6449
        %v6461 = vmul.f32 %v5980, %v6449
        %v6462 = vmul.f32 %v5984, %v6449
        %v6463 = vmul.f32 %v5988, %v6449
        %v6464 = vmul.f32 %v5992, %v6449
        %v6465 = vmul.f32 %v5996, %v6449
        %v6466 = vmul.f32 %v6000, %v6449
        %v6467 = vmul.f32 %v6004, %v6449
        %v6468 = vmul.f32 %v6008, %v6449
        %v6469 = vmul.f32 %v6012, %v6449
        %v6470 = vmul.f32 %v6016, %v6449
        %v6471 = vmul.f32 %v6020, %v6449
        %v6472 = vmul.f32 %v6024, %v6449
        %v6473 = vmul.f32 %v6028, %v6449
        %v6474 = vmul.f32 %v6032, %v6449
        %v6475 = vmul.f32 %v6036, %v6449
        %v6476 = vmul.f32 %v6040, %v6449
        %v6477 = vmul.f32 %v6044, %v6449
        %v6478 = vmul.f32 %v6048, %v6449
        %v6479 = vmul.f32 %v6052, %v6449
        %v6480 = vmul.f32 %v6056, %v6449
        %v6481 = vmul.f32 %v6060, %v6449
        %v6482 = vmul.f32 %v6064, %v6449
        %v6483 = vmul.f32 %v6068, %v6449
        %v6484 = vmul.f32 %v6072, %v6449
        %v6485 = vmul.f32 %v6076, %v6449
        %v6486 = vmul.f32 %v6080, %v6449
        %v6487 = vmul.f32 %v6084, %v6449
        %v6488 = vmul.f32 %v6088, %v6449
        %v6489 = vmul.f32 %v6092, %v6449
        %v6490 = vmul.f32 %v6096, %v6449
        %v6491 = vmul.f32 %v6100, %v6449
        %v6492 = vmul.f32 %v6104, %v6449
        %v6493 = vmul.f32 %v6108, %v6449
        %v6494 = vmul.f32 %v6112, %v6449
        %v6495 = vmul.f32 %v6116, %v6449
        %v6496 = vmul.f32 %v6120, %v6449
        %v6497 = vmul.f32 %v6124, %v6449
        %v6498 = vmul.f32 %v6128, %v6449
        %v6499 = vmul.f32 %v6132, %v6449
        %v6500 = vmul.f32 %v6136, %v6449
        %v6501 = vmul.f32 %v6140, %v6449
        %v6502 = vmul.f32 %v6144, %v6449
        %v6503 = vmul.f32 %v6148, %v6449
        %v6504 = vmul.f32 %v6152, %v6449
        %v6505 = vmul.f32 %v6156, %v6449
        %v6506 = vmul.f32 %v6160, %v6449
        %v6507 = vmul.f32 %v6164, %v6449
        %v6508 = vmul.f32 %v6168, %v6449
        %v6509 = vmul.f32 %v6172, %v6449
        %v6510 = vmul.f32 %v6176, %v6449
        %v6511 = vmul.f32 %v6180, %v6449
        %v6512 = vmul.f32 %v6184, %v6449
        %v6513 = vmul.f32 %v6188, %v6449
        %v6514 = vmul.f32 %v6192, %v6449
        %v6515 = vmul.f32 %v6196, %v6449
        %v6516 = vmul.f32 %v6200, %v6449
        %v6517 = vmul.f32 %v6204, %v6449
        %v6518 = vmul.f32 %v6208, %v6449
        %v6519 = vmul.f32 %v6212, %v6449
        %v6520 = vmul.f32 %v6216, %v6449
        %v6521 = vmul.f32 %v6220, %v6449
        %v6522 = vmul.f32 %v6224, %v6449
        %v6523 = vmul.f32 %v6228, %v6449
        %v6524 = vmul.f32 %v6232, %v6449
        %v6525 = vmul.f32 %v6236, %v6449
        %v6526 = vmul.f32 %v6240, %v6449
        %v6527 = vmul.f32 %v6244, %v6449
        %v6528 = vmul.f32 %v6248, %v6449
        %v6529 = vmul.f32 %v6252, %v6449
        %v6530 = vmul.f32 %v6256, %v6449
        %v6531 = vmul.f32 %v6260, %v6449
        %v6532 = vmul.f32 %v6264, %v6449
        %v6533 = vmul.f32 %v6268, %v6449
        %v6534 = vmul.f32 %v6272, %v6449
        %v6535 = vmul.f32 %v6276, %v6449
        %v6536 = vmul.f32 %v6280, %v6449
        %v6537 = vmul.f32 %v6284, %v6449
        %v6538 = vmul.f32 %v6288, %v6449
        %v6539 = vmul.f32 %v6292, %v6449
        %v6540 = vmul.f32 %v6296, %v6449
        %v6541 = vmul.f32 %v6300, %v6449
        %v6542 = vmul.f32 %v6304, %v6449
        %v6543 = vmul.f32 %v6308, %v6449
        %v6544 = vmul.f32 %v6312, %v6449
        %v6545 = vmul.f32 %v6316, %v6449
        %v6546 = vmul.f32 %v6320, %v6449
        %v6547 = vmul.f32 %v6324, %v6449
        %v6548 = vmul.f32 %v6328, %v6449
        %v6549 = vmul.f32 %v6332, %v6449
        %v6550 = vmul.f32 %v6336, %v6449
        %v6551 = vmul.f32 %v6340, %v6449
        %v6552 = vmul.f32 %v6344, %v6449
        %v6553 = vmul.f32 %v6348, %v6449
        %v6554 = vmul.f32 %v6352, %v6449
        %v6555 = vmul.f32 %v6356, %v6449
        %v6556 = vmul.f32 %v6360, %v6449
        %v6557 = vmul.f32 %v6364, %v6449
        %v6558 = vmul.f32 %v6368, %v6449
        %v6559 = vmul.f32 %v6372, %v6449
        %v6560 = vmul.f32 %v6376, %v6449
        %v6561 = vmul.f32 %v6380, %v6449
        %v6562 = vmul.f32 %v6384, %v6449
        %v6563 = vmul.f32 %v6388, %v6449
        %v6564 = vmul.f32 %v6392, %v6449
        %v6565 = vmul.f32 %v6396, %v6449
        %v6566 = vmul.f32 %v6400, %v6449
        %v6567 = vmul.f32 %v6404, %v6449
        %v6568 = vmul.f32 %v6408, %v6449
        %v6569 = vmul.f32 %v6412, %v6449
        %v6570 = vmul.f32 %v6416, %v6449
        %v6571 = vmul.f32 %v6420, %v6449
        %v6572 = vmul.f32 %v6424, %v6449
        %v6573 = vmul.f32 %v6428, %v6449
        %v6574 = vmul.f32 %v6432, %v6449
        %v6575 = vmul.f32 %v6436, %v6449
        %v6576 = vmul.f32 %v6440, %v6449
        %v6577 = vmul.f32 %v6444, %v6449
        %v6578 = vadd.f32 %v5806, %v6450
        %v6579 = vadd.f32 %v5807, %v6451
        %v6580 = vadd.f32 %v5808, %v6452
        %v6581 = vadd.f32 %v5809, %v6453
        %v6582 = vadd.f32 %v5810, %v6454
        %v6583 = vadd.f32 %v5811, %v6455
        %v6584 = vadd.f32 %v5812, %v6456
        %v6585 = vadd.f32 %v5813, %v6457
        %v6586 = vadd.f32 %v5814, %v6458
        %v6587 = vadd.f32 %v5815, %v6459
        %v6588 = vadd.f32 %v5816, %v6460
        %v6589 = vadd.f32 %v5817, %v6461
        %v6590 = vadd.f32 %v5818, %v6462
        %v6591 = vadd.f32 %v5819, %v6463
        %v6592 = vadd.f32 %v5820, %v6464
        %v6593 = vadd.f32 %v5821, %v6465
        %v6594 = vadd.f32 %v5822, %v6466
        %v6595 = vadd.f32 %v5823, %v6467
        %v6596 = vadd.f32 %v5824, %v6468
        %v6597 = vadd.f32 %v5825, %v6469
        %v6598 = vadd.f32 %v5826, %v6470
        %v6599 = vadd.f32 %v5827, %v6471
        %v6600 = vadd.f32 %v5828, %v6472
        %v6601 = vadd.f32 %v5829, %v6473
        %v6602 = vadd.f32 %v5830, %v6474
        %v6603 = vadd.f32 %v5831, %v6475
        %v6604 = vadd.f32 %v5832, %v6476
        %v6605 = vadd.f32 %v5833, %v6477
        %v6606 = vadd.f32 %v5834, %v6478
        %v6607 = vadd.f32 %v5835, %v6479
        %v6608 = vadd.f32 %v5836, %v6480
        %v6609 = vadd.f32 %v5837, %v6481
        %v6610 = vadd.f32 %v5838, %v6482
        %v6611 = vadd.f32 %v5839, %v6483
        %v6612 = vadd.f32 %v5840, %v6484
        %v6613 = vadd.f32 %v5841, %v6485
        %v6614 = vadd.f32 %v5842, %v6486
        %v6615 = vadd.f32 %v5843, %v6487
        %v6616 = vadd.f32 %v5844, %v6488
        %v6617 = vadd.f32 %v5845, %v6489
        %v6618 = vadd.f32 %v5846, %v6490
        %v6619 = vadd.f32 %v5847, %v6491
        %v6620 = vadd.f32 %v5848, %v6492
        %v6621 = vadd.f32 %v5849, %v6493
        %v6622 = vadd.f32 %v5850, %v6494
        %v6623 = vadd.f32 %v5851, %v6495
        %v6624 = vadd.f32 %v5852, %v6496
        %v6625 = vadd.f32 %v5853, %v6497
        %v6626 = vadd.f32 %v5854, %v6498
        %v6627 = vadd.f32 %v5855, %v6499
        %v6628 = vadd.f32 %v5856, %v6500
        %v6629 = vadd.f32 %v5857, %v6501
        %v6630 = vadd.f32 %v5858, %v6502
        %v6631 = vadd.f32 %v5859, %v6503
        %v6632 = vadd.f32 %v5860, %v6504
        %v6633 = vadd.f32 %v5861, %v6505
        %v6634 = vadd.f32 %v5862, %v6506
        %v6635 = vadd.f32 %v5863, %v6507
        %v6636 = vadd.f32 %v5864, %v6508
        %v6637 = vadd.f32 %v5865, %v6509
        %v6638 = vadd.f32 %v5866, %v6510
        %v6639 = vadd.f32 %v5867, %v6511
        %v6640 = vadd.f32 %v5868, %v6512
        %v6641 = vadd.f32 %v5869, %v6513
        %v6642 = vadd.f32 %v5870, %v6514
        %v6643 = vadd.f32 %v5871, %v6515
        %v6644 = vadd.f32 %v5872, %v6516
        %v6645 = vadd.f32 %v5873, %v6517
        %v6646 = vadd.f32 %v5874, %v6518
        %v6647 = vadd.f32 %v5875, %v6519
        %v6648 = vadd.f32 %v5876, %v6520
        %v6649 = vadd.f32 %v5877, %v6521
        %v6650 = vadd.f32 %v5878, %v6522
        %v6651 = vadd.f32 %v5879, %v6523
        %v6652 = vadd.f32 %v5880, %v6524
        %v6653 = vadd.f32 %v5881, %v6525
        %v6654 = vadd.f32 %v5882, %v6526
        %v6655 = vadd.f32 %v5883, %v6527
        %v6656 = vadd.f32 %v5884, %v6528
        %v6657 = vadd.f32 %v5885, %v6529
        %v6658 = vadd.f32 %v5886, %v6530
        %v6659 = vadd.f32 %v5887, %v6531
        %v6660 = vadd.f32 %v5888, %v6532
        %v6661 = vadd.f32 %v5889, %v6533
        %v6662 = vadd.f32 %v5890, %v6534
        %v6663 = vadd.f32 %v5891, %v6535
        %v6664 = vadd.f32 %v5892, %v6536
        %v6665 = vadd.f32 %v5893, %v6537
        %v6666 = vadd.f32 %v5894, %v6538
        %v6667 = vadd.f32 %v5895, %v6539
        %v6668 = vadd.f32 %v5896, %v6540
        %v6669 = vadd.f32 %v5897, %v6541
        %v6670 = vadd.f32 %v5898, %v6542
        %v6671 = vadd.f32 %v5899, %v6543
        %v6672 = vadd.f32 %v5900, %v6544
        %v6673 = vadd.f32 %v5901, %v6545
        %v6674 = vadd.f32 %v5902, %v6546
        %v6675 = vadd.f32 %v5903, %v6547
        %v6676 = vadd.f32 %v5904, %v6548
        %v6677 = vadd.f32 %v5905, %v6549
        %v6678 = vadd.f32 %v5906, %v6550
        %v6679 = vadd.f32 %v5907, %v6551
        %v6680 = vadd.f32 %v5908, %v6552
        %v6681 = vadd.f32 %v5909, %v6553
        %v6682 = vadd.f32 %v5910, %v6554
        %v6683 = vadd.f32 %v5911, %v6555
        %v6684 = vadd.f32 %v5912, %v6556
        %v6685 = vadd.f32 %v5913, %v6557
        %v6686 = vadd.f32 %v5914, %v6558
        %v6687 = vadd.f32 %v5915, %v6559
        %v6688 = vadd.f32 %v5916, %v6560
        %v6689 = vadd.f32 %v5917, %v6561
        %v6690 = vadd.f32 %v5918, %v6562
        %v6691 = vadd.f32 %v5919, %v6563
        %v6692 = vadd.f32 %v5920, %v6564
        %v6693 = vadd.f32 %v5921, %v6565
        %v6694 = vadd.f32 %v5922, %v6566
        %v6695 = vadd.f32 %v5923, %v6567
        %v6696 = vadd.f32 %v5924, %v6568
        %v6697 = vadd.f32 %v5925, %v6569
        %v6698 = vadd.f32 %v5926, %v6570
        %v6699 = vadd.f32 %v5927, %v6571
        %v6700 = vadd.f32 %v5928, %v6572
        %v6701 = vadd.f32 %v5929, %v6573
        %v6702 = vadd.f32 %v5930, %v6574
        %v6703 = vadd.f32 %v5931, %v6575
        %v6704 = vadd.f32 %v5932, %v6576
        %v6705 = vadd.f32 %v5933, %v6577
        %v6707 = vlaneseq
        %v6708 = vshrl.u32 %v6707, 7
        %v6709 = vsub.s32 0, %v6708
        %v6710 = vrot.slane %v254, %v6709
        %v6712 = vadd.f32 %v6578, %v6710
        %v6713 = vadd.f32 %v6579, %v6710
        %v6714 = vadd.f32 %v6580, %v6710
        %v6715 = vadd.f32 %v6581, %v6710
        %v6716 = vadd.f32 %v6582, %v6710
        %v6717 = vadd.f32 %v6583, %v6710
        %v6718 = vadd.f32 %v6584, %v6710
        %v6719 = vadd.f32 %v6585, %v6710
        %v6720 = vadd.f32 %v6586, %v6710
        %v6721 = vadd.f32 %v6587, %v6710
        %v6722 = vadd.f32 %v6588, %v6710
        %v6723 = vadd.f32 %v6589, %v6710
        %v6724 = vadd.f32 %v6590, %v6710
        %v6725 = vadd.f32 %v6591, %v6710
        %v6726 = vadd.f32 %v6592, %v6710
        %v6727 = vadd.f32 %v6593, %v6710
        %v6728 = vadd.f32 %v6594, %v6710
        %v6729 = vadd.f32 %v6595, %v6710
        %v6730 = vadd.f32 %v6596, %v6710
        %v6731 = vadd.f32 %v6597, %v6710
        %v6732 = vadd.f32 %v6598, %v6710
        %v6733 = vadd.f32 %v6599, %v6710
        %v6734 = vadd.f32 %v6600, %v6710
        %v6735 = vadd.f32 %v6601, %v6710
        %v6736 = vadd.f32 %v6602, %v6710
        %v6737 = vadd.f32 %v6603, %v6710
        %v6738 = vadd.f32 %v6604, %v6710
        %v6739 = vadd.f32 %v6605, %v6710
        %v6740 = vadd.f32 %v6606, %v6710
        %v6741 = vadd.f32 %v6607, %v6710
        %v6742 = vadd.f32 %v6608, %v6710
        %v6743 = vadd.f32 %v6609, %v6710
        %v6744 = vadd.f32 %v6610, %v6710
        %v6745 = vadd.f32 %v6611, %v6710
        %v6746 = vadd.f32 %v6612, %v6710
        %v6747 = vadd.f32 %v6613, %v6710
        %v6748 = vadd.f32 %v6614, %v6710
        %v6749 = vadd.f32 %v6615, %v6710
        %v6750 = vadd.f32 %v6616, %v6710
        %v6751 = vadd.f32 %v6617, %v6710
        %v6752 = vadd.f32 %v6618, %v6710
        %v6753 = vadd.f32 %v6619, %v6710
        %v6754 = vadd.f32 %v6620, %v6710
        %v6755 = vadd.f32 %v6621, %v6710
        %v6756 = vadd.f32 %v6622, %v6710
        %v6757 = vadd.f32 %v6623, %v6710
        %v6758 = vadd.f32 %v6624, %v6710
        %v6759 = vadd.f32 %v6625, %v6710
        %v6760 = vadd.f32 %v6626, %v6710
        %v6761 = vadd.f32 %v6627, %v6710
        %v6762 = vadd.f32 %v6628, %v6710
        %v6763 = vadd.f32 %v6629, %v6710
        %v6764 = vadd.f32 %v6630, %v6710
        %v6765 = vadd.f32 %v6631, %v6710
        %v6766 = vadd.f32 %v6632, %v6710
        %v6767 = vadd.f32 %v6633, %v6710
        %v6768 = vadd.f32 %v6634, %v6710
        %v6769 = vadd.f32 %v6635, %v6710
        %v6770 = vadd.f32 %v6636, %v6710
        %v6771 = vadd.f32 %v6637, %v6710
        %v6772 = vadd.f32 %v6638, %v6710
        %v6773 = vadd.f32 %v6639, %v6710
        %v6774 = vadd.f32 %v6640, %v6710
        %v6775 = vadd.f32 %v6641, %v6710
        %v6776 = vadd.f32 %v6642, %v6710
        %v6777 = vadd.f32 %v6643, %v6710
        %v6778 = vadd.f32 %v6644, %v6710
        %v6779 = vadd.f32 %v6645, %v6710
        %v6780 = vadd.f32 %v6646, %v6710
        %v6781 = vadd.f32 %v6647, %v6710
        %v6782 = vadd.f32 %v6648, %v6710
        %v6783 = vadd.f32 %v6649, %v6710
        %v6784 = vadd.f32 %v6650, %v6710
        %v6785 = vadd.f32 %v6651, %v6710
        %v6786 = vadd.f32 %v6652, %v6710
        %v6787 = vadd.f32 %v6653, %v6710
        %v6788 = vadd.f32 %v6654, %v6710
        %v6789 = vadd.f32 %v6655, %v6710
        %v6790 = vadd.f32 %v6656, %v6710
        %v6791 = vadd.f32 %v6657, %v6710
        %v6792 = vadd.f32 %v6658, %v6710
        %v6793 = vadd.f32 %v6659, %v6710
        %v6794 = vadd.f32 %v6660, %v6710
        %v6795 = vadd.f32 %v6661, %v6710
        %v6796 = vadd.f32 %v6662, %v6710
        %v6797 = vadd.f32 %v6663, %v6710
        %v6798 = vadd.f32 %v6664, %v6710
        %v6799 = vadd.f32 %v6665, %v6710
        %v6800 = vadd.f32 %v6666, %v6710
        %v6801 = vadd.f32 %v6667, %v6710
        %v6802 = vadd.f32 %v6668, %v6710
        %v6803 = vadd.f32 %v6669, %v6710
        %v6804 = vadd.f32 %v6670, %v6710
        %v6805 = vadd.f32 %v6671, %v6710
        %v6806 = vadd.f32 %v6672, %v6710
        %v6807 = vadd.f32 %v6673, %v6710
        %v6808 = vadd.f32 %v6674, %v6710
        %v6809 = vadd.f32 %v6675, %v6710
        %v6810 = vadd.f32 %v6676, %v6710
        %v6811 = vadd.f32 %v6677, %v6710
        %v6812 = vadd.f32 %v6678, %v6710
        %v6813 = vadd.f32 %v6679, %v6710
        %v6814 = vadd.f32 %v6680, %v6710
        %v6815 = vadd.f32 %v6681, %v6710
        %v6816 = vadd.f32 %v6682, %v6710
        %v6817 = vadd.f32 %v6683, %v6710
        %v6818 = vadd.f32 %v6684, %v6710
        %v6819 = vadd.f32 %v6685, %v6710
        %v6820 = vadd.f32 %v6686, %v6710
        %v6821 = vadd.f32 %v6687, %v6710
        %v6822 = vadd.f32 %v6688, %v6710
        %v6823 = vadd.f32 %v6689, %v6710
        %v6824 = vadd.f32 %v6690, %v6710
        %v6825 = vadd.f32 %v6691, %v6710
        %v6826 = vadd.f32 %v6692, %v6710
        %v6827 = vadd.f32 %v6693, %v6710
        %v6828 = vadd.f32 %v6694, %v6710
        %v6829 = vadd.f32 %v6695, %v6710
        %v6830 = vadd.f32 %v6696, %v6710
        %v6831 = vadd.f32 %v6697, %v6710
        %v6832 = vadd.f32 %v6698, %v6710
        %v6833 = vadd.f32 %v6699, %v6710
        %v6834 = vadd.f32 %v6700, %v6710
        %v6835 = vadd.f32 %v6701, %v6710
        %v6836 = vadd.f32 %v6702, %v6710
        %v6837 = vadd.f32 %v6703, %v6710
        %v6838 = vadd.f32 %v6704, %v6710
        %v6839 = vadd.f32 %v6705, %v6710
        %v6840 = vmax.f32 %v6712, 0.0
        %v6841 = vmax.f32 %v6713, 0.0
        %v6842 = vmax.f32 %v6714, 0.0
        %v6843 = vmax.f32 %v6715, 0.0
        %v6844 = vmax.f32 %v6716, 0.0
        %v6845 = vmax.f32 %v6717, 0.0
        %v6846 = vmax.f32 %v6718, 0.0
        %v6847 = vmax.f32 %v6719, 0.0
        %v6848 = vmax.f32 %v6720, 0.0
        %v6849 = vmax.f32 %v6721, 0.0
        %v6850 = vmax.f32 %v6722, 0.0
        %v6851 = vmax.f32 %v6723, 0.0
        %v6852 = vmax.f32 %v6724, 0.0
        %v6853 = vmax.f32 %v6725, 0.0
        %v6854 = vmax.f32 %v6726, 0.0
        %v6855 = vmax.f32 %v6727, 0.0
        %v6856 = vmax.f32 %v6728, 0.0
        %v6857 = vmax.f32 %v6729, 0.0
        %v6858 = vmax.f32 %v6730, 0.0
        %v6859 = vmax.f32 %v6731, 0.0
        %v6860 = vmax.f32 %v6732, 0.0
        %v6861 = vmax.f32 %v6733, 0.0
        %v6862 = vmax.f32 %v6734, 0.0
        %v6863 = vmax.f32 %v6735, 0.0
        %v6864 = vmax.f32 %v6736, 0.0
        %v6865 = vmax.f32 %v6737, 0.0
        %v6866 = vmax.f32 %v6738, 0.0
        %v6867 = vmax.f32 %v6739, 0.0
        %v6868 = vmax.f32 %v6740, 0.0
        %v6869 = vmax.f32 %v6741, 0.0
        %v6870 = vmax.f32 %v6742, 0.0
        %v6871 = vmax.f32 %v6743, 0.0
        %v6872 = vmax.f32 %v6744, 0.0
        %v6873 = vmax.f32 %v6745, 0.0
        %v6874 = vmax.f32 %v6746, 0.0
        %v6875 = vmax.f32 %v6747, 0.0
        %v6876 = vmax.f32 %v6748, 0.0
        %v6877 = vmax.f32 %v6749, 0.0
        %v6878 = vmax.f32 %v6750, 0.0
        %v6879 = vmax.f32 %v6751, 0.0
        %v6880 = vmax.f32 %v6752, 0.0
        %v6881 = vmax.f32 %v6753, 0.0
        %v6882 = vmax.f32 %v6754, 0.0
        %v6883 = vmax.f32 %v6755, 0.0
        %v6884 = vmax.f32 %v6756, 0.0
        %v6885 = vmax.f32 %v6757, 0.0
        %v6886 = vmax.f32 %v6758, 0.0
        %v6887 = vmax.f32 %v6759, 0.0
        %v6888 = vmax.f32 %v6760, 0.0
        %v6889 = vmax.f32 %v6761, 0.0
        %v6890 = vmax.f32 %v6762, 0.0
        %v6891 = vmax.f32 %v6763, 0.0
        %v6892 = vmax.f32 %v6764, 0.0
        %v6893 = vmax.f32 %v6765, 0.0
        %v6894 = vmax.f32 %v6766, 0.0
        %v6895 = vmax.f32 %v6767, 0.0
        %v6896 = vmax.f32 %v6768, 0.0
        %v6897 = vmax.f32 %v6769, 0.0
        %v6898 = vmax.f32 %v6770, 0.0
        %v6899 = vmax.f32 %v6771, 0.0
        %v6900 = vmax.f32 %v6772, 0.0
        %v6901 = vmax.f32 %v6773, 0.0
        %v6902 = vmax.f32 %v6774, 0.0
        %v6903 = vmax.f32 %v6775, 0.0
        %v6904 = vmax.f32 %v6776, 0.0
        %v6905 = vmax.f32 %v6777, 0.0
        %v6906 = vmax.f32 %v6778, 0.0
        %v6907 = vmax.f32 %v6779, 0.0
        %v6908 = vmax.f32 %v6780, 0.0
        %v6909 = vmax.f32 %v6781, 0.0
        %v6910 = vmax.f32 %v6782, 0.0
        %v6911 = vmax.f32 %v6783, 0.0
        %v6912 = vmax.f32 %v6784, 0.0
        %v6913 = vmax.f32 %v6785, 0.0
        %v6914 = vmax.f32 %v6786, 0.0
        %v6915 = vmax.f32 %v6787, 0.0
        %v6916 = vmax.f32 %v6788, 0.0
        %v6917 = vmax.f32 %v6789, 0.0
        %v6918 = vmax.f32 %v6790, 0.0
        %v6919 = vmax.f32 %v6791, 0.0
        %v6920 = vmax.f32 %v6792, 0.0
        %v6921 = vmax.f32 %v6793, 0.0
        %v6922 = vmax.f32 %v6794, 0.0
        %v6923 = vmax.f32 %v6795, 0.0
        %v6924 = vmax.f32 %v6796, 0.0
        %v6925 = vmax.f32 %v6797, 0.0
        %v6926 = vmax.f32 %v6798, 0.0
        %v6927 = vmax.f32 %v6799, 0.0
        %v6928 = vmax.f32 %v6800, 0.0
        %v6929 = vmax.f32 %v6801, 0.0
        %v6930 = vmax.f32 %v6802, 0.0
        %v6931 = vmax.f32 %v6803, 0.0
        %v6932 = vmax.f32 %v6804, 0.0
        %v6933 = vmax.f32 %v6805, 0.0
        %v6934 = vmax.f32 %v6806, 0.0
        %v6935 = vmax.f32 %v6807, 0.0
        %v6936 = vmax.f32 %v6808, 0.0
        %v6937 = vmax.f32 %v6809, 0.0
        %v6938 = vmax.f32 %v6810, 0.0
        %v6939 = vmax.f32 %v6811, 0.0
        %v6940 = vmax.f32 %v6812, 0.0
        %v6941 = vmax.f32 %v6813, 0.0
        %v6942 = vmax.f32 %v6814, 0.0
        %v6943 = vmax.f32 %v6815, 0.0
        %v6944 = vmax.f32 %v6816, 0.0
        %v6945 = vmax.f32 %v6817, 0.0
        %v6946 = vmax.f32 %v6818, 0.0
        %v6947 = vmax.f32 %v6819, 0.0
        %v6948 = vmax.f32 %v6820, 0.0
        %v6949 = vmax.f32 %v6821, 0.0
        %v6950 = vmax.f32 %v6822, 0.0
        %v6951 = vmax.f32 %v6823, 0.0
        %v6952 = vmax.f32 %v6824, 0.0
        %v6953 = vmax.f32 %v6825, 0.0
        %v6954 = vmax.f32 %v6826, 0.0
        %v6955 = vmax.f32 %v6827, 0.0
        %v6956 = vmax.f32 %v6828, 0.0
        %v6957 = vmax.f32 %v6829, 0.0
        %v6958 = vmax.f32 %v6830, 0.0
        %v6959 = vmax.f32 %v6831, 0.0
        %v6960 = vmax.f32 %v6832, 0.0
        %v6961 = vmax.f32 %v6833, 0.0
        %v6962 = vmax.f32 %v6834, 0.0
        %v6963 = vmax.f32 %v6835, 0.0
        %v6964 = vmax.f32 %v6836, 0.0
        %v6965 = vmax.f32 %v6837, 0.0
        %v6966 = vmax.f32 %v6838, 0.0
        %v6967 = vmax.f32 %v6839, 0.0
        %v6968 = vpack.c.bf16 %v6841, %v6840
        %v6969 = vpack.c.bf16 %v6843, %v6842
        %v6970 = vpack.c.bf16 %v6845, %v6844
        %v6971 = vpack.c.bf16 %v6847, %v6846
        %v6972 = vpack.c.bf16 %v6849, %v6848
        %v6973 = vpack.c.bf16 %v6851, %v6850
        %v6974 = vpack.c.bf16 %v6853, %v6852
        %v6975 = vpack.c.bf16 %v6855, %v6854
        %v6976 = vpack.c.bf16 %v6857, %v6856
        %v6977 = vpack.c.bf16 %v6859, %v6858
        %v6978 = vpack.c.bf16 %v6861, %v6860
        %v6979 = vpack.c.bf16 %v6863, %v6862
        %v6980 = vpack.c.bf16 %v6865, %v6864
        %v6981 = vpack.c.bf16 %v6867, %v6866
        %v6982 = vpack.c.bf16 %v6869, %v6868
        %v6983 = vpack.c.bf16 %v6871, %v6870
        %v6984 = vpack.c.bf16 %v6873, %v6872
        %v6985 = vpack.c.bf16 %v6875, %v6874
        %v6986 = vpack.c.bf16 %v6877, %v6876
        %v6987 = vpack.c.bf16 %v6879, %v6878
        %v6988 = vpack.c.bf16 %v6881, %v6880
        %v6989 = vpack.c.bf16 %v6883, %v6882
        %v6990 = vpack.c.bf16 %v6885, %v6884
        %v6991 = vpack.c.bf16 %v6887, %v6886
        %v6992 = vpack.c.bf16 %v6889, %v6888
        %v6993 = vpack.c.bf16 %v6891, %v6890
        %v6994 = vpack.c.bf16 %v6893, %v6892
        %v6995 = vpack.c.bf16 %v6895, %v6894
        %v6996 = vpack.c.bf16 %v6897, %v6896
        %v6997 = vpack.c.bf16 %v6899, %v6898
        %v6998 = vpack.c.bf16 %v6901, %v6900
        %v6999 = vpack.c.bf16 %v6903, %v6902
        %v7000 = vpack.c.bf16 %v6905, %v6904
        %v7001 = vpack.c.bf16 %v6907, %v6906
        %v7002 = vpack.c.bf16 %v6909, %v6908
        %v7003 = vpack.c.bf16 %v6911, %v6910
        %v7004 = vpack.c.bf16 %v6913, %v6912
        %v7005 = vpack.c.bf16 %v6915, %v6914
        %v7006 = vpack.c.bf16 %v6917, %v6916
        %v7007 = vpack.c.bf16 %v6919, %v6918
        %v7008 = vpack.c.bf16 %v6921, %v6920
        %v7009 = vpack.c.bf16 %v6923, %v6922
        %v7010 = vpack.c.bf16 %v6925, %v6924
        %v7011 = vpack.c.bf16 %v6927, %v6926
        %v7012 = vpack.c.bf16 %v6929, %v6928
        %v7013 = vpack.c.bf16 %v6931, %v6930
        %v7014 = vpack.c.bf16 %v6933, %v6932
        %v7015 = vpack.c.bf16 %v6935, %v6934
        %v7016 = vpack.c.bf16 %v6937, %v6936
        %v7017 = vpack.c.bf16 %v6939, %v6938
        %v7018 = vpack.c.bf16 %v6941, %v6940
        %v7019 = vpack.c.bf16 %v6943, %v6942
        %v7020 = vpack.c.bf16 %v6945, %v6944
        %v7021 = vpack.c.bf16 %v6947, %v6946
        %v7022 = vpack.c.bf16 %v6949, %v6948
        %v7023 = vpack.c.bf16 %v6951, %v6950
        %v7024 = vpack.c.bf16 %v6953, %v6952
        %v7025 = vpack.c.bf16 %v6955, %v6954
        %v7026 = vpack.c.bf16 %v6957, %v6956
        %v7027 = vpack.c.bf16 %v6959, %v6958
        %v7028 = vpack.c.bf16 %v6961, %v6960
        %v7029 = vpack.c.bf16 %v6963, %v6962
        %v7030 = vpack.c.bf16 %v6965, %v6964
        %v7031 = vpack.c.bf16 %v6967, %v6966
        %v7033 = vlaneseq
        %v7034 = vshrl.u32 %v7033, 7
        %v7035 = vsub.s32 0, %v7034
        %v7036 = vrot.slane %v255, %v7035
        %v7054 = vunpack.c.l.b16 %v256
        %v7055 = vunpack.c.l.b16 %v257
        %v7056 = vunpack.c.l.b16 %v258
        %v7057 = vunpack.c.l.b16 %v259
        %v7058 = vunpack.c.l.b16 %v260
        %v7059 = vunpack.c.l.b16 %v261
        %v7060 = vunpack.c.l.b16 %v262
        %v7061 = vunpack.c.l.b16 %v263
        %v7062 = vunpack.c.l.b16 %v264
        %v7063 = vunpack.c.l.b16 %v265
        %v7064 = vunpack.c.l.b16 %v266
        %v7065 = vunpack.c.l.b16 %v267
        %v7066 = vunpack.c.l.b16 %v268
        %v7067 = vunpack.c.l.b16 %v269
        %v7068 = vunpack.c.l.b16 %v270
        %v7069 = vunpack.c.l.b16 %v271
        %v7070 = vpack.c.b16 %v7055, %v7054
        %v7071 = vpack.c.b16 %v7057, %v7056
        %v7072 = vpack.c.b16 %v7059, %v7058
        %v7073 = vpack.c.b16 %v7061, %v7060
        %v7074 = vpack.c.b16 %v7063, %v7062
        %v7075 = vpack.c.b16 %v7065, %v7064
        %v7076 = vpack.c.b16 %v7067, %v7066
        %v7077 = vpack.c.b16 %v7069, %v7068
        %7086 = vmatprep.subr.bf16.mxu0 0
        %7087 = vmatpush1.bf16.msra.mxu0 %v7077
        %7088 = vmatprep.subr.bf16.mxu0 0
        %7089 = vmatpush1.bf16.msra.mxu0 %v7076
        %7090 = vmatprep.subr.bf16.mxu0 0
        %7091 = vmatpush1.bf16.msra.mxu0 %v7075
        %7092 = vmatprep.subr.bf16.mxu0 0
        %7093 = vmatpush1.bf16.msra.mxu0 %v7074
        %7094 = vmatprep.subr.bf16.mxu0 0
        %7095 = vmatpush1.bf16.msra.mxu0 %v7073
        %7096 = vmatprep.subr.bf16.mxu0 0
        %7097 = vmatpush1.bf16.msra.mxu0 %v7072
        %7098 = vmatprep.subr.bf16.mxu0 0
        %7099 = vmatpush1.bf16.msra.mxu0 %v7071
        %7100 = vmatprep.subr.bf16.mxu0 0
        %7101 = vmatpush1.bf16.msra.mxu0 %v7070
        %7102 = vmatprep.subr.bf16.mxu0 0
        %7103 = vmatpush2.bf16.msra.mxu0 0
        %7104 = vmatprep.subr.bf16.mxu0 0
        %7105 = vmatpush2.bf16.msra.mxu0 0
        %7106 = vmatprep.subr.bf16.mxu0 0
        %7107 = vmatpush2.bf16.msra.mxu0 0
        %7108 = vmatprep.subr.bf16.mxu0 0
        %7109 = vmatpush2.bf16.msra.mxu0 0
        %7110 = vmatprep.subr.bf16.mxu0 0
        %7111 = vmatpush2.bf16.msra.mxu0 0
        %7112 = vmatprep.subr.bf16.mxu0 0
        %7113 = vmatpush2.bf16.msra.mxu0 0
        %7114 = vmatprep.subr.bf16.mxu0 0
        %7115 = vmatpush2.bf16.msra.mxu0 0
        %7116 = vmatprep.subr.bf16.mxu0 0
        %7117 = vmatpush2.bf16.msra.mxu0 0
        %7118 = vmatprep.mubr.bf16.mxu0 0
        %7119 = vmatmul.mubr.bf16.gmra.mxu0 %v6968
        %v7120 = vpop.f32.mrf.mxu0
        %v7121 = vadd.f32 %v7036, %v7120
        %v7122 = vpop.f32.mrf.mxu0
        %v7123 = vpop.f32.mrf.mxu0
        %v7124 = vadd.f32 %v7036, %v7123
        %v7125 = vpop.f32.mrf.mxu0
        %7126 = vmatprep.mubr.bf16.mxu0 0
        %7127 = vmatmul.mubr.bf16.gmra.mxu0 %v6969
        %v7128 = vpop.f32.mrf.mxu0
        %v7129 = vadd.f32 %v7036, %v7128
        %v7130 = vpop.f32.mrf.mxu0
        %v7131 = vpop.f32.mrf.mxu0
        %v7132 = vadd.f32 %v7036, %v7131
        %v7133 = vpop.f32.mrf.mxu0
        %7134 = vmatprep.mubr.bf16.mxu0 0
        %7135 = vmatmul.mubr.bf16.gmra.mxu0 %v6970
        %v7136 = vpop.f32.mrf.mxu0
        %v7137 = vadd.f32 %v7036, %v7136
        %v7138 = vpop.f32.mrf.mxu0
        %v7139 = vpop.f32.mrf.mxu0
        %v7140 = vadd.f32 %v7036, %v7139
        %v7141 = vpop.f32.mrf.mxu0
        %7142 = vmatprep.mubr.bf16.mxu0 0
        %7143 = vmatmul.mubr.bf16.gmra.mxu0 %v6971
        %v7144 = vpop.f32.mrf.mxu0
        %v7145 = vadd.f32 %v7036, %v7144
        %v7146 = vpop.f32.mrf.mxu0
        %v7147 = vpop.f32.mrf.mxu0
        %v7148 = vadd.f32 %v7036, %v7147
        %v7149 = vpop.f32.mrf.mxu0
        %7150 = vmatprep.mubr.bf16.mxu0 0
        %7151 = vmatmul.mubr.bf16.gmra.mxu0 %v6972
        %v7152 = vpop.f32.mrf.mxu0
        %v7153 = vadd.f32 %v7036, %v7152
        %v7154 = vpop.f32.mrf.mxu0
        %v7155 = vpop.f32.mrf.mxu0
        %v7156 = vadd.f32 %v7036, %v7155
        %v7157 = vpop.f32.mrf.mxu0
        %7158 = vmatprep.mubr.bf16.mxu0 0
        %7159 = vmatmul.mubr.bf16.gmra.mxu0 %v6973
        %v7160 = vpop.f32.mrf.mxu0
        %v7161 = vadd.f32 %v7036, %v7160
        %v7162 = vpop.f32.mrf.mxu0
        %v7163 = vpop.f32.mrf.mxu0
        %v7164 = vadd.f32 %v7036, %v7163
        %v7165 = vpop.f32.mrf.mxu0
        %7166 = vmatprep.mubr.bf16.mxu0 0
        %7167 = vmatmul.mubr.bf16.gmra.mxu0 %v6974
        %v7168 = vpop.f32.mrf.mxu0
        %v7169 = vadd.f32 %v7036, %v7168
        %v7170 = vpop.f32.mrf.mxu0
        %v7171 = vpop.f32.mrf.mxu0
        %v7172 = vadd.f32 %v7036, %v7171
        %v7173 = vpop.f32.mrf.mxu0
        %7174 = vmatprep.mubr.bf16.mxu0 0
        %7175 = vmatmul.mubr.bf16.gmra.mxu0 %v6975
        %v7176 = vpop.f32.mrf.mxu0
        %v7177 = vadd.f32 %v7036, %v7176
        %v7178 = vpop.f32.mrf.mxu0
        %v7179 = vpop.f32.mrf.mxu0
        %v7180 = vadd.f32 %v7036, %v7179
        %v7181 = vpop.f32.mrf.mxu0
        %7182 = vmatprep.mubr.bf16.mxu0 0
        %7183 = vmatmul.mubr.bf16.gmra.mxu0 %v6976
        %v7184 = vpop.f32.mrf.mxu0
        %v7185 = vadd.f32 %v7036, %v7184
        %v7186 = vpop.f32.mrf.mxu0
        %v7187 = vpop.f32.mrf.mxu0
        %v7188 = vadd.f32 %v7036, %v7187
        %v7189 = vpop.f32.mrf.mxu0
        %7190 = vmatprep.mubr.bf16.mxu0 0
        %7191 = vmatmul.mubr.bf16.gmra.mxu0 %v6977
        %v7192 = vpop.f32.mrf.mxu0
        %v7193 = vadd.f32 %v7036, %v7192
        %v7194 = vpop.f32.mrf.mxu0
        %v7195 = vpop.f32.mrf.mxu0
        %v7196 = vadd.f32 %v7036, %v7195
        %v7197 = vpop.f32.mrf.mxu0
        %7198 = vmatprep.mubr.bf16.mxu0 0
        %7199 = vmatmul.mubr.bf16.gmra.mxu0 %v6978
        %v7200 = vpop.f32.mrf.mxu0
        %v7201 = vadd.f32 %v7036, %v7200
        %v7202 = vpop.f32.mrf.mxu0
        %v7203 = vpop.f32.mrf.mxu0
        %v7204 = vadd.f32 %v7036, %v7203
        %v7205 = vpop.f32.mrf.mxu0
        %7206 = vmatprep.mubr.bf16.mxu0 0
        %7207 = vmatmul.mubr.bf16.gmra.mxu0 %v6979
        %v7208 = vpop.f32.mrf.mxu0
        %v7209 = vadd.f32 %v7036, %v7208
        %v7210 = vpop.f32.mrf.mxu0
        %v7211 = vpop.f32.mrf.mxu0
        %v7212 = vadd.f32 %v7036, %v7211
        %v7213 = vpop.f32.mrf.mxu0
        %7214 = vmatprep.mubr.bf16.mxu0 0
        %7215 = vmatmul.mubr.bf16.gmra.mxu0 %v6980
        %v7216 = vpop.f32.mrf.mxu0
        %v7217 = vadd.f32 %v7036, %v7216
        %v7218 = vpop.f32.mrf.mxu0
        %v7219 = vpop.f32.mrf.mxu0
        %v7220 = vadd.f32 %v7036, %v7219
        %v7221 = vpop.f32.mrf.mxu0
        %7222 = vmatprep.mubr.bf16.mxu0 0
        %7223 = vmatmul.mubr.bf16.gmra.mxu0 %v6981
        %v7224 = vpop.f32.mrf.mxu0
        %v7225 = vadd.f32 %v7036, %v7224
        %v7226 = vpop.f32.mrf.mxu0
        %v7227 = vpop.f32.mrf.mxu0
        %v7228 = vadd.f32 %v7036, %v7227
        %v7229 = vpop.f32.mrf.mxu0
        %7230 = vmatprep.mubr.bf16.mxu0 0
        %7231 = vmatmul.mubr.bf16.gmra.mxu0 %v6982
        %v7232 = vpop.f32.mrf.mxu0
        %v7233 = vadd.f32 %v7036, %v7232
        %v7234 = vpop.f32.mrf.mxu0
        %v7235 = vpop.f32.mrf.mxu0
        %v7236 = vadd.f32 %v7036, %v7235
        %v7237 = vpop.f32.mrf.mxu0
        %7238 = vmatprep.mubr.bf16.mxu0 0
        %7239 = vmatmul.mubr.bf16.gmra.mxu0 %v6983
        %v7240 = vpop.f32.mrf.mxu0
        %v7241 = vadd.f32 %v7036, %v7240
        %v7242 = vpop.f32.mrf.mxu0
        %v7243 = vpop.f32.mrf.mxu0
        %v7244 = vadd.f32 %v7036, %v7243
        %v7245 = vpop.f32.mrf.mxu0
        %7246 = vmatprep.mubr.bf16.mxu0 0
        %7247 = vmatmul.mubr.bf16.gmra.mxu0 %v6984
        %v7248 = vpop.f32.mrf.mxu0
        %v7249 = vadd.f32 %v7036, %v7248
        %v7250 = vpop.f32.mrf.mxu0
        %v7251 = vpop.f32.mrf.mxu0
        %v7252 = vadd.f32 %v7036, %v7251
        %v7253 = vpop.f32.mrf.mxu0
        %7254 = vmatprep.mubr.bf16.mxu0 0
        %7255 = vmatmul.mubr.bf16.gmra.mxu0 %v6985
        %v7256 = vpop.f32.mrf.mxu0
        %v7257 = vadd.f32 %v7036, %v7256
        %v7258 = vpop.f32.mrf.mxu0
        %v7259 = vpop.f32.mrf.mxu0
        %v7260 = vadd.f32 %v7036, %v7259
        %v7261 = vpop.f32.mrf.mxu0
        %7262 = vmatprep.mubr.bf16.mxu0 0
        %7263 = vmatmul.mubr.bf16.gmra.mxu0 %v6986
        %v7264 = vpop.f32.mrf.mxu0
        %v7265 = vadd.f32 %v7036, %v7264
        %v7266 = vpop.f32.mrf.mxu0
        %v7267 = vpop.f32.mrf.mxu0
        %v7268 = vadd.f32 %v7036, %v7267
        %v7269 = vpop.f32.mrf.mxu0
        %7270 = vmatprep.mubr.bf16.mxu0 0
        %7271 = vmatmul.mubr.bf16.gmra.mxu0 %v6987
        %v7272 = vpop.f32.mrf.mxu0
        %v7273 = vadd.f32 %v7036, %v7272
        %v7274 = vpop.f32.mrf.mxu0
        %v7275 = vpop.f32.mrf.mxu0
        %v7276 = vadd.f32 %v7036, %v7275
        %v7277 = vpop.f32.mrf.mxu0
        %7278 = vmatprep.mubr.bf16.mxu0 0
        %7279 = vmatmul.mubr.bf16.gmra.mxu0 %v6988
        %v7280 = vpop.f32.mrf.mxu0
        %v7281 = vadd.f32 %v7036, %v7280
        %v7282 = vpop.f32.mrf.mxu0
        %v7283 = vpop.f32.mrf.mxu0
        %v7284 = vadd.f32 %v7036, %v7283
        %v7285 = vpop.f32.mrf.mxu0
        %7286 = vmatprep.mubr.bf16.mxu0 0
        %7287 = vmatmul.mubr.bf16.gmra.mxu0 %v6989
        %v7288 = vpop.f32.mrf.mxu0
        %v7289 = vadd.f32 %v7036, %v7288
        %v7290 = vpop.f32.mrf.mxu0
        %v7291 = vpop.f32.mrf.mxu0
        %v7292 = vadd.f32 %v7036, %v7291
        %v7293 = vpop.f32.mrf.mxu0
        %7294 = vmatprep.mubr.bf16.mxu0 0
        %7295 = vmatmul.mubr.bf16.gmra.mxu0 %v6990
        %v7296 = vpop.f32.mrf.mxu0
        %v7297 = vadd.f32 %v7036, %v7296
        %v7298 = vpop.f32.mrf.mxu0
        %v7299 = vpop.f32.mrf.mxu0
        %v7300 = vadd.f32 %v7036, %v7299
        %v7301 = vpop.f32.mrf.mxu0
        %7302 = vmatprep.mubr.bf16.mxu0 0
        %7303 = vmatmul.mubr.bf16.gmra.mxu0 %v6991
        %v7304 = vpop.f32.mrf.mxu0
        %v7305 = vadd.f32 %v7036, %v7304
        %v7306 = vpop.f32.mrf.mxu0
        %v7307 = vpop.f32.mrf.mxu0
        %v7308 = vadd.f32 %v7036, %v7307
        %v7309 = vpop.f32.mrf.mxu0
        %7310 = vmatprep.mubr.bf16.mxu0 0
        %7311 = vmatmul.mubr.bf16.gmra.mxu0 %v6992
        %v7312 = vpop.f32.mrf.mxu0
        %v7313 = vadd.f32 %v7036, %v7312
        %v7314 = vpop.f32.mrf.mxu0
        %v7315 = vpop.f32.mrf.mxu0
        %v7316 = vadd.f32 %v7036, %v7315
        %v7317 = vpop.f32.mrf.mxu0
        %7318 = vmatprep.mubr.bf16.mxu0 0
        %7319 = vmatmul.mubr.bf16.gmra.mxu0 %v6993
        %v7320 = vpop.f32.mrf.mxu0
        %v7321 = vadd.f32 %v7036, %v7320
        %v7322 = vpop.f32.mrf.mxu0
        %v7323 = vpop.f32.mrf.mxu0
        %v7324 = vadd.f32 %v7036, %v7323
        %v7325 = vpop.f32.mrf.mxu0
        %7326 = vmatprep.mubr.bf16.mxu0 0
        %7327 = vmatmul.mubr.bf16.gmra.mxu0 %v6994
        %v7328 = vpop.f32.mrf.mxu0
        %v7329 = vadd.f32 %v7036, %v7328
        %v7330 = vpop.f32.mrf.mxu0
        %v7331 = vpop.f32.mrf.mxu0
        %v7332 = vadd.f32 %v7036, %v7331
        %v7333 = vpop.f32.mrf.mxu0
        %7334 = vmatprep.mubr.bf16.mxu0 0
        %7335 = vmatmul.mubr.bf16.gmra.mxu0 %v6995
        %v7336 = vpop.f32.mrf.mxu0
        %v7337 = vadd.f32 %v7036, %v7336
        %v7338 = vpop.f32.mrf.mxu0
        %v7339 = vpop.f32.mrf.mxu0
        %v7340 = vadd.f32 %v7036, %v7339
        %v7341 = vpop.f32.mrf.mxu0
        %7342 = vmatprep.mubr.bf16.mxu0 0
        %7343 = vmatmul.mubr.bf16.gmra.mxu0 %v6996
        %v7344 = vpop.f32.mrf.mxu0
        %v7345 = vadd.f32 %v7036, %v7344
        %v7346 = vpop.f32.mrf.mxu0
        %v7347 = vpop.f32.mrf.mxu0
        %v7348 = vadd.f32 %v7036, %v7347
        %v7349 = vpop.f32.mrf.mxu0
        %7350 = vmatprep.mubr.bf16.mxu0 0
        %7351 = vmatmul.mubr.bf16.gmra.mxu0 %v6997
        %v7352 = vpop.f32.mrf.mxu0
        %v7353 = vadd.f32 %v7036, %v7352
        %v7354 = vpop.f32.mrf.mxu0
        %v7355 = vpop.f32.mrf.mxu0
        %v7356 = vadd.f32 %v7036, %v7355
        %v7357 = vpop.f32.mrf.mxu0
        %7358 = vmatprep.mubr.bf16.mxu0 0
        %7359 = vmatmul.mubr.bf16.gmra.mxu0 %v6998
        %v7360 = vpop.f32.mrf.mxu0
        %v7361 = vadd.f32 %v7036, %v7360
        %v7362 = vpop.f32.mrf.mxu0
        %v7363 = vpop.f32.mrf.mxu0
        %v7364 = vadd.f32 %v7036, %v7363
        %v7365 = vpop.f32.mrf.mxu0
        %7366 = vmatprep.mubr.bf16.mxu0 0
        %7367 = vmatmul.mubr.bf16.gmra.mxu0 %v6999
        %v7368 = vpop.f32.mrf.mxu0
        %v7369 = vadd.f32 %v7036, %v7368
        %v7370 = vpop.f32.mrf.mxu0
        %v7371 = vpop.f32.mrf.mxu0
        %v7372 = vadd.f32 %v7036, %v7371
        %v7373 = vpop.f32.mrf.mxu0
        %7374 = vmatprep.mubr.bf16.mxu0 0
        %7375 = vmatmul.mubr.bf16.gmra.mxu0 %v7000
        %v7376 = vpop.f32.mrf.mxu0
        %v7377 = vadd.f32 %v7036, %v7376
        %v7378 = vpop.f32.mrf.mxu0
        %v7379 = vpop.f32.mrf.mxu0
        %v7380 = vadd.f32 %v7036, %v7379
        %v7381 = vpop.f32.mrf.mxu0
        %7382 = vmatprep.mubr.bf16.mxu0 0
        %7383 = vmatmul.mubr.bf16.gmra.mxu0 %v7001
        %v7384 = vpop.f32.mrf.mxu0
        %v7385 = vadd.f32 %v7036, %v7384
        %v7386 = vpop.f32.mrf.mxu0
        %v7387 = vpop.f32.mrf.mxu0
        %v7388 = vadd.f32 %v7036, %v7387
        %v7389 = vpop.f32.mrf.mxu0
        %7390 = vmatprep.mubr.bf16.mxu0 0
        %7391 = vmatmul.mubr.bf16.gmra.mxu0 %v7002
        %v7392 = vpop.f32.mrf.mxu0
        %v7393 = vadd.f32 %v7036, %v7392
        %v7394 = vpop.f32.mrf.mxu0
        %v7395 = vpop.f32.mrf.mxu0
        %v7396 = vadd.f32 %v7036, %v7395
        %v7397 = vpop.f32.mrf.mxu0
        %7398 = vmatprep.mubr.bf16.mxu0 0
        %7399 = vmatmul.mubr.bf16.gmra.mxu0 %v7003
        %v7400 = vpop.f32.mrf.mxu0
        %v7401 = vadd.f32 %v7036, %v7400
        %v7402 = vpop.f32.mrf.mxu0
        %v7403 = vpop.f32.mrf.mxu0
        %v7404 = vadd.f32 %v7036, %v7403
        %v7405 = vpop.f32.mrf.mxu0
        %7406 = vmatprep.mubr.bf16.mxu0 0
        %7407 = vmatmul.mubr.bf16.gmra.mxu0 %v7004
        %v7408 = vpop.f32.mrf.mxu0
        %v7409 = vadd.f32 %v7036, %v7408
        %v7410 = vpop.f32.mrf.mxu0
        %v7411 = vpop.f32.mrf.mxu0
        %v7412 = vadd.f32 %v7036, %v7411
        %v7413 = vpop.f32.mrf.mxu0
        %7414 = vmatprep.mubr.bf16.mxu0 0
        %7415 = vmatmul.mubr.bf16.gmra.mxu0 %v7005
        %v7416 = vpop.f32.mrf.mxu0
        %v7417 = vadd.f32 %v7036, %v7416
        %v7418 = vpop.f32.mrf.mxu0
        %v7419 = vpop.f32.mrf.mxu0
        %v7420 = vadd.f32 %v7036, %v7419
        %v7421 = vpop.f32.mrf.mxu0
        %7422 = vmatprep.mubr.bf16.mxu0 0
        %7423 = vmatmul.mubr.bf16.gmra.mxu0 %v7006
        %v7424 = vpop.f32.mrf.mxu0
        %v7425 = vadd.f32 %v7036, %v7424
        %v7426 = vpop.f32.mrf.mxu0
        %v7427 = vpop.f32.mrf.mxu0
        %v7428 = vadd.f32 %v7036, %v7427
        %v7429 = vpop.f32.mrf.mxu0
        %7430 = vmatprep.mubr.bf16.mxu0 0
        %7431 = vmatmul.mubr.bf16.gmra.mxu0 %v7007
        %v7432 = vpop.f32.mrf.mxu0
        %v7433 = vadd.f32 %v7036, %v7432
        %v7434 = vpop.f32.mrf.mxu0
        %v7435 = vpop.f32.mrf.mxu0
        %v7436 = vadd.f32 %v7036, %v7435
        %v7437 = vpop.f32.mrf.mxu0
        %7438 = vmatprep.mubr.bf16.mxu0 0
        %7439 = vmatmul.mubr.bf16.gmra.mxu0 %v7008
        %v7440 = vpop.f32.mrf.mxu0
        %v7441 = vadd.f32 %v7036, %v7440
        %v7442 = vpop.f32.mrf.mxu0
        %v7443 = vpop.f32.mrf.mxu0
        %v7444 = vadd.f32 %v7036, %v7443
        %v7445 = vpop.f32.mrf.mxu0
        %7446 = vmatprep.mubr.bf16.mxu0 0
        %7447 = vmatmul.mubr.bf16.gmra.mxu0 %v7009
        %v7448 = vpop.f32.mrf.mxu0
        %v7449 = vadd.f32 %v7036, %v7448
        %v7450 = vpop.f32.mrf.mxu0
        %v7451 = vpop.f32.mrf.mxu0
        %v7452 = vadd.f32 %v7036, %v7451
        %v7453 = vpop.f32.mrf.mxu0
        %7454 = vmatprep.mubr.bf16.mxu0 0
        %7455 = vmatmul.mubr.bf16.gmra.mxu0 %v7010
        %v7456 = vpop.f32.mrf.mxu0
        %v7457 = vadd.f32 %v7036, %v7456
        %v7458 = vpop.f32.mrf.mxu0
        %v7459 = vpop.f32.mrf.mxu0
        %v7460 = vadd.f32 %v7036, %v7459
        %v7461 = vpop.f32.mrf.mxu0
        %7462 = vmatprep.mubr.bf16.mxu0 0
        %7463 = vmatmul.mubr.bf16.gmra.mxu0 %v7011
        %v7464 = vpop.f32.mrf.mxu0
        %v7465 = vadd.f32 %v7036, %v7464
        %v7466 = vpop.f32.mrf.mxu0
        %v7467 = vpop.f32.mrf.mxu0
        %v7468 = vadd.f32 %v7036, %v7467
        %v7469 = vpop.f32.mrf.mxu0
        %7470 = vmatprep.mubr.bf16.mxu0 0
        %7471 = vmatmul.mubr.bf16.gmra.mxu0 %v7012
        %v7472 = vpop.f32.mrf.mxu0
        %v7473 = vadd.f32 %v7036, %v7472
        %v7474 = vpop.f32.mrf.mxu0
        %v7475 = vpop.f32.mrf.mxu0
        %v7476 = vadd.f32 %v7036, %v7475
        %v7477 = vpop.f32.mrf.mxu0
        %7478 = vmatprep.mubr.bf16.mxu0 0
        %7479 = vmatmul.mubr.bf16.gmra.mxu0 %v7013
        %v7480 = vpop.f32.mrf.mxu0
        %v7481 = vadd.f32 %v7036, %v7480
        %v7482 = vpop.f32.mrf.mxu0
        %v7483 = vpop.f32.mrf.mxu0
        %v7484 = vadd.f32 %v7036, %v7483
        %v7485 = vpop.f32.mrf.mxu0
        %7486 = vmatprep.mubr.bf16.mxu0 0
        %7487 = vmatmul.mubr.bf16.gmra.mxu0 %v7014
        %v7488 = vpop.f32.mrf.mxu0
        %v7489 = vadd.f32 %v7036, %v7488
        %v7490 = vpop.f32.mrf.mxu0
        %v7491 = vpop.f32.mrf.mxu0
        %v7492 = vadd.f32 %v7036, %v7491
        %v7493 = vpop.f32.mrf.mxu0
        %7494 = vmatprep.mubr.bf16.mxu0 0
        %7495 = vmatmul.mubr.bf16.gmra.mxu0 %v7015
        %v7496 = vpop.f32.mrf.mxu0
        %v7497 = vadd.f32 %v7036, %v7496
        %v7498 = vpop.f32.mrf.mxu0
        %v7499 = vpop.f32.mrf.mxu0
        %v7500 = vadd.f32 %v7036, %v7499
        %v7501 = vpop.f32.mrf.mxu0
        %7502 = vmatprep.mubr.bf16.mxu0 0
        %7503 = vmatmul.mubr.bf16.gmra.mxu0 %v7016
        %v7504 = vpop.f32.mrf.mxu0
        %v7505 = vadd.f32 %v7036, %v7504
        %v7506 = vpop.f32.mrf.mxu0
        %v7507 = vpop.f32.mrf.mxu0
        %v7508 = vadd.f32 %v7036, %v7507
        %v7509 = vpop.f32.mrf.mxu0
        %7510 = vmatprep.mubr.bf16.mxu0 0
        %7511 = vmatmul.mubr.bf16.gmra.mxu0 %v7017
        %v7512 = vpop.f32.mrf.mxu0
        %v7513 = vadd.f32 %v7036, %v7512
        %v7514 = vpop.f32.mrf.mxu0
        %v7515 = vpop.f32.mrf.mxu0
        %v7516 = vadd.f32 %v7036, %v7515
        %v7517 = vpop.f32.mrf.mxu0
        %7518 = vmatprep.mubr.bf16.mxu0 0
        %7519 = vmatmul.mubr.bf16.gmra.mxu0 %v7018
        %v7520 = vpop.f32.mrf.mxu0
        %v7521 = vadd.f32 %v7036, %v7520
        %v7522 = vpop.f32.mrf.mxu0
        %v7523 = vpop.f32.mrf.mxu0
        %v7524 = vadd.f32 %v7036, %v7523
        %v7525 = vpop.f32.mrf.mxu0
        %7526 = vmatprep.mubr.bf16.mxu0 0
        %7527 = vmatmul.mubr.bf16.gmra.mxu0 %v7019
        %v7528 = vpop.f32.mrf.mxu0
        %v7529 = vadd.f32 %v7036, %v7528
        %v7530 = vpop.f32.mrf.mxu0
        %v7531 = vpop.f32.mrf.mxu0
        %v7532 = vadd.f32 %v7036, %v7531
        %v7533 = vpop.f32.mrf.mxu0
        %7534 = vmatprep.mubr.bf16.mxu0 0
        %7535 = vmatmul.mubr.bf16.gmra.mxu0 %v7020
        %v7536 = vpop.f32.mrf.mxu0
        %v7537 = vadd.f32 %v7036, %v7536
        %v7538 = vpop.f32.mrf.mxu0
        %v7539 = vpop.f32.mrf.mxu0
        %v7540 = vadd.f32 %v7036, %v7539
        %v7541 = vpop.f32.mrf.mxu0
        %7542 = vmatprep.mubr.bf16.mxu0 0
        %7543 = vmatmul.mubr.bf16.gmra.mxu0 %v7021
        %v7544 = vpop.f32.mrf.mxu0
        %v7545 = vadd.f32 %v7036, %v7544
        %v7546 = vpop.f32.mrf.mxu0
        %v7547 = vpop.f32.mrf.mxu0
        %v7548 = vadd.f32 %v7036, %v7547
        %v7549 = vpop.f32.mrf.mxu0
        %7550 = vmatprep.mubr.bf16.mxu0 0
        %7551 = vmatmul.mubr.bf16.gmra.mxu0 %v7022
        %v7552 = vpop.f32.mrf.mxu0
        %v7553 = vadd.f32 %v7036, %v7552
        %v7554 = vpop.f32.mrf.mxu0
        %v7555 = vpop.f32.mrf.mxu0
        %v7556 = vadd.f32 %v7036, %v7555
        %v7557 = vpop.f32.mrf.mxu0
        %7558 = vmatprep.mubr.bf16.mxu0 0
        %7559 = vmatmul.mubr.bf16.gmra.mxu0 %v7023
        %v7560 = vpop.f32.mrf.mxu0
        %v7561 = vadd.f32 %v7036, %v7560
        %v7562 = vpop.f32.mrf.mxu0
        %v7563 = vpop.f32.mrf.mxu0
        %v7564 = vadd.f32 %v7036, %v7563
        %v7565 = vpop.f32.mrf.mxu0
        %7566 = vmatprep.mubr.bf16.mxu0 0
        %7567 = vmatmul.mubr.bf16.gmra.mxu0 %v7024
        %v7568 = vpop.f32.mrf.mxu0
        %v7569 = vadd.f32 %v7036, %v7568
        %v7570 = vpop.f32.mrf.mxu0
        %v7571 = vpop.f32.mrf.mxu0
        %v7572 = vadd.f32 %v7036, %v7571
        %v7573 = vpop.f32.mrf.mxu0
        %7574 = vmatprep.mubr.bf16.mxu0 0
        %7575 = vmatmul.mubr.bf16.gmra.mxu0 %v7025
        %v7576 = vpop.f32.mrf.mxu0
        %v7577 = vadd.f32 %v7036, %v7576
        %v7578 = vpop.f32.mrf.mxu0
        %v7579 = vpop.f32.mrf.mxu0
        %v7580 = vadd.f32 %v7036, %v7579
        %v7581 = vpop.f32.mrf.mxu0
        %7582 = vmatprep.mubr.bf16.mxu0 0
        %7583 = vmatmul.mubr.bf16.gmra.mxu0 %v7026
        %v7584 = vpop.f32.mrf.mxu0
        %v7585 = vadd.f32 %v7036, %v7584
        %v7586 = vpop.f32.mrf.mxu0
        %v7587 = vpop.f32.mrf.mxu0
        %v7588 = vadd.f32 %v7036, %v7587
        %v7589 = vpop.f32.mrf.mxu0
        %7590 = vmatprep.mubr.bf16.mxu0 0
        %7591 = vmatmul.mubr.bf16.gmra.mxu0 %v7027
        %v7592 = vpop.f32.mrf.mxu0
        %v7593 = vadd.f32 %v7036, %v7592
        %v7594 = vpop.f32.mrf.mxu0
        %v7595 = vpop.f32.mrf.mxu0
        %v7596 = vadd.f32 %v7036, %v7595
        %v7597 = vpop.f32.mrf.mxu0
        %7598 = vmatprep.mubr.bf16.mxu0 0
        %7599 = vmatmul.mubr.bf16.gmra.mxu0 %v7028
        %v7600 = vpop.f32.mrf.mxu0
        %v7601 = vadd.f32 %v7036, %v7600
        %v7602 = vpop.f32.mrf.mxu0
        %v7603 = vpop.f32.mrf.mxu0
        %v7604 = vadd.f32 %v7036, %v7603
        %v7605 = vpop.f32.mrf.mxu0
        %7606 = vmatprep.mubr.bf16.mxu0 0
        %7607 = vmatmul.mubr.bf16.gmra.mxu0 %v7029
        %v7608 = vpop.f32.mrf.mxu0
        %v7609 = vadd.f32 %v7036, %v7608
        %v7610 = vpop.f32.mrf.mxu0
        %v7611 = vpop.f32.mrf.mxu0
        %v7612 = vadd.f32 %v7036, %v7611
        %v7613 = vpop.f32.mrf.mxu0
        %7614 = vmatprep.mubr.bf16.mxu0 0
        %7615 = vmatmul.mubr.bf16.gmra.mxu0 %v7030
        %v7616 = vpop.f32.mrf.mxu0
        %v7617 = vadd.f32 %v7036, %v7616
        %v7618 = vpop.f32.mrf.mxu0
        %v7619 = vpop.f32.mrf.mxu0
        %v7620 = vadd.f32 %v7036, %v7619
        %v7621 = vpop.f32.mrf.mxu0
        %7622 = vmatprep.mubr.bf16.mxu0 0
        %7623 = vmatmul.mubr.bf16.gmra.mxu0 %v7031
        %v7624 = vpop.f32.mrf.mxu0
        %v7625 = vadd.f32 %v7036, %v7624
        %v7626 = vpop.f32.mrf.mxu0
        %v7627 = vpop.f32.mrf.mxu0
        %v7628 = vadd.f32 %v7036, %v7627
        %v7629 = vpop.f32.mrf.mxu0
        %7630 = vdwg.mxu0
        %v7631 = vmax.f32 %v7121, 0.0
        %v7632 = vmax.f32 %v7124, 0.0
        %v7633 = vmax.f32 %v7129, 0.0
        %v7634 = vmax.f32 %v7132, 0.0
        %v7635 = vmax.f32 %v7137, 0.0
        %v7636 = vmax.f32 %v7140, 0.0
        %v7637 = vmax.f32 %v7145, 0.0
        %v7638 = vmax.f32 %v7148, 0.0
        %v7639 = vmax.f32 %v7153, 0.0
        %v7640 = vmax.f32 %v7156, 0.0
        %v7641 = vmax.f32 %v7161, 0.0
        %v7642 = vmax.f32 %v7164, 0.0
        %v7643 = vmax.f32 %v7169, 0.0
        %v7644 = vmax.f32 %v7172, 0.0
        %v7645 = vmax.f32 %v7177, 0.0
        %v7646 = vmax.f32 %v7180, 0.0
        %v7647 = vmax.f32 %v7185, 0.0
        %v7648 = vmax.f32 %v7188, 0.0
        %v7649 = vmax.f32 %v7193, 0.0
        %v7650 = vmax.f32 %v7196, 0.0
        %v7651 = vmax.f32 %v7201, 0.0
        %v7652 = vmax.f32 %v7204, 0.0
        %v7653 = vmax.f32 %v7209, 0.0
        %v7654 = vmax.f32 %v7212, 0.0
        %v7655 = vmax.f32 %v7217, 0.0
        %v7656 = vmax.f32 %v7220, 0.0
        %v7657 = vmax.f32 %v7225, 0.0
        %v7658 = vmax.f32 %v7228, 0.0
        %v7659 = vmax.f32 %v7233, 0.0
        %v7660 = vmax.f32 %v7236, 0.0
        %v7661 = vmax.f32 %v7241, 0.0
        %v7662 = vmax.f32 %v7244, 0.0
        %v7663 = vmax.f32 %v7249, 0.0
        %v7664 = vmax.f32 %v7252, 0.0
        %v7665 = vmax.f32 %v7257, 0.0
        %v7666 = vmax.f32 %v7260, 0.0
        %v7667 = vmax.f32 %v7265, 0.0
        %v7668 = vmax.f32 %v7268, 0.0
        %v7669 = vmax.f32 %v7273, 0.0
        %v7670 = vmax.f32 %v7276, 0.0
        %v7671 = vmax.f32 %v7281, 0.0
        %v7672 = vmax.f32 %v7284, 0.0
        %v7673 = vmax.f32 %v7289, 0.0
        %v7674 = vmax.f32 %v7292, 0.0
        %v7675 = vmax.f32 %v7297, 0.0
        %v7676 = vmax.f32 %v7300, 0.0
        %v7677 = vmax.f32 %v7305, 0.0
        %v7678 = vmax.f32 %v7308, 0.0
        %v7679 = vmax.f32 %v7313, 0.0
        %v7680 = vmax.f32 %v7316, 0.0
        %v7681 = vmax.f32 %v7321, 0.0
        %v7682 = vmax.f32 %v7324, 0.0
        %v7683 = vmax.f32 %v7329, 0.0
        %v7684 = vmax.f32 %v7332, 0.0
        %v7685 = vmax.f32 %v7337, 0.0
        %v7686 = vmax.f32 %v7340, 0.0
        %v7687 = vmax.f32 %v7345, 0.0
        %v7688 = vmax.f32 %v7348, 0.0
        %v7689 = vmax.f32 %v7353, 0.0
        %v7690 = vmax.f32 %v7356, 0.0
        %v7691 = vmax.f32 %v7361, 0.0
        %v7692 = vmax.f32 %v7364, 0.0
        %v7693 = vmax.f32 %v7369, 0.0
        %v7694 = vmax.f32 %v7372, 0.0
        %v7695 = vmax.f32 %v7377, 0.0
        %v7696 = vmax.f32 %v7380, 0.0
        %v7697 = vmax.f32 %v7385, 0.0
        %v7698 = vmax.f32 %v7388, 0.0
        %v7699 = vmax.f32 %v7393, 0.0
        %v7700 = vmax.f32 %v7396, 0.0
        %v7701 = vmax.f32 %v7401, 0.0
        %v7702 = vmax.f32 %v7404, 0.0
        %v7703 = vmax.f32 %v7409, 0.0
        %v7704 = vmax.f32 %v7412, 0.0
        %v7705 = vmax.f32 %v7417, 0.0
        %v7706 = vmax.f32 %v7420, 0.0
        %v7707 = vmax.f32 %v7425, 0.0
        %v7708 = vmax.f32 %v7428, 0.0
        %v7709 = vmax.f32 %v7433, 0.0
        %v7710 = vmax.f32 %v7436, 0.0
        %v7711 = vmax.f32 %v7441, 0.0
        %v7712 = vmax.f32 %v7444, 0.0
        %v7713 = vmax.f32 %v7449, 0.0
        %v7714 = vmax.f32 %v7452, 0.0
        %v7715 = vmax.f32 %v7457, 0.0
        %v7716 = vmax.f32 %v7460, 0.0
        %v7717 = vmax.f32 %v7465, 0.0
        %v7718 = vmax.f32 %v7468, 0.0
        %v7719 = vmax.f32 %v7473, 0.0
        %v7720 = vmax.f32 %v7476, 0.0
        %v7721 = vmax.f32 %v7481, 0.0
        %v7722 = vmax.f32 %v7484, 0.0
        %v7723 = vmax.f32 %v7489, 0.0
        %v7724 = vmax.f32 %v7492, 0.0
        %v7725 = vmax.f32 %v7497, 0.0
        %v7726 = vmax.f32 %v7500, 0.0
        %v7727 = vmax.f32 %v7505, 0.0
        %v7728 = vmax.f32 %v7508, 0.0
        %v7729 = vmax.f32 %v7513, 0.0
        %v7730 = vmax.f32 %v7516, 0.0
        %v7731 = vmax.f32 %v7521, 0.0
        %v7732 = vmax.f32 %v7524, 0.0
        %v7733 = vmax.f32 %v7529, 0.0
        %v7734 = vmax.f32 %v7532, 0.0
        %v7735 = vmax.f32 %v7537, 0.0
        %v7736 = vmax.f32 %v7540, 0.0
        %v7737 = vmax.f32 %v7545, 0.0
        %v7738 = vmax.f32 %v7548, 0.0
        %v7739 = vmax.f32 %v7553, 0.0
        %v7740 = vmax.f32 %v7556, 0.0
        %v7741 = vmax.f32 %v7561, 0.0
        %v7742 = vmax.f32 %v7564, 0.0
        %v7743 = vmax.f32 %v7569, 0.0
        %v7744 = vmax.f32 %v7572, 0.0
        %v7745 = vmax.f32 %v7577, 0.0
        %v7746 = vmax.f32 %v7580, 0.0
        %v7747 = vmax.f32 %v7585, 0.0
        %v7748 = vmax.f32 %v7588, 0.0
        %v7749 = vmax.f32 %v7593, 0.0
        %v7750 = vmax.f32 %v7596, 0.0
        %v7751 = vmax.f32 %v7601, 0.0
        %v7752 = vmax.f32 %v7604, 0.0
        %v7753 = vmax.f32 %v7609, 0.0
        %v7754 = vmax.f32 %v7612, 0.0
        %v7755 = vmax.f32 %v7617, 0.0
        %v7756 = vmax.f32 %v7620, 0.0
        %v7757 = vmax.f32 %v7625, 0.0
        %v7758 = vmax.f32 %v7628, 0.0
        %v7759 = vrot.slane %v7631, 4
        %v7760 = vmax.f32 %v7631, %v7759
        %v7761 = vrot.slane %v7760, 2
        %v7762 = vmax.f32 %v7760, %v7761
        %v7763 = vrot.slane %v7762, 1
        %v7764 = vmax.f32 %v7762, %v7763
        %v7765 = vrot.slane %v7632, 4
        %v7766 = vmax.f32 %v7632, %v7765
        %v7767 = vrot.slane %v7766, 2
        %v7768 = vmax.f32 %v7766, %v7767
        %v7769 = vrot.slane %v7768, 1
        %v7770 = vmax.f32 %v7768, %v7769
        %v7771 = vrot.slane %v7633, 4
        %v7772 = vmax.f32 %v7633, %v7771
        %v7773 = vrot.slane %v7772, 2
        %v7774 = vmax.f32 %v7772, %v7773
        %v7775 = vrot.slane %v7774, 1
        %v7776 = vmax.f32 %v7774, %v7775
        %v7777 = vrot.slane %v7634, 4
        %v7778 = vmax.f32 %v7634, %v7777
        %v7779 = vrot.slane %v7778, 2
        %v7780 = vmax.f32 %v7778, %v7779
        %v7781 = vrot.slane %v7780, 1
        %v7782 = vmax.f32 %v7780, %v7781
        %v7783 = vrot.slane %v7635, 4
        %v7784 = vmax.f32 %v7635, %v7783
        %v7785 = vrot.slane %v7784, 2
        %v7786 = vmax.f32 %v7784, %v7785
        %v7787 = vrot.slane %v7786, 1
        %v7788 = vmax.f32 %v7786, %v7787
        %v7789 = vrot.slane %v7636, 4
        %v7790 = vmax.f32 %v7636, %v7789
        %v7791 = vrot.slane %v7790, 2
        %v7792 = vmax.f32 %v7790, %v7791
        %v7793 = vrot.slane %v7792, 1
        %v7794 = vmax.f32 %v7792, %v7793
        %v7795 = vrot.slane %v7637, 4
        %v7796 = vmax.f32 %v7637, %v7795
        %v7797 = vrot.slane %v7796, 2
        %v7798 = vmax.f32 %v7796, %v7797
        %v7799 = vrot.slane %v7798, 1
        %v7800 = vmax.f32 %v7798, %v7799
        %v7801 = vrot.slane %v7638, 4
        %v7802 = vmax.f32 %v7638, %v7801
        %v7803 = vrot.slane %v7802, 2
        %v7804 = vmax.f32 %v7802, %v7803
        %v7805 = vrot.slane %v7804, 1
        %v7806 = vmax.f32 %v7804, %v7805
        %v7807 = vrot.slane %v7639, 4
        %v7808 = vmax.f32 %v7639, %v7807
        %v7809 = vrot.slane %v7808, 2
        %v7810 = vmax.f32 %v7808, %v7809
        %v7811 = vrot.slane %v7810, 1
        %v7812 = vmax.f32 %v7810, %v7811
        %v7813 = vrot.slane %v7640, 4
        %v7814 = vmax.f32 %v7640, %v7813
        %v7815 = vrot.slane %v7814, 2
        %v7816 = vmax.f32 %v7814, %v7815
        %v7817 = vrot.slane %v7816, 1
        %v7818 = vmax.f32 %v7816, %v7817
        %v7819 = vrot.slane %v7641, 4
        %v7820 = vmax.f32 %v7641, %v7819
        %v7821 = vrot.slane %v7820, 2
        %v7822 = vmax.f32 %v7820, %v7821
        %v7823 = vrot.slane %v7822, 1
        %v7824 = vmax.f32 %v7822, %v7823
        %v7825 = vrot.slane %v7642, 4
        %v7826 = vmax.f32 %v7642, %v7825
        %v7827 = vrot.slane %v7826, 2
        %v7828 = vmax.f32 %v7826, %v7827
        %v7829 = vrot.slane %v7828, 1
        %v7830 = vmax.f32 %v7828, %v7829
        %v7831 = vrot.slane %v7643, 4
        %v7832 = vmax.f32 %v7643, %v7831
        %v7833 = vrot.slane %v7832, 2
        %v7834 = vmax.f32 %v7832, %v7833
        %v7835 = vrot.slane %v7834, 1
        %v7836 = vmax.f32 %v7834, %v7835
        %v7837 = vrot.slane %v7644, 4
        %v7838 = vmax.f32 %v7644, %v7837
        %v7839 = vrot.slane %v7838, 2
        %v7840 = vmax.f32 %v7838, %v7839
        %v7841 = vrot.slane %v7840, 1
        %v7842 = vmax.f32 %v7840, %v7841
        %v7843 = vrot.slane %v7645, 4
        %v7844 = vmax.f32 %v7645, %v7843
        %v7845 = vrot.slane %v7844, 2
        %v7846 = vmax.f32 %v7844, %v7845
        %v7847 = vrot.slane %v7846, 1
        %v7848 = vmax.f32 %v7846, %v7847
        %v7849 = vrot.slane %v7646, 4
        %v7850 = vmax.f32 %v7646, %v7849
        %v7851 = vrot.slane %v7850, 2
        %v7852 = vmax.f32 %v7850, %v7851
        %v7853 = vrot.slane %v7852, 1
        %v7854 = vmax.f32 %v7852, %v7853
        %v7855 = vrot.slane %v7647, 4
        %v7856 = vmax.f32 %v7647, %v7855
        %v7857 = vrot.slane %v7856, 2
        %v7858 = vmax.f32 %v7856, %v7857
        %v7859 = vrot.slane %v7858, 1
        %v7860 = vmax.f32 %v7858, %v7859
        %v7861 = vrot.slane %v7648, 4
        %v7862 = vmax.f32 %v7648, %v7861
        %v7863 = vrot.slane %v7862, 2
        %v7864 = vmax.f32 %v7862, %v7863
        %v7865 = vrot.slane %v7864, 1
        %v7866 = vmax.f32 %v7864, %v7865
        %v7867 = vrot.slane %v7649, 4
        %v7868 = vmax.f32 %v7649, %v7867
        %v7869 = vrot.slane %v7868, 2
        %v7870 = vmax.f32 %v7868, %v7869
        %v7871 = vrot.slane %v7870, 1
        %v7872 = vmax.f32 %v7870, %v7871
        %v7873 = vrot.slane %v7650, 4
        %v7874 = vmax.f32 %v7650, %v7873
        %v7875 = vrot.slane %v7874, 2
        %v7876 = vmax.f32 %v7874, %v7875
        %v7877 = vrot.slane %v7876, 1
        %v7878 = vmax.f32 %v7876, %v7877
        %v7879 = vrot.slane %v7651, 4
        %v7880 = vmax.f32 %v7651, %v7879
        %v7881 = vrot.slane %v7880, 2
        %v7882 = vmax.f32 %v7880, %v7881
        %v7883 = vrot.slane %v7882, 1
        %v7884 = vmax.f32 %v7882, %v7883
        %v7885 = vrot.slane %v7652, 4
        %v7886 = vmax.f32 %v7652, %v7885
        %v7887 = vrot.slane %v7886, 2
        %v7888 = vmax.f32 %v7886, %v7887
        %v7889 = vrot.slane %v7888, 1
        %v7890 = vmax.f32 %v7888, %v7889
        %v7891 = vrot.slane %v7653, 4
        %v7892 = vmax.f32 %v7653, %v7891
        %v7893 = vrot.slane %v7892, 2
        %v7894 = vmax.f32 %v7892, %v7893
        %v7895 = vrot.slane %v7894, 1
        %v7896 = vmax.f32 %v7894, %v7895
        %v7897 = vrot.slane %v7654, 4
        %v7898 = vmax.f32 %v7654, %v7897
        %v7899 = vrot.slane %v7898, 2
        %v7900 = vmax.f32 %v7898, %v7899
        %v7901 = vrot.slane %v7900, 1
        %v7902 = vmax.f32 %v7900, %v7901
        %v7903 = vrot.slane %v7655, 4
        %v7904 = vmax.f32 %v7655, %v7903
        %v7905 = vrot.slane %v7904, 2
        %v7906 = vmax.f32 %v7904, %v7905
        %v7907 = vrot.slane %v7906, 1
        %v7908 = vmax.f32 %v7906, %v7907
        %v7909 = vrot.slane %v7656, 4
        %v7910 = vmax.f32 %v7656, %v7909
        %v7911 = vrot.slane %v7910, 2
        %v7912 = vmax.f32 %v7910, %v7911
        %v7913 = vrot.slane %v7912, 1
        %v7914 = vmax.f32 %v7912, %v7913
        %v7915 = vrot.slane %v7657, 4
        %v7916 = vmax.f32 %v7657, %v7915
        %v7917 = vrot.slane %v7916, 2
        %v7918 = vmax.f32 %v7916, %v7917
        %v7919 = vrot.slane %v7918, 1
        %v7920 = vmax.f32 %v7918, %v7919
        %v7921 = vrot.slane %v7658, 4
        %v7922 = vmax.f32 %v7658, %v7921
        %v7923 = vrot.slane %v7922, 2
        %v7924 = vmax.f32 %v7922, %v7923
        %v7925 = vrot.slane %v7924, 1
        %v7926 = vmax.f32 %v7924, %v7925
        %v7927 = vrot.slane %v7659, 4
        %v7928 = vmax.f32 %v7659, %v7927
        %v7929 = vrot.slane %v7928, 2
        %v7930 = vmax.f32 %v7928, %v7929
        %v7931 = vrot.slane %v7930, 1
        %v7932 = vmax.f32 %v7930, %v7931
        %v7933 = vrot.slane %v7660, 4
        %v7934 = vmax.f32 %v7660, %v7933
        %v7935 = vrot.slane %v7934, 2
        %v7936 = vmax.f32 %v7934, %v7935
        %v7937 = vrot.slane %v7936, 1
        %v7938 = vmax.f32 %v7936, %v7937
        %v7939 = vrot.slane %v7661, 4
        %v7940 = vmax.f32 %v7661, %v7939
        %v7941 = vrot.slane %v7940, 2
        %v7942 = vmax.f32 %v7940, %v7941
        %v7943 = vrot.slane %v7942, 1
        %v7944 = vmax.f32 %v7942, %v7943
        %v7945 = vrot.slane %v7662, 4
        %v7946 = vmax.f32 %v7662, %v7945
        %v7947 = vrot.slane %v7946, 2
        %v7948 = vmax.f32 %v7946, %v7947
        %v7949 = vrot.slane %v7948, 1
        %v7950 = vmax.f32 %v7948, %v7949
        %v7951 = vrot.slane %v7663, 4
        %v7952 = vmax.f32 %v7663, %v7951
        %v7953 = vrot.slane %v7952, 2
        %v7954 = vmax.f32 %v7952, %v7953
        %v7955 = vrot.slane %v7954, 1
        %v7956 = vmax.f32 %v7954, %v7955
        %v7957 = vrot.slane %v7664, 4
        %v7958 = vmax.f32 %v7664, %v7957
        %v7959 = vrot.slane %v7958, 2
        %v7960 = vmax.f32 %v7958, %v7959
        %v7961 = vrot.slane %v7960, 1
        %v7962 = vmax.f32 %v7960, %v7961
        %v7963 = vrot.slane %v7665, 4
        %v7964 = vmax.f32 %v7665, %v7963
        %v7965 = vrot.slane %v7964, 2
        %v7966 = vmax.f32 %v7964, %v7965
        %v7967 = vrot.slane %v7966, 1
        %v7968 = vmax.f32 %v7966, %v7967
        %v7969 = vrot.slane %v7666, 4
        %v7970 = vmax.f32 %v7666, %v7969
        %v7971 = vrot.slane %v7970, 2
        %v7972 = vmax.f32 %v7970, %v7971
        %v7973 = vrot.slane %v7972, 1
        %v7974 = vmax.f32 %v7972, %v7973
        %v7975 = vrot.slane %v7667, 4
        %v7976 = vmax.f32 %v7667, %v7975
        %v7977 = vrot.slane %v7976, 2
        %v7978 = vmax.f32 %v7976, %v7977
        %v7979 = vrot.slane %v7978, 1
        %v7980 = vmax.f32 %v7978, %v7979
        %v7981 = vrot.slane %v7668, 4
        %v7982 = vmax.f32 %v7668, %v7981
        %v7983 = vrot.slane %v7982, 2
        %v7984 = vmax.f32 %v7982, %v7983
        %v7985 = vrot.slane %v7984, 1
        %v7986 = vmax.f32 %v7984, %v7985
        %v7987 = vrot.slane %v7669, 4
        %v7988 = vmax.f32 %v7669, %v7987
        %v7989 = vrot.slane %v7988, 2
        %v7990 = vmax.f32 %v7988, %v7989
        %v7991 = vrot.slane %v7990, 1
        %v7992 = vmax.f32 %v7990, %v7991
        %v7993 = vrot.slane %v7670, 4
        %v7994 = vmax.f32 %v7670, %v7993
        %v7995 = vrot.slane %v7994, 2
        %v7996 = vmax.f32 %v7994, %v7995
        %v7997 = vrot.slane %v7996, 1
        %v7998 = vmax.f32 %v7996, %v7997
        %v7999 = vrot.slane %v7671, 4
        %v8000 = vmax.f32 %v7671, %v7999
        %v8001 = vrot.slane %v8000, 2
        %v8002 = vmax.f32 %v8000, %v8001
        %v8003 = vrot.slane %v8002, 1
        %v8004 = vmax.f32 %v8002, %v8003
        %v8005 = vrot.slane %v7672, 4
        %v8006 = vmax.f32 %v7672, %v8005
        %v8007 = vrot.slane %v8006, 2
        %v8008 = vmax.f32 %v8006, %v8007
        %v8009 = vrot.slane %v8008, 1
        %v8010 = vmax.f32 %v8008, %v8009
        %v8011 = vrot.slane %v7673, 4
        %v8012 = vmax.f32 %v7673, %v8011
        %v8013 = vrot.slane %v8012, 2
        %v8014 = vmax.f32 %v8012, %v8013
        %v8015 = vrot.slane %v8014, 1
        %v8016 = vmax.f32 %v8014, %v8015
        %v8017 = vrot.slane %v7674, 4
        %v8018 = vmax.f32 %v7674, %v8017
        %v8019 = vrot.slane %v8018, 2
        %v8020 = vmax.f32 %v8018, %v8019
        %v8021 = vrot.slane %v8020, 1
        %v8022 = vmax.f32 %v8020, %v8021
        %v8023 = vrot.slane %v7675, 4
        %v8024 = vmax.f32 %v7675, %v8023
        %v8025 = vrot.slane %v8024, 2
        %v8026 = vmax.f32 %v8024, %v8025
        %v8027 = vrot.slane %v8026, 1
        %v8028 = vmax.f32 %v8026, %v8027
        %v8029 = vrot.slane %v7676, 4
        %v8030 = vmax.f32 %v7676, %v8029
        %v8031 = vrot.slane %v8030, 2
        %v8032 = vmax.f32 %v8030, %v8031
        %v8033 = vrot.slane %v8032, 1
        %v8034 = vmax.f32 %v8032, %v8033
        %v8035 = vrot.slane %v7677, 4
        %v8036 = vmax.f32 %v7677, %v8035
        %v8037 = vrot.slane %v8036, 2
        %v8038 = vmax.f32 %v8036, %v8037
        %v8039 = vrot.slane %v8038, 1
        %v8040 = vmax.f32 %v8038, %v8039
        %v8041 = vrot.slane %v7678, 4
        %v8042 = vmax.f32 %v7678, %v8041
        %v8043 = vrot.slane %v8042, 2
        %v8044 = vmax.f32 %v8042, %v8043
        %v8045 = vrot.slane %v8044, 1
        %v8046 = vmax.f32 %v8044, %v8045
        %v8047 = vrot.slane %v7679, 4
        %v8048 = vmax.f32 %v7679, %v8047
        %v8049 = vrot.slane %v8048, 2
        %v8050 = vmax.f32 %v8048, %v8049
        %v8051 = vrot.slane %v8050, 1
        %v8052 = vmax.f32 %v8050, %v8051
        %v8053 = vrot.slane %v7680, 4
        %v8054 = vmax.f32 %v7680, %v8053
        %v8055 = vrot.slane %v8054, 2
        %v8056 = vmax.f32 %v8054, %v8055
        %v8057 = vrot.slane %v8056, 1
        %v8058 = vmax.f32 %v8056, %v8057
        %v8059 = vrot.slane %v7681, 4
        %v8060 = vmax.f32 %v7681, %v8059
        %v8061 = vrot.slane %v8060, 2
        %v8062 = vmax.f32 %v8060, %v8061
        %v8063 = vrot.slane %v8062, 1
        %v8064 = vmax.f32 %v8062, %v8063
        %v8065 = vrot.slane %v7682, 4
        %v8066 = vmax.f32 %v7682, %v8065
        %v8067 = vrot.slane %v8066, 2
        %v8068 = vmax.f32 %v8066, %v8067
        %v8069 = vrot.slane %v8068, 1
        %v8070 = vmax.f32 %v8068, %v8069
        %v8071 = vrot.slane %v7683, 4
        %v8072 = vmax.f32 %v7683, %v8071
        %v8073 = vrot.slane %v8072, 2
        %v8074 = vmax.f32 %v8072, %v8073
        %v8075 = vrot.slane %v8074, 1
        %v8076 = vmax.f32 %v8074, %v8075
        %v8077 = vrot.slane %v7684, 4
        %v8078 = vmax.f32 %v7684, %v8077
        %v8079 = vrot.slane %v8078, 2
        %v8080 = vmax.f32 %v8078, %v8079
        %v8081 = vrot.slane %v8080, 1
        %v8082 = vmax.f32 %v8080, %v8081
        %v8083 = vrot.slane %v7685, 4
        %v8084 = vmax.f32 %v7685, %v8083
        %v8085 = vrot.slane %v8084, 2
        %v8086 = vmax.f32 %v8084, %v8085
        %v8087 = vrot.slane %v8086, 1
        %v8088 = vmax.f32 %v8086, %v8087
        %v8089 = vrot.slane %v7686, 4
        %v8090 = vmax.f32 %v7686, %v8089
        %v8091 = vrot.slane %v8090, 2
        %v8092 = vmax.f32 %v8090, %v8091
        %v8093 = vrot.slane %v8092, 1
        %v8094 = vmax.f32 %v8092, %v8093
        %v8095 = vrot.slane %v7687, 4
        %v8096 = vmax.f32 %v7687, %v8095
        %v8097 = vrot.slane %v8096, 2
        %v8098 = vmax.f32 %v8096, %v8097
        %v8099 = vrot.slane %v8098, 1
        %v8100 = vmax.f32 %v8098, %v8099
        %v8101 = vrot.slane %v7688, 4
        %v8102 = vmax.f32 %v7688, %v8101
        %v8103 = vrot.slane %v8102, 2
        %v8104 = vmax.f32 %v8102, %v8103
        %v8105 = vrot.slane %v8104, 1
        %v8106 = vmax.f32 %v8104, %v8105
        %v8107 = vrot.slane %v7689, 4
        %v8108 = vmax.f32 %v7689, %v8107
        %v8109 = vrot.slane %v8108, 2
        %v8110 = vmax.f32 %v8108, %v8109
        %v8111 = vrot.slane %v8110, 1
        %v8112 = vmax.f32 %v8110, %v8111
        %v8113 = vrot.slane %v7690, 4
        %v8114 = vmax.f32 %v7690, %v8113
        %v8115 = vrot.slane %v8114, 2
        %v8116 = vmax.f32 %v8114, %v8115
        %v8117 = vrot.slane %v8116, 1
        %v8118 = vmax.f32 %v8116, %v8117
        %v8119 = vrot.slane %v7691, 4
        %v8120 = vmax.f32 %v7691, %v8119
        %v8121 = vrot.slane %v8120, 2
        %v8122 = vmax.f32 %v8120, %v8121
        %v8123 = vrot.slane %v8122, 1
        %v8124 = vmax.f32 %v8122, %v8123
        %v8125 = vrot.slane %v7692, 4
        %v8126 = vmax.f32 %v7692, %v8125
        %v8127 = vrot.slane %v8126, 2
        %v8128 = vmax.f32 %v8126, %v8127
        %v8129 = vrot.slane %v8128, 1
        %v8130 = vmax.f32 %v8128, %v8129
        %v8131 = vrot.slane %v7693, 4
        %v8132 = vmax.f32 %v7693, %v8131
        %v8133 = vrot.slane %v8132, 2
        %v8134 = vmax.f32 %v8132, %v8133
        %v8135 = vrot.slane %v8134, 1
        %v8136 = vmax.f32 %v8134, %v8135
        %v8137 = vrot.slane %v7694, 4
        %v8138 = vmax.f32 %v7694, %v8137
        %v8139 = vrot.slane %v8138, 2
        %v8140 = vmax.f32 %v8138, %v8139
        %v8141 = vrot.slane %v8140, 1
        %v8142 = vmax.f32 %v8140, %v8141
        %v8143 = vrot.slane %v7695, 4
        %v8144 = vmax.f32 %v7695, %v8143
        %v8145 = vrot.slane %v8144, 2
        %v8146 = vmax.f32 %v8144, %v8145
        %v8147 = vrot.slane %v8146, 1
        %v8148 = vmax.f32 %v8146, %v8147
        %v8149 = vrot.slane %v7696, 4
        %v8150 = vmax.f32 %v7696, %v8149
        %v8151 = vrot.slane %v8150, 2
        %v8152 = vmax.f32 %v8150, %v8151
        %v8153 = vrot.slane %v8152, 1
        %v8154 = vmax.f32 %v8152, %v8153
        %v8155 = vrot.slane %v7697, 4
        %v8156 = vmax.f32 %v7697, %v8155
        %v8157 = vrot.slane %v8156, 2
        %v8158 = vmax.f32 %v8156, %v8157
        %v8159 = vrot.slane %v8158, 1
        %v8160 = vmax.f32 %v8158, %v8159
        %v8161 = vrot.slane %v7698, 4
        %v8162 = vmax.f32 %v7698, %v8161
        %v8163 = vrot.slane %v8162, 2
        %v8164 = vmax.f32 %v8162, %v8163
        %v8165 = vrot.slane %v8164, 1
        %v8166 = vmax.f32 %v8164, %v8165
        %v8167 = vrot.slane %v7699, 4
        %v8168 = vmax.f32 %v7699, %v8167
        %v8169 = vrot.slane %v8168, 2
        %v8170 = vmax.f32 %v8168, %v8169
        %v8171 = vrot.slane %v8170, 1
        %v8172 = vmax.f32 %v8170, %v8171
        %v8173 = vrot.slane %v7700, 4
        %v8174 = vmax.f32 %v7700, %v8173
        %v8175 = vrot.slane %v8174, 2
        %v8176 = vmax.f32 %v8174, %v8175
        %v8177 = vrot.slane %v8176, 1
        %v8178 = vmax.f32 %v8176, %v8177
        %v8179 = vrot.slane %v7701, 4
        %v8180 = vmax.f32 %v7701, %v8179
        %v8181 = vrot.slane %v8180, 2
        %v8182 = vmax.f32 %v8180, %v8181
        %v8183 = vrot.slane %v8182, 1
        %v8184 = vmax.f32 %v8182, %v8183
        %v8185 = vrot.slane %v7702, 4
        %v8186 = vmax.f32 %v7702, %v8185
        %v8187 = vrot.slane %v8186, 2
        %v8188 = vmax.f32 %v8186, %v8187
        %v8189 = vrot.slane %v8188, 1
        %v8190 = vmax.f32 %v8188, %v8189
        %v8191 = vrot.slane %v7703, 4
        %v8192 = vmax.f32 %v7703, %v8191
        %v8193 = vrot.slane %v8192, 2
        %v8194 = vmax.f32 %v8192, %v8193
        %v8195 = vrot.slane %v8194, 1
        %v8196 = vmax.f32 %v8194, %v8195
        %v8197 = vrot.slane %v7704, 4
        %v8198 = vmax.f32 %v7704, %v8197
        %v8199 = vrot.slane %v8198, 2
        %v8200 = vmax.f32 %v8198, %v8199
        %v8201 = vrot.slane %v8200, 1
        %v8202 = vmax.f32 %v8200, %v8201
        %v8203 = vrot.slane %v7705, 4
        %v8204 = vmax.f32 %v7705, %v8203
        %v8205 = vrot.slane %v8204, 2
        %v8206 = vmax.f32 %v8204, %v8205
        %v8207 = vrot.slane %v8206, 1
        %v8208 = vmax.f32 %v8206, %v8207
        %v8209 = vrot.slane %v7706, 4
        %v8210 = vmax.f32 %v7706, %v8209
        %v8211 = vrot.slane %v8210, 2
        %v8212 = vmax.f32 %v8210, %v8211
        %v8213 = vrot.slane %v8212, 1
        %v8214 = vmax.f32 %v8212, %v8213
        %v8215 = vrot.slane %v7707, 4
        %v8216 = vmax.f32 %v7707, %v8215
        %v8217 = vrot.slane %v8216, 2
        %v8218 = vmax.f32 %v8216, %v8217
        %v8219 = vrot.slane %v8218, 1
        %v8220 = vmax.f32 %v8218, %v8219
        %v8221 = vrot.slane %v7708, 4
        %v8222 = vmax.f32 %v7708, %v8221
        %v8223 = vrot.slane %v8222, 2
        %v8224 = vmax.f32 %v8222, %v8223
        %v8225 = vrot.slane %v8224, 1
        %v8226 = vmax.f32 %v8224, %v8225
        %v8227 = vrot.slane %v7709, 4
        %v8228 = vmax.f32 %v7709, %v8227
        %v8229 = vrot.slane %v8228, 2
        %v8230 = vmax.f32 %v8228, %v8229
        %v8231 = vrot.slane %v8230, 1
        %v8232 = vmax.f32 %v8230, %v8231
        %v8233 = vrot.slane %v7710, 4
        %v8234 = vmax.f32 %v7710, %v8233
        %v8235 = vrot.slane %v8234, 2
        %v8236 = vmax.f32 %v8234, %v8235
        %v8237 = vrot.slane %v8236, 1
        %v8238 = vmax.f32 %v8236, %v8237
        %v8239 = vrot.slane %v7711, 4
        %v8240 = vmax.f32 %v7711, %v8239
        %v8241 = vrot.slane %v8240, 2
        %v8242 = vmax.f32 %v8240, %v8241
        %v8243 = vrot.slane %v8242, 1
        %v8244 = vmax.f32 %v8242, %v8243
        %v8245 = vrot.slane %v7712, 4
        %v8246 = vmax.f32 %v7712, %v8245
        %v8247 = vrot.slane %v8246, 2
        %v8248 = vmax.f32 %v8246, %v8247
        %v8249 = vrot.slane %v8248, 1
        %v8250 = vmax.f32 %v8248, %v8249
        %v8251 = vrot.slane %v7713, 4
        %v8252 = vmax.f32 %v7713, %v8251
        %v8253 = vrot.slane %v8252, 2
        %v8254 = vmax.f32 %v8252, %v8253
        %v8255 = vrot.slane %v8254, 1
        %v8256 = vmax.f32 %v8254, %v8255
        %v8257 = vrot.slane %v7714, 4
        %v8258 = vmax.f32 %v7714, %v8257
        %v8259 = vrot.slane %v8258, 2
        %v8260 = vmax.f32 %v8258, %v8259
        %v8261 = vrot.slane %v8260, 1
        %v8262 = vmax.f32 %v8260, %v8261
        %v8263 = vrot.slane %v7715, 4
        %v8264 = vmax.f32 %v7715, %v8263
        %v8265 = vrot.slane %v8264, 2
        %v8266 = vmax.f32 %v8264, %v8265
        %v8267 = vrot.slane %v8266, 1
        %v8268 = vmax.f32 %v8266, %v8267
        %v8269 = vrot.slane %v7716, 4
        %v8270 = vmax.f32 %v7716, %v8269
        %v8271 = vrot.slane %v8270, 2
        %v8272 = vmax.f32 %v8270, %v8271
        %v8273 = vrot.slane %v8272, 1
        %v8274 = vmax.f32 %v8272, %v8273
        %v8275 = vrot.slane %v7717, 4
        %v8276 = vmax.f32 %v7717, %v8275
        %v8277 = vrot.slane %v8276, 2
        %v8278 = vmax.f32 %v8276, %v8277
        %v8279 = vrot.slane %v8278, 1
        %v8280 = vmax.f32 %v8278, %v8279
        %v8281 = vrot.slane %v7718, 4
        %v8282 = vmax.f32 %v7718, %v8281
        %v8283 = vrot.slane %v8282, 2
        %v8284 = vmax.f32 %v8282, %v8283
        %v8285 = vrot.slane %v8284, 1
        %v8286 = vmax.f32 %v8284, %v8285
        %v8287 = vrot.slane %v7719, 4
        %v8288 = vmax.f32 %v7719, %v8287
        %v8289 = vrot.slane %v8288, 2
        %v8290 = vmax.f32 %v8288, %v8289
        %v8291 = vrot.slane %v8290, 1
        %v8292 = vmax.f32 %v8290, %v8291
        %v8293 = vrot.slane %v7720, 4
        %v8294 = vmax.f32 %v7720, %v8293
        %v8295 = vrot.slane %v8294, 2
        %v8296 = vmax.f32 %v8294, %v8295
        %v8297 = vrot.slane %v8296, 1
        %v8298 = vmax.f32 %v8296, %v8297
        %v8299 = vrot.slane %v7721, 4
        %v8300 = vmax.f32 %v7721, %v8299
        %v8301 = vrot.slane %v8300, 2
        %v8302 = vmax.f32 %v8300, %v8301
        %v8303 = vrot.slane %v8302, 1
        %v8304 = vmax.f32 %v8302, %v8303
        %v8305 = vrot.slane %v7722, 4
        %v8306 = vmax.f32 %v7722, %v8305
        %v8307 = vrot.slane %v8306, 2
        %v8308 = vmax.f32 %v8306, %v8307
        %v8309 = vrot.slane %v8308, 1
        %v8310 = vmax.f32 %v8308, %v8309
        %v8311 = vrot.slane %v7723, 4
        %v8312 = vmax.f32 %v7723, %v8311
        %v8313 = vrot.slane %v8312, 2
        %v8314 = vmax.f32 %v8312, %v8313
        %v8315 = vrot.slane %v8314, 1
        %v8316 = vmax.f32 %v8314, %v8315
        %v8317 = vrot.slane %v7724, 4
        %v8318 = vmax.f32 %v7724, %v8317
        %v8319 = vrot.slane %v8318, 2
        %v8320 = vmax.f32 %v8318, %v8319
        %v8321 = vrot.slane %v8320, 1
        %v8322 = vmax.f32 %v8320, %v8321
        %v8323 = vrot.slane %v7725, 4
        %v8324 = vmax.f32 %v7725, %v8323
        %v8325 = vrot.slane %v8324, 2
        %v8326 = vmax.f32 %v8324, %v8325
        %v8327 = vrot.slane %v8326, 1
        %v8328 = vmax.f32 %v8326, %v8327
        %v8329 = vrot.slane %v7726, 4
        %v8330 = vmax.f32 %v7726, %v8329
        %v8331 = vrot.slane %v8330, 2
        %v8332 = vmax.f32 %v8330, %v8331
        %v8333 = vrot.slane %v8332, 1
        %v8334 = vmax.f32 %v8332, %v8333
        %v8335 = vrot.slane %v7727, 4
        %v8336 = vmax.f32 %v7727, %v8335
        %v8337 = vrot.slane %v8336, 2
        %v8338 = vmax.f32 %v8336, %v8337
        %v8339 = vrot.slane %v8338, 1
        %v8340 = vmax.f32 %v8338, %v8339
        %v8341 = vrot.slane %v7728, 4
        %v8342 = vmax.f32 %v7728, %v8341
        %v8343 = vrot.slane %v8342, 2
        %v8344 = vmax.f32 %v8342, %v8343
        %v8345 = vrot.slane %v8344, 1
        %v8346 = vmax.f32 %v8344, %v8345
        %v8347 = vrot.slane %v7729, 4
        %v8348 = vmax.f32 %v7729, %v8347
        %v8349 = vrot.slane %v8348, 2
        %v8350 = vmax.f32 %v8348, %v8349
        %v8351 = vrot.slane %v8350, 1
        %v8352 = vmax.f32 %v8350, %v8351
        %v8353 = vrot.slane %v7730, 4
        %v8354 = vmax.f32 %v7730, %v8353
        %v8355 = vrot.slane %v8354, 2
        %v8356 = vmax.f32 %v8354, %v8355
        %v8357 = vrot.slane %v8356, 1
        %v8358 = vmax.f32 %v8356, %v8357
        %v8359 = vrot.slane %v7731, 4
        %v8360 = vmax.f32 %v7731, %v8359
        %v8361 = vrot.slane %v8360, 2
        %v8362 = vmax.f32 %v8360, %v8361
        %v8363 = vrot.slane %v8362, 1
        %v8364 = vmax.f32 %v8362, %v8363
        %v8365 = vrot.slane %v7732, 4
        %v8366 = vmax.f32 %v7732, %v8365
        %v8367 = vrot.slane %v8366, 2
        %v8368 = vmax.f32 %v8366, %v8367
        %v8369 = vrot.slane %v8368, 1
        %v8370 = vmax.f32 %v8368, %v8369
        %v8371 = vrot.slane %v7733, 4
        %v8372 = vmax.f32 %v7733, %v8371
        %v8373 = vrot.slane %v8372, 2
        %v8374 = vmax.f32 %v8372, %v8373
        %v8375 = vrot.slane %v8374, 1
        %v8376 = vmax.f32 %v8374, %v8375
        %v8377 = vrot.slane %v7734, 4
        %v8378 = vmax.f32 %v7734, %v8377
        %v8379 = vrot.slane %v8378, 2
        %v8380 = vmax.f32 %v8378, %v8379
        %v8381 = vrot.slane %v8380, 1
        %v8382 = vmax.f32 %v8380, %v8381
        %v8383 = vrot.slane %v7735, 4
        %v8384 = vmax.f32 %v7735, %v8383
        %v8385 = vrot.slane %v8384, 2
        %v8386 = vmax.f32 %v8384, %v8385
        %v8387 = vrot.slane %v8386, 1
        %v8388 = vmax.f32 %v8386, %v8387
        %v8389 = vrot.slane %v7736, 4
        %v8390 = vmax.f32 %v7736, %v8389
        %v8391 = vrot.slane %v8390, 2
        %v8392 = vmax.f32 %v8390, %v8391
        %v8393 = vrot.slane %v8392, 1
        %v8394 = vmax.f32 %v8392, %v8393
        %v8395 = vrot.slane %v7737, 4
        %v8396 = vmax.f32 %v7737, %v8395
        %v8397 = vrot.slane %v8396, 2
        %v8398 = vmax.f32 %v8396, %v8397
        %v8399 = vrot.slane %v8398, 1
        %v8400 = vmax.f32 %v8398, %v8399
        %v8401 = vrot.slane %v7738, 4
        %v8402 = vmax.f32 %v7738, %v8401
        %v8403 = vrot.slane %v8402, 2
        %v8404 = vmax.f32 %v8402, %v8403
        %v8405 = vrot.slane %v8404, 1
        %v8406 = vmax.f32 %v8404, %v8405
        %v8407 = vrot.slane %v7739, 4
        %v8408 = vmax.f32 %v7739, %v8407
        %v8409 = vrot.slane %v8408, 2
        %v8410 = vmax.f32 %v8408, %v8409
        %v8411 = vrot.slane %v8410, 1
        %v8412 = vmax.f32 %v8410, %v8411
        %v8413 = vrot.slane %v7740, 4
        %v8414 = vmax.f32 %v7740, %v8413
        %v8415 = vrot.slane %v8414, 2
        %v8416 = vmax.f32 %v8414, %v8415
        %v8417 = vrot.slane %v8416, 1
        %v8418 = vmax.f32 %v8416, %v8417
        %v8419 = vrot.slane %v7741, 4
        %v8420 = vmax.f32 %v7741, %v8419
        %v8421 = vrot.slane %v8420, 2
        %v8422 = vmax.f32 %v8420, %v8421
        %v8423 = vrot.slane %v8422, 1
        %v8424 = vmax.f32 %v8422, %v8423
        %v8425 = vrot.slane %v7742, 4
        %v8426 = vmax.f32 %v7742, %v8425
        %v8427 = vrot.slane %v8426, 2
        %v8428 = vmax.f32 %v8426, %v8427
        %v8429 = vrot.slane %v8428, 1
        %v8430 = vmax.f32 %v8428, %v8429
        %v8431 = vrot.slane %v7743, 4
        %v8432 = vmax.f32 %v7743, %v8431
        %v8433 = vrot.slane %v8432, 2
        %v8434 = vmax.f32 %v8432, %v8433
        %v8435 = vrot.slane %v8434, 1
        %v8436 = vmax.f32 %v8434, %v8435
        %v8437 = vrot.slane %v7744, 4
        %v8438 = vmax.f32 %v7744, %v8437
        %v8439 = vrot.slane %v8438, 2
        %v8440 = vmax.f32 %v8438, %v8439
        %v8441 = vrot.slane %v8440, 1
        %v8442 = vmax.f32 %v8440, %v8441
        %v8443 = vrot.slane %v7745, 4
        %v8444 = vmax.f32 %v7745, %v8443
        %v8445 = vrot.slane %v8444, 2
        %v8446 = vmax.f32 %v8444, %v8445
        %v8447 = vrot.slane %v8446, 1
        %v8448 = vmax.f32 %v8446, %v8447
        %v8449 = vrot.slane %v7746, 4
        %v8450 = vmax.f32 %v7746, %v8449
        %v8451 = vrot.slane %v8450, 2
        %v8452 = vmax.f32 %v8450, %v8451
        %v8453 = vrot.slane %v8452, 1
        %v8454 = vmax.f32 %v8452, %v8453
        %v8455 = vrot.slane %v7747, 4
        %v8456 = vmax.f32 %v7747, %v8455
        %v8457 = vrot.slane %v8456, 2
        %v8458 = vmax.f32 %v8456, %v8457
        %v8459 = vrot.slane %v8458, 1
        %v8460 = vmax.f32 %v8458, %v8459
        %v8461 = vrot.slane %v7748, 4
        %v8462 = vmax.f32 %v7748, %v8461
        %v8463 = vrot.slane %v8462, 2
        %v8464 = vmax.f32 %v8462, %v8463
        %v8465 = vrot.slane %v8464, 1
        %v8466 = vmax.f32 %v8464, %v8465
        %v8467 = vrot.slane %v7749, 4
        %v8468 = vmax.f32 %v7749, %v8467
        %v8469 = vrot.slane %v8468, 2
        %v8470 = vmax.f32 %v8468, %v8469
        %v8471 = vrot.slane %v8470, 1
        %v8472 = vmax.f32 %v8470, %v8471
        %v8473 = vrot.slane %v7750, 4
        %v8474 = vmax.f32 %v7750, %v8473
        %v8475 = vrot.slane %v8474, 2
        %v8476 = vmax.f32 %v8474, %v8475
        %v8477 = vrot.slane %v8476, 1
        %v8478 = vmax.f32 %v8476, %v8477
        %v8479 = vrot.slane %v7751, 4
        %v8480 = vmax.f32 %v7751, %v8479
        %v8481 = vrot.slane %v8480, 2
        %v8482 = vmax.f32 %v8480, %v8481
        %v8483 = vrot.slane %v8482, 1
        %v8484 = vmax.f32 %v8482, %v8483
        %v8485 = vrot.slane %v7752, 4
        %v8486 = vmax.f32 %v7752, %v8485
        %v8487 = vrot.slane %v8486, 2
        %v8488 = vmax.f32 %v8486, %v8487
        %v8489 = vrot.slane %v8488, 1
        %v8490 = vmax.f32 %v8488, %v8489
        %v8491 = vrot.slane %v7753, 4
        %v8492 = vmax.f32 %v7753, %v8491
        %v8493 = vrot.slane %v8492, 2
        %v8494 = vmax.f32 %v8492, %v8493
        %v8495 = vrot.slane %v8494, 1
        %v8496 = vmax.f32 %v8494, %v8495
        %v8497 = vrot.slane %v7754, 4
        %v8498 = vmax.f32 %v7754, %v8497
        %v8499 = vrot.slane %v8498, 2
        %v8500 = vmax.f32 %v8498, %v8499
        %v8501 = vrot.slane %v8500, 1
        %v8502 = vmax.f32 %v8500, %v8501
        %v8503 = vrot.slane %v7755, 4
        %v8504 = vmax.f32 %v7755, %v8503
        %v8505 = vrot.slane %v8504, 2
        %v8506 = vmax.f32 %v8504, %v8505
        %v8507 = vrot.slane %v8506, 1
        %v8508 = vmax.f32 %v8506, %v8507
        %v8509 = vrot.slane %v7756, 4
        %v8510 = vmax.f32 %v7756, %v8509
        %v8511 = vrot.slane %v8510, 2
        %v8512 = vmax.f32 %v8510, %v8511
        %v8513 = vrot.slane %v8512, 1
        %v8514 = vmax.f32 %v8512, %v8513
        %v8515 = vrot.slane %v7757, 4
        %v8516 = vmax.f32 %v7757, %v8515
        %v8517 = vrot.slane %v8516, 2
        %v8518 = vmax.f32 %v8516, %v8517
        %v8519 = vrot.slane %v8518, 1
        %v8520 = vmax.f32 %v8518, %v8519
        %v8521 = vrot.slane %v7758, 4
        %v8522 = vmax.f32 %v7758, %v8521
        %v8523 = vrot.slane %v8522, 2
        %v8524 = vmax.f32 %v8522, %v8523
        %v8525 = vrot.slane %v8524, 1
        %v8526 = vmax.f32 %v8524, %v8525
        %vm8655 = vcmask 1041409
        %v8656 = vsel %vm8655, %v7770, %v7764
        %vm8657 = vcmask 1042434
        %v8658 = vsel %vm8657, %v7776, %v8656
        %vm8659 = vcmask 1043459
        %v8660 = vsel %vm8659, %v7782, %v8658
        %vm8661 = vcmask 1044484
        %v8662 = vsel %vm8661, %v7788, %v8660
        %vm8663 = vcmask 1045509
        %v8664 = vsel %vm8663, %v7794, %v8662
        %vm8665 = vcmask 1046534
        %v8666 = vsel %vm8665, %v7800, %v8664
        %vm8667 = vcmask 1047559
        %v8668 = vsel %vm8667, %v7806, %v8666
        %v8669 = vsel %vm8655, %v7818, %v7812
        %v8670 = vsel %vm8657, %v7824, %v8669
        %v8671 = vsel %vm8659, %v7830, %v8670
        %v8672 = vsel %vm8661, %v7836, %v8671
        %v8673 = vsel %vm8663, %v7842, %v8672
        %v8674 = vsel %vm8665, %v7848, %v8673
        %v8675 = vsel %vm8667, %v7854, %v8674
        %v8676 = vsel %vm8655, %v7866, %v7860
        %v8677 = vsel %vm8657, %v7872, %v8676
        %v8678 = vsel %vm8659, %v7878, %v8677
        %v8679 = vsel %vm8661, %v7884, %v8678
        %v8680 = vsel %vm8663, %v7890, %v8679
        %v8681 = vsel %vm8665, %v7896, %v8680
        %v8682 = vsel %vm8667, %v7902, %v8681
        %v8683 = vsel %vm8655, %v7914, %v7908
        %v8684 = vsel %vm8657, %v7920, %v8683
        %v8685 = vsel %vm8659, %v7926, %v8684
        %v8686 = vsel %vm8661, %v7932, %v8685
        %v8687 = vsel %vm8663, %v7938, %v8686
        %v8688 = vsel %vm8665, %v7944, %v8687
        %v8689 = vsel %vm8667, %v7950, %v8688
        %v8690 = vsel %vm8655, %v7962, %v7956
        %v8691 = vsel %vm8657, %v7968, %v8690
        %v8692 = vsel %vm8659, %v7974, %v8691
        %v8693 = vsel %vm8661, %v7980, %v8692
        %v8694 = vsel %vm8663, %v7986, %v8693
        %v8695 = vsel %vm8665, %v7992, %v8694
        %v8696 = vsel %vm8667, %v7998, %v8695
        %v8697 = vsel %vm8655, %v8010, %v8004
        %v8698 = vsel %vm8657, %v8016, %v8697
        %v8699 = vsel %vm8659, %v8022, %v8698
        %v8700 = vsel %vm8661, %v8028, %v8699
        %v8701 = vsel %vm8663, %v8034, %v8700
        %v8702 = vsel %vm8665, %v8040, %v8701
        %v8703 = vsel %vm8667, %v8046, %v8702
        %v8704 = vsel %vm8655, %v8058, %v8052
        %v8705 = vsel %vm8657, %v8064, %v8704
        %v8706 = vsel %vm8659, %v8070, %v8705
        %v8707 = vsel %vm8661, %v8076, %v8706
        %v8708 = vsel %vm8663, %v8082, %v8707
        %v8709 = vsel %vm8665, %v8088, %v8708
        %v8710 = vsel %vm8667, %v8094, %v8709
        %v8711 = vsel %vm8655, %v8106, %v8100
        %v8712 = vsel %vm8657, %v8112, %v8711
        %v8713 = vsel %vm8659, %v8118, %v8712
        %v8714 = vsel %vm8661, %v8124, %v8713
        %v8715 = vsel %vm8663, %v8130, %v8714
        %v8716 = vsel %vm8665, %v8136, %v8715
        %v8717 = vsel %vm8667, %v8142, %v8716
        %v8718 = vsel %vm8655, %v8154, %v8148
        %v8719 = vsel %vm8657, %v8160, %v8718
        %v8720 = vsel %vm8659, %v8166, %v8719
        %v8721 = vsel %vm8661, %v8172, %v8720
        %v8722 = vsel %vm8663, %v8178, %v8721
        %v8723 = vsel %vm8665, %v8184, %v8722
        %v8724 = vsel %vm8667, %v8190, %v8723
        %v8725 = vsel %vm8655, %v8202, %v8196
        %v8726 = vsel %vm8657, %v8208, %v8725
        %v8727 = vsel %vm8659, %v8214, %v8726
        %v8728 = vsel %vm8661, %v8220, %v8727
        %v8729 = vsel %vm8663, %v8226, %v8728
        %v8730 = vsel %vm8665, %v8232, %v8729
        %v8731 = vsel %vm8667, %v8238, %v8730
        %v8732 = vsel %vm8655, %v8250, %v8244
        %v8733 = vsel %vm8657, %v8256, %v8732
        %v8734 = vsel %vm8659, %v8262, %v8733
        %v8735 = vsel %vm8661, %v8268, %v8734
        %v8736 = vsel %vm8663, %v8274, %v8735
        %v8737 = vsel %vm8665, %v8280, %v8736
        %v8738 = vsel %vm8667, %v8286, %v8737
        %v8739 = vsel %vm8655, %v8298, %v8292
        %v8740 = vsel %vm8657, %v8304, %v8739
        %v8741 = vsel %vm8659, %v8310, %v8740
        %v8742 = vsel %vm8661, %v8316, %v8741
        %v8743 = vsel %vm8663, %v8322, %v8742
        %v8744 = vsel %vm8665, %v8328, %v8743
        %v8745 = vsel %vm8667, %v8334, %v8744
        %v8746 = vsel %vm8655, %v8346, %v8340
        %v8747 = vsel %vm8657, %v8352, %v8746
        %v8748 = vsel %vm8659, %v8358, %v8747
        %v8749 = vsel %vm8661, %v8364, %v8748
        %v8750 = vsel %vm8663, %v8370, %v8749
        %v8751 = vsel %vm8665, %v8376, %v8750
        %v8752 = vsel %vm8667, %v8382, %v8751
        %v8753 = vsel %vm8655, %v8394, %v8388
        %v8754 = vsel %vm8657, %v8400, %v8753
        %v8755 = vsel %vm8659, %v8406, %v8754
        %v8756 = vsel %vm8661, %v8412, %v8755
        %v8757 = vsel %vm8663, %v8418, %v8756
        %v8758 = vsel %vm8665, %v8424, %v8757
        %v8759 = vsel %vm8667, %v8430, %v8758
        %v8760 = vsel %vm8655, %v8442, %v8436
        %v8761 = vsel %vm8657, %v8448, %v8760
        %v8762 = vsel %vm8659, %v8454, %v8761
        %v8763 = vsel %vm8661, %v8460, %v8762
        %v8764 = vsel %vm8663, %v8466, %v8763
        %v8765 = vsel %vm8665, %v8472, %v8764
        %v8766 = vsel %vm8667, %v8478, %v8765
        %v8767 = vsel %vm8655, %v8490, %v8484
        %v8768 = vsel %vm8657, %v8496, %v8767
        %v8769 = vsel %vm8659, %v8502, %v8768
        %v8770 = vsel %vm8661, %v8508, %v8769
        %v8771 = vsel %vm8663, %v8514, %v8770
        %v8772 = vsel %vm8665, %v8520, %v8771
        %v8773 = vsel %vm8667, %v8526, %v8772
        %8790 = vst [vmem:[#allocation2] sm:$0xff] %v8668
        %8791 = vst [vmem:[#allocation2 + $0x8] sm:$0xff] %v8675
        %8792 = vst [vmem:[#allocation2 + $0x10] sm:$0xff] %v8682
        %8793 = vst [vmem:[#allocation2 + $0x18] sm:$0xff] %v8689
        %8794 = vst [vmem:[#allocation2 + $0x20] sm:$0xff] %v8696
        %8795 = vst [vmem:[#allocation2 + $0x28] sm:$0xff] %v8703
        %8796 = vst [vmem:[#allocation2 + $0x30] sm:$0xff] %v8710
        %8797 = vst [vmem:[#allocation2 + $0x38] sm:$0xff] %v8717
        %8798 = vst [vmem:[#allocation2 + $0x40] sm:$0xff] %v8724
        %8799 = vst [vmem:[#allocation2 + $0x48] sm:$0xff] %v8731
        %8800 = vst [vmem:[#allocation2 + $0x50] sm:$0xff] %v8738
        %8801 = vst [vmem:[#allocation2 + $0x58] sm:$0xff] %v8745
        %8802 = vst [vmem:[#allocation2 + $0x60] sm:$0xff] %v8752
        %8803 = vst [vmem:[#allocation2 + $0x68] sm:$0xff] %v8759
        %8804 = vst [vmem:[#allocation2 + $0x70] sm:$0xff] %v8766
        %8805 = vst [vmem:[#allocation2 + $0x78] sm:$0xff] %v8773
        %v8806 = vld [vmem:[#allocation2] sm:$0xff]
        %v8807 = vld [vmem:[#allocation2 + $0x8] sm:$0xff]
        %v8808 = vld [vmem:[#allocation2 + $0x10] sm:$0xff]
        %v8809 = vld [vmem:[#allocation2 + $0x18] sm:$0xff]
        %v8810 = vld [vmem:[#allocation2 + $0x20] sm:$0xff]
        %v8811 = vld [vmem:[#allocation2 + $0x28] sm:$0xff]
        %v8812 = vld [vmem:[#allocation2 + $0x30] sm:$0xff]
        %v8813 = vld [vmem:[#allocation2 + $0x38] sm:$0xff]
        %v8814 = vld [vmem:[#allocation2 + $0x40] sm:$0xff]
        %v8815 = vld [vmem:[#allocation2 + $0x48] sm:$0xff]
        %v8816 = vld [vmem:[#allocation2 + $0x50] sm:$0xff]
        %v8817 = vld [vmem:[#allocation2 + $0x58] sm:$0xff]
        %v8818 = vld [vmem:[#allocation2 + $0x60] sm:$0xff]
        %v8819 = vld [vmem:[#allocation2 + $0x68] sm:$0xff]
        %v8820 = vld [vmem:[#allocation2 + $0x70] sm:$0xff]
        %v8821 = vld [vmem:[#allocation2 + $0x78] sm:$0xff]
        %8822 = vxpose.xlu0.b32.start [1/16] %v8806, 128
        %8823 = vxpose.xlu0.b32.cont [2/16] %v8807, 128
        %8824 = vxpose.xlu0.b32.cont [3/16] %v8808, 128
        %8825 = vxpose.xlu0.b32.cont [4/16] %v8809, 128
        %8826 = vxpose.xlu0.b32.cont [5/16] %v8810, 128
        %8827 = vxpose.xlu0.b32.cont [6/16] %v8811, 128
        %8828 = vxpose.xlu0.b32.cont [7/16] %v8812, 128
        %8829 = vxpose.xlu0.b32.cont [8/16] %v8813, 128
        %8830 = vxpose.xlu0.b32.cont [9/16] %v8814, 128
        %8831 = vxpose.xlu0.b32.cont [10/16] %v8815, 128
        %8832 = vxpose.xlu0.b32.cont [11/16] %v8816, 128
        %8833 = vxpose.xlu0.b32.cont [12/16] %v8817, 128
        %8834 = vxpose.xlu0.b32.cont [13/16] %v8818, 128
        %8835 = vxpose.xlu0.b32.cont [14/16] %v8819, 128
        %8836 = vxpose.xlu0.b32.cont [15/16] %v8820, 128
        %8837 = vxpose.xlu0.b32.end [16/16] %v8821, 128
        %v8838 = vpop.trf.xlu0
        %v8839 = vpop.trf.xlu0
        %v8840 = vpop.trf.xlu0
        %v8841 = vpop.trf.xlu0
        %v8842 = vpop.trf.xlu0
        %v8843 = vpop.trf.xlu0
        %v8844 = vpop.trf.xlu0
        %v8845 = vpop.trf.xlu0
        %v8846 = vpop.trf.xlu0
        %v8847 = vpop.trf.xlu0
        %v8848 = vpop.trf.xlu0
        %v8849 = vpop.trf.xlu0
        %v8850 = vpop.trf.xlu0
        %v8851 = vpop.trf.xlu0
        %v8852 = vpop.trf.xlu0
        %v8853 = vpop.trf.xlu0
        %8854 = vst [vmem:[%s242] sm:$0xff] %v8838
        %8855 = vst [vmem:[%s242 + $0x8] sm:$0xff] %v8839
        %8856 = vst [vmem:[%s242 + $0x10] sm:$0xff] %v8840
        %8857 = vst [vmem:[%s242 + $0x18] sm:$0xff] %v8841
        %s8858 = sand.u32 %s153, 1
        %s8859 = scalar_lea.sflag [#allocation4], %s8858
        %s8860 = sand.u32 %s153, 1
        %s8861 = smul.addr %s8860, 32
        %s8862 = scalar_lea.vmem [#allocation3], %s8861
        // Predicated region
        $region41: #{tpu_custom_call.1} parent=39 // pred_check
          %p8863 = pneg %p163
        $region42: #{tpu_custom_call.1} parent=39 // pred_check_branch
          %8865 = sbr.rel (%p8863) target = $region44
        $region43: #{tpu_custom_call.1} parent=39 // pred_region
          %s8867 = ssub.s32 512, 512
          %8868 = vsyncadd %s8859, %s8867
          %s8869 = smul.addr %s23, 4
          %s8870 = sadd.s32 %s24, %s8869
          %s8871 = smul.addr %s8870, 128
          %s8872 = scalar_lea.hbm %s5, %s8871
          %s8873 = sshll.u32 %s8862, 4
          %s8874 = int_to_ptr.vmem [resolvable:$true] %s8873
          %8879 = dma.vmem_to_hbm [thread:$0]  %s8874, 512, %s8872, %s8859, 128, 128, 8
        $region44: #{tpu_custom_call.1} parent=39 // pred_fallthru
          _
      $region40: #{tpu_custom_call.1} parent=5 // pred_fallthru
        _
      %p8880 = scmp.le.s32.totalorder 2, %s14
      // Predicated region
      $region45: #{tpu_custom_call.1} parent=5 // pred_check
        %p8881 = pneg %p8880
      $region46: #{tpu_custom_call.1} parent=5 // pred_check_branch
        %8883 = sbr.rel (%p8881) target = $region48
      $region47: #{tpu_custom_call.1} parent=5 // pred_region
        %s8884 = ssub.s32 %s14, 2
        // Predicated region
        $region49: #{tpu_custom_call.1} parent=47 // pred_check
          %p8885 = pneg %p169
        $region50: #{tpu_custom_call.1} parent=47 // pred_check_branch
          %8887 = sbr.rel (%p8885) target = $region52
        $region51: #{tpu_custom_call.1} parent=47 // pred_region
          %s8888 = sand.u32 %s154, 1
          %s8889 = scalar_lea.sflag [#allocation4], %s8888
          %s8890 = sand.u32 %s154, 1
          %s8891 = smul.addr %s8890, 32
          %s8892 = scalar_lea.vmem [#allocation3], %s8891
          %8893 = dma.done %s8889, 512
        $region52: #{tpu_custom_call.1} parent=47 // pred_fallthru
          _
      $region48: #{tpu_custom_call.1} parent=5 // pred_fallthru
        _
    $region6: #{tpu_custom_call.1} parent=1 // loop_footer
      %s18 = sadd.s32 1, %s14
    $region7: #{tpu_custom_call.1} parent=1 // loop_footer_branch
      %13 = sbr.rel target = $region3
    $region8: #{tpu_custom_call.1} parent=1 // loop_exit
      _
    %8894 = vsyncpa [#allocation4], 1
    %s8895 = scalar_lea.sflag [#allocation4], 1
    %8896 = vsyncpa %s8895, 1

</llo_original>
